<compile_context>
chip_gen: v7x
topology: tpu7x:2x2x1
jax: 0.10.0
libtpu: 0.0.40
codegen_flags: <defaults>
</compile_context>

<pallas_src>
import functools

import jax
import jax.numpy as jnp
from jax.experimental import pallas as pl
from jax.experimental.pallas import tpu as pltpu

SQRT2_INV = 0.7071067811865476


def _gelu_exact(y):
    # matches torch.nn.functional.gelu default (erf based)
    return 0.5 * y * (1.0 + jax.lax.erf(y * SQRT2_INV))


# ----------------------------------------------------------------------------
# Fused kernel: fc0 lift -> 4 x (SpectralConv1dV + Conv1d_1x1 + GELU) -> fc1/GELU/fc2.
# Activation layout inside the kernel: channel-first (C, bt*S), column index = b*S + s,
# so every pointwise/channel matmul folds the batch tile into its N dimension and the
# spectral transforms fold it into rows/columns of a single MXU matmul.
# ----------------------------------------------------------------------------
def vno1d_fused_kernel(x_ref, gt_ref, w0x_ref, w0g_ref, b0_ref,
                       vf_ref, vi_ref, wmix_ref, cw_ref, cb_ref,
                       w1t_ref, b1_ref, w2t_ref, b2_ref, o_ref):
    bt, cin, s = x_ref.shape
    w = w0x_ref.shape[0]
    n_layers = wmix_ref.shape[0]
    m2 = vf_ref.shape[0]                 # 2 * modes
    m = m2 // 2
    co = w2t_ref.shape[0]
    bts = bt * s
    f32 = jnp.float32

    # ---- lift (fc0 with the PyTorch permutes folded into the weight layout) ----
    # h[w, b*S+s] = sum_c w0x[w,c]*x[b,c,s] + w0g[w]*grid[s] + b0[w]
    xcs = jnp.concatenate(
        [x_ref[:, c, :].reshape(1, bts) for c in range(cin)], axis=0)       # (Cin, bt*S)
    h = (jnp.dot(w0x_ref[...], xcs, preferred_element_type=f32)
         + w0g_ref[...] * gt_ref[...] + b0_ref[...])                        # (W, bt*S)

    v_fwd = vf_ref[...]                  # (2M, S)  rows: [vre ; vim]        (part-major)
    v_inv = vi_ref[...]                  # (2M, S)  rows interleaved (m, re/im) mode-major

    # ---- 4 fused Fourier layers ----
    for li in range(n_layers):
        w_mix = wmix_ref[li]             # (M, 2*Wout, 2*Win)  re/im-stacked channel mix
        cw = cw_ref[li]                  # (Wout, Win)          1x1-conv skip weight
        cb = cb_ref[li]                  # (Wout, 1)

        # forward nonuniform transform, batch folded into matmul columns:
        #   Xft[(p,m), (i,b)] = sum_s V[(p,m), s] * h[i, b*S+s]
        h3 = h.reshape(w * bt, s)                                            # rows (i, b)
        xft = jax.lax.dot_general(v_fwd, h3, (((1,), (1,)), ((), ())),
                                  preferred_element_type=f32)                # (2M, W*bt)
        xri = jnp.concatenate(
            [xft[:m].reshape(m, w, bt),                                      # Re(x_ft)
             xft[m:].reshape(m, w, bt)], axis=1)                             # (M, 2W, bt)

        # complex channel mix: ONE mode-batched matmul (K = 2*Win, 2*Wout output rows,
        # batch tile as the N columns).  Row p*Wout+o of block m holds Re (p=0) / Im (p=1).
        o_both = jax.lax.dot_general(w_mix, xri, (((2,), (1,)), ((0,), (0,))),
                                     preferred_element_type=f32)             # (M, 2W, bt)

        # inverse transform  x1 = Re(out_ft @ conj(V)):  rows of o2 are (m, re/im)
        # mode-major, matching v_inv, so the whole contraction is one K=2M matmul.
        o2 = o_both.reshape(m2, w * bt)                                      # (2M, W*bt)
        x1 = jnp.dot(o2.T, v_inv, preferred_element_type=f32)                # (W*bt, S)
        x1 = x1.reshape(w, bts)                                              # (W, bt*S)

        # 1x1-conv skip path, batch folded into matmul columns
        x2 = jnp.dot(cw, h, preferred_element_type=f32) + cb                 # (W, bt*S)

        h = x1 + x2
        if li < n_layers - 1:
            h = _gelu_exact(h)

    # ---- projection head fc1 -> exact GELU -> fc2 (the 128-wide intermediate never
    #      leaves the kernel) ----
    h1 = _gelu_exact(jnp.dot(w1t_ref[...], h, preferred_element_type=f32)
                     + b1_ref[...])                                          # (128, bt*S)
    y = jnp.dot(w2t_ref[...], h1, preferred_element_type=f32) + b2_ref[...]  # (Co, bt*S)

    if co == 1:
        # (1, bt, S) -> (bt, 1, S) is order-preserving: pure reshape, no transpose.
        o_ref[...] = y.reshape(bt, co, s).astype(o_ref.dtype)
    else:
        y3 = y.reshape(co, bt, s)
        o_ref[...] = jnp.stack([y3[c] for c in range(co)], axis=1).astype(o_ref.dtype)


# ----------------------------------------------------------------------------
# Wrapper: one pallas_call for the whole network, grid over batch tiles.
# ----------------------------------------------------------------------------
def vno1d_forward(x, kp, bt=None):
    B, Cin, S = x.shape
    if bt is None:
        # >=2 grid steps keeps both v7x TensorCores busy; on v5e/v6e (single TC) prefer
        # bt=B (one big step, no per-step pipeline overhead).
        bt = max(1, B // 2)
    assert B % bt == 0
    W = kp["w0x"].shape[0]
    M2 = kp["v_fwd"].shape[0]
    Co = kp["w2t"].shape[0]
    H1 = kp["w1t"].shape[0]
    nL = kp["w_mix"].shape[0]

    grid_t = jnp.tile(kp["grid_row"], (1, bt))                               # (1, bt*S)

    flops = int(
        2 * B * S * (Cin * W + nL * (M2 * W + M2 * W + W * W) + W * H1 + H1 * Co)
        + 2 * nL * B * M2 * W * 2 * W)
    transcendentals = int(B * S * ((nL - 1) * W + H1))
    bytes_accessed = int(4 * (x.size + B * Co * S
                              + kp["v_fwd"].size + kp["v_inv"].size
                              + kp["w_mix"].size + kp["cw"].size + kp["cb"].size
                              + kp["w0x"].size + kp["w1t"].size + kp["w2t"].size))

    def full(shape):
        return pl.BlockSpec(shape, lambda i, _n=len(shape): (0,) * _n)

    return pl.pallas_call(
        vno1d_fused_kernel,
        out_shape=jax.ShapeDtypeStruct((B, Co, S), jnp.float32),
        grid=(B // bt,),
        in_specs=[
            pl.BlockSpec((bt, Cin, S), lambda i: (i, 0, 0)),   # x (batch-tiled)
            full((1, bt * S)),                                 # grid row, tiled over bt
            full((W, Cin)),                                    # w0x
            full((W, 1)),                                      # w0g
            full((W, 1)),                                      # b0
            full((M2, S)),                                     # v_fwd  [vre; vim]
            full((M2, S)),                                     # v_inv  interleaved
            full((nL, M2 // 2, 2 * W, 2 * W)),                 # stacked complex mix
            full((nL, W, W)),                                  # 1x1 conv weights
            full((nL, W, 1)),                                  # 1x1 conv biases
            full((H1, W)),                                     # fc1^T
            full((H1, 1)),                                     # fc1 bias
            full((Co, H1)),                                    # fc2^T
            full((Co, 1)),                                     # fc2 bias
        ],
        out_specs=pl.BlockSpec((bt, Co, S), lambda i: (i, 0, 0)),
        compiler_params=pltpu.CompilerParams(dimension_semantics=("parallel",)),
        cost_estimate=pl.CostEstimate(flops=flops, transcendentals=transcendentals,
                                      bytes_accessed=bytes_accessed),
    )(x, grid_t, kp["w0x"], kp["w0g"], kp["b0"], kp["v_fwd"], kp["v_inv"],
      kp["w_mix"], kp["cw"], kp["cb"], kp["w1t"], kp["b1"], kp["w2t"], kp["b2"])


# ----------------------------------------------------------------------------
# One-time host-side weight re-layout (kernel-ready, matmul-shaped operands).
# ----------------------------------------------------------------------------
def prepare_kernel_params(params, input_size):
    W = params["fc0_w"].shape[1]
    M = params["vre"].shape[0]
    vre, vim = params["vre"], params["vim"]                       # (M, S)
    kp = {
        "grid_row": params["grid"].reshape(1, -1),
        # forward-transform operand: [vre ; vim] part-major            -> (2M, S)
        "v_fwd": jnp.concatenate([vre, vim], axis=0),
        # inverse-transform operand: (m, re/im) interleaved mode-major -> (2M, S)
        "v_inv": jnp.stack([vre, vim], axis=1).reshape(2 * M, -1),
        "w0x": params["fc0_w"][:input_size, :].T,                 # (W, Cin)
        "w0g": params["fc0_w"][input_size, :].reshape(W, 1),      # grid channel of fc0
        "b0": params["fc0_b"].reshape(W, 1),
        "w1t": params["fc1_w"].T,                                  # (128, W)
        "b1": params["fc1_b"].reshape(-1, 1),
        "w2t": params["fc2_w"].T,                                  # (Co, 128)
        "b2": params["fc2_b"].reshape(-1, 1),
    }
    w_mix_l, cw_l, cb_l = [], [], []
    for p in params["layers"]:
        wr = jnp.transpose(p["wr"], (2, 1, 0))                    # (M, Wout, Win)
        wi = jnp.transpose(p["wi"], (2, 1, 0))
        a_re = jnp.concatenate([wr, -wi], axis=2)                  # Re rows, K = [xr | xi]
        a_im = jnp.concatenate([wi, wr], axis=2)                   # Im rows
        w_mix = jnp.concatenate([a_re[:, None], a_im[:, None]], axis=1)
        w_mix_l.append(w_mix.reshape(M, 2 * W, 2 * W))             # row = p*Wout + o
        cw_l.append(p["cw"])
        cb_l.append(p["cb"].reshape(-1, 1))
    kp["w_mix"] = jnp.stack(w_mix_l, axis=0)                       # (4, M, 2W, 2W)
    kp["cw"] = jnp.stack(cw_l, axis=0)                             # (4, W, W)
    kp["cb"] = jnp.stack(cb_l, axis=0)                             # (4, W, 1)
    return kp


# ----------------------------------------------------------------------------
# Pure-JAX reference (mirrors the PyTorch forward, complex math explicit)
# ----------------------------------------------------------------------------
def reference_forward(x, params):
    B, Cin, S = x.shape
    h = jnp.transpose(x, (0, 2, 1))
    grid = jnp.broadcast_to(params["grid"][None, :, None], (B, S, 1))
    h = jnp.concatenate([h, grid], axis=-1)
    h = h @ params["fc0_w"] + params["fc0_b"]
    h = h.transpose(0, 2, 1)

    V = (params["vre"] + 1j * params["vim"]).astype(jnp.complex64)   # (M, S)
    Vt = V.T                                                         # (S, M)
    Vc = jnp.conj(V)                                                 # (M, S)
    for li in range(4):
        p = params["layers"][li]
        w = (p["wr"] + 1j * p["wi"]).astype(jnp.complex64)
        xft = h.astype(jnp.complex64) @ Vt                           # (B, W, M)
        out_ft = jnp.einsum("bix,iox->box", xft, w)                  # (B, W, M)
        x1 = jnp.real(out_ft @ Vc)                                   # (B, W, S)
        x2 = jnp.einsum("oi,bis->bos", p["cw"], h) + p["cb"][None, :, None]
        h = x1 + x2
        if li < 3:
            h = jax.nn.gelu(h, approximate=False)

    h = h.transpose(0, 2, 1)
    h = jax.nn.gelu(h @ params["fc1_w"] + params["fc1_b"], approximate=False)
    y = h @ params["fc2_w"] + params["fc2_b"]
    return y.transpose(0, 2, 1)


# ----------------------------------------------------------------------------
# Deterministic synthetic parameter init (shapes from VNO1d.__init__).
# Note: the PyTorch vft1d references self.positions which is never set; the
# Vandermonde nodes are interpreted here as the linspace grid over `domain`
# (consistent between the kernel path and the reference).
# ----------------------------------------------------------------------------
def init_params(key, input_size, width, modes, S, output_size, domain):
    ks = jax.random.split(key, 24)
    pos = jnp.linspace(domain[0], domain[1], S).astype(jnp.float32)
    m = jnp.arange(modes, dtype=jnp.float32)
    ang = m[:, None] * pos[None, :]                                   # (M, S)
    sc = 1.0 / jnp.sqrt(jnp.float32(S))
    params = {
        "grid": pos,
        "vre": jnp.cos(ang) * sc,                                     # V = exp(-1j*m*pos)/sqrt(S)
        "vim": -jnp.sin(ang) * sc,
        "fc0_w": 0.1 * jax.random.normal(ks[0], (input_size + 1, width), jnp.float32),
        "fc0_b": 0.1 * jax.random.normal(ks[1], (width,), jnp.float32),
        "fc1_w": 0.1 * jax.random.normal(ks[2], (width, 128), jnp.float32),
        "fc1_b": 0.1 * jax.random.normal(ks[3], (128,), jnp.float32),
        "fc2_w": 0.1 * jax.random.normal(ks[4], (128, output_size), jnp.float32),
        "fc2_b": 0.1 * jax.random.normal(ks[5], (output_size,), jnp.float32),
        "layers": [],
    }
    wscale = 1.0 / (width * width)
    for l in range(4):
        base = 6 + 4 * l
        params["layers"].append({
            "wr": wscale * jax.random.uniform(ks[base + 0], (width, width, modes), jnp.float32),
            "wi": wscale * jax.random.uniform(ks[base + 1], (width, width, modes), jnp.float32),
            "cw": 0.1 * jax.random.normal(ks[base + 2], (width, width), jnp.float32),
            "cb": 0.1 * jax.random.normal(ks[base + 3], (width,), jnp.float32),
        })
    return params


if __name__ == "__main__":
    B, input_size, S = 2, 2, 16
    modes, width, output_size = 8, 32, 1
    domain = (0.0, 1.0)

    key = jax.random.PRNGKey(0)
    kx, kparam = jax.random.split(key)
    params = init_params(kparam, input_size, width, modes, S, output_size, domain)
    kparams = prepare_kernel_params(params, input_size)
    x = jax.random.normal(kx, (B, input_size, S), dtype=jnp.float32)

    # bt=1 -> 2 "parallel" grid steps (both v7x TensorCores busy); use bt=B on v5e/v6e.
    fwd = jax.jit(functools.partial(vno1d_forward, bt=1))
    out = jax.block_until_ready(fwd(x, kparams))
    assert out.shape == (B, output_size, S), out.shape

    ref = reference_forward(x, params)
    err = float(jnp.max(jnp.abs(out - ref)))
    assert err < 1e-3, f"mismatch vs reference: {err}"

    print("KERNEL_OK")
</pallas_src>

<mosaic_0001>
module attributes {stable_mosaic.version = 11 : i64} {
  func.func @vno1d_fused_kernel(%arg0: i32, %arg1: memref<1x2x16xf32, #tpu.memory_space<vmem>>, %arg2: memref<1x16xf32, #tpu.memory_space<vmem>>, %arg3: memref<32x2xf32, #tpu.memory_space<vmem>>, %arg4: memref<32x1xf32, #tpu.memory_space<vmem>>, %arg5: memref<32x1xf32, #tpu.memory_space<vmem>>, %arg6: memref<16x16xf32, #tpu.memory_space<vmem>>, %arg7: memref<16x16xf32, #tpu.memory_space<vmem>>, %arg8: memref<4x8x64x64xf32, #tpu.memory_space<vmem>>, %arg9: memref<4x32x32xf32, #tpu.memory_space<vmem>>, %arg10: memref<4x32x1xf32, #tpu.memory_space<vmem>>, %arg11: memref<128x32xf32, #tpu.memory_space<vmem>>, %arg12: memref<128x1xf32, #tpu.memory_space<vmem>>, %arg13: memref<1x128xf32, #tpu.memory_space<vmem>>, %arg14: memref<1x1xf32, #tpu.memory_space<vmem>>, %arg15: memref<1x1x16xf32, #tpu.memory_space<vmem>>) attributes {dimension_semantics = [#tpu.dimension_semantics<parallel>], iteration_bounds = array<i64: 2>, scalar_prefetch = 0 : i64, scratch_operands = 0 : i64, tpu.core_type = #tpu.core_type<tc>, window_params = [{transform_indices = @transform_0, window_bounds = array<i64: 1, 2, 16>}, {pipeline_mode = #tpu.pipeline_mode<synchronous>, transform_indices = @transform_1, window_bounds = array<i64: 1, 16>}, {pipeline_mode = #tpu.pipeline_mode<synchronous>, transform_indices = @transform_2, window_bounds = array<i64: 32, 2>}, {pipeline_mode = #tpu.pipeline_mode<synchronous>, transform_indices = @transform_3, window_bounds = array<i64: 32, 1>}, {pipeline_mode = #tpu.pipeline_mode<synchronous>, transform_indices = @transform_4, window_bounds = array<i64: 32, 1>}, {pipeline_mode = #tpu.pipeline_mode<synchronous>, transform_indices = @transform_5, window_bounds = array<i64: 16, 16>}, {pipeline_mode = #tpu.pipeline_mode<synchronous>, transform_indices = @transform_6, window_bounds = array<i64: 16, 16>}, {pipeline_mode = #tpu.pipeline_mode<synchronous>, transform_indices = @transform_7, window_bounds = array<i64: 4, 8, 64, 64>}, {pipeline_mode = #tpu.pipeline_mode<synchronous>, transform_indices = @transform_8, window_bounds = array<i64: 4, 32, 32>}, {pipeline_mode = #tpu.pipeline_mode<synchronous>, transform_indices = @transform_9, window_bounds = array<i64: 4, 32, 1>}, {pipeline_mode = #tpu.pipeline_mode<synchronous>, transform_indices = @transform_10, window_bounds = array<i64: 128, 32>}, {pipeline_mode = #tpu.pipeline_mode<synchronous>, transform_indices = @transform_11, window_bounds = array<i64: 128, 1>}, {pipeline_mode = #tpu.pipeline_mode<synchronous>, transform_indices = @transform_12, window_bounds = array<i64: 1, 128>}, {pipeline_mode = #tpu.pipeline_mode<synchronous>, transform_indices = @transform_13, window_bounds = array<i64: 1, 1>}, {transform_indices = @transform_14, window_bounds = array<i64: 1, 1, 16>}]} {
    %c0 = arith.constant 0 : index
    %c0_0 = arith.constant 0 : index
    %c0_1 = arith.constant 0 : index
    %0 = vector.load %arg1[%c0, %c0_0, %c0_1] : memref<1x2x16xf32, #tpu.memory_space<vmem>>, vector<1x1x16xf32>
    %1 = vector.shape_cast %0 : vector<1x1x16xf32> to vector<1x16xf32>
    %c0_2 = arith.constant 0 : index
    %c1 = arith.constant 1 : index
    %c0_3 = arith.constant 0 : index
    %2 = vector.load %arg1[%c0_2, %c1, %c0_3] : memref<1x2x16xf32, #tpu.memory_space<vmem>>, vector<1x1x16xf32>
    %3 = vector.shape_cast %2 : vector<1x1x16xf32> to vector<1x16xf32>
    %4 = tpu.concatenate %1, %3 in 0 : vector<1x16xf32>, vector<1x16xf32> -> vector<2x16xf32>
    %c0_4 = arith.constant 0 : index
    %c0_5 = arith.constant 0 : index
    %5 = vector.load %arg3[%c0_4, %c0_5] : memref<32x2xf32, #tpu.memory_space<vmem>>, vector<32x2xf32>
    %cst = arith.constant dense<0.000000e+00> : vector<32x16xf32>
    %6 = tpu.matmul %5, %4, %cst {dimension_numbers = #tpu.dot_dimension_numbers<[1], [0], [0], [1], [0, 0, 1, 1], [], []>} : vector<32x2xf32>, vector<2x16xf32>, vector<32x16xf32> -> vector<32x16xf32>
    %c0_6 = arith.constant 0 : index
    %c0_7 = arith.constant 0 : index
    %7 = vector.load %arg4[%c0_6, %c0_7] : memref<32x1xf32, #tpu.memory_space<vmem>>, vector<32x1xf32>
    %c0_8 = arith.constant 0 : index
    %c0_9 = arith.constant 0 : index
    %8 = vector.load %arg2[%c0_8, %c0_9] : memref<1x16xf32, #tpu.memory_space<vmem>>, vector<1x16xf32>
    %9 = vector.broadcast %7 : vector<32x1xf32> to vector<32x16xf32>
    %10 = vector.broadcast %8 : vector<1x16xf32> to vector<32x16xf32>
    %11 = arith.mulf %9, %10 : vector<32x16xf32>
    %12 = arith.addf %6, %11 : vector<32x16xf32>
    %c0_10 = arith.constant 0 : index
    %c0_11 = arith.constant 0 : index
    %13 = vector.load %arg5[%c0_10, %c0_11] : memref<32x1xf32, #tpu.memory_space<vmem>>, vector<32x1xf32>
    %14 = vector.broadcast %13 : vector<32x1xf32> to vector<32x16xf32>
    %15 = arith.addf %12, %14 : vector<32x16xf32>
    %c0_12 = arith.constant 0 : index
    %c0_13 = arith.constant 0 : index
    %16 = vector.load %arg6[%c0_12, %c0_13] : memref<16x16xf32, #tpu.memory_space<vmem>>, vector<16x16xf32>
    %c0_14 = arith.constant 0 : index
    %c0_15 = arith.constant 0 : index
    %17 = vector.load %arg7[%c0_14, %c0_15] : memref<16x16xf32, #tpu.memory_space<vmem>>, vector<16x16xf32>
    %c0_16 = arith.constant 0 : index
    %c0_17 = arith.constant 0 : index
    %c0_18 = arith.constant 0 : index
    %c0_19 = arith.constant 0 : index
    %18 = vector.load %arg8[%c0_16, %c0_17, %c0_18, %c0_19] : memref<4x8x64x64xf32, #tpu.memory_space<vmem>>, vector<1x8x64x64xf32>
    %19 = vector.shape_cast %18 : vector<1x8x64x64xf32> to vector<8x64x64xf32>
    %c0_20 = arith.constant 0 : index
    %c0_21 = arith.constant 0 : index
    %c0_22 = arith.constant 0 : index
    %20 = vector.load %arg9[%c0_20, %c0_21, %c0_22] : memref<4x32x32xf32, #tpu.memory_space<vmem>>, vector<1x32x32xf32>
    %21 = vector.shape_cast %20 : vector<1x32x32xf32> to vector<32x32xf32>
    %c0_23 = arith.constant 0 : index
    %c0_24 = arith.constant 0 : index
    %c0_25 = arith.constant 0 : index
    %22 = vector.load %arg10[%c0_23, %c0_24, %c0_25] : memref<4x32x1xf32, #tpu.memory_space<vmem>>, vector<1x32x1xf32>
    %23 = vector.shape_cast %22 : vector<1x32x1xf32> to vector<32x1xf32>
    %cst_26 = arith.constant dense<0.000000e+00> : vector<16x32xf32>
    %24 = tpu.matmul %16, %15, %cst_26 {dimension_numbers = #tpu.dot_dimension_numbers<[1], [1], [0], [0], [0, 0, 1, 0], [], []>} : vector<16x16xf32>, vector<32x16xf32>, vector<16x32xf32> -> vector<16x32xf32>
    %25 = vector.extract_strided_slice %24 {offsets = [0, 0], sizes = [8, 32], strides = [1, 1]} : vector<16x32xf32> to vector<8x32xf32>
    %26 = vector.shape_cast %25 : vector<8x32xf32> to vector<8x32x1xf32>
    %27 = vector.extract_strided_slice %24 {offsets = [8, 0], sizes = [8, 32], strides = [1, 1]} : vector<16x32xf32> to vector<8x32xf32>
    %28 = vector.shape_cast %27 : vector<8x32xf32> to vector<8x32x1xf32>
    %29 = tpu.concatenate %26, %28 in 1 : vector<8x32x1xf32>, vector<8x32x1xf32> -> vector<8x64x1xf32>
    %cst_27 = arith.constant dense<0.000000e+00> : vector<8x64x1xf32>
    %30 = tpu.matmul %19, %29, %cst_27 {dimension_numbers = #tpu.dot_dimension_numbers<[2], [1], [1], [2], [0, 0, 0, 1, 1, 2], [0], [0]>} : vector<8x64x64xf32>, vector<8x64x1xf32>, vector<8x64x1xf32> -> vector<8x64x1xf32>
    %31 = vector.shape_cast %30 : vector<8x64x1xf32> to vector<16x32xf32>
    %32 = tpu.transpose %31, [1, 0] : vector<16x32xf32> -> vector<32x16xf32>
    %cst_28 = arith.constant dense<0.000000e+00> : vector<32x16xf32>
    %33 = tpu.matmul %32, %17, %cst_28 {dimension_numbers = #tpu.dot_dimension_numbers<[1], [0], [0], [1], [0, 0, 1, 1], [], []>} : vector<32x16xf32>, vector<16x16xf32>, vector<32x16xf32> -> vector<32x16xf32>
    %cst_29 = arith.constant dense<0.000000e+00> : vector<32x16xf32>
    %34 = tpu.matmul %21, %15, %cst_29 {dimension_numbers = #tpu.dot_dimension_numbers<[1], [0], [0], [1], [0, 0, 1, 1], [], []>} : vector<32x32xf32>, vector<32x16xf32>, vector<32x16xf32> -> vector<32x16xf32>
    %35 = vector.broadcast %23 : vector<32x1xf32> to vector<32x16xf32>
    %36 = arith.addf %34, %35 : vector<32x16xf32>
    %37 = arith.addf %33, %36 : vector<32x16xf32>
    %cst_30 = arith.constant 5.000000e-01 : f32
    %38 = vector.broadcast %cst_30 : f32 to vector<32x16xf32>
    %39 = arith.mulf %38, %37 : vector<32x16xf32>
    %cst_31 = arith.constant 0.707106769 : f32
    %40 = vector.broadcast %cst_31 : f32 to vector<32x16xf32>
    %41 = arith.mulf %37, %40 : vector<32x16xf32>
    %42 = math.erf %41 : vector<32x16xf32>
    %cst_32 = arith.constant 1.000000e+00 : f32
    %43 = vector.broadcast %cst_32 : f32 to vector<32x16xf32>
    %44 = arith.addf %43, %42 : vector<32x16xf32>
    %45 = arith.mulf %39, %44 : vector<32x16xf32>
    %c1_33 = arith.constant 1 : index
    %c0_34 = arith.constant 0 : index
    %c0_35 = arith.constant 0 : index
    %c0_36 = arith.constant 0 : index
    %46 = vector.load %arg8[%c1_33, %c0_34, %c0_35, %c0_36] : memref<4x8x64x64xf32, #tpu.memory_space<vmem>>, vector<1x8x64x64xf32>
    %47 = vector.shape_cast %46 : vector<1x8x64x64xf32> to vector<8x64x64xf32>
    %c1_37 = arith.constant 1 : index
    %c0_38 = arith.constant 0 : index
    %c0_39 = arith.constant 0 : index
    %48 = vector.load %arg9[%c1_37, %c0_38, %c0_39] : memref<4x32x32xf32, #tpu.memory_space<vmem>>, vector<1x32x32xf32>
    %49 = vector.shape_cast %48 : vector<1x32x32xf32> to vector<32x32xf32>
    %c1_40 = arith.constant 1 : index
    %c0_41 = arith.constant 0 : index
    %c0_42 = arith.constant 0 : index
    %50 = vector.load %arg10[%c1_40, %c0_41, %c0_42] : memref<4x32x1xf32, #tpu.memory_space<vmem>>, vector<1x32x1xf32>
    %51 = vector.shape_cast %50 : vector<1x32x1xf32> to vector<32x1xf32>
    %cst_43 = arith.constant dense<0.000000e+00> : vector<16x32xf32>
    %52 = tpu.matmul %16, %45, %cst_43 {dimension_numbers = #tpu.dot_dimension_numbers<[1], [1], [0], [0], [0, 0, 1, 0], [], []>} : vector<16x16xf32>, vector<32x16xf32>, vector<16x32xf32> -> vector<16x32xf32>
    %53 = vector.extract_strided_slice %52 {offsets = [0, 0], sizes = [8, 32], strides = [1, 1]} : vector<16x32xf32> to vector<8x32xf32>
    %54 = vector.shape_cast %53 : vector<8x32xf32> to vector<8x32x1xf32>
    %55 = vector.extract_strided_slice %52 {offsets = [8, 0], sizes = [8, 32], strides = [1, 1]} : vector<16x32xf32> to vector<8x32xf32>
    %56 = vector.shape_cast %55 : vector<8x32xf32> to vector<8x32x1xf32>
    %57 = tpu.concatenate %54, %56 in 1 : vector<8x32x1xf32>, vector<8x32x1xf32> -> vector<8x64x1xf32>
    %cst_44 = arith.constant dense<0.000000e+00> : vector<8x64x1xf32>
    %58 = tpu.matmul %47, %57, %cst_44 {dimension_numbers = #tpu.dot_dimension_numbers<[2], [1], [1], [2], [0, 0, 0, 1, 1, 2], [0], [0]>} : vector<8x64x64xf32>, vector<8x64x1xf32>, vector<8x64x1xf32> -> vector<8x64x1xf32>
    %59 = vector.shape_cast %58 : vector<8x64x1xf32> to vector<16x32xf32>
    %60 = tpu.transpose %59, [1, 0] : vector<16x32xf32> -> vector<32x16xf32>
    %cst_45 = arith.constant dense<0.000000e+00> : vector<32x16xf32>
    %61 = tpu.matmul %60, %17, %cst_45 {dimension_numbers = #tpu.dot_dimension_numbers<[1], [0], [0], [1], [0, 0, 1, 1], [], []>} : vector<32x16xf32>, vector<16x16xf32>, vector<32x16xf32> -> vector<32x16xf32>
    %cst_46 = arith.constant dense<0.000000e+00> : vector<32x16xf32>
    %62 = tpu.matmul %49, %45, %cst_46 {dimension_numbers = #tpu.dot_dimension_numbers<[1], [0], [0], [1], [0, 0, 1, 1], [], []>} : vector<32x32xf32>, vector<32x16xf32>, vector<32x16xf32> -> vector<32x16xf32>
    %63 = vector.broadcast %51 : vector<32x1xf32> to vector<32x16xf32>
    %64 = arith.addf %62, %63 : vector<32x16xf32>
    %65 = arith.addf %61, %64 : vector<32x16xf32>
    %cst_47 = arith.constant 5.000000e-01 : f32
    %66 = vector.broadcast %cst_47 : f32 to vector<32x16xf32>
    %67 = arith.mulf %66, %65 : vector<32x16xf32>
    %cst_48 = arith.constant 0.707106769 : f32
    %68 = vector.broadcast %cst_48 : f32 to vector<32x16xf32>
    %69 = arith.mulf %65, %68 : vector<32x16xf32>
    %70 = math.erf %69 : vector<32x16xf32>
    %cst_49 = arith.constant 1.000000e+00 : f32
    %71 = vector.broadcast %cst_49 : f32 to vector<32x16xf32>
    %72 = arith.addf %71, %70 : vector<32x16xf32>
    %73 = arith.mulf %67, %72 : vector<32x16xf32>
    %c2 = arith.constant 2 : index
    %c0_50 = arith.constant 0 : index
    %c0_51 = arith.constant 0 : index
    %c0_52 = arith.constant 0 : index
    %74 = vector.load %arg8[%c2, %c0_50, %c0_51, %c0_52] : memref<4x8x64x64xf32, #tpu.memory_space<vmem>>, vector<1x8x64x64xf32>
    %75 = vector.shape_cast %74 : vector<1x8x64x64xf32> to vector<8x64x64xf32>
    %c2_53 = arith.constant 2 : index
    %c0_54 = arith.constant 0 : index
    %c0_55 = arith.constant 0 : index
    %76 = vector.load %arg9[%c2_53, %c0_54, %c0_55] : memref<4x32x32xf32, #tpu.memory_space<vmem>>, vector<1x32x32xf32>
    %77 = vector.shape_cast %76 : vector<1x32x32xf32> to vector<32x32xf32>
    %c2_56 = arith.constant 2 : index
    %c0_57 = arith.constant 0 : index
    %c0_58 = arith.constant 0 : index
    %78 = vector.load %arg10[%c2_56, %c0_57, %c0_58] : memref<4x32x1xf32, #tpu.memory_space<vmem>>, vector<1x32x1xf32>
    %79 = vector.shape_cast %78 : vector<1x32x1xf32> to vector<32x1xf32>
    %cst_59 = arith.constant dense<0.000000e+00> : vector<16x32xf32>
    %80 = tpu.matmul %16, %73, %cst_59 {dimension_numbers = #tpu.dot_dimension_numbers<[1], [1], [0], [0], [0, 0, 1, 0], [], []>} : vector<16x16xf32>, vector<32x16xf32>, vector<16x32xf32> -> vector<16x32xf32>
    %81 = vector.extract_strided_slice %80 {offsets = [0, 0], sizes = [8, 32], strides = [1, 1]} : vector<16x32xf32> to vector<8x32xf32>
    %82 = vector.shape_cast %81 : vector<8x32xf32> to vector<8x32x1xf32>
    %83 = vector.extract_strided_slice %80 {offsets = [8, 0], sizes = [8, 32], strides = [1, 1]} : vector<16x32xf32> to vector<8x32xf32>
    %84 = vector.shape_cast %83 : vector<8x32xf32> to vector<8x32x1xf32>
    %85 = tpu.concatenate %82, %84 in 1 : vector<8x32x1xf32>, vector<8x32x1xf32> -> vector<8x64x1xf32>
    %cst_60 = arith.constant dense<0.000000e+00> : vector<8x64x1xf32>
    %86 = tpu.matmul %75, %85, %cst_60 {dimension_numbers = #tpu.dot_dimension_numbers<[2], [1], [1], [2], [0, 0, 0, 1, 1, 2], [0], [0]>} : vector<8x64x64xf32>, vector<8x64x1xf32>, vector<8x64x1xf32> -> vector<8x64x1xf32>
    %87 = vector.shape_cast %86 : vector<8x64x1xf32> to vector<16x32xf32>
    %88 = tpu.transpose %87, [1, 0] : vector<16x32xf32> -> vector<32x16xf32>
    %cst_61 = arith.constant dense<0.000000e+00> : vector<32x16xf32>
    %89 = tpu.matmul %88, %17, %cst_61 {dimension_numbers = #tpu.dot_dimension_numbers<[1], [0], [0], [1], [0, 0, 1, 1], [], []>} : vector<32x16xf32>, vector<16x16xf32>, vector<32x16xf32> -> vector<32x16xf32>
    %cst_62 = arith.constant dense<0.000000e+00> : vector<32x16xf32>
    %90 = tpu.matmul %77, %73, %cst_62 {dimension_numbers = #tpu.dot_dimension_numbers<[1], [0], [0], [1], [0, 0, 1, 1], [], []>} : vector<32x32xf32>, vector<32x16xf32>, vector<32x16xf32> -> vector<32x16xf32>
    %91 = vector.broadcast %79 : vector<32x1xf32> to vector<32x16xf32>
    %92 = arith.addf %90, %91 : vector<32x16xf32>
    %93 = arith.addf %89, %92 : vector<32x16xf32>
    %cst_63 = arith.constant 5.000000e-01 : f32
    %94 = vector.broadcast %cst_63 : f32 to vector<32x16xf32>
    %95 = arith.mulf %94, %93 : vector<32x16xf32>
    %cst_64 = arith.constant 0.707106769 : f32
    %96 = vector.broadcast %cst_64 : f32 to vector<32x16xf32>
    %97 = arith.mulf %93, %96 : vector<32x16xf32>
    %98 = math.erf %97 : vector<32x16xf32>
    %cst_65 = arith.constant 1.000000e+00 : f32
    %99 = vector.broadcast %cst_65 : f32 to vector<32x16xf32>
    %100 = arith.addf %99, %98 : vector<32x16xf32>
    %101 = arith.mulf %95, %100 : vector<32x16xf32>
    %c3 = arith.constant 3 : index
    %c0_66 = arith.constant 0 : index
    %c0_67 = arith.constant 0 : index
    %c0_68 = arith.constant 0 : index
    %102 = vector.load %arg8[%c3, %c0_66, %c0_67, %c0_68] : memref<4x8x64x64xf32, #tpu.memory_space<vmem>>, vector<1x8x64x64xf32>
    %103 = vector.shape_cast %102 : vector<1x8x64x64xf32> to vector<8x64x64xf32>
    %c3_69 = arith.constant 3 : index
    %c0_70 = arith.constant 0 : index
    %c0_71 = arith.constant 0 : index
    %104 = vector.load %arg9[%c3_69, %c0_70, %c0_71] : memref<4x32x32xf32, #tpu.memory_space<vmem>>, vector<1x32x32xf32>
    %105 = vector.shape_cast %104 : vector<1x32x32xf32> to vector<32x32xf32>
    %c3_72 = arith.constant 3 : index
    %c0_73 = arith.constant 0 : index
    %c0_74 = arith.constant 0 : index
    %106 = vector.load %arg10[%c3_72, %c0_73, %c0_74] : memref<4x32x1xf32, #tpu.memory_space<vmem>>, vector<1x32x1xf32>
    %107 = vector.shape_cast %106 : vector<1x32x1xf32> to vector<32x1xf32>
    %cst_75 = arith.constant dense<0.000000e+00> : vector<16x32xf32>
    %108 = tpu.matmul %16, %101, %cst_75 {dimension_numbers = #tpu.dot_dimension_numbers<[1], [1], [0], [0], [0, 0, 1, 0], [], []>} : vector<16x16xf32>, vector<32x16xf32>, vector<16x32xf32> -> vector<16x32xf32>
    %109 = vector.extract_strided_slice %108 {offsets = [0, 0], sizes = [8, 32], strides = [1, 1]} : vector<16x32xf32> to vector<8x32xf32>
    %110 = vector.shape_cast %109 : vector<8x32xf32> to vector<8x32x1xf32>
    %111 = vector.extract_strided_slice %108 {offsets = [8, 0], sizes = [8, 32], strides = [1, 1]} : vector<16x32xf32> to vector<8x32xf32>
    %112 = vector.shape_cast %111 : vector<8x32xf32> to vector<8x32x1xf32>
    %113 = tpu.concatenate %110, %112 in 1 : vector<8x32x1xf32>, vector<8x32x1xf32> -> vector<8x64x1xf32>
    %cst_76 = arith.constant dense<0.000000e+00> : vector<8x64x1xf32>
    %114 = tpu.matmul %103, %113, %cst_76 {dimension_numbers = #tpu.dot_dimension_numbers<[2], [1], [1], [2], [0, 0, 0, 1, 1, 2], [0], [0]>} : vector<8x64x64xf32>, vector<8x64x1xf32>, vector<8x64x1xf32> -> vector<8x64x1xf32>
    %115 = vector.shape_cast %114 : vector<8x64x1xf32> to vector<16x32xf32>
    %116 = tpu.transpose %115, [1, 0] : vector<16x32xf32> -> vector<32x16xf32>
    %cst_77 = arith.constant dense<0.000000e+00> : vector<32x16xf32>
    %117 = tpu.matmul %116, %17, %cst_77 {dimension_numbers = #tpu.dot_dimension_numbers<[1], [0], [0], [1], [0, 0, 1, 1], [], []>} : vector<32x16xf32>, vector<16x16xf32>, vector<32x16xf32> -> vector<32x16xf32>
    %cst_78 = arith.constant dense<0.000000e+00> : vector<32x16xf32>
    %118 = tpu.matmul %105, %101, %cst_78 {dimension_numbers = #tpu.dot_dimension_numbers<[1], [0], [0], [1], [0, 0, 1, 1], [], []>} : vector<32x32xf32>, vector<32x16xf32>, vector<32x16xf32> -> vector<32x16xf32>
    %119 = vector.broadcast %107 : vector<32x1xf32> to vector<32x16xf32>
    %120 = arith.addf %118, %119 : vector<32x16xf32>
    %121 = arith.addf %117, %120 : vector<32x16xf32>
    %c0_79 = arith.constant 0 : index
    %c0_80 = arith.constant 0 : index
    %122 = vector.load %arg11[%c0_79, %c0_80] : memref<128x32xf32, #tpu.memory_space<vmem>>, vector<128x32xf32>
    %cst_81 = arith.constant dense<0.000000e+00> : vector<128x16xf32>
    %123 = tpu.matmul %122, %121, %cst_81 {dimension_numbers = #tpu.dot_dimension_numbers<[1], [0], [0], [1], [0, 0, 1, 1], [], []>} : vector<128x32xf32>, vector<32x16xf32>, vector<128x16xf32> -> vector<128x16xf32>
    %c0_82 = arith.constant 0 : index
    %c0_83 = arith.constant 0 : index
    %124 = vector.load %arg12[%c0_82, %c0_83] : memref<128x1xf32, #tpu.memory_space<vmem>>, vector<128x1xf32>
    %125 = vector.broadcast %124 : vector<128x1xf32> to vector<128x16xf32>
    %126 = arith.addf %123, %125 : vector<128x16xf32>
    %cst_84 = arith.constant 5.000000e-01 : f32
    %127 = vector.broadcast %cst_84 : f32 to vector<128x16xf32>
    %128 = arith.mulf %127, %126 : vector<128x16xf32>
    %cst_85 = arith.constant 0.707106769 : f32
    %129 = vector.broadcast %cst_85 : f32 to vector<128x16xf32>
    %130 = arith.mulf %126, %129 : vector<128x16xf32>
    %131 = math.erf %130 : vector<128x16xf32>
    %cst_86 = arith.constant 1.000000e+00 : f32
    %132 = vector.broadcast %cst_86 : f32 to vector<128x16xf32>
    %133 = arith.addf %132, %131 : vector<128x16xf32>
    %134 = arith.mulf %128, %133 : vector<128x16xf32>
    %c0_87 = arith.constant 0 : index
    %c0_88 = arith.constant 0 : index
    %135 = vector.load %arg13[%c0_87, %c0_88] : memref<1x128xf32, #tpu.memory_space<vmem>>, vector<1x128xf32>
    %cst_89 = arith.constant dense<0.000000e+00> : vector<1x16xf32>
    %136 = tpu.matmul %135, %134, %cst_89 {dimension_numbers = #tpu.dot_dimension_numbers<[1], [0], [0], [1], [0, 0, 1, 1], [], []>} : vector<1x128xf32>, vector<128x16xf32>, vector<1x16xf32> -> vector<1x16xf32>
    %c0_90 = arith.constant 0 : index
    %c0_91 = arith.constant 0 : index
    %137 = vector.load %arg14[%c0_90, %c0_91] : memref<1x1xf32, #tpu.memory_space<vmem>>, vector<1x1xf32>
    %138 = vector.broadcast %137 : vector<1x1xf32> to vector<1x16xf32>
    %139 = arith.addf %136, %138 : vector<1x16xf32>
    %140 = vector.shape_cast %139 : vector<1x16xf32> to vector<1x1x16xf32>
    %c0_92 = arith.constant 0 : index
    %c0_93 = arith.constant 0 : index
    %c0_94 = arith.constant 0 : index
    %141 = vector.load %arg15[%c0_92, %c0_93, %c0_94] : memref<1x1x16xf32, #tpu.memory_space<vmem>>, vector<1x1x16xf32>
    tpu.vector_store %arg15[%c0_92, %c0_93, %c0_94], %140 {strides = array<i32>} : memref<1x1x16xf32, #tpu.memory_space<vmem>>, vector<1x1x16xf32>,
    return
  }
  func.func @transform_0(%arg0: i32) -> (i32, i32, i32) {
    %c0_i32 = arith.constant 0 : i32
    %c0_i32_0 = arith.constant 0 : i32
    %c0_i32_1 = arith.constant 0 : i32
    return %arg0, %c0_i32, %c0_i32_0 : i32, i32, i32
  }
  func.func @transform_1(%arg0: i32) -> (i32, i32) {
    %c0_i32 = arith.constant 0 : i32
    %c0_i32_0 = arith.constant 0 : i32
    %c0_i32_1 = arith.constant 0 : i32
    return %c0_i32, %c0_i32_0 : i32, i32
  }
  func.func @transform_2(%arg0: i32) -> (i32, i32) {
    %c0_i32 = arith.constant 0 : i32
    %c0_i32_0 = arith.constant 0 : i32
    %c0_i32_1 = arith.constant 0 : i32
    return %c0_i32, %c0_i32_0 : i32, i32
  }
  func.func @transform_3(%arg0: i32) -> (i32, i32) {
    %c0_i32 = arith.constant 0 : i32
    %c0_i32_0 = arith.constant 0 : i32
    %c0_i32_1 = arith.constant 0 : i32
    return %c0_i32, %c0_i32_0 : i32, i32
  }
  func.func @transform_4(%arg0: i32) -> (i32, i32) {
    %c0_i32 = arith.constant 0 : i32
    %c0_i32_0 = arith.constant 0 : i32
    %c0_i32_1 = arith.constant 0 : i32
    return %c0_i32, %c0_i32_0 : i32, i32
  }
  func.func @transform_5(%arg0: i32) -> (i32, i32) {
    %c0_i32 = arith.constant 0 : i32
    %c0_i32_0 = arith.constant 0 : i32
    %c0_i32_1 = arith.constant 0 : i32
    return %c0_i32, %c0_i32_0 : i32, i32
  }
  func.func @transform_6(%arg0: i32) -> (i32, i32) {
    %c0_i32 = arith.constant 0 : i32
    %c0_i32_0 = arith.constant 0 : i32
    %c0_i32_1 = arith.constant 0 : i32
    return %c0_i32, %c0_i32_0 : i32, i32
  }
  func.func @transform_7(%arg0: i32) -> (i32, i32, i32, i32) {
    %c0_i32 = arith.constant 0 : i32
    %c0_i32_0 = arith.constant 0 : i32
    %c0_i32_1 = arith.constant 0 : i32
    %c0_i32_2 = arith.constant 0 : i32
    %c0_i32_3 = arith.constant 0 : i32
    return %c0_i32, %c0_i32_0, %c0_i32_1, %c0_i32_2 : i32, i32, i32, i32
  }
  func.func @transform_8(%arg0: i32) -> (i32, i32, i32) {
    %c0_i32 = arith.constant 0 : i32
    %c0_i32_0 = arith.constant 0 : i32
    %c0_i32_1 = arith.constant 0 : i32
    %c0_i32_2 = arith.constant 0 : i32
    return %c0_i32, %c0_i32_0, %c0_i32_1 : i32, i32, i32
  }
  func.func @transform_9(%arg0: i32) -> (i32, i32, i32) {
    %c0_i32 = arith.constant 0 : i32
    %c0_i32_0 = arith.constant 0 : i32
    %c0_i32_1 = arith.constant 0 : i32
    %c0_i32_2 = arith.constant 0 : i32
    return %c0_i32, %c0_i32_0, %c0_i32_1 : i32, i32, i32
  }
  func.func @transform_10(%arg0: i32) -> (i32, i32) {
    %c0_i32 = arith.constant 0 : i32
    %c0_i32_0 = arith.constant 0 : i32
    %c0_i32_1 = arith.constant 0 : i32
    return %c0_i32, %c0_i32_0 : i32, i32
  }
  func.func @transform_11(%arg0: i32) -> (i32, i32) {
    %c0_i32 = arith.constant 0 : i32
    %c0_i32_0 = arith.constant 0 : i32
    %c0_i32_1 = arith.constant 0 : i32
    return %c0_i32, %c0_i32_0 : i32, i32
  }
  func.func @transform_12(%arg0: i32) -> (i32, i32) {
    %c0_i32 = arith.constant 0 : i32
    %c0_i32_0 = arith.constant 0 : i32
    %c0_i32_1 = arith.constant 0 : i32
    return %c0_i32, %c0_i32_0 : i32, i32
  }
  func.func @transform_13(%arg0: i32) -> (i32, i32) {
    %c0_i32 = arith.constant 0 : i32
    %c0_i32_0 = arith.constant 0 : i32
    %c0_i32_1 = arith.constant 0 : i32
    return %c0_i32, %c0_i32_0 : i32, i32
  }
  func.func @transform_14(%arg0: i32) -> (i32, i32, i32) {
    %c0_i32 = arith.constant 0 : i32
    %c0_i32_0 = arith.constant 0 : i32
    %c0_i32_1 = arith.constant 0 : i32
    return %arg0, %c0_i32, %c0_i32_0 : i32, i32, i32
  }
}

</mosaic_0001>

<llo_original>
// kernel: vno1d_forward.1
$region0: #{vno1d_forward.1}
  #allocation0 [shape = 'u32[]', space=smem, size = 0x4, offset = 0x4, fixed_abs, tag = 'smem constant byte address 0x4 - core index']
  #allocation1 [shape = 'u32[144,128]{1,0:T(1,128)}', space=vmem, size = 0x12000, scoped, tag = 'internal scratch']
  #allocation2 [shape = 'f32[1,1]{1,0:T(1,128)S(1)}', space=vmem, size = 0x200, scoped, tag = 'scoped memory for vno1d_forward.1']
  %s0 = inlined_call_operand.vmem [shape: f32[2,2,16], index: 0, kind: input, shape index: {}]
  %s1 = inlined_call_operand.vmem [shape: f32[1,16], index: 1, kind: input, shape index: {}]
  %s2 = inlined_call_operand.vmem [shape: f32[32,2], index: 2, kind: input, shape index: {}]
  %s3 = inlined_call_operand.vmem [shape: f32[32,1], index: 3, kind: input, shape index: {}]
  %s4 = inlined_call_operand.vmem [shape: f32[32,1], index: 4, kind: input, shape index: {}]
  %s5 = inlined_call_operand.vmem [shape: f32[16,16], index: 5, kind: input, shape index: {}]
  %s6 = inlined_call_operand.vmem [shape: f32[16,16], index: 6, kind: input, shape index: {}]
  %s7 = inlined_call_operand.hbm [shape: f32[4,8,64,64], index: 7, kind: input, shape index: {}]
  %s8 = inlined_call_operand.vmem [shape: f32[4,32,32], index: 8, kind: input, shape index: {}]
  %s9 = inlined_call_operand.vmem [shape: f32[4,32,1], index: 9, kind: input, shape index: {}]
  %s10 = inlined_call_operand.vmem [shape: f32[128,32], index: 10, kind: input, shape index: {}]
  %s11 = inlined_call_operand.vmem [shape: f32[128,1], index: 11, kind: input, shape index: {}]
  %s12 = inlined_call_operand.vmem [shape: f32[1,128], index: 12, kind: input, shape index: {}]
  %s13 = inlined_call_operand.<no memory space> [shape: f32[1,1], index: 13, kind: input, shape index: {}]
  %s14 = inlined_call_operand.hbm [shape: f32[2,1,16], index: 14, kind: output, shape index: {}]
  %s15 = sld [smem:[#allocation0]]
  $region93: #{vno1d_forward.1} parent=0
    _
  %s17 = ssub.s32 1, %s15
  %s18 = scalar_select 0, %s17, %s15
  %v19 = vstv %s13
  %20 = vst [vmem:[#allocation2] sm:$0x1] %v19
  $region1: #{vno1d_forward.1} parent=0
    #allocation3 [shape = 'u8[1048576]{0}', space=vmem, size = 0x100000, scoped, tag = 'input window, operand 7, single buffered']
    #allocation4 [shape = 's32[2]{0}', space=sflag, size = 0x8, scoped, tag = 'scoped memory for vno1d_forward.1']
    #allocation5 [shape = 's32[2]{0}', space=sflag, size = 0x8, scoped, tag = 'scoped memory for vno1d_forward.1']
    #allocation6 [shape = 'u8[1024]{0}', space=vmem, size = 0x400, scoped, tag = 'output window, operand 0']
    %21 = vsyncpa [#allocation4], 0
    %22 = vsyncpa [#allocation5], 0
    %s23 = scalar_lea.sflag [#allocation5], 1
    %24 = vsyncpa %s23, 0
    loop: start=0, step=1, limit=4
    $region2: #{vno1d_forward.1} parent=1 // loop_pre_header
      _
    $region3: #{vno1d_forward.1} parent=1 // loop_header
      %s26 = sphi 0, %s30
      %p27 = scmp.ge.s32.totalorder %s26, 4
      %s36 = sphi 0, %s38
      %s39 = sphi 0, %s36
      %s40 = sphi 0, %s39
      %s56 = sphi 0, %s40
      %s60 = sphi 0, %s60
      %s62 = sphi 0, %s60
      %s63 = sphi 0, %s62
      %s77 = sphi 0, %s63
      %s81 = sphi 0, %s81
      %s83 = sphi 0, %s81
      %s84 = sphi 0, %s83
      %s98 = sphi 0, %s84
      %s102 = sphi 0, %s102
      %s104 = sphi 0, %s102
      %s105 = sphi 0, %s104
      %s119 = sphi 0, %s105
      %s123 = sphi 0, %s123
      %s125 = sphi 0, %s123
      %s126 = sphi 0, %s125
      %s140 = sphi 0, %s126
      %s144 = sphi 0, %s144
      %s146 = sphi 0, %s144
      %s147 = sphi 0, %s146
      %s161 = sphi 0, %s147
      %s165 = sphi 0, %s165
      %s167 = sphi 0, %s165
      %s168 = sphi 0, %s167
      %s182 = sphi 0, %s168
      %s186 = sphi 0, %s186
      %s188 = sphi 0, %s186
      %s189 = sphi 0, %s188
      %s203 = sphi 0, %s189
      %s207 = sphi 0, %s207
      %s209 = sphi 0, %s207
      %s210 = sphi 0, %s209
      %s224 = sphi 0, %s210
      %s228 = sphi 0, %s228
      %s230 = sphi 0, %s228
      %s231 = sphi 0, %s230
      %s245 = sphi 0, %s231
      %s249 = sphi 0, %s249
      %s251 = sphi 0, %s249
      %s252 = sphi 0, %s251
      %s266 = sphi 0, %s252
      %s270 = sphi 0, %s270
      %s272 = sphi 0, %s270
      %s273 = sphi 0, %s272
      %s287 = sphi 0, %s273
      %s291 = sphi 0, %s291
      %s293 = sphi 0, %s291
      %s294 = sphi 0, %s293
      %s308 = sphi 0, %s294
      %s312 = sphi 0, %s312
      %s314 = sphi 0, %s312
      %s315 = sphi 0, %s314
      %s329 = sphi 0, %s315
      %s335 = sphi 0, %s337
      %s338 = sphi 0, %s335
      %s339 = sphi 0, %s338
      %s355 = sphi 0, %s339
    $region4: #{vno1d_forward.1} parent=1 // loop_header_branch
      %29 = sbr.rel (%p27) target = $region8
    $region5: #{vno1d_forward.1} parent=1 // loop_body
      %s31 = ssub.s32 %s26, 1
      %s32 = ssub.s32 %s26, 2
      %s33 = sadd.s32 %s26, 1
      %s34 = ssub.s32 %s26, %s33
      %p35 = scmp.eq.s32.totalorder %s34, 0
      %s37 = sadd.s32 %s36, 1
      %s38 = scalar_select %p35, %s36, %s37
      %p41 = pneg %p35
      %p42 = scmp.eq.s32.totalorder %s26, 1
      %p43 = por %p41, %p42
      %p44 = scmp.ne.s32.totalorder %s36, %s39
      %p45 = scmp.eq.s32.totalorder %s26, 0
      %p46 = por %p44, %p45
      %p47 = scmp.ne.s32.totalorder %s36, %s39
      %p48 = scmp.eq.s32.totalorder %s31, 1
      %p49 = por %p47, %p48
      %p50 = scmp.ne.s32.totalorder %s39, %s40
      %p51 = scmp.eq.s32.totalorder %s31, 0
      %p52 = por %p50, %p51
      %p53 = scmp.ne.s32.totalorder %s39, %s40
      %p54 = scmp.eq.s32.totalorder %s32, 1
      %p55 = por %p53, %p54
      %p57 = scmp.ne.s32.totalorder %s40, %s56
      %p58 = scmp.eq.s32.totalorder %s32, 0
      %p59 = por %p57, %p58
      %s61 = sadd.s32 %s60, 1
      %p64 = scmp.eq.s32.totalorder %s26, 1
      %p65 = scmp.ne.s32.totalorder %s60, %s62
      %p66 = scmp.eq.s32.totalorder %s26, 0
      %p67 = por %p65, %p66
      %p68 = scmp.ne.s32.totalorder %s60, %s62
      %p69 = scmp.eq.s32.totalorder %s31, 1
      %p70 = por %p68, %p69
      %p71 = scmp.ne.s32.totalorder %s62, %s63
      %p72 = scmp.eq.s32.totalorder %s31, 0
      %p73 = por %p71, %p72
      %p74 = scmp.ne.s32.totalorder %s62, %s63
      %p75 = scmp.eq.s32.totalorder %s32, 1
      %p76 = por %p74, %p75
      %p78 = scmp.ne.s32.totalorder %s63, %s77
      %p79 = scmp.eq.s32.totalorder %s32, 0
      %p80 = por %p78, %p79
      %s82 = sadd.s32 %s81, 1
      %p85 = scmp.eq.s32.totalorder %s26, 1
      %p86 = scmp.ne.s32.totalorder %s81, %s83
      %p87 = scmp.eq.s32.totalorder %s26, 0
      %p88 = por %p86, %p87
      %p89 = scmp.ne.s32.totalorder %s81, %s83
      %p90 = scmp.eq.s32.totalorder %s31, 1
      %p91 = por %p89, %p90
      %p92 = scmp.ne.s32.totalorder %s83, %s84
      %p93 = scmp.eq.s32.totalorder %s31, 0
      %p94 = por %p92, %p93
      %p95 = scmp.ne.s32.totalorder %s83, %s84
      %p96 = scmp.eq.s32.totalorder %s32, 1
      %p97 = por %p95, %p96
      %p99 = scmp.ne.s32.totalorder %s84, %s98
      %p100 = scmp.eq.s32.totalorder %s32, 0
      %p101 = por %p99, %p100
      %s103 = sadd.s32 %s102, 1
      %p106 = scmp.eq.s32.totalorder %s26, 1
      %p107 = scmp.ne.s32.totalorder %s102, %s104
      %p108 = scmp.eq.s32.totalorder %s26, 0
      %p109 = por %p107, %p108
      %p110 = scmp.ne.s32.totalorder %s102, %s104
      %p111 = scmp.eq.s32.totalorder %s31, 1
      %p112 = por %p110, %p111
      %p113 = scmp.ne.s32.totalorder %s104, %s105
      %p114 = scmp.eq.s32.totalorder %s31, 0
      %p115 = por %p113, %p114
      %p116 = scmp.ne.s32.totalorder %s104, %s105
      %p117 = scmp.eq.s32.totalorder %s32, 1
      %p118 = por %p116, %p117
      %p120 = scmp.ne.s32.totalorder %s105, %s119
      %p121 = scmp.eq.s32.totalorder %s32, 0
      %p122 = por %p120, %p121
      %s124 = sadd.s32 %s123, 1
      %p127 = scmp.eq.s32.totalorder %s26, 1
      %p128 = scmp.ne.s32.totalorder %s123, %s125
      %p129 = scmp.eq.s32.totalorder %s26, 0
      %p130 = por %p128, %p129
      %p131 = scmp.ne.s32.totalorder %s123, %s125
      %p132 = scmp.eq.s32.totalorder %s31, 1
      %p133 = por %p131, %p132
      %p134 = scmp.ne.s32.totalorder %s125, %s126
      %p135 = scmp.eq.s32.totalorder %s31, 0
      %p136 = por %p134, %p135
      %p137 = scmp.ne.s32.totalorder %s125, %s126
      %p138 = scmp.eq.s32.totalorder %s32, 1
      %p139 = por %p137, %p138
      %p141 = scmp.ne.s32.totalorder %s126, %s140
      %p142 = scmp.eq.s32.totalorder %s32, 0
      %p143 = por %p141, %p142
      %s145 = sadd.s32 %s144, 1
      %p148 = scmp.eq.s32.totalorder %s26, 1
      %p149 = scmp.ne.s32.totalorder %s144, %s146
      %p150 = scmp.eq.s32.totalorder %s26, 0
      %p151 = por %p149, %p150
      %p152 = scmp.ne.s32.totalorder %s144, %s146
      %p153 = scmp.eq.s32.totalorder %s31, 1
      %p154 = por %p152, %p153
      %p155 = scmp.ne.s32.totalorder %s146, %s147
      %p156 = scmp.eq.s32.totalorder %s31, 0
      %p157 = por %p155, %p156
      %p158 = scmp.ne.s32.totalorder %s146, %s147
      %p159 = scmp.eq.s32.totalorder %s32, 1
      %p160 = por %p158, %p159
      %p162 = scmp.ne.s32.totalorder %s147, %s161
      %p163 = scmp.eq.s32.totalorder %s32, 0
      %p164 = por %p162, %p163
      %s166 = sadd.s32 %s165, 1
      %p169 = scmp.eq.s32.totalorder %s26, 1
      %p170 = scmp.ne.s32.totalorder %s165, %s167
      %p171 = scmp.eq.s32.totalorder %s26, 0
      %p172 = por %p170, %p171
      %p173 = scmp.ne.s32.totalorder %s165, %s167
      %p174 = scmp.eq.s32.totalorder %s31, 1
      %p175 = por %p173, %p174
      %p176 = scmp.ne.s32.totalorder %s167, %s168
      %p177 = scmp.eq.s32.totalorder %s31, 0
      %p178 = por %p176, %p177
      %p179 = scmp.ne.s32.totalorder %s167, %s168
      %p180 = scmp.eq.s32.totalorder %s32, 1
      %p181 = por %p179, %p180
      %p183 = scmp.ne.s32.totalorder %s168, %s182
      %p184 = scmp.eq.s32.totalorder %s32, 0
      %p185 = por %p183, %p184
      %s187 = sadd.s32 %s186, 1
      %p190 = scmp.eq.s32.totalorder %s26, 1
      %p191 = scmp.ne.s32.totalorder %s186, %s188
      %p192 = scmp.eq.s32.totalorder %s26, 0
      %p193 = por %p191, %p192
      %p194 = scmp.ne.s32.totalorder %s186, %s188
      %p195 = scmp.eq.s32.totalorder %s31, 1
      %p196 = por %p194, %p195
      %p197 = scmp.ne.s32.totalorder %s188, %s189
      %p198 = scmp.eq.s32.totalorder %s31, 0
      %p199 = por %p197, %p198
      %p200 = scmp.ne.s32.totalorder %s188, %s189
      %p201 = scmp.eq.s32.totalorder %s32, 1
      %p202 = por %p200, %p201
      %p204 = scmp.ne.s32.totalorder %s189, %s203
      %p205 = scmp.eq.s32.totalorder %s32, 0
      %p206 = por %p204, %p205
      %s208 = sadd.s32 %s207, 1
      %p211 = scmp.eq.s32.totalorder %s26, 1
      %p212 = scmp.ne.s32.totalorder %s207, %s209
      %p213 = scmp.eq.s32.totalorder %s26, 0
      %p214 = por %p212, %p213
      %p215 = scmp.ne.s32.totalorder %s207, %s209
      %p216 = scmp.eq.s32.totalorder %s31, 1
      %p217 = por %p215, %p216
      %p218 = scmp.ne.s32.totalorder %s209, %s210
      %p219 = scmp.eq.s32.totalorder %s31, 0
      %p220 = por %p218, %p219
      %p221 = scmp.ne.s32.totalorder %s209, %s210
      %p222 = scmp.eq.s32.totalorder %s32, 1
      %p223 = por %p221, %p222
      %p225 = scmp.ne.s32.totalorder %s210, %s224
      %p226 = scmp.eq.s32.totalorder %s32, 0
      %p227 = por %p225, %p226
      %s229 = sadd.s32 %s228, 1
      %p232 = scmp.eq.s32.totalorder %s26, 1
      %p233 = scmp.ne.s32.totalorder %s228, %s230
      %p234 = scmp.eq.s32.totalorder %s26, 0
      %p235 = por %p233, %p234
      %p236 = scmp.ne.s32.totalorder %s228, %s230
      %p237 = scmp.eq.s32.totalorder %s31, 1
      %p238 = por %p236, %p237
      %p239 = scmp.ne.s32.totalorder %s230, %s231
      %p240 = scmp.eq.s32.totalorder %s31, 0
      %p241 = por %p239, %p240
      %p242 = scmp.ne.s32.totalorder %s230, %s231
      %p243 = scmp.eq.s32.totalorder %s32, 1
      %p244 = por %p242, %p243
      %p246 = scmp.ne.s32.totalorder %s231, %s245
      %p247 = scmp.eq.s32.totalorder %s32, 0
      %p248 = por %p246, %p247
      %s250 = sadd.s32 %s249, 1
      %p253 = scmp.eq.s32.totalorder %s26, 1
      %p254 = scmp.ne.s32.totalorder %s249, %s251
      %p255 = scmp.eq.s32.totalorder %s26, 0
      %p256 = por %p254, %p255
      %p257 = scmp.ne.s32.totalorder %s249, %s251
      %p258 = scmp.eq.s32.totalorder %s31, 1
      %p259 = por %p257, %p258
      %p260 = scmp.ne.s32.totalorder %s251, %s252
      %p261 = scmp.eq.s32.totalorder %s31, 0
      %p262 = por %p260, %p261
      %p263 = scmp.ne.s32.totalorder %s251, %s252
      %p264 = scmp.eq.s32.totalorder %s32, 1
      %p265 = por %p263, %p264
      %p267 = scmp.ne.s32.totalorder %s252, %s266
      %p268 = scmp.eq.s32.totalorder %s32, 0
      %p269 = por %p267, %p268
      %s271 = sadd.s32 %s270, 1
      %p274 = scmp.eq.s32.totalorder %s26, 1
      %p275 = scmp.ne.s32.totalorder %s270, %s272
      %p276 = scmp.eq.s32.totalorder %s26, 0
      %p277 = por %p275, %p276
      %p278 = scmp.ne.s32.totalorder %s270, %s272
      %p279 = scmp.eq.s32.totalorder %s31, 1
      %p280 = por %p278, %p279
      %p281 = scmp.ne.s32.totalorder %s272, %s273
      %p282 = scmp.eq.s32.totalorder %s31, 0
      %p283 = por %p281, %p282
      %p284 = scmp.ne.s32.totalorder %s272, %s273
      %p285 = scmp.eq.s32.totalorder %s32, 1
      %p286 = por %p284, %p285
      %p288 = scmp.ne.s32.totalorder %s273, %s287
      %p289 = scmp.eq.s32.totalorder %s32, 0
      %p290 = por %p288, %p289
      %s292 = sadd.s32 %s291, 1
      %p295 = scmp.eq.s32.totalorder %s26, 1
      %p296 = scmp.ne.s32.totalorder %s291, %s293
      %p297 = scmp.eq.s32.totalorder %s26, 0
      %p298 = por %p296, %p297
      %p299 = scmp.ne.s32.totalorder %s291, %s293
      %p300 = scmp.eq.s32.totalorder %s31, 1
      %p301 = por %p299, %p300
      %p302 = scmp.ne.s32.totalorder %s293, %s294
      %p303 = scmp.eq.s32.totalorder %s31, 0
      %p304 = por %p302, %p303
      %p305 = scmp.ne.s32.totalorder %s293, %s294
      %p306 = scmp.eq.s32.totalorder %s32, 1
      %p307 = por %p305, %p306
      %p309 = scmp.ne.s32.totalorder %s294, %s308
      %p310 = scmp.eq.s32.totalorder %s32, 0
      %p311 = por %p309, %p310
      %s313 = sadd.s32 %s312, 1
      %p316 = scmp.eq.s32.totalorder %s26, 1
      %p317 = scmp.ne.s32.totalorder %s312, %s314
      %p318 = scmp.eq.s32.totalorder %s26, 0
      %p319 = por %p317, %p318
      %p320 = scmp.ne.s32.totalorder %s312, %s314
      %p321 = scmp.eq.s32.totalorder %s31, 1
      %p322 = por %p320, %p321
      %p323 = scmp.ne.s32.totalorder %s314, %s315
      %p324 = scmp.eq.s32.totalorder %s31, 0
      %p325 = por %p323, %p324
      %p326 = scmp.ne.s32.totalorder %s314, %s315
      %p327 = scmp.eq.s32.totalorder %s32, 1
      %p328 = por %p326, %p327
      %p330 = scmp.ne.s32.totalorder %s315, %s329
      %p331 = scmp.eq.s32.totalorder %s32, 0
      %p332 = por %p330, %p331
      %s333 = ssub.s32 %s26, %s33
      %p334 = scmp.eq.s32.totalorder %s333, 0
      %s336 = sadd.s32 %s335, 1
      %s337 = scalar_select %p334, %s335, %s336
      %p340 = pneg %p334
      %p341 = scmp.eq.s32.totalorder %s26, 1
      %p342 = por %p340, %p341
      %p343 = scmp.ne.s32.totalorder %s335, %s338
      %p344 = scmp.eq.s32.totalorder %s26, 0
      %p345 = por %p343, %p344
      %p346 = scmp.ne.s32.totalorder %s335, %s338
      %p347 = scmp.eq.s32.totalorder %s31, 1
      %p348 = por %p346, %p347
      %p349 = scmp.ne.s32.totalorder %s338, %s339
      %p350 = scmp.eq.s32.totalorder %s31, 0
      %p351 = por %p349, %p350
      %p352 = scmp.ne.s32.totalorder %s338, %s339
      %p353 = scmp.eq.s32.totalorder %s32, 1
      %p354 = por %p352, %p353
      %p356 = scmp.ne.s32.totalorder %s339, %s355
      %p357 = scmp.eq.s32.totalorder %s32, 0
      %p358 = por %p356, %p357
      %p359 = scmp.le.s32.totalorder 1, %s26
      %p360 = scmp.lt.s32.totalorder %s26, 3
      %p361 = pnand %p359, %p360
      %p362 = pneg %p361
      // Predicated region
      $region9: #{vno1d_forward.1} parent=5 // pred_check
        _
      $region10: #{vno1d_forward.1} parent=5 // pred_check_branch
        %364 = sbr.rel (%p361) target = $region12
      $region11: #{vno1d_forward.1} parent=5 // pred_region
        %s365 = ssub.s32 %s26, 1
        // Predicated region
        $region13: #{vno1d_forward.1} parent=11 // pred_check
          %p366 = pneg %p73
        $region14: #{vno1d_forward.1} parent=11 // pred_check_branch
          %368 = sbr.rel (%p366) target = $region16
        $region15: #{vno1d_forward.1} parent=11 // pred_region
          _
        $region16: #{vno1d_forward.1} parent=11 // pred_fallthru
          _
        // Predicated region
        $region17: #{vno1d_forward.1} parent=11 // pred_check
          %p369 = pneg %p94
        $region18: #{vno1d_forward.1} parent=11 // pred_check_branch
          %371 = sbr.rel (%p369) target = $region20
        $region19: #{vno1d_forward.1} parent=11 // pred_region
          _
        $region20: #{vno1d_forward.1} parent=11 // pred_fallthru
          _
        // Predicated region
        $region21: #{vno1d_forward.1} parent=11 // pred_check
          %p372 = pneg %p115
        $region22: #{vno1d_forward.1} parent=11 // pred_check_branch
          %374 = sbr.rel (%p372) target = $region24
        $region23: #{vno1d_forward.1} parent=11 // pred_region
          _
        $region24: #{vno1d_forward.1} parent=11 // pred_fallthru
          _
        // Predicated region
        $region25: #{vno1d_forward.1} parent=11 // pred_check
          %p375 = pneg %p136
        $region26: #{vno1d_forward.1} parent=11 // pred_check_branch
          %377 = sbr.rel (%p375) target = $region28
        $region27: #{vno1d_forward.1} parent=11 // pred_region
          _
        $region28: #{vno1d_forward.1} parent=11 // pred_fallthru
          _
        // Predicated region
        $region29: #{vno1d_forward.1} parent=11 // pred_check
          %p378 = pneg %p157
        $region30: #{vno1d_forward.1} parent=11 // pred_check_branch
          %380 = sbr.rel (%p378) target = $region32
        $region31: #{vno1d_forward.1} parent=11 // pred_region
          _
        $region32: #{vno1d_forward.1} parent=11 // pred_fallthru
          _
        // Predicated region
        $region33: #{vno1d_forward.1} parent=11 // pred_check
          %p381 = pneg %p178
        $region34: #{vno1d_forward.1} parent=11 // pred_check_branch
          %383 = sbr.rel (%p381) target = $region36
        $region35: #{vno1d_forward.1} parent=11 // pred_region
          _
        $region36: #{vno1d_forward.1} parent=11 // pred_fallthru
          _
        // Predicated region
        $region37: #{vno1d_forward.1} parent=11 // pred_check
          %p384 = pneg %p199
        $region38: #{vno1d_forward.1} parent=11 // pred_check_branch
          %386 = sbr.rel (%p384) target = $region40
        $region39: #{vno1d_forward.1} parent=11 // pred_region
          %s388 = ssub.s32 32768, 32768
          %389 = vsyncadd [#allocation4], %s388
          %s390 = sshll.u32 [#allocation3], 4
          %s391 = int_to_ptr.vmem [resolvable:$true] %s390
          %396 = dma.hbm_to_vmem [thread:$0]  %s7, 32768, %s391, [#allocation4], 128, 128, 8
        $region40: #{vno1d_forward.1} parent=11 // pred_fallthru
          _
        // Predicated region
        $region41: #{vno1d_forward.1} parent=11 // pred_check
          %p397 = pneg %p220
        $region42: #{vno1d_forward.1} parent=11 // pred_check_branch
          %399 = sbr.rel (%p397) target = $region44
        $region43: #{vno1d_forward.1} parent=11 // pred_region
          _
        $region44: #{vno1d_forward.1} parent=11 // pred_fallthru
          _
        // Predicated region
        $region45: #{vno1d_forward.1} parent=11 // pred_check
          %p400 = pneg %p241
        $region46: #{vno1d_forward.1} parent=11 // pred_check_branch
          %402 = sbr.rel (%p400) target = $region48
        $region47: #{vno1d_forward.1} parent=11 // pred_region
          _
        $region48: #{vno1d_forward.1} parent=11 // pred_fallthru
          _
        // Predicated region
        $region49: #{vno1d_forward.1} parent=11 // pred_check
          %p403 = pneg %p262
        $region50: #{vno1d_forward.1} parent=11 // pred_check_branch
          %405 = sbr.rel (%p403) target = $region52
        $region51: #{vno1d_forward.1} parent=11 // pred_region
          _
        $region52: #{vno1d_forward.1} parent=11 // pred_fallthru
          _
        // Predicated region
        $region53: #{vno1d_forward.1} parent=11 // pred_check
          %p406 = pneg %p283
        $region54: #{vno1d_forward.1} parent=11 // pred_check_branch
          %408 = sbr.rel (%p406) target = $region56
        $region55: #{vno1d_forward.1} parent=11 // pred_region
          _
        $region56: #{vno1d_forward.1} parent=11 // pred_fallthru
          _
        // Predicated region
        $region57: #{vno1d_forward.1} parent=11 // pred_check
          %p409 = pneg %p304
        $region58: #{vno1d_forward.1} parent=11 // pred_check_branch
          %411 = sbr.rel (%p409) target = $region60
        $region59: #{vno1d_forward.1} parent=11 // pred_region
          _
        $region60: #{vno1d_forward.1} parent=11 // pred_fallthru
          _
        // Predicated region
        $region61: #{vno1d_forward.1} parent=11 // pred_check
          %p412 = pneg %p325
        $region62: #{vno1d_forward.1} parent=11 // pred_check_branch
          %414 = sbr.rel (%p412) target = $region64
        $region63: #{vno1d_forward.1} parent=11 // pred_region
          _
        $region64: #{vno1d_forward.1} parent=11 // pred_fallthru
          _
      $region12: #{vno1d_forward.1} parent=5 // pred_fallthru
        _
      %p415 = scmp.lt.s32.totalorder %s26, 2
      // Predicated region
      $region65: #{vno1d_forward.1} parent=5 // pred_check
        %p416 = pneg %p415
      $region66: #{vno1d_forward.1} parent=5 // pred_check_branch
        %418 = sbr.rel (%p416) target = $region68
      $region67: #{vno1d_forward.1} parent=5 // pred_region
        // Predicated region
        $region69: #{vno1d_forward.1} parent=67 // pred_check
          %p419 = pneg %p46
        $region70: #{vno1d_forward.1} parent=67 // pred_check_branch
          %421 = sbr.rel (%p419) target = $region72
        $region71: #{vno1d_forward.1} parent=67 // pred_region
          %p422 = scmp.lt.s32.totalorder %s26, 1
          %s423 = scalar_select %p422, %s26, 1
          %s424 = smul.addr %s423, 2
          %s425 = scalar_lea.vmem %s0, %s424
        $region72: #{vno1d_forward.1} parent=67 // pred_fallthru
          _
      $region68: #{vno1d_forward.1} parent=5 // pred_fallthru
        _
      %p426 = scmp.le.s32.totalorder 1, %s26
      %p427 = scmp.lt.s32.totalorder %s26, 3
      %p428 = pnand %p426, %p427
      %p429 = pneg %p428
      // Predicated region
      $region73: #{vno1d_forward.1} parent=5 // pred_check
        _
      $region74: #{vno1d_forward.1} parent=5 // pred_check_branch
        %431 = sbr.rel (%p428) target = $region76
      $region75: #{vno1d_forward.1} parent=5 // pred_region
        %s432 = ssub.s32 %s26, 1
        // Predicated region
        $region77: #{vno1d_forward.1} parent=75 // pred_check
          %p433 = pneg %p199
        $region78: #{vno1d_forward.1} parent=75 // pred_check_branch
          %435 = sbr.rel (%p433) target = $region80
        $region79: #{vno1d_forward.1} parent=75 // pred_region
          %436 = dma.done [#allocation4], 32768
        $region80: #{vno1d_forward.1} parent=75 // pred_fallthru
          _
        %p437 = scmp.lt.s32.totalorder %s31, 1
        %s438 = scalar_select %p437, %s31, 1
        %s439 = smul.addr %s438, 2
        %s440 = scalar_lea.vmem %s0, %s439
        %p441 = pneg %p52
        %p442 = pneg %p49
        %p443 = pneg %p73
        %p444 = pneg %p70
        %p445 = pneg %p94
        %p446 = pneg %p91
        %p447 = pneg %p115
        %p448 = pneg %p112
        %p449 = pneg %p136
        %p450 = pneg %p133
        %p451 = pneg %p157
        %p452 = pneg %p154
        %p453 = pneg %p178
        %p454 = pneg %p175
        %p455 = pneg %p199
        %p456 = pneg %p196
        %p457 = pneg %p220
        %p458 = pneg %p217
        %p459 = pneg %p241
        %p460 = pneg %p238
        %p461 = pneg %p262
        %p462 = pneg %p259
        %p463 = pneg %p283
        %p464 = pneg %p280
        %p465 = pneg %p304
        %p466 = pneg %p301
        %p467 = pneg %p325
        %p468 = pneg %p322
        %p469 = pneg %p351
        %p470 = pneg %p348
        %s471 = sand.u32 %s338, 1
        %s472 = scalar_lea.sflag [#allocation5], %s471
        %s473 = sand.u32 %s338, 1
        %s474 = scalar_lea.vmem [#allocation6], %s473
        %p475 = scmp.lt.s32.totalorder %s31, 1
        %s476 = scalar_select %p475, %s31, 1
        %s477 = smul.addr %s476, 2
        %s478 = scalar_lea.vmem %s0, %s477
        %v479 = vld [vmem:[%s478] sm:$0x1]
        %v480 = vld [vmem:[%s478 + $0x1] sm:$0x1]
        %v482 = vrot.slane %v480, 7
        %vm484 = vcmask 1040384
        %v485 = vsel %vm484, %v479, %v482
        %v486 = vld [vmem:[%s2] sm:$0xff]
        %v487 = vld [vmem:[%s2 + $0x8] sm:$0xff]
        %v488 = vld [vmem:[%s2 + $0x10] sm:$0xff]
        %v489 = vld [vmem:[%s2 + $0x18] sm:$0xff]
        %v490 = vld [vmem:[%s3] sm:$0xff]
        %v491 = vld [vmem:[%s3 + $0x8] sm:$0xff]
        %v492 = vld [vmem:[%s3 + $0x10] sm:$0xff]
        %v493 = vld [vmem:[%s3 + $0x18] sm:$0xff]
        %v494 = vld [vmem:[%s1] sm:$0x1]
        %496 = vset.pattern.permute.xlu0 0
        %497 = vperm.xlu0 %496, %v490
        %v498 = vpop.permute.xlu0 %497
        %501 = vset.pattern.permute.xlu0 0
        %502 = vperm.xlu0 %501, %v491
        %v503 = vpop.permute.xlu0 %502
        %506 = vset.pattern.permute.xlu0 0
        %507 = vperm.xlu0 %506, %v492
        %v508 = vpop.permute.xlu0 %507
        %511 = vset.pattern.permute.xlu0 0
        %512 = vperm.xlu0 %511, %v493
        %v513 = vpop.permute.xlu0 %512
        %v516 = vlaneseq
        %v517 = vshrl.u32 %v516, 7
        %v518 = vsub.s32 0, %v517
        %v519 = vrot.slane %v494, %v518
        %v521 = vmul.f32 %v498, %v519
        %v522 = vmul.f32 %v503, %v519
        %v523 = vmul.f32 %v508, %v519
        %v524 = vmul.f32 %v513, %v519
        %vm525 = vcmask 15360
        %v527 = vsel %vm525, %v486, 0
        %v530 = vsel %vm525, %v487, 0
        %v533 = vsel %vm525, %v488, 0
        %v536 = vsel %vm525, %v489, 0
        %vm538 = vcmask 1041408
        %v540 = vsel %vm538, %v485, 0
        %542 = vmatprep.subr.mxu0 0.0
        %543 = vmatpush1.msra.mxu0 %v540
        %544 = vmatprep.subr.mxu0 0.0
        %545 = vmatpush1.msra.mxu0 0.0
        %546 = vmatprep.subr.mxu0 0.0
        %547 = vmatpush1.msra.mxu0 0.0
        %548 = vmatprep.subr.mxu0 0.0
        %549 = vmatpush1.msra.mxu0 0.0
        %550 = vmatprep.subr.mxu0 0.0
        %551 = vmatpush1.msra.mxu0 0.0
        %552 = vmatprep.subr.mxu0 0.0
        %553 = vmatpush1.msra.mxu0 0.0
        %554 = vmatprep.subr.mxu0 0.0
        %555 = vmatpush1.msra.mxu0 0.0
        %556 = vmatprep.subr.mxu0 0.0
        %557 = vmatpush1.msra.mxu0 0.0
        %558 = vmatprep.subr.mxu0 0.0
        %559 = vmatpush1.msra.mxu0 0.0
        %560 = vmatprep.subr.mxu0 0.0
        %561 = vmatpush1.msra.mxu0 0.0
        %562 = vmatprep.subr.mxu0 0.0
        %563 = vmatpush1.msra.mxu0 0.0
        %564 = vmatprep.subr.mxu0 0.0
        %565 = vmatpush1.msra.mxu0 0.0
        %566 = vmatprep.subr.mxu0 0.0
        %567 = vmatpush1.msra.mxu0 0.0
        %568 = vmatprep.subr.mxu0 0.0
        %569 = vmatpush1.msra.mxu0 0.0
        %570 = vmatprep.subr.mxu0 0.0
        %571 = vmatpush1.msra.mxu0 0.0
        %572 = vmatprep.subr.mxu0 0.0
        %573 = vmatpush1.msra.mxu0 0.0
        %574 = vmatprep.subr.mxu0 0.0
        %575 = vmatpush1.msra.mxu0 0.0
        %576 = vmatprep.subr.mxu0 0.0
        %577 = vmatpush1.msra.mxu0 0.0
        %578 = vmatprep.subr.mxu0 0.0
        %579 = vmatpush1.msra.mxu0 0.0
        %580 = vmatprep.subr.mxu0 0.0
        %581 = vmatpush1.msra.mxu0 0.0
        %582 = vmatprep.subr.mxu0 0.0
        %583 = vmatpush1.msra.mxu0 0.0
        %584 = vmatprep.subr.mxu0 0.0
        %585 = vmatpush1.msra.mxu0 0.0
        %586 = vmatprep.subr.mxu0 0.0
        %587 = vmatpush1.msra.mxu0 0.0
        %588 = vmatprep.subr.mxu0 0.0
        %589 = vmatpush1.msra.mxu0 0.0
        %590 = vmatprep.subr.mxu0 0.0
        %591 = vmatpush1.msra.mxu0 0.0
        %592 = vmatprep.subr.mxu0 0.0
        %593 = vmatpush1.msra.mxu0 0.0
        %594 = vmatprep.subr.mxu0 0.0
        %595 = vmatpush1.msra.mxu0 0.0
        %596 = vmatprep.subr.mxu0 0.0
        %597 = vmatpush1.msra.mxu0 0.0
        %598 = vmatprep.subr.mxu0 0.0
        %599 = vmatpush1.msra.mxu0 0.0
        %600 = vmatprep.subr.mxu0 0.0
        %601 = vmatpush1.msra.mxu0 0.0
        %602 = vmatprep.subr.mxu0 0.0
        %603 = vmatpush1.msra.mxu0 0.0
        %604 = vmatprep.subr.mxu0 0.0
        %605 = vmatpush1.msra.mxu0 0.0
        %606 = vmatprep.mubr.f32.mxu0 0.0
        %607 = vmatmul.mubr.f32.gmra.mrb[0].mxu0 %v527
        %v608 = vpop.f32.mrb[0].mxu0
        %v609 = vadd.f32 %v521, %v608
        %v610 = vpop.f32.mrb[0].mxu0
        %611 = vmatprep.mubr.f32.mxu0 0.0
        %612 = vmatmul.mubr.f32.gmra.mrb[0].mxu0 %v530
        %v613 = vpop.f32.mrb[0].mxu0
        %v614 = vadd.f32 %v522, %v613
        %v615 = vpop.f32.mrb[0].mxu0
        %616 = vmatprep.mubr.f32.mxu0 0.0
        %617 = vmatmul.mubr.f32.gmra.mrb[0].mxu0 %v533
        %v618 = vpop.f32.mrb[0].mxu0
        %v619 = vadd.f32 %v523, %v618
        %v620 = vpop.f32.mrb[0].mxu0
        %621 = vmatprep.mubr.f32.mxu0 0.0
        %622 = vmatmul.mubr.f32.gmra.mrb[0].mxu0 %v536
        %v623 = vpop.f32.mrb[0].mxu0
        %v624 = vadd.f32 %v524, %v623
        %v625 = vpop.f32.mrb[0].mxu0
        %626 = vdwg.mxu0
        %v627 = vld [vmem:[%s4] sm:$0xff]
        %v628 = vld [vmem:[%s4 + $0x8] sm:$0xff]
        %v629 = vld [vmem:[%s4 + $0x10] sm:$0xff]
        %v630 = vld [vmem:[%s4 + $0x18] sm:$0xff]
        %632 = vset.pattern.permute.xlu0 0
        %633 = vperm.xlu0 %632, %v627
        %v634 = vpop.permute.xlu0 %633
        %637 = vset.pattern.permute.xlu0 0
        %638 = vperm.xlu0 %637, %v628
        %v639 = vpop.permute.xlu0 %638
        %642 = vset.pattern.permute.xlu0 0
        %643 = vperm.xlu0 %642, %v629
        %v644 = vpop.permute.xlu0 %643
        %647 = vset.pattern.permute.xlu0 0
        %648 = vperm.xlu0 %647, %v630
        %v649 = vpop.permute.xlu0 %648
        %v651 = vadd.f32 %v609, %v634
        %v652 = vadd.f32 %v614, %v639
        %v653 = vadd.f32 %v619, %v644
        %v654 = vadd.f32 %v624, %v649
        %v655 = vld [vmem:[%s5] sm:$0xff]
        %v656 = vld [vmem:[%s5 + $0x8] sm:$0xff]
        %v657 = vld [vmem:[%s6] sm:$0xff]
        %v658 = vld [vmem:[%s6 + $0x8] sm:$0xff]
        %v659 = vld [vmem:[#allocation3] sm:$0xff]
        %v660 = vld [vmem:[#allocation3 + $0x8] sm:$0xff]
        %v661 = vld [vmem:[#allocation3 + $0x10] sm:$0xff]
        %v662 = vld [vmem:[#allocation3 + $0x18] sm:$0xff]
        %v663 = vld [vmem:[#allocation3 + $0x20] sm:$0xff]
        %v664 = vld [vmem:[#allocation3 + $0x28] sm:$0xff]
        %v665 = vld [vmem:[#allocation3 + $0x30] sm:$0xff]
        %v666 = vld [vmem:[#allocation3 + $0x38] sm:$0xff]
        %v667 = vld [vmem:[#allocation3 + $0x40] sm:$0xff]
        %v668 = vld [vmem:[#allocation3 + $0x48] sm:$0xff]
        %v669 = vld [vmem:[#allocation3 + $0x50] sm:$0xff]
        %v670 = vld [vmem:[#allocation3 + $0x58] sm:$0xff]
        %v671 = vld [vmem:[#allocation3 + $0x60] sm:$0xff]
        %v672 = vld [vmem:[#allocation3 + $0x68] sm:$0xff]
        %v673 = vld [vmem:[#allocation3 + $0x70] sm:$0xff]
        %v674 = vld [vmem:[#allocation3 + $0x78] sm:$0xff]
        %v675 = vld [vmem:[#allocation3 + $0x80] sm:$0xff]
        %v676 = vld [vmem:[#allocation3 + $0x88] sm:$0xff]
        %v677 = vld [vmem:[#allocation3 + $0x90] sm:$0xff]
        %v678 = vld [vmem:[#allocation3 + $0x98] sm:$0xff]
        %v679 = vld [vmem:[#allocation3 + $0xa0] sm:$0xff]
        %v680 = vld [vmem:[#allocation3 + $0xa8] sm:$0xff]
        %v681 = vld [vmem:[#allocation3 + $0xb0] sm:$0xff]
        %v682 = vld [vmem:[#allocation3 + $0xb8] sm:$0xff]
        %v683 = vld [vmem:[#allocation3 + $0xc0] sm:$0xff]
        %v684 = vld [vmem:[#allocation3 + $0xc8] sm:$0xff]
        %v685 = vld [vmem:[#allocation3 + $0xd0] sm:$0xff]
        %v686 = vld [vmem:[#allocation3 + $0xd8] sm:$0xff]
        %v687 = vld [vmem:[#allocation3 + $0xe0] sm:$0xff]
        %v688 = vld [vmem:[#allocation3 + $0xe8] sm:$0xff]
        %v689 = vld [vmem:[#allocation3 + $0xf0] sm:$0xff]
        %v690 = vld [vmem:[#allocation3 + $0xf8] sm:$0xff]
        %v691 = vld [vmem:[#allocation3 + $0x100] sm:$0xff]
        %v692 = vld [vmem:[#allocation3 + $0x108] sm:$0xff]
        %v693 = vld [vmem:[#allocation3 + $0x110] sm:$0xff]
        %v694 = vld [vmem:[#allocation3 + $0x118] sm:$0xff]
        %v695 = vld [vmem:[#allocation3 + $0x120] sm:$0xff]
        %v696 = vld [vmem:[#allocation3 + $0x128] sm:$0xff]
        %v697 = vld [vmem:[#allocation3 + $0x130] sm:$0xff]
        %v698 = vld [vmem:[#allocation3 + $0x138] sm:$0xff]
        %v699 = vld [vmem:[#allocation3 + $0x140] sm:$0xff]
        %v700 = vld [vmem:[#allocation3 + $0x148] sm:$0xff]
        %v701 = vld [vmem:[#allocation3 + $0x150] sm:$0xff]
        %v702 = vld [vmem:[#allocation3 + $0x158] sm:$0xff]
        %v703 = vld [vmem:[#allocation3 + $0x160] sm:$0xff]
        %v704 = vld [vmem:[#allocation3 + $0x168] sm:$0xff]
        %v705 = vld [vmem:[#allocation3 + $0x170] sm:$0xff]
        %v706 = vld [vmem:[#allocation3 + $0x178] sm:$0xff]
        %v707 = vld [vmem:[#allocation3 + $0x180] sm:$0xff]
        %v708 = vld [vmem:[#allocation3 + $0x188] sm:$0xff]
        %v709 = vld [vmem:[#allocation3 + $0x190] sm:$0xff]
        %v710 = vld [vmem:[#allocation3 + $0x198] sm:$0xff]
        %v711 = vld [vmem:[#allocation3 + $0x1a0] sm:$0xff]
        %v712 = vld [vmem:[#allocation3 + $0x1a8] sm:$0xff]
        %v713 = vld [vmem:[#allocation3 + $0x1b0] sm:$0xff]
        %v714 = vld [vmem:[#allocation3 + $0x1b8] sm:$0xff]
        %v715 = vld [vmem:[#allocation3 + $0x1c0] sm:$0xff]
        %v716 = vld [vmem:[#allocation3 + $0x1c8] sm:$0xff]
        %v717 = vld [vmem:[#allocation3 + $0x1d0] sm:$0xff]
        %v718 = vld [vmem:[#allocation3 + $0x1d8] sm:$0xff]
        %v719 = vld [vmem:[#allocation3 + $0x1e0] sm:$0xff]
        %v720 = vld [vmem:[#allocation3 + $0x1e8] sm:$0xff]
        %v721 = vld [vmem:[#allocation3 + $0x1f0] sm:$0xff]
        %v722 = vld [vmem:[#allocation3 + $0x1f8] sm:$0xff]
        %v723 = vld [vmem:[%s8] sm:$0xff]
        %v724 = vld [vmem:[%s8 + $0x8] sm:$0xff]
        %v725 = vld [vmem:[%s8 + $0x10] sm:$0xff]
        %v726 = vld [vmem:[%s8 + $0x18] sm:$0xff]
        %v727 = vld [vmem:[%s9] sm:$0xff]
        %v728 = vld [vmem:[%s9 + $0x8] sm:$0xff]
        %v729 = vld [vmem:[%s9 + $0x10] sm:$0xff]
        %v730 = vld [vmem:[%s9 + $0x18] sm:$0xff]
        %vm731 = vcmask 130048
        %v733 = vsel %vm731, %v655, 0
        %v736 = vsel %vm731, %v656, 0
        %v739 = vsel %vm731, %v651, 0
        %v742 = vsel %vm731, %v652, 0
        %v745 = vsel %vm731, %v653, 0
        %v748 = vsel %vm731, %v654, 0
        %750 = vmatprep.subr.mxu0 0.0
        %751 = vmatpush1.xpose.msra.mxu0 %v739
        %752 = vmatprep.subr.mxu0 0.0
        %753 = vmatpush1.xpose.msra.mxu0 %v742
        %754 = vmatprep.subr.mxu0 0.0
        %755 = vmatpush1.xpose.msra.mxu0 %v745
        %756 = vmatprep.subr.mxu0 0.0
        %757 = vmatpush1.xpose.msra.mxu0 %v748
        %758 = vmatprep.subr.mxu0 0.0
        %759 = vmatpush1.xpose.msra.mxu0 0.0
        %760 = vmatprep.subr.mxu0 0.0
        %761 = vmatpush1.xpose.msra.mxu0 0.0
        %762 = vmatprep.subr.mxu0 0.0
        %763 = vmatpush1.xpose.msra.mxu0 0.0
        %764 = vmatprep.subr.mxu0 0.0
        %765 = vmatpush1.xpose.msra.mxu0 0.0
        %766 = vmatprep.subr.mxu0 0.0
        %767 = vmatpush1.xpose.msra.mxu0 0.0
        %768 = vmatprep.subr.mxu0 0.0
        %769 = vmatpush1.xpose.msra.mxu0 0.0
        %770 = vmatprep.subr.mxu0 0.0
        %771 = vmatpush1.xpose.msra.mxu0 0.0
        %772 = vmatprep.subr.mxu0 0.0
        %773 = vmatpush1.xpose.msra.mxu0 0.0
        %774 = vmatprep.subr.mxu0 0.0
        %775 = vmatpush1.xpose.msra.mxu0 0.0
        %776 = vmatprep.subr.mxu0 0.0
        %777 = vmatpush1.xpose.msra.mxu0 0.0
        %778 = vmatprep.subr.mxu0 0.0
        %779 = vmatpush1.xpose.msra.mxu0 0.0
        %780 = vmatprep.subr.mxu0 0.0
        %781 = vmatpush1.xpose.msra.mxu0 0.0
        %782 = vmatprep.subr.mxu0 0.0
        %783 = vmatpush1.xpose.msra.mxu0 0.0
        %784 = vmatprep.subr.mxu0 0.0
        %785 = vmatpush1.xpose.msra.mxu0 0.0
        %786 = vmatprep.subr.mxu0 0.0
        %787 = vmatpush1.xpose.msra.mxu0 0.0
        %788 = vmatprep.subr.mxu0 0.0
        %789 = vmatpush1.xpose.msra.mxu0 0.0
        %790 = vmatprep.subr.mxu0 0.0
        %791 = vmatpush1.xpose.msra.mxu0 0.0
        %792 = vmatprep.subr.mxu0 0.0
        %793 = vmatpush1.xpose.msra.mxu0 0.0
        %794 = vmatprep.subr.mxu0 0.0
        %795 = vmatpush1.xpose.msra.mxu0 0.0
        %796 = vmatprep.subr.mxu0 0.0
        %797 = vmatpush1.xpose.msra.mxu0 0.0
        %798 = vmatprep.subr.mxu0 0.0
        %799 = vmatpush1.xpose.msra.mxu0 0.0
        %800 = vmatprep.subr.mxu0 0.0
        %801 = vmatpush1.xpose.msra.mxu0 0.0
        %802 = vmatprep.subr.mxu0 0.0
        %803 = vmatpush1.xpose.msra.mxu0 0.0
        %804 = vmatprep.subr.mxu0 0.0
        %805 = vmatpush1.xpose.msra.mxu0 0.0
        %806 = vmatprep.subr.mxu0 0.0
        %807 = vmatpush1.xpose.msra.mxu0 0.0
        %808 = vmatprep.subr.mxu0 0.0
        %809 = vmatpush1.xpose.msra.mxu0 0.0
        %810 = vmatprep.subr.mxu0 0.0
        %811 = vmatpush1.xpose.msra.mxu0 0.0
        %812 = vmatprep.subr.mxu0 0.0
        %813 = vmatpush1.xpose.msra.mxu0 0.0
        %814 = vmatprep.mubr.f32.mxu0 0.0
        %815 = vmatmul.mubr.f32.gmra.mrb[0].mxu0 %v733
        %v816 = vpop.f32.mrb[0].mxu0
        %v817 = vadd.f32 0.0, %v816
        %v818 = vpop.f32.mrb[0].mxu0
        %819 = vmatprep.mubr.f32.mxu0 0.0
        %820 = vmatmul.mubr.f32.gmra.mrb[0].mxu0 %v736
        %v821 = vpop.f32.mrb[0].mxu0
        %v822 = vadd.f32 0.0, %v821
        %v823 = vpop.f32.mrb[0].mxu0
        %824 = vdwg.mxu0
        %v825 = vlaneseq
        %v826 = vshrl.u32 %v825, 7
        %v827 = vsub.s32 0, %v826
        %v828 = vrot.slane %v817, %v827
        %830 = vbcast.lane.b32.xlu0 %v828, 256
        %v831 = vpop.permute.xlu0 %830
        %s833 = sor.u32 256, 8
        %834 = vbcast.lane.b32.xlu0 %v828, %s833
        %v835 = vpop.permute.xlu0 %834
        %s837 = sor.u32 256, 16
        %838 = vbcast.lane.b32.xlu0 %v828, %s837
        %v839 = vpop.permute.xlu0 %838
        %s841 = sor.u32 256, 24
        %842 = vbcast.lane.b32.xlu0 %v828, %s841
        %v843 = vpop.permute.xlu0 %842
        %v844 = vlaneseq
        %v845 = vshrl.u32 %v844, 7
        %v846 = vsub.s32 1, %v845
        %v847 = vrot.slane %v817, %v846
        %849 = vbcast.lane.b32.xlu0 %v847, 256
        %v850 = vpop.permute.xlu0 %849
        %s852 = sor.u32 256, 8
        %853 = vbcast.lane.b32.xlu0 %v847, %s852
        %v854 = vpop.permute.xlu0 %853
        %s856 = sor.u32 256, 16
        %857 = vbcast.lane.b32.xlu0 %v847, %s856
        %v858 = vpop.permute.xlu0 %857
        %s860 = sor.u32 256, 24
        %861 = vbcast.lane.b32.xlu0 %v847, %s860
        %v862 = vpop.permute.xlu0 %861
        %v863 = vlaneseq
        %v864 = vshrl.u32 %v863, 7
        %v865 = vsub.s32 2, %v864
        %v866 = vrot.slane %v817, %v865
        %868 = vbcast.lane.b32.xlu0 %v866, 256
        %v869 = vpop.permute.xlu0 %868
        %s871 = sor.u32 256, 8
        %872 = vbcast.lane.b32.xlu0 %v866, %s871
        %v873 = vpop.permute.xlu0 %872
        %s875 = sor.u32 256, 16
        %876 = vbcast.lane.b32.xlu0 %v866, %s875
        %v877 = vpop.permute.xlu0 %876
        %s879 = sor.u32 256, 24
        %880 = vbcast.lane.b32.xlu0 %v866, %s879
        %v881 = vpop.permute.xlu0 %880
        %v882 = vlaneseq
        %v883 = vshrl.u32 %v882, 7
        %v884 = vsub.s32 3, %v883
        %v885 = vrot.slane %v817, %v884
        %887 = vbcast.lane.b32.xlu0 %v885, 256
        %v888 = vpop.permute.xlu0 %887
        %s890 = sor.u32 256, 8
        %891 = vbcast.lane.b32.xlu0 %v885, %s890
        %v892 = vpop.permute.xlu0 %891
        %s894 = sor.u32 256, 16
        %895 = vbcast.lane.b32.xlu0 %v885, %s894
        %v896 = vpop.permute.xlu0 %895
        %s898 = sor.u32 256, 24
        %899 = vbcast.lane.b32.xlu0 %v885, %s898
        %v900 = vpop.permute.xlu0 %899
        %v901 = vlaneseq
        %v902 = vshrl.u32 %v901, 7
        %v903 = vsub.s32 4, %v902
        %v904 = vrot.slane %v817, %v903
        %906 = vbcast.lane.b32.xlu0 %v904, 256
        %v907 = vpop.permute.xlu0 %906
        %s909 = sor.u32 256, 8
        %910 = vbcast.lane.b32.xlu0 %v904, %s909
        %v911 = vpop.permute.xlu0 %910
        %s913 = sor.u32 256, 16
        %914 = vbcast.lane.b32.xlu0 %v904, %s913
        %v915 = vpop.permute.xlu0 %914
        %s917 = sor.u32 256, 24
        %918 = vbcast.lane.b32.xlu0 %v904, %s917
        %v919 = vpop.permute.xlu0 %918
        %v920 = vlaneseq
        %v921 = vshrl.u32 %v920, 7
        %v922 = vsub.s32 5, %v921
        %v923 = vrot.slane %v817, %v922
        %925 = vbcast.lane.b32.xlu0 %v923, 256
        %v926 = vpop.permute.xlu0 %925
        %s928 = sor.u32 256, 8
        %929 = vbcast.lane.b32.xlu0 %v923, %s928
        %v930 = vpop.permute.xlu0 %929
        %s932 = sor.u32 256, 16
        %933 = vbcast.lane.b32.xlu0 %v923, %s932
        %v934 = vpop.permute.xlu0 %933
        %s936 = sor.u32 256, 24
        %937 = vbcast.lane.b32.xlu0 %v923, %s936
        %v938 = vpop.permute.xlu0 %937
        %v939 = vlaneseq
        %v940 = vshrl.u32 %v939, 7
        %v941 = vsub.s32 6, %v940
        %v942 = vrot.slane %v817, %v941
        %944 = vbcast.lane.b32.xlu0 %v942, 256
        %v945 = vpop.permute.xlu0 %944
        %s947 = sor.u32 256, 8
        %948 = vbcast.lane.b32.xlu0 %v942, %s947
        %v949 = vpop.permute.xlu0 %948
        %s951 = sor.u32 256, 16
        %952 = vbcast.lane.b32.xlu0 %v942, %s951
        %v953 = vpop.permute.xlu0 %952
        %s955 = sor.u32 256, 24
        %956 = vbcast.lane.b32.xlu0 %v942, %s955
        %v957 = vpop.permute.xlu0 %956
        %v958 = vlaneseq
        %v959 = vshrl.u32 %v958, 7
        %v960 = vsub.s32 7, %v959
        %v961 = vrot.slane %v817, %v960
        %963 = vbcast.lane.b32.xlu0 %v961, 256
        %v964 = vpop.permute.xlu0 %963
        %s966 = sor.u32 256, 8
        %967 = vbcast.lane.b32.xlu0 %v961, %s966
        %v968 = vpop.permute.xlu0 %967
        %s970 = sor.u32 256, 16
        %971 = vbcast.lane.b32.xlu0 %v961, %s970
        %v972 = vpop.permute.xlu0 %971
        %s974 = sor.u32 256, 24
        %975 = vbcast.lane.b32.xlu0 %v961, %s974
        %v976 = vpop.permute.xlu0 %975
        %v977 = vlaneseq
        %v978 = vshrl.u32 %v977, 7
        %v979 = vsub.s32 0, %v978
        %v980 = vrot.slane %v822, %v979
        %982 = vbcast.lane.b32.xlu0 %v980, 256
        %v983 = vpop.permute.xlu0 %982
        %s985 = sor.u32 256, 8
        %986 = vbcast.lane.b32.xlu0 %v980, %s985
        %v987 = vpop.permute.xlu0 %986
        %s989 = sor.u32 256, 16
        %990 = vbcast.lane.b32.xlu0 %v980, %s989
        %v991 = vpop.permute.xlu0 %990
        %s993 = sor.u32 256, 24
        %994 = vbcast.lane.b32.xlu0 %v980, %s993
        %v995 = vpop.permute.xlu0 %994
        %v996 = vlaneseq
        %v997 = vshrl.u32 %v996, 7
        %v998 = vsub.s32 1, %v997
        %v999 = vrot.slane %v822, %v998
        %1001 = vbcast.lane.b32.xlu0 %v999, 256
        %v1002 = vpop.permute.xlu0 %1001
        %s1004 = sor.u32 256, 8
        %1005 = vbcast.lane.b32.xlu0 %v999, %s1004
        %v1006 = vpop.permute.xlu0 %1005
        %s1008 = sor.u32 256, 16
        %1009 = vbcast.lane.b32.xlu0 %v999, %s1008
        %v1010 = vpop.permute.xlu0 %1009
        %s1012 = sor.u32 256, 24
        %1013 = vbcast.lane.b32.xlu0 %v999, %s1012
        %v1014 = vpop.permute.xlu0 %1013
        %v1015 = vlaneseq
        %v1016 = vshrl.u32 %v1015, 7
        %v1017 = vsub.s32 2, %v1016
        %v1018 = vrot.slane %v822, %v1017
        %1020 = vbcast.lane.b32.xlu0 %v1018, 256
        %v1021 = vpop.permute.xlu0 %1020
        %s1023 = sor.u32 256, 8
        %1024 = vbcast.lane.b32.xlu0 %v1018, %s1023
        %v1025 = vpop.permute.xlu0 %1024
        %s1027 = sor.u32 256, 16
        %1028 = vbcast.lane.b32.xlu0 %v1018, %s1027
        %v1029 = vpop.permute.xlu0 %1028
        %s1031 = sor.u32 256, 24
        %1032 = vbcast.lane.b32.xlu0 %v1018, %s1031
        %v1033 = vpop.permute.xlu0 %1032
        %v1034 = vlaneseq
        %v1035 = vshrl.u32 %v1034, 7
        %v1036 = vsub.s32 3, %v1035
        %v1037 = vrot.slane %v822, %v1036
        %1039 = vbcast.lane.b32.xlu0 %v1037, 256
        %v1040 = vpop.permute.xlu0 %1039
        %s1042 = sor.u32 256, 8
        %1043 = vbcast.lane.b32.xlu0 %v1037, %s1042
        %v1044 = vpop.permute.xlu0 %1043
        %s1046 = sor.u32 256, 16
        %1047 = vbcast.lane.b32.xlu0 %v1037, %s1046
        %v1048 = vpop.permute.xlu0 %1047
        %s1050 = sor.u32 256, 24
        %1051 = vbcast.lane.b32.xlu0 %v1037, %s1050
        %v1052 = vpop.permute.xlu0 %1051
        %v1053 = vlaneseq
        %v1054 = vshrl.u32 %v1053, 7
        %v1055 = vsub.s32 4, %v1054
        %v1056 = vrot.slane %v822, %v1055
        %1058 = vbcast.lane.b32.xlu0 %v1056, 256
        %v1059 = vpop.permute.xlu0 %1058
        %s1061 = sor.u32 256, 8
        %1062 = vbcast.lane.b32.xlu0 %v1056, %s1061
        %v1063 = vpop.permute.xlu0 %1062
        %s1065 = sor.u32 256, 16
        %1066 = vbcast.lane.b32.xlu0 %v1056, %s1065
        %v1067 = vpop.permute.xlu0 %1066
        %s1069 = sor.u32 256, 24
        %1070 = vbcast.lane.b32.xlu0 %v1056, %s1069
        %v1071 = vpop.permute.xlu0 %1070
        %v1072 = vlaneseq
        %v1073 = vshrl.u32 %v1072, 7
        %v1074 = vsub.s32 5, %v1073
        %v1075 = vrot.slane %v822, %v1074
        %1077 = vbcast.lane.b32.xlu0 %v1075, 256
        %v1078 = vpop.permute.xlu0 %1077
        %s1080 = sor.u32 256, 8
        %1081 = vbcast.lane.b32.xlu0 %v1075, %s1080
        %v1082 = vpop.permute.xlu0 %1081
        %s1084 = sor.u32 256, 16
        %1085 = vbcast.lane.b32.xlu0 %v1075, %s1084
        %v1086 = vpop.permute.xlu0 %1085
        %s1088 = sor.u32 256, 24
        %1089 = vbcast.lane.b32.xlu0 %v1075, %s1088
        %v1090 = vpop.permute.xlu0 %1089
        %v1091 = vlaneseq
        %v1092 = vshrl.u32 %v1091, 7
        %v1093 = vsub.s32 6, %v1092
        %v1094 = vrot.slane %v822, %v1093
        %1096 = vbcast.lane.b32.xlu0 %v1094, 256
        %v1097 = vpop.permute.xlu0 %1096
        %s1099 = sor.u32 256, 8
        %1100 = vbcast.lane.b32.xlu0 %v1094, %s1099
        %v1101 = vpop.permute.xlu0 %1100
        %s1103 = sor.u32 256, 16
        %1104 = vbcast.lane.b32.xlu0 %v1094, %s1103
        %v1105 = vpop.permute.xlu0 %1104
        %s1107 = sor.u32 256, 24
        %1108 = vbcast.lane.b32.xlu0 %v1094, %s1107
        %v1109 = vpop.permute.xlu0 %1108
        %v1110 = vlaneseq
        %v1111 = vshrl.u32 %v1110, 7
        %v1112 = vsub.s32 7, %v1111
        %v1113 = vrot.slane %v822, %v1112
        %1115 = vbcast.lane.b32.xlu0 %v1113, 256
        %v1116 = vpop.permute.xlu0 %1115
        %s1118 = sor.u32 256, 8
        %1119 = vbcast.lane.b32.xlu0 %v1113, %s1118
        %v1120 = vpop.permute.xlu0 %1119
        %s1122 = sor.u32 256, 16
        %1123 = vbcast.lane.b32.xlu0 %v1113, %s1122
        %v1124 = vpop.permute.xlu0 %1123
        %s1126 = sor.u32 256, 24
        %1127 = vbcast.lane.b32.xlu0 %v1113, %s1126
        %v1128 = vpop.permute.xlu0 %1127
        %vm1129 = vcmask 523264
        %v1131 = vsel %vm1129, %v659, 0
        %v1134 = vsel %vm1129, %v660, 0
        %v1137 = vsel %vm1129, %v661, 0
        %v1140 = vsel %vm1129, %v662, 0
        %v1143 = vsel %vm1129, %v663, 0
        %v1146 = vsel %vm1129, %v664, 0
        %v1149 = vsel %vm1129, %v665, 0
        %v1152 = vsel %vm1129, %v666, 0
        %1154 = vmatprep.subr.mxu0 0.0
        %1155 = vmatpush1.msra.mxu0 %v831
        %1156 = vmatprep.subr.mxu0 0.0
        %1157 = vmatpush1.msra.mxu0 %v835
        %1158 = vmatprep.subr.mxu0 0.0
        %1159 = vmatpush1.msra.mxu0 %v839
        %1160 = vmatprep.subr.mxu0 0.0
        %1161 = vmatpush1.msra.mxu0 %v843
        %1162 = vmatprep.subr.mxu0 0.0
        %1163 = vmatpush1.msra.mxu0 %v983
        %1164 = vmatprep.subr.mxu0 0.0
        %1165 = vmatpush1.msra.mxu0 %v987
        %1166 = vmatprep.subr.mxu0 0.0
        %1167 = vmatpush1.msra.mxu0 %v991
        %1168 = vmatprep.subr.mxu0 0.0
        %1169 = vmatpush1.msra.mxu0 %v995
        %1170 = vmatprep.subr.mxu0 0.0
        %1171 = vmatpush1.msra.mxu0 0.0
        %1172 = vmatprep.subr.mxu0 0.0
        %1173 = vmatpush1.msra.mxu0 0.0
        %1174 = vmatprep.subr.mxu0 0.0
        %1175 = vmatpush1.msra.mxu0 0.0
        %1176 = vmatprep.subr.mxu0 0.0
        %1177 = vmatpush1.msra.mxu0 0.0
        %1178 = vmatprep.subr.mxu0 0.0
        %1179 = vmatpush1.msra.mxu0 0.0
        %1180 = vmatprep.subr.mxu0 0.0
        %1181 = vmatpush1.msra.mxu0 0.0
        %1182 = vmatprep.subr.mxu0 0.0
        %1183 = vmatpush1.msra.mxu0 0.0
        %1184 = vmatprep.subr.mxu0 0.0
        %1185 = vmatpush1.msra.mxu0 0.0
        %1186 = vmatprep.subr.mxu0 0.0
        %1187 = vmatpush1.msra.mxu0 0.0
        %1188 = vmatprep.subr.mxu0 0.0
        %1189 = vmatpush1.msra.mxu0 0.0
        %1190 = vmatprep.subr.mxu0 0.0
        %1191 = vmatpush1.msra.mxu0 0.0
        %1192 = vmatprep.subr.mxu0 0.0
        %1193 = vmatpush1.msra.mxu0 0.0
        %1194 = vmatprep.subr.mxu0 0.0
        %1195 = vmatpush1.msra.mxu0 0.0
        %1196 = vmatprep.subr.mxu0 0.0
        %1197 = vmatpush1.msra.mxu0 0.0
        %1198 = vmatprep.subr.mxu0 0.0
        %1199 = vmatpush1.msra.mxu0 0.0
        %1200 = vmatprep.subr.mxu0 0.0
        %1201 = vmatpush1.msra.mxu0 0.0
        %1202 = vmatprep.subr.mxu0 0.0
        %1203 = vmatpush1.msra.mxu0 0.0
        %1204 = vmatprep.subr.mxu0 0.0
        %1205 = vmatpush1.msra.mxu0 0.0
        %1206 = vmatprep.subr.mxu0 0.0
        %1207 = vmatpush1.msra.mxu0 0.0
        %1208 = vmatprep.subr.mxu0 0.0
        %1209 = vmatpush1.msra.mxu0 0.0
        %1210 = vmatprep.subr.mxu0 0.0
        %1211 = vmatpush1.msra.mxu0 0.0
        %1212 = vmatprep.subr.mxu0 0.0
        %1213 = vmatpush1.msra.mxu0 0.0
        %1214 = vmatprep.subr.mxu0 0.0
        %1215 = vmatpush1.msra.mxu0 0.0
        %1216 = vmatprep.subr.mxu0 0.0
        %1217 = vmatpush1.msra.mxu0 0.0
        %1218 = vmatprep.mubr.f32.mxu0 0.0
        %1219 = vmatmul.mubr.f32.gmra.mrb[0].mxu0 %v1131
        %v1220 = vpop.f32.mrb[0].mxu0
        %v1221 = vadd.f32 0.0, %v1220
        %v1222 = vpop.f32.mrb[0].mxu0
        %1223 = vmatprep.mubr.f32.mxu0 0.0
        %1224 = vmatmul.mubr.f32.gmra.mrb[0].mxu0 %v1134
        %v1225 = vpop.f32.mrb[0].mxu0
        %v1226 = vadd.f32 0.0, %v1225
        %v1227 = vpop.f32.mrb[0].mxu0
        %1228 = vmatprep.mubr.f32.mxu0 0.0
        %1229 = vmatmul.mubr.f32.gmra.mrb[0].mxu0 %v1137
        %v1230 = vpop.f32.mrb[0].mxu0
        %v1231 = vadd.f32 0.0, %v1230
        %v1232 = vpop.f32.mrb[0].mxu0
        %1233 = vmatprep.mubr.f32.mxu0 0.0
        %1234 = vmatmul.mubr.f32.gmra.mrb[0].mxu0 %v1140
        %v1235 = vpop.f32.mrb[0].mxu0
        %v1236 = vadd.f32 0.0, %v1235
        %v1237 = vpop.f32.mrb[0].mxu0
        %1238 = vmatprep.mubr.f32.mxu0 0.0
        %1239 = vmatmul.mubr.f32.gmra.mrb[0].mxu0 %v1143
        %v1240 = vpop.f32.mrb[0].mxu0
        %v1241 = vadd.f32 0.0, %v1240
        %v1242 = vpop.f32.mrb[0].mxu0
        %1243 = vmatprep.mubr.f32.mxu0 0.0
        %1244 = vmatmul.mubr.f32.gmra.mrb[0].mxu0 %v1146
        %v1245 = vpop.f32.mrb[0].mxu0
        %v1246 = vadd.f32 0.0, %v1245
        %v1247 = vpop.f32.mrb[0].mxu0
        %1248 = vmatprep.mubr.f32.mxu0 0.0
        %1249 = vmatmul.mubr.f32.gmra.mrb[0].mxu0 %v1149
        %v1250 = vpop.f32.mrb[0].mxu0
        %v1251 = vadd.f32 0.0, %v1250
        %v1252 = vpop.f32.mrb[0].mxu0
        %1253 = vmatprep.mubr.f32.mxu0 0.0
        %1254 = vmatmul.mubr.f32.gmra.mrb[0].mxu0 %v1152
        %v1255 = vpop.f32.mrb[0].mxu0
        %v1256 = vadd.f32 0.0, %v1255
        %v1257 = vpop.f32.mrb[0].mxu0
        %1258 = vdwg.mxu0
        %v1260 = vsel %vm1129, %v667, 0
        %v1263 = vsel %vm1129, %v668, 0
        %v1266 = vsel %vm1129, %v669, 0
        %v1269 = vsel %vm1129, %v670, 0
        %v1272 = vsel %vm1129, %v671, 0
        %v1275 = vsel %vm1129, %v672, 0
        %v1278 = vsel %vm1129, %v673, 0
        %v1281 = vsel %vm1129, %v674, 0
        %1283 = vmatprep.subr.mxu0 0.0
        %1284 = vmatpush1.msra.mxu0 %v850
        %1285 = vmatprep.subr.mxu0 0.0
        %1286 = vmatpush1.msra.mxu0 %v854
        %1287 = vmatprep.subr.mxu0 0.0
        %1288 = vmatpush1.msra.mxu0 %v858
        %1289 = vmatprep.subr.mxu0 0.0
        %1290 = vmatpush1.msra.mxu0 %v862
        %1291 = vmatprep.subr.mxu0 0.0
        %1292 = vmatpush1.msra.mxu0 %v1002
        %1293 = vmatprep.subr.mxu0 0.0
        %1294 = vmatpush1.msra.mxu0 %v1006
        %1295 = vmatprep.subr.mxu0 0.0
        %1296 = vmatpush1.msra.mxu0 %v1010
        %1297 = vmatprep.subr.mxu0 0.0
        %1298 = vmatpush1.msra.mxu0 %v1014
        %1299 = vmatprep.subr.mxu0 0.0
        %1300 = vmatpush1.msra.mxu0 0.0
        %1301 = vmatprep.subr.mxu0 0.0
        %1302 = vmatpush1.msra.mxu0 0.0
        %1303 = vmatprep.subr.mxu0 0.0
        %1304 = vmatpush1.msra.mxu0 0.0
        %1305 = vmatprep.subr.mxu0 0.0
        %1306 = vmatpush1.msra.mxu0 0.0
        %1307 = vmatprep.subr.mxu0 0.0
        %1308 = vmatpush1.msra.mxu0 0.0
        %1309 = vmatprep.subr.mxu0 0.0
        %1310 = vmatpush1.msra.mxu0 0.0
        %1311 = vmatprep.subr.mxu0 0.0
        %1312 = vmatpush1.msra.mxu0 0.0
        %1313 = vmatprep.subr.mxu0 0.0
        %1314 = vmatpush1.msra.mxu0 0.0
        %1315 = vmatprep.subr.mxu0 0.0
        %1316 = vmatpush1.msra.mxu0 0.0
        %1317 = vmatprep.subr.mxu0 0.0
        %1318 = vmatpush1.msra.mxu0 0.0
        %1319 = vmatprep.subr.mxu0 0.0
        %1320 = vmatpush1.msra.mxu0 0.0
        %1321 = vmatprep.subr.mxu0 0.0
        %1322 = vmatpush1.msra.mxu0 0.0
        %1323 = vmatprep.subr.mxu0 0.0
        %1324 = vmatpush1.msra.mxu0 0.0
        %1325 = vmatprep.subr.mxu0 0.0
        %1326 = vmatpush1.msra.mxu0 0.0
        %1327 = vmatprep.subr.mxu0 0.0
        %1328 = vmatpush1.msra.mxu0 0.0
        %1329 = vmatprep.subr.mxu0 0.0
        %1330 = vmatpush1.msra.mxu0 0.0
        %1331 = vmatprep.subr.mxu0 0.0
        %1332 = vmatpush1.msra.mxu0 0.0
        %1333 = vmatprep.subr.mxu0 0.0
        %1334 = vmatpush1.msra.mxu0 0.0
        %1335 = vmatprep.subr.mxu0 0.0
        %1336 = vmatpush1.msra.mxu0 0.0
        %1337 = vmatprep.subr.mxu0 0.0
        %1338 = vmatpush1.msra.mxu0 0.0
        %1339 = vmatprep.subr.mxu0 0.0
        %1340 = vmatpush1.msra.mxu0 0.0
        %1341 = vmatprep.subr.mxu0 0.0
        %1342 = vmatpush1.msra.mxu0 0.0
        %1343 = vmatprep.subr.mxu0 0.0
        %1344 = vmatpush1.msra.mxu0 0.0
        %1345 = vmatprep.subr.mxu0 0.0
        %1346 = vmatpush1.msra.mxu0 0.0
        %1347 = vmatprep.mubr.f32.mxu0 0.0
        %1348 = vmatmul.mubr.f32.gmra.mrb[0].mxu0 %v1260
        %v1349 = vpop.f32.mrb[0].mxu0
        %v1350 = vadd.f32 0.0, %v1349
        %v1351 = vpop.f32.mrb[0].mxu0
        %1352 = vmatprep.mubr.f32.mxu0 0.0
        %1353 = vmatmul.mubr.f32.gmra.mrb[0].mxu0 %v1263
        %v1354 = vpop.f32.mrb[0].mxu0
        %v1355 = vadd.f32 0.0, %v1354
        %v1356 = vpop.f32.mrb[0].mxu0
        %1357 = vmatprep.mubr.f32.mxu0 0.0
        %1358 = vmatmul.mubr.f32.gmra.mrb[0].mxu0 %v1266
        %v1359 = vpop.f32.mrb[0].mxu0
        %v1360 = vadd.f32 0.0, %v1359
        %v1361 = vpop.f32.mrb[0].mxu0
        %1362 = vmatprep.mubr.f32.mxu0 0.0
        %1363 = vmatmul.mubr.f32.gmra.mrb[0].mxu0 %v1269
        %v1364 = vpop.f32.mrb[0].mxu0
        %v1365 = vadd.f32 0.0, %v1364
        %v1366 = vpop.f32.mrb[0].mxu0
        %1367 = vmatprep.mubr.f32.mxu0 0.0
        %1368 = vmatmul.mubr.f32.gmra.mrb[0].mxu0 %v1272
        %v1369 = vpop.f32.mrb[0].mxu0
        %v1370 = vadd.f32 0.0, %v1369
        %v1371 = vpop.f32.mrb[0].mxu0
        %1372 = vmatprep.mubr.f32.mxu0 0.0
        %1373 = vmatmul.mubr.f32.gmra.mrb[0].mxu0 %v1275
        %v1374 = vpop.f32.mrb[0].mxu0
        %v1375 = vadd.f32 0.0, %v1374
        %v1376 = vpop.f32.mrb[0].mxu0
        %1377 = vmatprep.mubr.f32.mxu0 0.0
        %1378 = vmatmul.mubr.f32.gmra.mrb[0].mxu0 %v1278
        %v1379 = vpop.f32.mrb[0].mxu0
        %v1380 = vadd.f32 0.0, %v1379
        %v1381 = vpop.f32.mrb[0].mxu0
        %1382 = vmatprep.mubr.f32.mxu0 0.0
        %1383 = vmatmul.mubr.f32.gmra.mrb[0].mxu0 %v1281
        %v1384 = vpop.f32.mrb[0].mxu0
        %v1385 = vadd.f32 0.0, %v1384
        %v1386 = vpop.f32.mrb[0].mxu0
        %1387 = vdwg.mxu0
        %v1389 = vsel %vm1129, %v675, 0
        %v1392 = vsel %vm1129, %v676, 0
        %v1395 = vsel %vm1129, %v677, 0
        %v1398 = vsel %vm1129, %v678, 0
        %v1401 = vsel %vm1129, %v679, 0
        %v1404 = vsel %vm1129, %v680, 0
        %v1407 = vsel %vm1129, %v681, 0
        %v1410 = vsel %vm1129, %v682, 0
        %1412 = vmatprep.subr.mxu0 0.0
        %1413 = vmatpush1.msra.mxu0 %v869
        %1414 = vmatprep.subr.mxu0 0.0
        %1415 = vmatpush1.msra.mxu0 %v873
        %1416 = vmatprep.subr.mxu0 0.0
        %1417 = vmatpush1.msra.mxu0 %v877
        %1418 = vmatprep.subr.mxu0 0.0
        %1419 = vmatpush1.msra.mxu0 %v881
        %1420 = vmatprep.subr.mxu0 0.0
        %1421 = vmatpush1.msra.mxu0 %v1021
        %1422 = vmatprep.subr.mxu0 0.0
        %1423 = vmatpush1.msra.mxu0 %v1025
        %1424 = vmatprep.subr.mxu0 0.0
        %1425 = vmatpush1.msra.mxu0 %v1029
        %1426 = vmatprep.subr.mxu0 0.0
        %1427 = vmatpush1.msra.mxu0 %v1033
        %1428 = vmatprep.subr.mxu0 0.0
        %1429 = vmatpush1.msra.mxu0 0.0
        %1430 = vmatprep.subr.mxu0 0.0
        %1431 = vmatpush1.msra.mxu0 0.0
        %1432 = vmatprep.subr.mxu0 0.0
        %1433 = vmatpush1.msra.mxu0 0.0
        %1434 = vmatprep.subr.mxu0 0.0
        %1435 = vmatpush1.msra.mxu0 0.0
        %1436 = vmatprep.subr.mxu0 0.0
        %1437 = vmatpush1.msra.mxu0 0.0
        %1438 = vmatprep.subr.mxu0 0.0
        %1439 = vmatpush1.msra.mxu0 0.0
        %1440 = vmatprep.subr.mxu0 0.0
        %1441 = vmatpush1.msra.mxu0 0.0
        %1442 = vmatprep.subr.mxu0 0.0
        %1443 = vmatpush1.msra.mxu0 0.0
        %1444 = vmatprep.subr.mxu0 0.0
        %1445 = vmatpush1.msra.mxu0 0.0
        %1446 = vmatprep.subr.mxu0 0.0
        %1447 = vmatpush1.msra.mxu0 0.0
        %1448 = vmatprep.subr.mxu0 0.0
        %1449 = vmatpush1.msra.mxu0 0.0
        %1450 = vmatprep.subr.mxu0 0.0
        %1451 = vmatpush1.msra.mxu0 0.0
        %1452 = vmatprep.subr.mxu0 0.0
        %1453 = vmatpush1.msra.mxu0 0.0
        %1454 = vmatprep.subr.mxu0 0.0
        %1455 = vmatpush1.msra.mxu0 0.0
        %1456 = vmatprep.subr.mxu0 0.0
        %1457 = vmatpush1.msra.mxu0 0.0
        %1458 = vmatprep.subr.mxu0 0.0
        %1459 = vmatpush1.msra.mxu0 0.0
        %1460 = vmatprep.subr.mxu0 0.0
        %1461 = vmatpush1.msra.mxu0 0.0
        %1462 = vmatprep.subr.mxu0 0.0
        %1463 = vmatpush1.msra.mxu0 0.0
        %1464 = vmatprep.subr.mxu0 0.0
        %1465 = vmatpush1.msra.mxu0 0.0
        %1466 = vmatprep.subr.mxu0 0.0
        %1467 = vmatpush1.msra.mxu0 0.0
        %1468 = vmatprep.subr.mxu0 0.0
        %1469 = vmatpush1.msra.mxu0 0.0
        %1470 = vmatprep.subr.mxu0 0.0
        %1471 = vmatpush1.msra.mxu0 0.0
        %1472 = vmatprep.subr.mxu0 0.0
        %1473 = vmatpush1.msra.mxu0 0.0
        %1474 = vmatprep.subr.mxu0 0.0
        %1475 = vmatpush1.msra.mxu0 0.0
        %1476 = vmatprep.mubr.f32.mxu0 0.0
        %1477 = vmatmul.mubr.f32.gmra.mrb[0].mxu0 %v1389
        %v1478 = vpop.f32.mrb[0].mxu0
        %v1479 = vadd.f32 0.0, %v1478
        %v1480 = vpop.f32.mrb[0].mxu0
        %1481 = vmatprep.mubr.f32.mxu0 0.0
        %1482 = vmatmul.mubr.f32.gmra.mrb[0].mxu0 %v1392
        %v1483 = vpop.f32.mrb[0].mxu0
        %v1484 = vadd.f32 0.0, %v1483
        %v1485 = vpop.f32.mrb[0].mxu0
        %1486 = vmatprep.mubr.f32.mxu0 0.0
        %1487 = vmatmul.mubr.f32.gmra.mrb[0].mxu0 %v1395
        %v1488 = vpop.f32.mrb[0].mxu0
        %v1489 = vadd.f32 0.0, %v1488
        %v1490 = vpop.f32.mrb[0].mxu0
        %1491 = vmatprep.mubr.f32.mxu0 0.0
        %1492 = vmatmul.mubr.f32.gmra.mrb[0].mxu0 %v1398
        %v1493 = vpop.f32.mrb[0].mxu0
        %v1494 = vadd.f32 0.0, %v1493
        %v1495 = vpop.f32.mrb[0].mxu0
        %1496 = vmatprep.mubr.f32.mxu0 0.0
        %1497 = vmatmul.mubr.f32.gmra.mrb[0].mxu0 %v1401
        %v1498 = vpop.f32.mrb[0].mxu0
        %v1499 = vadd.f32 0.0, %v1498
        %v1500 = vpop.f32.mrb[0].mxu0
        %1501 = vmatprep.mubr.f32.mxu0 0.0
        %1502 = vmatmul.mubr.f32.gmra.mrb[0].mxu0 %v1404
        %v1503 = vpop.f32.mrb[0].mxu0
        %v1504 = vadd.f32 0.0, %v1503
        %v1505 = vpop.f32.mrb[0].mxu0
        %1506 = vmatprep.mubr.f32.mxu0 0.0
        %1507 = vmatmul.mubr.f32.gmra.mrb[0].mxu0 %v1407
        %v1508 = vpop.f32.mrb[0].mxu0
        %v1509 = vadd.f32 0.0, %v1508
        %v1510 = vpop.f32.mrb[0].mxu0
        %1511 = vmatprep.mubr.f32.mxu0 0.0
        %1512 = vmatmul.mubr.f32.gmra.mrb[0].mxu0 %v1410
        %v1513 = vpop.f32.mrb[0].mxu0
        %v1514 = vadd.f32 0.0, %v1513
        %v1515 = vpop.f32.mrb[0].mxu0
        %1516 = vdwg.mxu0
        %v1518 = vsel %vm1129, %v683, 0
        %v1521 = vsel %vm1129, %v684, 0
        %v1524 = vsel %vm1129, %v685, 0
        %v1527 = vsel %vm1129, %v686, 0
        %v1530 = vsel %vm1129, %v687, 0
        %v1533 = vsel %vm1129, %v688, 0
        %v1536 = vsel %vm1129, %v689, 0
        %v1539 = vsel %vm1129, %v690, 0
        %1541 = vmatprep.subr.mxu0 0.0
        %1542 = vmatpush1.msra.mxu0 %v888
        %1543 = vmatprep.subr.mxu0 0.0
        %1544 = vmatpush1.msra.mxu0 %v892
        %1545 = vmatprep.subr.mxu0 0.0
        %1546 = vmatpush1.msra.mxu0 %v896
        %1547 = vmatprep.subr.mxu0 0.0
        %1548 = vmatpush1.msra.mxu0 %v900
        %1549 = vmatprep.subr.mxu0 0.0
        %1550 = vmatpush1.msra.mxu0 %v1040
        %1551 = vmatprep.subr.mxu0 0.0
        %1552 = vmatpush1.msra.mxu0 %v1044
        %1553 = vmatprep.subr.mxu0 0.0
        %1554 = vmatpush1.msra.mxu0 %v1048
        %1555 = vmatprep.subr.mxu0 0.0
        %1556 = vmatpush1.msra.mxu0 %v1052
        %1557 = vmatprep.subr.mxu0 0.0
        %1558 = vmatpush1.msra.mxu0 0.0
        %1559 = vmatprep.subr.mxu0 0.0
        %1560 = vmatpush1.msra.mxu0 0.0
        %1561 = vmatprep.subr.mxu0 0.0
        %1562 = vmatpush1.msra.mxu0 0.0
        %1563 = vmatprep.subr.mxu0 0.0
        %1564 = vmatpush1.msra.mxu0 0.0
        %1565 = vmatprep.subr.mxu0 0.0
        %1566 = vmatpush1.msra.mxu0 0.0
        %1567 = vmatprep.subr.mxu0 0.0
        %1568 = vmatpush1.msra.mxu0 0.0
        %1569 = vmatprep.subr.mxu0 0.0
        %1570 = vmatpush1.msra.mxu0 0.0
        %1571 = vmatprep.subr.mxu0 0.0
        %1572 = vmatpush1.msra.mxu0 0.0
        %1573 = vmatprep.subr.mxu0 0.0
        %1574 = vmatpush1.msra.mxu0 0.0
        %1575 = vmatprep.subr.mxu0 0.0
        %1576 = vmatpush1.msra.mxu0 0.0
        %1577 = vmatprep.subr.mxu0 0.0
        %1578 = vmatpush1.msra.mxu0 0.0
        %1579 = vmatprep.subr.mxu0 0.0
        %1580 = vmatpush1.msra.mxu0 0.0
        %1581 = vmatprep.subr.mxu0 0.0
        %1582 = vmatpush1.msra.mxu0 0.0
        %1583 = vmatprep.subr.mxu0 0.0
        %1584 = vmatpush1.msra.mxu0 0.0
        %1585 = vmatprep.subr.mxu0 0.0
        %1586 = vmatpush1.msra.mxu0 0.0
        %1587 = vmatprep.subr.mxu0 0.0
        %1588 = vmatpush1.msra.mxu0 0.0
        %1589 = vmatprep.subr.mxu0 0.0
        %1590 = vmatpush1.msra.mxu0 0.0
        %1591 = vmatprep.subr.mxu0 0.0
        %1592 = vmatpush1.msra.mxu0 0.0
        %1593 = vmatprep.subr.mxu0 0.0
        %1594 = vmatpush1.msra.mxu0 0.0
        %1595 = vmatprep.subr.mxu0 0.0
        %1596 = vmatpush1.msra.mxu0 0.0
        %1597 = vmatprep.subr.mxu0 0.0
        %1598 = vmatpush1.msra.mxu0 0.0
        %1599 = vmatprep.subr.mxu0 0.0
        %1600 = vmatpush1.msra.mxu0 0.0
        %1601 = vmatprep.subr.mxu0 0.0
        %1602 = vmatpush1.msra.mxu0 0.0
        %1603 = vmatprep.subr.mxu0 0.0
        %1604 = vmatpush1.msra.mxu0 0.0
        %1605 = vmatprep.mubr.f32.mxu0 0.0
        %1606 = vmatmul.mubr.f32.gmra.mrb[0].mxu0 %v1518
        %v1607 = vpop.f32.mrb[0].mxu0
        %v1608 = vadd.f32 0.0, %v1607
        %v1609 = vpop.f32.mrb[0].mxu0
        %1610 = vmatprep.mubr.f32.mxu0 0.0
        %1611 = vmatmul.mubr.f32.gmra.mrb[0].mxu0 %v1521
        %v1612 = vpop.f32.mrb[0].mxu0
        %v1613 = vadd.f32 0.0, %v1612
        %v1614 = vpop.f32.mrb[0].mxu0
        %1615 = vmatprep.mubr.f32.mxu0 0.0
        %1616 = vmatmul.mubr.f32.gmra.mrb[0].mxu0 %v1524
        %v1617 = vpop.f32.mrb[0].mxu0
        %v1618 = vadd.f32 0.0, %v1617
        %v1619 = vpop.f32.mrb[0].mxu0
        %1620 = vmatprep.mubr.f32.mxu0 0.0
        %1621 = vmatmul.mubr.f32.gmra.mrb[0].mxu0 %v1527
        %v1622 = vpop.f32.mrb[0].mxu0
        %v1623 = vadd.f32 0.0, %v1622
        %v1624 = vpop.f32.mrb[0].mxu0
        %1625 = vmatprep.mubr.f32.mxu0 0.0
        %1626 = vmatmul.mubr.f32.gmra.mrb[0].mxu0 %v1530
        %v1627 = vpop.f32.mrb[0].mxu0
        %v1628 = vadd.f32 0.0, %v1627
        %v1629 = vpop.f32.mrb[0].mxu0
        %1630 = vmatprep.mubr.f32.mxu0 0.0
        %1631 = vmatmul.mubr.f32.gmra.mrb[0].mxu0 %v1533
        %v1632 = vpop.f32.mrb[0].mxu0
        %v1633 = vadd.f32 0.0, %v1632
        %v1634 = vpop.f32.mrb[0].mxu0
        %1635 = vmatprep.mubr.f32.mxu0 0.0
        %1636 = vmatmul.mubr.f32.gmra.mrb[0].mxu0 %v1536
        %v1637 = vpop.f32.mrb[0].mxu0
        %v1638 = vadd.f32 0.0, %v1637
        %v1639 = vpop.f32.mrb[0].mxu0
        %1640 = vmatprep.mubr.f32.mxu0 0.0
        %1641 = vmatmul.mubr.f32.gmra.mrb[0].mxu0 %v1539
        %v1642 = vpop.f32.mrb[0].mxu0
        %v1643 = vadd.f32 0.0, %v1642
        %v1644 = vpop.f32.mrb[0].mxu0
        %1645 = vdwg.mxu0
        %v1647 = vsel %vm1129, %v691, 0
        %v1650 = vsel %vm1129, %v692, 0
        %v1653 = vsel %vm1129, %v693, 0
        %v1656 = vsel %vm1129, %v694, 0
        %v1659 = vsel %vm1129, %v695, 0
        %v1662 = vsel %vm1129, %v696, 0
        %v1665 = vsel %vm1129, %v697, 0
        %v1668 = vsel %vm1129, %v698, 0
        %1670 = vmatprep.subr.mxu0 0.0
        %1671 = vmatpush1.msra.mxu0 %v907
        %1672 = vmatprep.subr.mxu0 0.0
        %1673 = vmatpush1.msra.mxu0 %v911
        %1674 = vmatprep.subr.mxu0 0.0
        %1675 = vmatpush1.msra.mxu0 %v915
        %1676 = vmatprep.subr.mxu0 0.0
        %1677 = vmatpush1.msra.mxu0 %v919
        %1678 = vmatprep.subr.mxu0 0.0
        %1679 = vmatpush1.msra.mxu0 %v1059
        %1680 = vmatprep.subr.mxu0 0.0
        %1681 = vmatpush1.msra.mxu0 %v1063
        %1682 = vmatprep.subr.mxu0 0.0
        %1683 = vmatpush1.msra.mxu0 %v1067
        %1684 = vmatprep.subr.mxu0 0.0
        %1685 = vmatpush1.msra.mxu0 %v1071
        %1686 = vmatprep.subr.mxu0 0.0
        %1687 = vmatpush1.msra.mxu0 0.0
        %1688 = vmatprep.subr.mxu0 0.0
        %1689 = vmatpush1.msra.mxu0 0.0
        %1690 = vmatprep.subr.mxu0 0.0
        %1691 = vmatpush1.msra.mxu0 0.0
        %1692 = vmatprep.subr.mxu0 0.0
        %1693 = vmatpush1.msra.mxu0 0.0
        %1694 = vmatprep.subr.mxu0 0.0
        %1695 = vmatpush1.msra.mxu0 0.0
        %1696 = vmatprep.subr.mxu0 0.0
        %1697 = vmatpush1.msra.mxu0 0.0
        %1698 = vmatprep.subr.mxu0 0.0
        %1699 = vmatpush1.msra.mxu0 0.0
        %1700 = vmatprep.subr.mxu0 0.0
        %1701 = vmatpush1.msra.mxu0 0.0
        %1702 = vmatprep.subr.mxu0 0.0
        %1703 = vmatpush1.msra.mxu0 0.0
        %1704 = vmatprep.subr.mxu0 0.0
        %1705 = vmatpush1.msra.mxu0 0.0
        %1706 = vmatprep.subr.mxu0 0.0
        %1707 = vmatpush1.msra.mxu0 0.0
        %1708 = vmatprep.subr.mxu0 0.0
        %1709 = vmatpush1.msra.mxu0 0.0
        %1710 = vmatprep.subr.mxu0 0.0
        %1711 = vmatpush1.msra.mxu0 0.0
        %1712 = vmatprep.subr.mxu0 0.0
        %1713 = vmatpush1.msra.mxu0 0.0
        %1714 = vmatprep.subr.mxu0 0.0
        %1715 = vmatpush1.msra.mxu0 0.0
        %1716 = vmatprep.subr.mxu0 0.0
        %1717 = vmatpush1.msra.mxu0 0.0
        %1718 = vmatprep.subr.mxu0 0.0
        %1719 = vmatpush1.msra.mxu0 0.0
        %1720 = vmatprep.subr.mxu0 0.0
        %1721 = vmatpush1.msra.mxu0 0.0
        %1722 = vmatprep.subr.mxu0 0.0
        %1723 = vmatpush1.msra.mxu0 0.0
        %1724 = vmatprep.subr.mxu0 0.0
        %1725 = vmatpush1.msra.mxu0 0.0
        %1726 = vmatprep.subr.mxu0 0.0
        %1727 = vmatpush1.msra.mxu0 0.0
        %1728 = vmatprep.subr.mxu0 0.0
        %1729 = vmatpush1.msra.mxu0 0.0
        %1730 = vmatprep.subr.mxu0 0.0
        %1731 = vmatpush1.msra.mxu0 0.0
        %1732 = vmatprep.subr.mxu0 0.0
        %1733 = vmatpush1.msra.mxu0 0.0
        %1734 = vmatprep.mubr.f32.mxu0 0.0
        %1735 = vmatmul.mubr.f32.gmra.mrb[0].mxu0 %v1647
        %v1736 = vpop.f32.mrb[0].mxu0
        %v1737 = vadd.f32 0.0, %v1736
        %v1738 = vpop.f32.mrb[0].mxu0
        %1739 = vmatprep.mubr.f32.mxu0 0.0
        %1740 = vmatmul.mubr.f32.gmra.mrb[0].mxu0 %v1650
        %v1741 = vpop.f32.mrb[0].mxu0
        %v1742 = vadd.f32 0.0, %v1741
        %v1743 = vpop.f32.mrb[0].mxu0
        %1744 = vmatprep.mubr.f32.mxu0 0.0
        %1745 = vmatmul.mubr.f32.gmra.mrb[0].mxu0 %v1653
        %v1746 = vpop.f32.mrb[0].mxu0
        %v1747 = vadd.f32 0.0, %v1746
        %v1748 = vpop.f32.mrb[0].mxu0
        %1749 = vmatprep.mubr.f32.mxu0 0.0
        %1750 = vmatmul.mubr.f32.gmra.mrb[0].mxu0 %v1656
        %v1751 = vpop.f32.mrb[0].mxu0
        %v1752 = vadd.f32 0.0, %v1751
        %v1753 = vpop.f32.mrb[0].mxu0
        %1754 = vmatprep.mubr.f32.mxu0 0.0
        %1755 = vmatmul.mubr.f32.gmra.mrb[0].mxu0 %v1659
        %v1756 = vpop.f32.mrb[0].mxu0
        %v1757 = vadd.f32 0.0, %v1756
        %v1758 = vpop.f32.mrb[0].mxu0
        %1759 = vmatprep.mubr.f32.mxu0 0.0
        %1760 = vmatmul.mubr.f32.gmra.mrb[0].mxu0 %v1662
        %v1761 = vpop.f32.mrb[0].mxu0
        %v1762 = vadd.f32 0.0, %v1761
        %v1763 = vpop.f32.mrb[0].mxu0
        %1764 = vmatprep.mubr.f32.mxu0 0.0
        %1765 = vmatmul.mubr.f32.gmra.mrb[0].mxu0 %v1665
        %v1766 = vpop.f32.mrb[0].mxu0
        %v1767 = vadd.f32 0.0, %v1766
        %v1768 = vpop.f32.mrb[0].mxu0
        %1769 = vmatprep.mubr.f32.mxu0 0.0
        %1770 = vmatmul.mubr.f32.gmra.mrb[0].mxu0 %v1668
        %v1771 = vpop.f32.mrb[0].mxu0
        %v1772 = vadd.f32 0.0, %v1771
        %v1773 = vpop.f32.mrb[0].mxu0
        %1774 = vdwg.mxu0
        %v1776 = vsel %vm1129, %v699, 0
        %v1779 = vsel %vm1129, %v700, 0
        %v1782 = vsel %vm1129, %v701, 0
        %v1785 = vsel %vm1129, %v702, 0
        %v1788 = vsel %vm1129, %v703, 0
        %v1791 = vsel %vm1129, %v704, 0
        %v1794 = vsel %vm1129, %v705, 0
        %v1797 = vsel %vm1129, %v706, 0
        %1799 = vmatprep.subr.mxu0 0.0
        %1800 = vmatpush1.msra.mxu0 %v926
        %1801 = vmatprep.subr.mxu0 0.0
        %1802 = vmatpush1.msra.mxu0 %v930
        %1803 = vmatprep.subr.mxu0 0.0
        %1804 = vmatpush1.msra.mxu0 %v934
        %1805 = vmatprep.subr.mxu0 0.0
        %1806 = vmatpush1.msra.mxu0 %v938
        %1807 = vmatprep.subr.mxu0 0.0
        %1808 = vmatpush1.msra.mxu0 %v1078
        %1809 = vmatprep.subr.mxu0 0.0
        %1810 = vmatpush1.msra.mxu0 %v1082
        %1811 = vmatprep.subr.mxu0 0.0
        %1812 = vmatpush1.msra.mxu0 %v1086
        %1813 = vmatprep.subr.mxu0 0.0
        %1814 = vmatpush1.msra.mxu0 %v1090
        %1815 = vmatprep.subr.mxu0 0.0
        %1816 = vmatpush1.msra.mxu0 0.0
        %1817 = vmatprep.subr.mxu0 0.0
        %1818 = vmatpush1.msra.mxu0 0.0
        %1819 = vmatprep.subr.mxu0 0.0
        %1820 = vmatpush1.msra.mxu0 0.0
        %1821 = vmatprep.subr.mxu0 0.0
        %1822 = vmatpush1.msra.mxu0 0.0
        %1823 = vmatprep.subr.mxu0 0.0
        %1824 = vmatpush1.msra.mxu0 0.0
        %1825 = vmatprep.subr.mxu0 0.0
        %1826 = vmatpush1.msra.mxu0 0.0
        %1827 = vmatprep.subr.mxu0 0.0
        %1828 = vmatpush1.msra.mxu0 0.0
        %1829 = vmatprep.subr.mxu0 0.0
        %1830 = vmatpush1.msra.mxu0 0.0
        %1831 = vmatprep.subr.mxu0 0.0
        %1832 = vmatpush1.msra.mxu0 0.0
        %1833 = vmatprep.subr.mxu0 0.0
        %1834 = vmatpush1.msra.mxu0 0.0
        %1835 = vmatprep.subr.mxu0 0.0
        %1836 = vmatpush1.msra.mxu0 0.0
        %1837 = vmatprep.subr.mxu0 0.0
        %1838 = vmatpush1.msra.mxu0 0.0
        %1839 = vmatprep.subr.mxu0 0.0
        %1840 = vmatpush1.msra.mxu0 0.0
        %1841 = vmatprep.subr.mxu0 0.0
        %1842 = vmatpush1.msra.mxu0 0.0
        %1843 = vmatprep.subr.mxu0 0.0
        %1844 = vmatpush1.msra.mxu0 0.0
        %1845 = vmatprep.subr.mxu0 0.0
        %1846 = vmatpush1.msra.mxu0 0.0
        %1847 = vmatprep.subr.mxu0 0.0
        %1848 = vmatpush1.msra.mxu0 0.0
        %1849 = vmatprep.subr.mxu0 0.0
        %1850 = vmatpush1.msra.mxu0 0.0
        %1851 = vmatprep.subr.mxu0 0.0
        %1852 = vmatpush1.msra.mxu0 0.0
        %1853 = vmatprep.subr.mxu0 0.0
        %1854 = vmatpush1.msra.mxu0 0.0
        %1855 = vmatprep.subr.mxu0 0.0
        %1856 = vmatpush1.msra.mxu0 0.0
        %1857 = vmatprep.subr.mxu0 0.0
        %1858 = vmatpush1.msra.mxu0 0.0
        %1859 = vmatprep.subr.mxu0 0.0
        %1860 = vmatpush1.msra.mxu0 0.0
        %1861 = vmatprep.subr.mxu0 0.0
        %1862 = vmatpush1.msra.mxu0 0.0
        %1863 = vmatprep.mubr.f32.mxu0 0.0
        %1864 = vmatmul.mubr.f32.gmra.mrb[0].mxu0 %v1776
        %v1865 = vpop.f32.mrb[0].mxu0
        %v1866 = vadd.f32 0.0, %v1865
        %v1867 = vpop.f32.mrb[0].mxu0
        %1868 = vmatprep.mubr.f32.mxu0 0.0
        %1869 = vmatmul.mubr.f32.gmra.mrb[0].mxu0 %v1779
        %v1870 = vpop.f32.mrb[0].mxu0
        %v1871 = vadd.f32 0.0, %v1870
        %v1872 = vpop.f32.mrb[0].mxu0
        %1873 = vmatprep.mubr.f32.mxu0 0.0
        %1874 = vmatmul.mubr.f32.gmra.mrb[0].mxu0 %v1782
        %v1875 = vpop.f32.mrb[0].mxu0
        %v1876 = vadd.f32 0.0, %v1875
        %v1877 = vpop.f32.mrb[0].mxu0
        %1878 = vmatprep.mubr.f32.mxu0 0.0
        %1879 = vmatmul.mubr.f32.gmra.mrb[0].mxu0 %v1785
        %v1880 = vpop.f32.mrb[0].mxu0
        %v1881 = vadd.f32 0.0, %v1880
        %v1882 = vpop.f32.mrb[0].mxu0
        %1883 = vmatprep.mubr.f32.mxu0 0.0
        %1884 = vmatmul.mubr.f32.gmra.mrb[0].mxu0 %v1788
        %v1885 = vpop.f32.mrb[0].mxu0
        %v1886 = vadd.f32 0.0, %v1885
        %v1887 = vpop.f32.mrb[0].mxu0
        %1888 = vmatprep.mubr.f32.mxu0 0.0
        %1889 = vmatmul.mubr.f32.gmra.mrb[0].mxu0 %v1791
        %v1890 = vpop.f32.mrb[0].mxu0
        %v1891 = vadd.f32 0.0, %v1890
        %v1892 = vpop.f32.mrb[0].mxu0
        %1893 = vmatprep.mubr.f32.mxu0 0.0
        %1894 = vmatmul.mubr.f32.gmra.mrb[0].mxu0 %v1794
        %v1895 = vpop.f32.mrb[0].mxu0
        %v1896 = vadd.f32 0.0, %v1895
        %v1897 = vpop.f32.mrb[0].mxu0
        %1898 = vmatprep.mubr.f32.mxu0 0.0
        %1899 = vmatmul.mubr.f32.gmra.mrb[0].mxu0 %v1797
        %v1900 = vpop.f32.mrb[0].mxu0
        %v1901 = vadd.f32 0.0, %v1900
        %v1902 = vpop.f32.mrb[0].mxu0
        %1903 = vdwg.mxu0
        %v1905 = vsel %vm1129, %v707, 0
        %v1908 = vsel %vm1129, %v708, 0
        %v1911 = vsel %vm1129, %v709, 0
        %v1914 = vsel %vm1129, %v710, 0
        %v1917 = vsel %vm1129, %v711, 0
        %v1920 = vsel %vm1129, %v712, 0
        %v1923 = vsel %vm1129, %v713, 0
        %v1926 = vsel %vm1129, %v714, 0
        %1928 = vmatprep.subr.mxu0 0.0
        %1929 = vmatpush1.msra.mxu0 %v945
        %1930 = vmatprep.subr.mxu0 0.0
        %1931 = vmatpush1.msra.mxu0 %v949
        %1932 = vmatprep.subr.mxu0 0.0
        %1933 = vmatpush1.msra.mxu0 %v953
        %1934 = vmatprep.subr.mxu0 0.0
        %1935 = vmatpush1.msra.mxu0 %v957
        %1936 = vmatprep.subr.mxu0 0.0
        %1937 = vmatpush1.msra.mxu0 %v1097
        %1938 = vmatprep.subr.mxu0 0.0
        %1939 = vmatpush1.msra.mxu0 %v1101
        %1940 = vmatprep.subr.mxu0 0.0
        %1941 = vmatpush1.msra.mxu0 %v1105
        %1942 = vmatprep.subr.mxu0 0.0
        %1943 = vmatpush1.msra.mxu0 %v1109
        %1944 = vmatprep.subr.mxu0 0.0
        %1945 = vmatpush1.msra.mxu0 0.0
        %1946 = vmatprep.subr.mxu0 0.0
        %1947 = vmatpush1.msra.mxu0 0.0
        %1948 = vmatprep.subr.mxu0 0.0
        %1949 = vmatpush1.msra.mxu0 0.0
        %1950 = vmatprep.subr.mxu0 0.0
        %1951 = vmatpush1.msra.mxu0 0.0
        %1952 = vmatprep.subr.mxu0 0.0
        %1953 = vmatpush1.msra.mxu0 0.0
        %1954 = vmatprep.subr.mxu0 0.0
        %1955 = vmatpush1.msra.mxu0 0.0
        %1956 = vmatprep.subr.mxu0 0.0
        %1957 = vmatpush1.msra.mxu0 0.0
        %1958 = vmatprep.subr.mxu0 0.0
        %1959 = vmatpush1.msra.mxu0 0.0
        %1960 = vmatprep.subr.mxu0 0.0
        %1961 = vmatpush1.msra.mxu0 0.0
        %1962 = vmatprep.subr.mxu0 0.0
        %1963 = vmatpush1.msra.mxu0 0.0
        %1964 = vmatprep.subr.mxu0 0.0
        %1965 = vmatpush1.msra.mxu0 0.0
        %1966 = vmatprep.subr.mxu0 0.0
        %1967 = vmatpush1.msra.mxu0 0.0
        %1968 = vmatprep.subr.mxu0 0.0
        %1969 = vmatpush1.msra.mxu0 0.0
        %1970 = vmatprep.subr.mxu0 0.0
        %1971 = vmatpush1.msra.mxu0 0.0
        %1972 = vmatprep.subr.mxu0 0.0
        %1973 = vmatpush1.msra.mxu0 0.0
        %1974 = vmatprep.subr.mxu0 0.0
        %1975 = vmatpush1.msra.mxu0 0.0
        %1976 = vmatprep.subr.mxu0 0.0
        %1977 = vmatpush1.msra.mxu0 0.0
        %1978 = vmatprep.subr.mxu0 0.0
        %1979 = vmatpush1.msra.mxu0 0.0
        %1980 = vmatprep.subr.mxu0 0.0
        %1981 = vmatpush1.msra.mxu0 0.0
        %1982 = vmatprep.subr.mxu0 0.0
        %1983 = vmatpush1.msra.mxu0 0.0
        %1984 = vmatprep.subr.mxu0 0.0
        %1985 = vmatpush1.msra.mxu0 0.0
        %1986 = vmatprep.subr.mxu0 0.0
        %1987 = vmatpush1.msra.mxu0 0.0
        %1988 = vmatprep.subr.mxu0 0.0
        %1989 = vmatpush1.msra.mxu0 0.0
        %1990 = vmatprep.subr.mxu0 0.0
        %1991 = vmatpush1.msra.mxu0 0.0
        %1992 = vmatprep.mubr.f32.mxu0 0.0
        %1993 = vmatmul.mubr.f32.gmra.mrb[0].mxu0 %v1905
        %v1994 = vpop.f32.mrb[0].mxu0
        %v1995 = vadd.f32 0.0, %v1994
        %v1996 = vpop.f32.mrb[0].mxu0
        %1997 = vmatprep.mubr.f32.mxu0 0.0
        %1998 = vmatmul.mubr.f32.gmra.mrb[0].mxu0 %v1908
        %v1999 = vpop.f32.mrb[0].mxu0
        %v2000 = vadd.f32 0.0, %v1999
        %v2001 = vpop.f32.mrb[0].mxu0
        %2002 = vmatprep.mubr.f32.mxu0 0.0
        %2003 = vmatmul.mubr.f32.gmra.mrb[0].mxu0 %v1911
        %v2004 = vpop.f32.mrb[0].mxu0
        %v2005 = vadd.f32 0.0, %v2004
        %v2006 = vpop.f32.mrb[0].mxu0
        %2007 = vmatprep.mubr.f32.mxu0 0.0
        %2008 = vmatmul.mubr.f32.gmra.mrb[0].mxu0 %v1914
        %v2009 = vpop.f32.mrb[0].mxu0
        %v2010 = vadd.f32 0.0, %v2009
        %v2011 = vpop.f32.mrb[0].mxu0
        %2012 = vmatprep.mubr.f32.mxu0 0.0
        %2013 = vmatmul.mubr.f32.gmra.mrb[0].mxu0 %v1917
        %v2014 = vpop.f32.mrb[0].mxu0
        %v2015 = vadd.f32 0.0, %v2014
        %v2016 = vpop.f32.mrb[0].mxu0
        %2017 = vmatprep.mubr.f32.mxu0 0.0
        %2018 = vmatmul.mubr.f32.gmra.mrb[0].mxu0 %v1920
        %v2019 = vpop.f32.mrb[0].mxu0
        %v2020 = vadd.f32 0.0, %v2019
        %v2021 = vpop.f32.mrb[0].mxu0
        %2022 = vmatprep.mubr.f32.mxu0 0.0
        %2023 = vmatmul.mubr.f32.gmra.mrb[0].mxu0 %v1923
        %v2024 = vpop.f32.mrb[0].mxu0
        %v2025 = vadd.f32 0.0, %v2024
        %v2026 = vpop.f32.mrb[0].mxu0
        %2027 = vmatprep.mubr.f32.mxu0 0.0
        %2028 = vmatmul.mubr.f32.gmra.mrb[0].mxu0 %v1926
        %v2029 = vpop.f32.mrb[0].mxu0
        %v2030 = vadd.f32 0.0, %v2029
        %v2031 = vpop.f32.mrb[0].mxu0
        %2032 = vdwg.mxu0
        %v2034 = vsel %vm1129, %v715, 0
        %v2037 = vsel %vm1129, %v716, 0
        %v2040 = vsel %vm1129, %v717, 0
        %v2043 = vsel %vm1129, %v718, 0
        %v2046 = vsel %vm1129, %v719, 0
        %v2049 = vsel %vm1129, %v720, 0
        %v2052 = vsel %vm1129, %v721, 0
        %v2055 = vsel %vm1129, %v722, 0
        %2057 = vmatprep.subr.mxu0 0.0
        %2058 = vmatpush1.msra.mxu0 %v964
        %2059 = vmatprep.subr.mxu0 0.0
        %2060 = vmatpush1.msra.mxu0 %v968
        %2061 = vmatprep.subr.mxu0 0.0
        %2062 = vmatpush1.msra.mxu0 %v972
        %2063 = vmatprep.subr.mxu0 0.0
        %2064 = vmatpush1.msra.mxu0 %v976
        %2065 = vmatprep.subr.mxu0 0.0
        %2066 = vmatpush1.msra.mxu0 %v1116
        %2067 = vmatprep.subr.mxu0 0.0
        %2068 = vmatpush1.msra.mxu0 %v1120
        %2069 = vmatprep.subr.mxu0 0.0
        %2070 = vmatpush1.msra.mxu0 %v1124
        %2071 = vmatprep.subr.mxu0 0.0
        %2072 = vmatpush1.msra.mxu0 %v1128
        %2073 = vmatprep.subr.mxu0 0.0
        %2074 = vmatpush1.msra.mxu0 0.0
        %2075 = vmatprep.subr.mxu0 0.0
        %2076 = vmatpush1.msra.mxu0 0.0
        %2077 = vmatprep.subr.mxu0 0.0
        %2078 = vmatpush1.msra.mxu0 0.0
        %2079 = vmatprep.subr.mxu0 0.0
        %2080 = vmatpush1.msra.mxu0 0.0
        %2081 = vmatprep.subr.mxu0 0.0
        %2082 = vmatpush1.msra.mxu0 0.0
        %2083 = vmatprep.subr.mxu0 0.0
        %2084 = vmatpush1.msra.mxu0 0.0
        %2085 = vmatprep.subr.mxu0 0.0
        %2086 = vmatpush1.msra.mxu0 0.0
        %2087 = vmatprep.subr.mxu0 0.0
        %2088 = vmatpush1.msra.mxu0 0.0
        %2089 = vmatprep.subr.mxu0 0.0
        %2090 = vmatpush1.msra.mxu0 0.0
        %2091 = vmatprep.subr.mxu0 0.0
        %2092 = vmatpush1.msra.mxu0 0.0
        %2093 = vmatprep.subr.mxu0 0.0
        %2094 = vmatpush1.msra.mxu0 0.0
        %2095 = vmatprep.subr.mxu0 0.0
        %2096 = vmatpush1.msra.mxu0 0.0
        %2097 = vmatprep.subr.mxu0 0.0
        %2098 = vmatpush1.msra.mxu0 0.0
        %2099 = vmatprep.subr.mxu0 0.0
        %2100 = vmatpush1.msra.mxu0 0.0
        %2101 = vmatprep.subr.mxu0 0.0
        %2102 = vmatpush1.msra.mxu0 0.0
        %2103 = vmatprep.subr.mxu0 0.0
        %2104 = vmatpush1.msra.mxu0 0.0
        %2105 = vmatprep.subr.mxu0 0.0
        %2106 = vmatpush1.msra.mxu0 0.0
        %2107 = vmatprep.subr.mxu0 0.0
        %2108 = vmatpush1.msra.mxu0 0.0
        %2109 = vmatprep.subr.mxu0 0.0
        %2110 = vmatpush1.msra.mxu0 0.0
        %2111 = vmatprep.subr.mxu0 0.0
        %2112 = vmatpush1.msra.mxu0 0.0
        %2113 = vmatprep.subr.mxu0 0.0
        %2114 = vmatpush1.msra.mxu0 0.0
        %2115 = vmatprep.subr.mxu0 0.0
        %2116 = vmatpush1.msra.mxu0 0.0
        %2117 = vmatprep.subr.mxu0 0.0
        %2118 = vmatpush1.msra.mxu0 0.0
        %2119 = vmatprep.subr.mxu0 0.0
        %2120 = vmatpush1.msra.mxu0 0.0
        %2121 = vmatprep.mubr.f32.mxu0 0.0
        %2122 = vmatmul.mubr.f32.gmra.mrb[0].mxu0 %v2034
        %v2123 = vpop.f32.mrb[0].mxu0
        %v2124 = vadd.f32 0.0, %v2123
        %v2125 = vpop.f32.mrb[0].mxu0
        %2126 = vmatprep.mubr.f32.mxu0 0.0
        %2127 = vmatmul.mubr.f32.gmra.mrb[0].mxu0 %v2037
        %v2128 = vpop.f32.mrb[0].mxu0
        %v2129 = vadd.f32 0.0, %v2128
        %v2130 = vpop.f32.mrb[0].mxu0
        %2131 = vmatprep.mubr.f32.mxu0 0.0
        %2132 = vmatmul.mubr.f32.gmra.mrb[0].mxu0 %v2040
        %v2133 = vpop.f32.mrb[0].mxu0
        %v2134 = vadd.f32 0.0, %v2133
        %v2135 = vpop.f32.mrb[0].mxu0
        %2136 = vmatprep.mubr.f32.mxu0 0.0
        %2137 = vmatmul.mubr.f32.gmra.mrb[0].mxu0 %v2043
        %v2138 = vpop.f32.mrb[0].mxu0
        %v2139 = vadd.f32 0.0, %v2138
        %v2140 = vpop.f32.mrb[0].mxu0
        %2141 = vmatprep.mubr.f32.mxu0 0.0
        %2142 = vmatmul.mubr.f32.gmra.mrb[0].mxu0 %v2046
        %v2143 = vpop.f32.mrb[0].mxu0
        %v2144 = vadd.f32 0.0, %v2143
        %v2145 = vpop.f32.mrb[0].mxu0
        %2146 = vmatprep.mubr.f32.mxu0 0.0
        %2147 = vmatmul.mubr.f32.gmra.mrb[0].mxu0 %v2049
        %v2148 = vpop.f32.mrb[0].mxu0
        %v2149 = vadd.f32 0.0, %v2148
        %v2150 = vpop.f32.mrb[0].mxu0
        %2151 = vmatprep.mubr.f32.mxu0 0.0
        %2152 = vmatmul.mubr.f32.gmra.mrb[0].mxu0 %v2052
        %v2153 = vpop.f32.mrb[0].mxu0
        %v2154 = vadd.f32 0.0, %v2153
        %v2155 = vpop.f32.mrb[0].mxu0
        %2156 = vmatprep.mubr.f32.mxu0 0.0
        %2157 = vmatmul.mubr.f32.gmra.mrb[0].mxu0 %v2055
        %v2158 = vpop.f32.mrb[0].mxu0
        %v2159 = vadd.f32 0.0, %v2158
        %v2160 = vpop.f32.mrb[0].mxu0
        %2161 = vdwg.mxu0
        %2226 = vset.pattern.permute.xlu0 0
        %2227 = vperm.xlu0 %2226, %v1221
        %v2228 = vpop.permute.xlu0 %2227
        %2229 = vset.pattern.permute.xlu0 0
        %2230 = vperm.xlu0 %2229, %v1226
        %v2231 = vpop.permute.xlu0 %2230
        %2232 = vset.pattern.permute.xlu0 0
        %2233 = vperm.xlu0 %2232, %v1231
        %v2234 = vpop.permute.xlu0 %2233
        %2235 = vset.pattern.permute.xlu0 0
        %2236 = vperm.xlu0 %2235, %v1236
        %v2237 = vpop.permute.xlu0 %2236
        %2238 = vset.pattern.permute.xlu0 0
        %2239 = vperm.xlu0 %2238, %v1241
        %v2240 = vpop.permute.xlu0 %2239
        %2241 = vset.pattern.permute.xlu0 0
        %2242 = vperm.xlu0 %2241, %v1246
        %v2243 = vpop.permute.xlu0 %2242
        %2244 = vset.pattern.permute.xlu0 0
        %2245 = vperm.xlu0 %2244, %v1251
        %v2246 = vpop.permute.xlu0 %2245
        %2247 = vset.pattern.permute.xlu0 0
        %2248 = vperm.xlu0 %2247, %v1256
        %v2249 = vpop.permute.xlu0 %2248
        %2250 = vset.pattern.permute.xlu0 0
        %2251 = vperm.xlu0 %2250, %v1350
        %v2252 = vpop.permute.xlu0 %2251
        %2253 = vset.pattern.permute.xlu0 0
        %2254 = vperm.xlu0 %2253, %v1355
        %v2255 = vpop.permute.xlu0 %2254
        %2256 = vset.pattern.permute.xlu0 0
        %2257 = vperm.xlu0 %2256, %v1360
        %v2258 = vpop.permute.xlu0 %2257
        %2259 = vset.pattern.permute.xlu0 0
        %2260 = vperm.xlu0 %2259, %v1365
        %v2261 = vpop.permute.xlu0 %2260
        %2262 = vset.pattern.permute.xlu0 0
        %2263 = vperm.xlu0 %2262, %v1370
        %v2264 = vpop.permute.xlu0 %2263
        %2265 = vset.pattern.permute.xlu0 0
        %2266 = vperm.xlu0 %2265, %v1375
        %v2267 = vpop.permute.xlu0 %2266
        %2268 = vset.pattern.permute.xlu0 0
        %2269 = vperm.xlu0 %2268, %v1380
        %v2270 = vpop.permute.xlu0 %2269
        %2271 = vset.pattern.permute.xlu0 0
        %2272 = vperm.xlu0 %2271, %v1385
        %v2273 = vpop.permute.xlu0 %2272
        %2274 = vset.pattern.permute.xlu0 0
        %2275 = vperm.xlu0 %2274, %v1479
        %v2276 = vpop.permute.xlu0 %2275
        %2277 = vset.pattern.permute.xlu0 0
        %2278 = vperm.xlu0 %2277, %v1484
        %v2279 = vpop.permute.xlu0 %2278
        %2280 = vset.pattern.permute.xlu0 0
        %2281 = vperm.xlu0 %2280, %v1489
        %v2282 = vpop.permute.xlu0 %2281
        %2283 = vset.pattern.permute.xlu0 0
        %2284 = vperm.xlu0 %2283, %v1494
        %v2285 = vpop.permute.xlu0 %2284
        %2286 = vset.pattern.permute.xlu0 0
        %2287 = vperm.xlu0 %2286, %v1499
        %v2288 = vpop.permute.xlu0 %2287
        %2289 = vset.pattern.permute.xlu0 0
        %2290 = vperm.xlu0 %2289, %v1504
        %v2291 = vpop.permute.xlu0 %2290
        %2292 = vset.pattern.permute.xlu0 0
        %2293 = vperm.xlu0 %2292, %v1509
        %v2294 = vpop.permute.xlu0 %2293
        %2295 = vset.pattern.permute.xlu0 0
        %2296 = vperm.xlu0 %2295, %v1514
        %v2297 = vpop.permute.xlu0 %2296
        %2298 = vset.pattern.permute.xlu0 0
        %2299 = vperm.xlu0 %2298, %v1608
        %v2300 = vpop.permute.xlu0 %2299
        %2301 = vset.pattern.permute.xlu0 0
        %2302 = vperm.xlu0 %2301, %v1613
        %v2303 = vpop.permute.xlu0 %2302
        %2304 = vset.pattern.permute.xlu0 0
        %2305 = vperm.xlu0 %2304, %v1618
        %v2306 = vpop.permute.xlu0 %2305
        %2307 = vset.pattern.permute.xlu0 0
        %2308 = vperm.xlu0 %2307, %v1623
        %v2309 = vpop.permute.xlu0 %2308
        %2310 = vset.pattern.permute.xlu0 0
        %2311 = vperm.xlu0 %2310, %v1628
        %v2312 = vpop.permute.xlu0 %2311
        %2313 = vset.pattern.permute.xlu0 0
        %2314 = vperm.xlu0 %2313, %v1633
        %v2315 = vpop.permute.xlu0 %2314
        %2316 = vset.pattern.permute.xlu0 0
        %2317 = vperm.xlu0 %2316, %v1638
        %v2318 = vpop.permute.xlu0 %2317
        %2319 = vset.pattern.permute.xlu0 0
        %2320 = vperm.xlu0 %2319, %v1643
        %v2321 = vpop.permute.xlu0 %2320
        %2322 = vset.pattern.permute.xlu0 0
        %2323 = vperm.xlu0 %2322, %v1737
        %v2324 = vpop.permute.xlu0 %2323
        %2325 = vset.pattern.permute.xlu0 0
        %2326 = vperm.xlu0 %2325, %v1742
        %v2327 = vpop.permute.xlu0 %2326
        %2328 = vset.pattern.permute.xlu0 0
        %2329 = vperm.xlu0 %2328, %v1747
        %v2330 = vpop.permute.xlu0 %2329
        %2331 = vset.pattern.permute.xlu0 0
        %2332 = vperm.xlu0 %2331, %v1752
        %v2333 = vpop.permute.xlu0 %2332
        %2334 = vset.pattern.permute.xlu0 0
        %2335 = vperm.xlu0 %2334, %v1757
        %v2336 = vpop.permute.xlu0 %2335
        %2337 = vset.pattern.permute.xlu0 0
        %2338 = vperm.xlu0 %2337, %v1762
        %v2339 = vpop.permute.xlu0 %2338
        %2340 = vset.pattern.permute.xlu0 0
        %2341 = vperm.xlu0 %2340, %v1767
        %v2342 = vpop.permute.xlu0 %2341
        %2343 = vset.pattern.permute.xlu0 0
        %2344 = vperm.xlu0 %2343, %v1772
        %v2345 = vpop.permute.xlu0 %2344
        %2346 = vset.pattern.permute.xlu0 0
        %2347 = vperm.xlu0 %2346, %v1866
        %v2348 = vpop.permute.xlu0 %2347
        %2349 = vset.pattern.permute.xlu0 0
        %2350 = vperm.xlu0 %2349, %v1871
        %v2351 = vpop.permute.xlu0 %2350
        %2352 = vset.pattern.permute.xlu0 0
        %2353 = vperm.xlu0 %2352, %v1876
        %v2354 = vpop.permute.xlu0 %2353
        %2355 = vset.pattern.permute.xlu0 0
        %2356 = vperm.xlu0 %2355, %v1881
        %v2357 = vpop.permute.xlu0 %2356
        %2358 = vset.pattern.permute.xlu0 0
        %2359 = vperm.xlu0 %2358, %v1886
        %v2360 = vpop.permute.xlu0 %2359
        %2361 = vset.pattern.permute.xlu0 0
        %2362 = vperm.xlu0 %2361, %v1891
        %v2363 = vpop.permute.xlu0 %2362
        %2364 = vset.pattern.permute.xlu0 0
        %2365 = vperm.xlu0 %2364, %v1896
        %v2366 = vpop.permute.xlu0 %2365
        %2367 = vset.pattern.permute.xlu0 0
        %2368 = vperm.xlu0 %2367, %v1901
        %v2369 = vpop.permute.xlu0 %2368
        %2370 = vset.pattern.permute.xlu0 0
        %2371 = vperm.xlu0 %2370, %v1995
        %v2372 = vpop.permute.xlu0 %2371
        %2373 = vset.pattern.permute.xlu0 0
        %2374 = vperm.xlu0 %2373, %v2000
        %v2375 = vpop.permute.xlu0 %2374
        %2376 = vset.pattern.permute.xlu0 0
        %2377 = vperm.xlu0 %2376, %v2005
        %v2378 = vpop.permute.xlu0 %2377
        %2379 = vset.pattern.permute.xlu0 0
        %2380 = vperm.xlu0 %2379, %v2010
        %v2381 = vpop.permute.xlu0 %2380
        %2382 = vset.pattern.permute.xlu0 0
        %2383 = vperm.xlu0 %2382, %v2015
        %v2384 = vpop.permute.xlu0 %2383
        %2385 = vset.pattern.permute.xlu0 0
        %2386 = vperm.xlu0 %2385, %v2020
        %v2387 = vpop.permute.xlu0 %2386
        %2388 = vset.pattern.permute.xlu0 0
        %2389 = vperm.xlu0 %2388, %v2025
        %v2390 = vpop.permute.xlu0 %2389
        %2391 = vset.pattern.permute.xlu0 0
        %2392 = vperm.xlu0 %2391, %v2030
        %v2393 = vpop.permute.xlu0 %2392
        %2394 = vset.pattern.permute.xlu0 0
        %2395 = vperm.xlu0 %2394, %v2124
        %v2396 = vpop.permute.xlu0 %2395
        %2397 = vset.pattern.permute.xlu0 0
        %2398 = vperm.xlu0 %2397, %v2129
        %v2399 = vpop.permute.xlu0 %2398
        %2400 = vset.pattern.permute.xlu0 0
        %2401 = vperm.xlu0 %2400, %v2134
        %v2402 = vpop.permute.xlu0 %2401
        %2403 = vset.pattern.permute.xlu0 0
        %2404 = vperm.xlu0 %2403, %v2139
        %v2405 = vpop.permute.xlu0 %2404
        %2406 = vset.pattern.permute.xlu0 0
        %2407 = vperm.xlu0 %2406, %v2144
        %v2408 = vpop.permute.xlu0 %2407
        %2409 = vset.pattern.permute.xlu0 0
        %2410 = vperm.xlu0 %2409, %v2149
        %v2411 = vpop.permute.xlu0 %2410
        %2412 = vset.pattern.permute.xlu0 0
        %2413 = vperm.xlu0 %2412, %v2154
        %v2414 = vpop.permute.xlu0 %2413
        %2415 = vset.pattern.permute.xlu0 0
        %2416 = vperm.xlu0 %2415, %v2159
        %v2417 = vpop.permute.xlu0 %2416
        %v2418 = vlaneseq
        %v2419 = vand.u32 %v2418, 127
        %v2420 = vlaneseq
        %v2421 = vshrl.u32 %v2420, 7
        %v2422 = vsub.s32 %v2419, %v2421
        %v2423 = vrot.slane %v2228, %v2422
        %v2424 = vadd.s32 %v2419, 4294967288
        %v2425 = vlaneseq
        %v2426 = vshrl.u32 %v2425, 7
        %v2427 = vsub.s32 %v2424, %v2426
        %v2428 = vrot.slane %v2231, %v2427
        %vm2429 = vcmask 130112
        %v2430 = vsel %vm2429, %v2428, %v2423
        %v2431 = vadd.s32 %v2419, 4294967280
        %v2432 = vlaneseq
        %v2433 = vshrl.u32 %v2432, 7
        %v2434 = vsub.s32 %v2431, %v2433
        %v2435 = vrot.slane %v2234, %v2434
        %vm2436 = vcmask 195712
        %v2437 = vsel %vm2436, %v2435, %v2430
        %v2438 = vadd.s32 %v2419, 4294967272
        %v2439 = vlaneseq
        %v2440 = vshrl.u32 %v2439, 7
        %v2441 = vsub.s32 %v2438, %v2440
        %v2442 = vrot.slane %v2237, %v2441
        %vm2443 = vcmask 261312
        %v2444 = vsel %vm2443, %v2442, %v2437
        %v2445 = vlaneseq
        %v2446 = vshrl.u32 %v2445, 7
        %v2447 = vsub.s32 %v2419, %v2446
        %v2448 = vrot.slane %v2240, %v2447
        %v2449 = vlaneseq
        %v2450 = vshrl.u32 %v2449, 7
        %v2451 = vsub.s32 %v2424, %v2450
        %v2452 = vrot.slane %v2243, %v2451
        %v2453 = vsel %vm2429, %v2452, %v2448
        %v2454 = vlaneseq
        %v2455 = vshrl.u32 %v2454, 7
        %v2456 = vsub.s32 %v2431, %v2455
        %v2457 = vrot.slane %v2246, %v2456
        %v2458 = vsel %vm2436, %v2457, %v2453
        %v2459 = vlaneseq
        %v2460 = vshrl.u32 %v2459, 7
        %v2461 = vsub.s32 %v2438, %v2460
        %v2462 = vrot.slane %v2249, %v2461
        %v2463 = vsel %vm2443, %v2462, %v2458
        %v2464 = vlaneseq
        %v2465 = vshrl.u32 %v2464, 7
        %v2466 = vsub.s32 %v2419, %v2465
        %v2467 = vrot.slane %v2252, %v2466
        %v2468 = vlaneseq
        %v2469 = vshrl.u32 %v2468, 7
        %v2470 = vsub.s32 %v2424, %v2469
        %v2471 = vrot.slane %v2255, %v2470
        %v2472 = vsel %vm2429, %v2471, %v2467
        %v2473 = vlaneseq
        %v2474 = vshrl.u32 %v2473, 7
        %v2475 = vsub.s32 %v2431, %v2474
        %v2476 = vrot.slane %v2258, %v2475
        %v2477 = vsel %vm2436, %v2476, %v2472
        %v2478 = vlaneseq
        %v2479 = vshrl.u32 %v2478, 7
        %v2480 = vsub.s32 %v2438, %v2479
        %v2481 = vrot.slane %v2261, %v2480
        %v2482 = vsel %vm2443, %v2481, %v2477
        %v2483 = vlaneseq
        %v2484 = vshrl.u32 %v2483, 7
        %v2485 = vsub.s32 %v2419, %v2484
        %v2486 = vrot.slane %v2264, %v2485
        %v2487 = vlaneseq
        %v2488 = vshrl.u32 %v2487, 7
        %v2489 = vsub.s32 %v2424, %v2488
        %v2490 = vrot.slane %v2267, %v2489
        %v2491 = vsel %vm2429, %v2490, %v2486
        %v2492 = vlaneseq
        %v2493 = vshrl.u32 %v2492, 7
        %v2494 = vsub.s32 %v2431, %v2493
        %v2495 = vrot.slane %v2270, %v2494
        %v2496 = vsel %vm2436, %v2495, %v2491
        %v2497 = vlaneseq
        %v2498 = vshrl.u32 %v2497, 7
        %v2499 = vsub.s32 %v2438, %v2498
        %v2500 = vrot.slane %v2273, %v2499
        %v2501 = vsel %vm2443, %v2500, %v2496
        %v2502 = vlaneseq
        %v2503 = vshrl.u32 %v2502, 7
        %v2504 = vsub.s32 %v2419, %v2503
        %v2505 = vrot.slane %v2276, %v2504
        %v2506 = vlaneseq
        %v2507 = vshrl.u32 %v2506, 7
        %v2508 = vsub.s32 %v2424, %v2507
        %v2509 = vrot.slane %v2279, %v2508
        %v2510 = vsel %vm2429, %v2509, %v2505
        %v2511 = vlaneseq
        %v2512 = vshrl.u32 %v2511, 7
        %v2513 = vsub.s32 %v2431, %v2512
        %v2514 = vrot.slane %v2282, %v2513
        %v2515 = vsel %vm2436, %v2514, %v2510
        %v2516 = vlaneseq
        %v2517 = vshrl.u32 %v2516, 7
        %v2518 = vsub.s32 %v2438, %v2517
        %v2519 = vrot.slane %v2285, %v2518
        %v2520 = vsel %vm2443, %v2519, %v2515
        %v2521 = vlaneseq
        %v2522 = vshrl.u32 %v2521, 7
        %v2523 = vsub.s32 %v2419, %v2522
        %v2524 = vrot.slane %v2288, %v2523
        %v2525 = vlaneseq
        %v2526 = vshrl.u32 %v2525, 7
        %v2527 = vsub.s32 %v2424, %v2526
        %v2528 = vrot.slane %v2291, %v2527
        %v2529 = vsel %vm2429, %v2528, %v2524
        %v2530 = vlaneseq
        %v2531 = vshrl.u32 %v2530, 7
        %v2532 = vsub.s32 %v2431, %v2531
        %v2533 = vrot.slane %v2294, %v2532
        %v2534 = vsel %vm2436, %v2533, %v2529
        %v2535 = vlaneseq
        %v2536 = vshrl.u32 %v2535, 7
        %v2537 = vsub.s32 %v2438, %v2536
        %v2538 = vrot.slane %v2297, %v2537
        %v2539 = vsel %vm2443, %v2538, %v2534
        %v2540 = vlaneseq
        %v2541 = vshrl.u32 %v2540, 7
        %v2542 = vsub.s32 %v2419, %v2541
        %v2543 = vrot.slane %v2300, %v2542
        %v2544 = vlaneseq
        %v2545 = vshrl.u32 %v2544, 7
        %v2546 = vsub.s32 %v2424, %v2545
        %v2547 = vrot.slane %v2303, %v2546
        %v2548 = vsel %vm2429, %v2547, %v2543
        %v2549 = vlaneseq
        %v2550 = vshrl.u32 %v2549, 7
        %v2551 = vsub.s32 %v2431, %v2550
        %v2552 = vrot.slane %v2306, %v2551
        %v2553 = vsel %vm2436, %v2552, %v2548
        %v2554 = vlaneseq
        %v2555 = vshrl.u32 %v2554, 7
        %v2556 = vsub.s32 %v2438, %v2555
        %v2557 = vrot.slane %v2309, %v2556
        %v2558 = vsel %vm2443, %v2557, %v2553
        %v2559 = vlaneseq
        %v2560 = vshrl.u32 %v2559, 7
        %v2561 = vsub.s32 %v2419, %v2560
        %v2562 = vrot.slane %v2312, %v2561
        %v2563 = vlaneseq
        %v2564 = vshrl.u32 %v2563, 7
        %v2565 = vsub.s32 %v2424, %v2564
        %v2566 = vrot.slane %v2315, %v2565
        %v2567 = vsel %vm2429, %v2566, %v2562
        %v2568 = vlaneseq
        %v2569 = vshrl.u32 %v2568, 7
        %v2570 = vsub.s32 %v2431, %v2569
        %v2571 = vrot.slane %v2318, %v2570
        %v2572 = vsel %vm2436, %v2571, %v2567
        %v2573 = vlaneseq
        %v2574 = vshrl.u32 %v2573, 7
        %v2575 = vsub.s32 %v2438, %v2574
        %v2576 = vrot.slane %v2321, %v2575
        %v2577 = vsel %vm2443, %v2576, %v2572
        %v2578 = vlaneseq
        %v2579 = vshrl.u32 %v2578, 7
        %v2580 = vsub.s32 %v2419, %v2579
        %v2581 = vrot.slane %v2324, %v2580
        %v2582 = vlaneseq
        %v2583 = vshrl.u32 %v2582, 7
        %v2584 = vsub.s32 %v2424, %v2583
        %v2585 = vrot.slane %v2327, %v2584
        %v2586 = vsel %vm2429, %v2585, %v2581
        %v2587 = vlaneseq
        %v2588 = vshrl.u32 %v2587, 7
        %v2589 = vsub.s32 %v2431, %v2588
        %v2590 = vrot.slane %v2330, %v2589
        %v2591 = vsel %vm2436, %v2590, %v2586
        %v2592 = vlaneseq
        %v2593 = vshrl.u32 %v2592, 7
        %v2594 = vsub.s32 %v2438, %v2593
        %v2595 = vrot.slane %v2333, %v2594
        %v2596 = vsel %vm2443, %v2595, %v2591
        %v2597 = vlaneseq
        %v2598 = vshrl.u32 %v2597, 7
        %v2599 = vsub.s32 %v2419, %v2598
        %v2600 = vrot.slane %v2336, %v2599
        %v2601 = vlaneseq
        %v2602 = vshrl.u32 %v2601, 7
        %v2603 = vsub.s32 %v2424, %v2602
        %v2604 = vrot.slane %v2339, %v2603
        %v2605 = vsel %vm2429, %v2604, %v2600
        %v2606 = vlaneseq
        %v2607 = vshrl.u32 %v2606, 7
        %v2608 = vsub.s32 %v2431, %v2607
        %v2609 = vrot.slane %v2342, %v2608
        %v2610 = vsel %vm2436, %v2609, %v2605
        %v2611 = vlaneseq
        %v2612 = vshrl.u32 %v2611, 7
        %v2613 = vsub.s32 %v2438, %v2612
        %v2614 = vrot.slane %v2345, %v2613
        %v2615 = vsel %vm2443, %v2614, %v2610
        %v2616 = vlaneseq
        %v2617 = vshrl.u32 %v2616, 7
        %v2618 = vsub.s32 %v2419, %v2617
        %v2619 = vrot.slane %v2348, %v2618
        %v2620 = vlaneseq
        %v2621 = vshrl.u32 %v2620, 7
        %v2622 = vsub.s32 %v2424, %v2621
        %v2623 = vrot.slane %v2351, %v2622
        %v2624 = vsel %vm2429, %v2623, %v2619
        %v2625 = vlaneseq
        %v2626 = vshrl.u32 %v2625, 7
        %v2627 = vsub.s32 %v2431, %v2626
        %v2628 = vrot.slane %v2354, %v2627
        %v2629 = vsel %vm2436, %v2628, %v2624
        %v2630 = vlaneseq
        %v2631 = vshrl.u32 %v2630, 7
        %v2632 = vsub.s32 %v2438, %v2631
        %v2633 = vrot.slane %v2357, %v2632
        %v2634 = vsel %vm2443, %v2633, %v2629
        %v2635 = vlaneseq
        %v2636 = vshrl.u32 %v2635, 7
        %v2637 = vsub.s32 %v2419, %v2636
        %v2638 = vrot.slane %v2360, %v2637
        %v2639 = vlaneseq
        %v2640 = vshrl.u32 %v2639, 7
        %v2641 = vsub.s32 %v2424, %v2640
        %v2642 = vrot.slane %v2363, %v2641
        %v2643 = vsel %vm2429, %v2642, %v2638
        %v2644 = vlaneseq
        %v2645 = vshrl.u32 %v2644, 7
        %v2646 = vsub.s32 %v2431, %v2645
        %v2647 = vrot.slane %v2366, %v2646
        %v2648 = vsel %vm2436, %v2647, %v2643
        %v2649 = vlaneseq
        %v2650 = vshrl.u32 %v2649, 7
        %v2651 = vsub.s32 %v2438, %v2650
        %v2652 = vrot.slane %v2369, %v2651
        %v2653 = vsel %vm2443, %v2652, %v2648
        %v2654 = vlaneseq
        %v2655 = vshrl.u32 %v2654, 7
        %v2656 = vsub.s32 %v2419, %v2655
        %v2657 = vrot.slane %v2372, %v2656
        %v2658 = vlaneseq
        %v2659 = vshrl.u32 %v2658, 7
        %v2660 = vsub.s32 %v2424, %v2659
        %v2661 = vrot.slane %v2375, %v2660
        %v2662 = vsel %vm2429, %v2661, %v2657
        %v2663 = vlaneseq
        %v2664 = vshrl.u32 %v2663, 7
        %v2665 = vsub.s32 %v2431, %v2664
        %v2666 = vrot.slane %v2378, %v2665
        %v2667 = vsel %vm2436, %v2666, %v2662
        %v2668 = vlaneseq
        %v2669 = vshrl.u32 %v2668, 7
        %v2670 = vsub.s32 %v2438, %v2669
        %v2671 = vrot.slane %v2381, %v2670
        %v2672 = vsel %vm2443, %v2671, %v2667
        %v2673 = vlaneseq
        %v2674 = vshrl.u32 %v2673, 7
        %v2675 = vsub.s32 %v2419, %v2674
        %v2676 = vrot.slane %v2384, %v2675
        %v2677 = vlaneseq
        %v2678 = vshrl.u32 %v2677, 7
        %v2679 = vsub.s32 %v2424, %v2678
        %v2680 = vrot.slane %v2387, %v2679
        %v2681 = vsel %vm2429, %v2680, %v2676
        %v2682 = vlaneseq
        %v2683 = vshrl.u32 %v2682, 7
        %v2684 = vsub.s32 %v2431, %v2683
        %v2685 = vrot.slane %v2390, %v2684
        %v2686 = vsel %vm2436, %v2685, %v2681
        %v2687 = vlaneseq
        %v2688 = vshrl.u32 %v2687, 7
        %v2689 = vsub.s32 %v2438, %v2688
        %v2690 = vrot.slane %v2393, %v2689
        %v2691 = vsel %vm2443, %v2690, %v2686
        %v2692 = vlaneseq
        %v2693 = vshrl.u32 %v2692, 7
        %v2694 = vsub.s32 %v2419, %v2693
        %v2695 = vrot.slane %v2396, %v2694
        %v2696 = vlaneseq
        %v2697 = vshrl.u32 %v2696, 7
        %v2698 = vsub.s32 %v2424, %v2697
        %v2699 = vrot.slane %v2399, %v2698
        %v2700 = vsel %vm2429, %v2699, %v2695
        %v2701 = vlaneseq
        %v2702 = vshrl.u32 %v2701, 7
        %v2703 = vsub.s32 %v2431, %v2702
        %v2704 = vrot.slane %v2402, %v2703
        %v2705 = vsel %vm2436, %v2704, %v2700
        %v2706 = vlaneseq
        %v2707 = vshrl.u32 %v2706, 7
        %v2708 = vsub.s32 %v2438, %v2707
        %v2709 = vrot.slane %v2405, %v2708
        %v2710 = vsel %vm2443, %v2709, %v2705
        %v2711 = vlaneseq
        %v2712 = vshrl.u32 %v2711, 7
        %v2713 = vsub.s32 %v2419, %v2712
        %v2714 = vrot.slane %v2408, %v2713
        %v2715 = vlaneseq
        %v2716 = vshrl.u32 %v2715, 7
        %v2717 = vsub.s32 %v2424, %v2716
        %v2718 = vrot.slane %v2411, %v2717
        %v2719 = vsel %vm2429, %v2718, %v2714
        %v2720 = vlaneseq
        %v2721 = vshrl.u32 %v2720, 7
        %v2722 = vsub.s32 %v2431, %v2721
        %v2723 = vrot.slane %v2414, %v2722
        %v2724 = vsel %vm2436, %v2723, %v2719
        %v2725 = vlaneseq
        %v2726 = vshrl.u32 %v2725, 7
        %v2727 = vsub.s32 %v2438, %v2726
        %v2728 = vrot.slane %v2417, %v2727
        %v2729 = vsel %vm2443, %v2728, %v2724
        %vm2730 = vcmask 1041409
        %v2731 = vsel %vm2730, %v2463, %v2444
        %vm2732 = vcmask 1042434
        %v2733 = vsel %vm2732, %v2482, %v2731
        %vm2734 = vcmask 1043459
        %v2735 = vsel %vm2734, %v2501, %v2733
        %vm2736 = vcmask 1044484
        %v2737 = vsel %vm2736, %v2520, %v2735
        %vm2738 = vcmask 1045509
        %v2739 = vsel %vm2738, %v2539, %v2737
        %vm2740 = vcmask 1046534
        %v2741 = vsel %vm2740, %v2558, %v2739
        %vm2742 = vcmask 1047559
        %v2743 = vsel %vm2742, %v2577, %v2741
        %v2744 = vsel %vm2730, %v2615, %v2596
        %v2745 = vsel %vm2732, %v2634, %v2744
        %v2746 = vsel %vm2734, %v2653, %v2745
        %v2747 = vsel %vm2736, %v2672, %v2746
        %v2748 = vsel %vm2738, %v2691, %v2747
        %v2749 = vsel %vm2740, %v2710, %v2748
        %v2750 = vsel %vm2742, %v2729, %v2749
        %2753 = vxpose.xlu0.b32.start [1/16] %v2743, 128
        %2754 = vxpose.xlu0.b32.cont [2/16] %v2750, 128
        %2755 = vxpose.xlu0.b32.cont [3/16] 0.0, 128
        %2756 = vxpose.xlu0.b32.cont [4/16] 0.0, 128
        %2757 = vxpose.xlu0.b32.cont [5/16] 0.0, 128
        %2758 = vxpose.xlu0.b32.cont [6/16] 0.0, 128
        %2759 = vxpose.xlu0.b32.cont [7/16] 0.0, 128
        %2760 = vxpose.xlu0.b32.cont [8/16] 0.0, 128
        %2761 = vxpose.xlu0.b32.cont [9/16] 0.0, 128
        %2762 = vxpose.xlu0.b32.cont [10/16] 0.0, 128
        %2763 = vxpose.xlu0.b32.cont [11/16] 0.0, 128
        %2764 = vxpose.xlu0.b32.cont [12/16] 0.0, 128
        %2765 = vxpose.xlu0.b32.cont [13/16] 0.0, 128
        %2766 = vxpose.xlu0.b32.cont [14/16] 0.0, 128
        %2767 = vxpose.xlu0.b32.cont [15/16] 0.0, 128
        %2768 = vxpose.xlu0.b32.end [16/16] 0.0, 128
        %v2769 = vpop.trf.xlu0
        %v2770 = vpop.trf.xlu0
        %v2771 = vpop.trf.xlu0
        %v2772 = vpop.trf.xlu0
        %v2773 = vpop.trf.xlu0
        %v2774 = vpop.trf.xlu0
        %v2775 = vpop.trf.xlu0
        %v2776 = vpop.trf.xlu0
        %v2777 = vpop.trf.xlu0
        %v2778 = vpop.trf.xlu0
        %v2779 = vpop.trf.xlu0
        %v2780 = vpop.trf.xlu0
        %v2781 = vpop.trf.xlu0
        %v2782 = vpop.trf.xlu0
        %v2783 = vpop.trf.xlu0
        %v2784 = vpop.trf.xlu0
        %2786 = vset.pattern.permute.xlu0 0
        %2787 = vperm.xlu0 %2786, %v727
        %v2788 = vpop.permute.xlu0 %2787
        %2791 = vset.pattern.permute.xlu0 0
        %2792 = vperm.xlu0 %2791, %v728
        %v2793 = vpop.permute.xlu0 %2792
        %2796 = vset.pattern.permute.xlu0 0
        %2797 = vperm.xlu0 %2796, %v729
        %v2798 = vpop.permute.xlu0 %2797
        %2801 = vset.pattern.permute.xlu0 0
        %2802 = vperm.xlu0 %2801, %v730
        %v2803 = vpop.permute.xlu0 %2802
        %vm2805 = vcmask 261120
        %v2807 = vsel %vm2805, %v723, 0
        %v2810 = vsel %vm2805, %v724, 0
        %v2813 = vsel %vm2805, %v725, 0
        %v2816 = vsel %vm2805, %v726, 0
        %2818 = vmatprep.subr.mxu0 0.0
        %2819 = vmatpush1.msra.mxu0 %v651
        %2820 = vmatprep.subr.mxu0 0.0
        %2821 = vmatpush1.msra.mxu0 %v652
        %2822 = vmatprep.subr.mxu0 0.0
        %2823 = vmatpush1.msra.mxu0 %v653
        %2824 = vmatprep.subr.mxu0 0.0
        %2825 = vmatpush1.msra.mxu0 %v654
        %2826 = vmatprep.subr.mxu0 0.0
        %2827 = vmatpush1.msra.mxu0 0.0
        %2828 = vmatprep.subr.mxu0 0.0
        %2829 = vmatpush1.msra.mxu0 0.0
        %2830 = vmatprep.subr.mxu0 0.0
        %2831 = vmatpush1.msra.mxu0 0.0
        %2832 = vmatprep.subr.mxu0 0.0
        %2833 = vmatpush1.msra.mxu0 0.0
        %2834 = vmatprep.subr.mxu0 0.0
        %2835 = vmatpush1.msra.mxu0 0.0
        %2836 = vmatprep.subr.mxu0 0.0
        %2837 = vmatpush1.msra.mxu0 0.0
        %2838 = vmatprep.subr.mxu0 0.0
        %2839 = vmatpush1.msra.mxu0 0.0
        %2840 = vmatprep.subr.mxu0 0.0
        %2841 = vmatpush1.msra.mxu0 0.0
        %2842 = vmatprep.subr.mxu0 0.0
        %2843 = vmatpush1.msra.mxu0 0.0
        %2844 = vmatprep.subr.mxu0 0.0
        %2845 = vmatpush1.msra.mxu0 0.0
        %2846 = vmatprep.subr.mxu0 0.0
        %2847 = vmatpush1.msra.mxu0 0.0
        %2848 = vmatprep.subr.mxu0 0.0
        %2849 = vmatpush1.msra.mxu0 0.0
        %2850 = vmatprep.subr.mxu0 0.0
        %2851 = vmatpush1.msra.mxu0 0.0
        %2852 = vmatprep.subr.mxu0 0.0
        %2853 = vmatpush1.msra.mxu0 0.0
        %2854 = vmatprep.subr.mxu0 0.0
        %2855 = vmatpush1.msra.mxu0 0.0
        %2856 = vmatprep.subr.mxu0 0.0
        %2857 = vmatpush1.msra.mxu0 0.0
        %2858 = vmatprep.subr.mxu0 0.0
        %2859 = vmatpush1.msra.mxu0 0.0
        %2860 = vmatprep.subr.mxu0 0.0
        %2861 = vmatpush1.msra.mxu0 0.0
        %2862 = vmatprep.subr.mxu0 0.0
        %2863 = vmatpush1.msra.mxu0 0.0
        %2864 = vmatprep.subr.mxu0 0.0
        %2865 = vmatpush1.msra.mxu0 0.0
        %2866 = vmatprep.subr.mxu0 0.0
        %2867 = vmatpush1.msra.mxu0 0.0
        %2868 = vmatprep.subr.mxu0 0.0
        %2869 = vmatpush1.msra.mxu0 0.0
        %2870 = vmatprep.subr.mxu0 0.0
        %2871 = vmatpush1.msra.mxu0 0.0
        %2872 = vmatprep.subr.mxu0 0.0
        %2873 = vmatpush1.msra.mxu0 0.0
        %2874 = vmatprep.subr.mxu0 0.0
        %2875 = vmatpush1.msra.mxu0 0.0
        %2876 = vmatprep.subr.mxu0 0.0
        %2877 = vmatpush1.msra.mxu0 0.0
        %2878 = vmatprep.subr.mxu0 0.0
        %2879 = vmatpush1.msra.mxu0 0.0
        %2880 = vmatprep.subr.mxu0 0.0
        %2881 = vmatpush1.msra.mxu0 0.0
        %2882 = vmatprep.mubr.f32.mxu0 0.0
        %2883 = vmatmul.mubr.f32.gmra.mrb[0].mxu0 %v2807
        %v2884 = vpop.f32.mrb[0].mxu0
        %v2885 = vadd.f32 %v2788, %v2884
        %v2886 = vpop.f32.mrb[0].mxu0
        %2887 = vmatprep.mubr.f32.mxu0 0.0
        %2888 = vmatmul.mubr.f32.gmra.mrb[0].mxu0 %v2810
        %v2889 = vpop.f32.mrb[0].mxu0
        %v2890 = vadd.f32 %v2793, %v2889
        %v2891 = vpop.f32.mrb[0].mxu0
        %2892 = vmatprep.mubr.f32.mxu0 0.0
        %2893 = vmatmul.mubr.f32.gmra.mrb[0].mxu0 %v2813
        %v2894 = vpop.f32.mrb[0].mxu0
        %v2895 = vadd.f32 %v2798, %v2894
        %v2896 = vpop.f32.mrb[0].mxu0
        %2897 = vmatprep.mubr.f32.mxu0 0.0
        %2898 = vmatmul.mubr.f32.gmra.mrb[0].mxu0 %v2816
        %v2899 = vpop.f32.mrb[0].mxu0
        %v2900 = vadd.f32 %v2803, %v2899
        %v2901 = vpop.f32.mrb[0].mxu0
        %2902 = vdwg.mxu0
        %v2904 = vsel %vm731, %v2769, 0
        %v2907 = vsel %vm731, %v2770, 0
        %v2910 = vsel %vm731, %v2771, 0
        %v2913 = vsel %vm731, %v2772, 0
        %2915 = vmatprep.subr.mxu0 0.0
        %2916 = vmatpush1.msra.mxu0 %v657
        %2917 = vmatprep.subr.mxu0 0.0
        %2918 = vmatpush1.msra.mxu0 %v658
        %2919 = vmatprep.subr.mxu0 0.0
        %2920 = vmatpush1.msra.mxu0 0.0
        %2921 = vmatprep.subr.mxu0 0.0
        %2922 = vmatpush1.msra.mxu0 0.0
        %2923 = vmatprep.subr.mxu0 0.0
        %2924 = vmatpush1.msra.mxu0 0.0
        %2925 = vmatprep.subr.mxu0 0.0
        %2926 = vmatpush1.msra.mxu0 0.0
        %2927 = vmatprep.subr.mxu0 0.0
        %2928 = vmatpush1.msra.mxu0 0.0
        %2929 = vmatprep.subr.mxu0 0.0
        %2930 = vmatpush1.msra.mxu0 0.0
        %2931 = vmatprep.subr.mxu0 0.0
        %2932 = vmatpush1.msra.mxu0 0.0
        %2933 = vmatprep.subr.mxu0 0.0
        %2934 = vmatpush1.msra.mxu0 0.0
        %2935 = vmatprep.subr.mxu0 0.0
        %2936 = vmatpush1.msra.mxu0 0.0
        %2937 = vmatprep.subr.mxu0 0.0
        %2938 = vmatpush1.msra.mxu0 0.0
        %2939 = vmatprep.subr.mxu0 0.0
        %2940 = vmatpush1.msra.mxu0 0.0
        %2941 = vmatprep.subr.mxu0 0.0
        %2942 = vmatpush1.msra.mxu0 0.0
        %2943 = vmatprep.subr.mxu0 0.0
        %2944 = vmatpush1.msra.mxu0 0.0
        %2945 = vmatprep.subr.mxu0 0.0
        %2946 = vmatpush1.msra.mxu0 0.0
        %2947 = vmatprep.subr.mxu0 0.0
        %2948 = vmatpush1.msra.mxu0 0.0
        %2949 = vmatprep.subr.mxu0 0.0
        %2950 = vmatpush1.msra.mxu0 0.0
        %2951 = vmatprep.subr.mxu0 0.0
        %2952 = vmatpush1.msra.mxu0 0.0
        %2953 = vmatprep.subr.mxu0 0.0
        %2954 = vmatpush1.msra.mxu0 0.0
        %2955 = vmatprep.subr.mxu0 0.0
        %2956 = vmatpush1.msra.mxu0 0.0
        %2957 = vmatprep.subr.mxu0 0.0
        %2958 = vmatpush1.msra.mxu0 0.0
        %2959 = vmatprep.subr.mxu0 0.0
        %2960 = vmatpush1.msra.mxu0 0.0
        %2961 = vmatprep.subr.mxu0 0.0
        %2962 = vmatpush1.msra.mxu0 0.0
        %2963 = vmatprep.subr.mxu0 0.0
        %2964 = vmatpush1.msra.mxu0 0.0
        %2965 = vmatprep.subr.mxu0 0.0
        %2966 = vmatpush1.msra.mxu0 0.0
        %2967 = vmatprep.subr.mxu0 0.0
        %2968 = vmatpush1.msra.mxu0 0.0
        %2969 = vmatprep.subr.mxu0 0.0
        %2970 = vmatpush1.msra.mxu0 0.0
        %2971 = vmatprep.subr.mxu0 0.0
        %2972 = vmatpush1.msra.mxu0 0.0
        %2973 = vmatprep.subr.mxu0 0.0
        %2974 = vmatpush1.msra.mxu0 0.0
        %2975 = vmatprep.subr.mxu0 0.0
        %2976 = vmatpush1.msra.mxu0 0.0
        %2977 = vmatprep.subr.mxu0 0.0
        %2978 = vmatpush1.msra.mxu0 0.0
        %2979 = vmatprep.mubr.f32.mxu0 0.0
        %2980 = vmatmul.mubr.f32.gmra.mrb[0].mxu0 %v2904
        %v2981 = vpop.f32.mrb[0].mxu0
        %v2982 = vadd.f32 %v2885, %v2981
        %v2983 = vpop.f32.mrb[0].mxu0
        %2984 = vmatprep.mubr.f32.mxu0 0.0
        %2985 = vmatmul.mubr.f32.gmra.mrb[0].mxu0 %v2907
        %v2986 = vpop.f32.mrb[0].mxu0
        %v2987 = vadd.f32 %v2890, %v2986
        %v2988 = vpop.f32.mrb[0].mxu0
        %2989 = vmatprep.mubr.f32.mxu0 0.0
        %2990 = vmatmul.mubr.f32.gmra.mrb[0].mxu0 %v2910
        %v2991 = vpop.f32.mrb[0].mxu0
        %v2992 = vadd.f32 %v2895, %v2991
        %v2993 = vpop.f32.mrb[0].mxu0
        %2994 = vmatprep.mubr.f32.mxu0 0.0
        %2995 = vmatmul.mubr.f32.gmra.mrb[0].mxu0 %v2913
        %v2996 = vpop.f32.mrb[0].mxu0
        %v2997 = vadd.f32 %v2900, %v2996
        %v2998 = vpop.f32.mrb[0].mxu0
        %2999 = vdwg.mxu0
        %v3000 = vmul.f32 %v2982, 0.5
        %v3001 = vmul.f32 %v2987, 0.5
        %v3002 = vmul.f32 %v2992, 0.5
        %v3003 = vmul.f32 %v2997, 0.5
        %v3004 = vmul.f32 %v2982, 0.70710677
        %v3005 = vmul.f32 %v2987, 0.70710677
        %v3006 = vmul.f32 %v2992, 0.70710677
        %v3007 = vmul.f32 %v2997, 0.70710677
        %v3008 = verf.f32.pop %v3004
        %v3009 = verf.f32.pop %v3005
        %v3010 = verf.f32.pop %v3006
        %v3011 = verf.f32.pop %v3007
        %v3012 = vadd.f32 %v3008, 1.0
        %v3013 = vadd.f32 %v3009, 1.0
        %v3014 = vadd.f32 %v3010, 1.0
        %v3015 = vadd.f32 %v3011, 1.0
        %v3016 = vmul.f32 %v3000, %v3012
        %v3017 = vmul.f32 %v3001, %v3013
        %v3018 = vmul.f32 %v3002, %v3014
        %v3019 = vmul.f32 %v3003, %v3015
        %s3020 = scalar_lea.vmem [#allocation3], 512
        %v3021 = vld [vmem:[%s3020] sm:$0xff]
        %v3022 = vld [vmem:[%s3020 + $0x8] sm:$0xff]
        %v3023 = vld [vmem:[%s3020 + $0x10] sm:$0xff]
        %v3024 = vld [vmem:[%s3020 + $0x18] sm:$0xff]
        %v3025 = vld [vmem:[%s3020 + $0x20] sm:$0xff]
        %v3026 = vld [vmem:[%s3020 + $0x28] sm:$0xff]
        %v3027 = vld [vmem:[%s3020 + $0x30] sm:$0xff]
        %v3028 = vld [vmem:[%s3020 + $0x38] sm:$0xff]
        %v3029 = vld [vmem:[%s3020 + $0x40] sm:$0xff]
        %v3030 = vld [vmem:[%s3020 + $0x48] sm:$0xff]
        %v3031 = vld [vmem:[%s3020 + $0x50] sm:$0xff]
        %v3032 = vld [vmem:[%s3020 + $0x58] sm:$0xff]
        %v3033 = vld [vmem:[%s3020 + $0x60] sm:$0xff]
        %v3034 = vld [vmem:[%s3020 + $0x68] sm:$0xff]
        %v3035 = vld [vmem:[%s3020 + $0x70] sm:$0xff]
        %v3036 = vld [vmem:[%s3020 + $0x78] sm:$0xff]
        %v3037 = vld [vmem:[%s3020 + $0x80] sm:$0xff]
        %v3038 = vld [vmem:[%s3020 + $0x88] sm:$0xff]
        %v3039 = vld [vmem:[%s3020 + $0x90] sm:$0xff]
        %v3040 = vld [vmem:[%s3020 + $0x98] sm:$0xff]
        %v3041 = vld [vmem:[%s3020 + $0xa0] sm:$0xff]
        %v3042 = vld [vmem:[%s3020 + $0xa8] sm:$0xff]
        %v3043 = vld [vmem:[%s3020 + $0xb0] sm:$0xff]
        %v3044 = vld [vmem:[%s3020 + $0xb8] sm:$0xff]
        %v3045 = vld [vmem:[%s3020 + $0xc0] sm:$0xff]
        %v3046 = vld [vmem:[%s3020 + $0xc8] sm:$0xff]
        %v3047 = vld [vmem:[%s3020 + $0xd0] sm:$0xff]
        %v3048 = vld [vmem:[%s3020 + $0xd8] sm:$0xff]
        %v3049 = vld [vmem:[%s3020 + $0xe0] sm:$0xff]
        %v3050 = vld [vmem:[%s3020 + $0xe8] sm:$0xff]
        %v3051 = vld [vmem:[%s3020 + $0xf0] sm:$0xff]
        %v3052 = vld [vmem:[%s3020 + $0xf8] sm:$0xff]
        %v3053 = vld [vmem:[%s3020 + $0x100] sm:$0xff]
        %v3054 = vld [vmem:[%s3020 + $0x108] sm:$0xff]
        %v3055 = vld [vmem:[%s3020 + $0x110] sm:$0xff]
        %v3056 = vld [vmem:[%s3020 + $0x118] sm:$0xff]
        %v3057 = vld [vmem:[%s3020 + $0x120] sm:$0xff]
        %v3058 = vld [vmem:[%s3020 + $0x128] sm:$0xff]
        %v3059 = vld [vmem:[%s3020 + $0x130] sm:$0xff]
        %v3060 = vld [vmem:[%s3020 + $0x138] sm:$0xff]
        %v3061 = vld [vmem:[%s3020 + $0x140] sm:$0xff]
        %v3062 = vld [vmem:[%s3020 + $0x148] sm:$0xff]
        %v3063 = vld [vmem:[%s3020 + $0x150] sm:$0xff]
        %v3064 = vld [vmem:[%s3020 + $0x158] sm:$0xff]
        %v3065 = vld [vmem:[%s3020 + $0x160] sm:$0xff]
        %v3066 = vld [vmem:[%s3020 + $0x168] sm:$0xff]
        %v3067 = vld [vmem:[%s3020 + $0x170] sm:$0xff]
        %v3068 = vld [vmem:[%s3020 + $0x178] sm:$0xff]
        %v3069 = vld [vmem:[%s3020 + $0x180] sm:$0xff]
        %v3070 = vld [vmem:[%s3020 + $0x188] sm:$0xff]
        %v3071 = vld [vmem:[%s3020 + $0x190] sm:$0xff]
        %v3072 = vld [vmem:[%s3020 + $0x198] sm:$0xff]
        %v3073 = vld [vmem:[%s3020 + $0x1a0] sm:$0xff]
        %v3074 = vld [vmem:[%s3020 + $0x1a8] sm:$0xff]
        %v3075 = vld [vmem:[%s3020 + $0x1b0] sm:$0xff]
        %v3076 = vld [vmem:[%s3020 + $0x1b8] sm:$0xff]
        %v3077 = vld [vmem:[%s3020 + $0x1c0] sm:$0xff]
        %v3078 = vld [vmem:[%s3020 + $0x1c8] sm:$0xff]
        %v3079 = vld [vmem:[%s3020 + $0x1d0] sm:$0xff]
        %v3080 = vld [vmem:[%s3020 + $0x1d8] sm:$0xff]
        %v3081 = vld [vmem:[%s3020 + $0x1e0] sm:$0xff]
        %v3082 = vld [vmem:[%s3020 + $0x1e8] sm:$0xff]
        %v3083 = vld [vmem:[%s3020 + $0x1f0] sm:$0xff]
        %v3084 = vld [vmem:[%s3020 + $0x1f8] sm:$0xff]
        %s3085 = scalar_lea.vmem %s8, 32
        %v3086 = vld [vmem:[%s3085] sm:$0xff]
        %v3087 = vld [vmem:[%s3085 + $0x8] sm:$0xff]
        %v3088 = vld [vmem:[%s3085 + $0x10] sm:$0xff]
        %v3089 = vld [vmem:[%s3085 + $0x18] sm:$0xff]
        %s3090 = scalar_lea.vmem %s9, 32
        %v3091 = vld [vmem:[%s3090] sm:$0xff]
        %v3092 = vld [vmem:[%s3090 + $0x8] sm:$0xff]
        %v3093 = vld [vmem:[%s3090 + $0x10] sm:$0xff]
        %v3094 = vld [vmem:[%s3090 + $0x18] sm:$0xff]
        %v3096 = vsel %vm731, %v3016, 0
        %v3099 = vsel %vm731, %v3017, 0
        %v3102 = vsel %vm731, %v3018, 0
        %v3105 = vsel %vm731, %v3019, 0
        %3107 = vmatprep.subr.mxu0 0.0
        %3108 = vmatpush1.xpose.msra.mxu0 %v3096
        %3109 = vmatprep.subr.mxu0 0.0
        %3110 = vmatpush1.xpose.msra.mxu0 %v3099
        %3111 = vmatprep.subr.mxu0 0.0
        %3112 = vmatpush1.xpose.msra.mxu0 %v3102
        %3113 = vmatprep.subr.mxu0 0.0
        %3114 = vmatpush1.xpose.msra.mxu0 %v3105
        %3115 = vmatprep.subr.mxu0 0.0
        %3116 = vmatpush1.xpose.msra.mxu0 0.0
        %3117 = vmatprep.subr.mxu0 0.0
        %3118 = vmatpush1.xpose.msra.mxu0 0.0
        %3119 = vmatprep.subr.mxu0 0.0
        %3120 = vmatpush1.xpose.msra.mxu0 0.0
        %3121 = vmatprep.subr.mxu0 0.0
        %3122 = vmatpush1.xpose.msra.mxu0 0.0
        %3123 = vmatprep.subr.mxu0 0.0
        %3124 = vmatpush1.xpose.msra.mxu0 0.0
        %3125 = vmatprep.subr.mxu0 0.0
        %3126 = vmatpush1.xpose.msra.mxu0 0.0
        %3127 = vmatprep.subr.mxu0 0.0
        %3128 = vmatpush1.xpose.msra.mxu0 0.0
        %3129 = vmatprep.subr.mxu0 0.0
        %3130 = vmatpush1.xpose.msra.mxu0 0.0
        %3131 = vmatprep.subr.mxu0 0.0
        %3132 = vmatpush1.xpose.msra.mxu0 0.0
        %3133 = vmatprep.subr.mxu0 0.0
        %3134 = vmatpush1.xpose.msra.mxu0 0.0
        %3135 = vmatprep.subr.mxu0 0.0
        %3136 = vmatpush1.xpose.msra.mxu0 0.0
        %3137 = vmatprep.subr.mxu0 0.0
        %3138 = vmatpush1.xpose.msra.mxu0 0.0
        %3139 = vmatprep.subr.mxu0 0.0
        %3140 = vmatpush1.xpose.msra.mxu0 0.0
        %3141 = vmatprep.subr.mxu0 0.0
        %3142 = vmatpush1.xpose.msra.mxu0 0.0
        %3143 = vmatprep.subr.mxu0 0.0
        %3144 = vmatpush1.xpose.msra.mxu0 0.0
        %3145 = vmatprep.subr.mxu0 0.0
        %3146 = vmatpush1.xpose.msra.mxu0 0.0
        %3147 = vmatprep.subr.mxu0 0.0
        %3148 = vmatpush1.xpose.msra.mxu0 0.0
        %3149 = vmatprep.subr.mxu0 0.0
        %3150 = vmatpush1.xpose.msra.mxu0 0.0
        %3151 = vmatprep.subr.mxu0 0.0
        %3152 = vmatpush1.xpose.msra.mxu0 0.0
        %3153 = vmatprep.subr.mxu0 0.0
        %3154 = vmatpush1.xpose.msra.mxu0 0.0
        %3155 = vmatprep.subr.mxu0 0.0
        %3156 = vmatpush1.xpose.msra.mxu0 0.0
        %3157 = vmatprep.subr.mxu0 0.0
        %3158 = vmatpush1.xpose.msra.mxu0 0.0
        %3159 = vmatprep.subr.mxu0 0.0
        %3160 = vmatpush1.xpose.msra.mxu0 0.0
        %3161 = vmatprep.subr.mxu0 0.0
        %3162 = vmatpush1.xpose.msra.mxu0 0.0
        %3163 = vmatprep.subr.mxu0 0.0
        %3164 = vmatpush1.xpose.msra.mxu0 0.0
        %3165 = vmatprep.subr.mxu0 0.0
        %3166 = vmatpush1.xpose.msra.mxu0 0.0
        %3167 = vmatprep.subr.mxu0 0.0
        %3168 = vmatpush1.xpose.msra.mxu0 0.0
        %3169 = vmatprep.subr.mxu0 0.0
        %3170 = vmatpush1.xpose.msra.mxu0 0.0
        %3171 = vmatprep.mubr.f32.mxu0 0.0
        %3172 = vmatmul.mubr.f32.gmra.mrb[0].mxu0 %v733
        %v3173 = vpop.f32.mrb[0].mxu0
        %v3174 = vadd.f32 0.0, %v3173
        %v3175 = vpop.f32.mrb[0].mxu0
        %3176 = vmatprep.mubr.f32.mxu0 0.0
        %3177 = vmatmul.mubr.f32.gmra.mrb[0].mxu0 %v736
        %v3178 = vpop.f32.mrb[0].mxu0
        %v3179 = vadd.f32 0.0, %v3178
        %v3180 = vpop.f32.mrb[0].mxu0
        %3181 = vdwg.mxu0
        %v3182 = vlaneseq
        %v3183 = vshrl.u32 %v3182, 7
        %v3184 = vsub.s32 0, %v3183
        %v3185 = vrot.slane %v3174, %v3184
        %3187 = vbcast.lane.b32.xlu0 %v3185, 256
        %v3188 = vpop.permute.xlu0 %3187
        %s3190 = sor.u32 256, 8
        %3191 = vbcast.lane.b32.xlu0 %v3185, %s3190
        %v3192 = vpop.permute.xlu0 %3191
        %s3194 = sor.u32 256, 16
        %3195 = vbcast.lane.b32.xlu0 %v3185, %s3194
        %v3196 = vpop.permute.xlu0 %3195
        %s3198 = sor.u32 256, 24
        %3199 = vbcast.lane.b32.xlu0 %v3185, %s3198
        %v3200 = vpop.permute.xlu0 %3199
        %v3201 = vlaneseq
        %v3202 = vshrl.u32 %v3201, 7
        %v3203 = vsub.s32 1, %v3202
        %v3204 = vrot.slane %v3174, %v3203
        %3206 = vbcast.lane.b32.xlu0 %v3204, 256
        %v3207 = vpop.permute.xlu0 %3206
        %s3209 = sor.u32 256, 8
        %3210 = vbcast.lane.b32.xlu0 %v3204, %s3209
        %v3211 = vpop.permute.xlu0 %3210
        %s3213 = sor.u32 256, 16
        %3214 = vbcast.lane.b32.xlu0 %v3204, %s3213
        %v3215 = vpop.permute.xlu0 %3214
        %s3217 = sor.u32 256, 24
        %3218 = vbcast.lane.b32.xlu0 %v3204, %s3217
        %v3219 = vpop.permute.xlu0 %3218
        %v3220 = vlaneseq
        %v3221 = vshrl.u32 %v3220, 7
        %v3222 = vsub.s32 2, %v3221
        %v3223 = vrot.slane %v3174, %v3222
        %3225 = vbcast.lane.b32.xlu0 %v3223, 256
        %v3226 = vpop.permute.xlu0 %3225
        %s3228 = sor.u32 256, 8
        %3229 = vbcast.lane.b32.xlu0 %v3223, %s3228
        %v3230 = vpop.permute.xlu0 %3229
        %s3232 = sor.u32 256, 16
        %3233 = vbcast.lane.b32.xlu0 %v3223, %s3232
        %v3234 = vpop.permute.xlu0 %3233
        %s3236 = sor.u32 256, 24
        %3237 = vbcast.lane.b32.xlu0 %v3223, %s3236
        %v3238 = vpop.permute.xlu0 %3237
        %v3239 = vlaneseq
        %v3240 = vshrl.u32 %v3239, 7
        %v3241 = vsub.s32 3, %v3240
        %v3242 = vrot.slane %v3174, %v3241
        %3244 = vbcast.lane.b32.xlu0 %v3242, 256
        %v3245 = vpop.permute.xlu0 %3244
        %s3247 = sor.u32 256, 8
        %3248 = vbcast.lane.b32.xlu0 %v3242, %s3247
        %v3249 = vpop.permute.xlu0 %3248
        %s3251 = sor.u32 256, 16
        %3252 = vbcast.lane.b32.xlu0 %v3242, %s3251
        %v3253 = vpop.permute.xlu0 %3252
        %s3255 = sor.u32 256, 24
        %3256 = vbcast.lane.b32.xlu0 %v3242, %s3255
        %v3257 = vpop.permute.xlu0 %3256
        %v3258 = vlaneseq
        %v3259 = vshrl.u32 %v3258, 7
        %v3260 = vsub.s32 4, %v3259
        %v3261 = vrot.slane %v3174, %v3260
        %3263 = vbcast.lane.b32.xlu0 %v3261, 256
        %v3264 = vpop.permute.xlu0 %3263
        %s3266 = sor.u32 256, 8
        %3267 = vbcast.lane.b32.xlu0 %v3261, %s3266
        %v3268 = vpop.permute.xlu0 %3267
        %s3270 = sor.u32 256, 16
        %3271 = vbcast.lane.b32.xlu0 %v3261, %s3270
        %v3272 = vpop.permute.xlu0 %3271
        %s3274 = sor.u32 256, 24
        %3275 = vbcast.lane.b32.xlu0 %v3261, %s3274
        %v3276 = vpop.permute.xlu0 %3275
        %v3277 = vlaneseq
        %v3278 = vshrl.u32 %v3277, 7
        %v3279 = vsub.s32 5, %v3278
        %v3280 = vrot.slane %v3174, %v3279
        %3282 = vbcast.lane.b32.xlu0 %v3280, 256
        %v3283 = vpop.permute.xlu0 %3282
        %s3285 = sor.u32 256, 8
        %3286 = vbcast.lane.b32.xlu0 %v3280, %s3285
        %v3287 = vpop.permute.xlu0 %3286
        %s3289 = sor.u32 256, 16
        %3290 = vbcast.lane.b32.xlu0 %v3280, %s3289
        %v3291 = vpop.permute.xlu0 %3290
        %s3293 = sor.u32 256, 24
        %3294 = vbcast.lane.b32.xlu0 %v3280, %s3293
        %v3295 = vpop.permute.xlu0 %3294
        %v3296 = vlaneseq
        %v3297 = vshrl.u32 %v3296, 7
        %v3298 = vsub.s32 6, %v3297
        %v3299 = vrot.slane %v3174, %v3298
        %3301 = vbcast.lane.b32.xlu0 %v3299, 256
        %v3302 = vpop.permute.xlu0 %3301
        %s3304 = sor.u32 256, 8
        %3305 = vbcast.lane.b32.xlu0 %v3299, %s3304
        %v3306 = vpop.permute.xlu0 %3305
        %s3308 = sor.u32 256, 16
        %3309 = vbcast.lane.b32.xlu0 %v3299, %s3308
        %v3310 = vpop.permute.xlu0 %3309
        %s3312 = sor.u32 256, 24
        %3313 = vbcast.lane.b32.xlu0 %v3299, %s3312
        %v3314 = vpop.permute.xlu0 %3313
        %v3315 = vlaneseq
        %v3316 = vshrl.u32 %v3315, 7
        %v3317 = vsub.s32 7, %v3316
        %v3318 = vrot.slane %v3174, %v3317
        %3320 = vbcast.lane.b32.xlu0 %v3318, 256
        %v3321 = vpop.permute.xlu0 %3320
        %s3323 = sor.u32 256, 8
        %3324 = vbcast.lane.b32.xlu0 %v3318, %s3323
        %v3325 = vpop.permute.xlu0 %3324
        %s3327 = sor.u32 256, 16
        %3328 = vbcast.lane.b32.xlu0 %v3318, %s3327
        %v3329 = vpop.permute.xlu0 %3328
        %s3331 = sor.u32 256, 24
        %3332 = vbcast.lane.b32.xlu0 %v3318, %s3331
        %v3333 = vpop.permute.xlu0 %3332
        %v3334 = vlaneseq
        %v3335 = vshrl.u32 %v3334, 7
        %v3336 = vsub.s32 0, %v3335
        %v3337 = vrot.slane %v3179, %v3336
        %3339 = vbcast.lane.b32.xlu0 %v3337, 256
        %v3340 = vpop.permute.xlu0 %3339
        %s3342 = sor.u32 256, 8
        %3343 = vbcast.lane.b32.xlu0 %v3337, %s3342
        %v3344 = vpop.permute.xlu0 %3343
        %s3346 = sor.u32 256, 16
        %3347 = vbcast.lane.b32.xlu0 %v3337, %s3346
        %v3348 = vpop.permute.xlu0 %3347
        %s3350 = sor.u32 256, 24
        %3351 = vbcast.lane.b32.xlu0 %v3337, %s3350
        %v3352 = vpop.permute.xlu0 %3351
        %v3353 = vlaneseq
        %v3354 = vshrl.u32 %v3353, 7
        %v3355 = vsub.s32 1, %v3354
        %v3356 = vrot.slane %v3179, %v3355
        %3358 = vbcast.lane.b32.xlu0 %v3356, 256
        %v3359 = vpop.permute.xlu0 %3358
        %s3361 = sor.u32 256, 8
        %3362 = vbcast.lane.b32.xlu0 %v3356, %s3361
        %v3363 = vpop.permute.xlu0 %3362
        %s3365 = sor.u32 256, 16
        %3366 = vbcast.lane.b32.xlu0 %v3356, %s3365
        %v3367 = vpop.permute.xlu0 %3366
        %s3369 = sor.u32 256, 24
        %3370 = vbcast.lane.b32.xlu0 %v3356, %s3369
        %v3371 = vpop.permute.xlu0 %3370
        %v3372 = vlaneseq
        %v3373 = vshrl.u32 %v3372, 7
        %v3374 = vsub.s32 2, %v3373
        %v3375 = vrot.slane %v3179, %v3374
        %3377 = vbcast.lane.b32.xlu0 %v3375, 256
        %v3378 = vpop.permute.xlu0 %3377
        %s3380 = sor.u32 256, 8
        %3381 = vbcast.lane.b32.xlu0 %v3375, %s3380
        %v3382 = vpop.permute.xlu0 %3381
        %s3384 = sor.u32 256, 16
        %3385 = vbcast.lane.b32.xlu0 %v3375, %s3384
        %v3386 = vpop.permute.xlu0 %3385
        %s3388 = sor.u32 256, 24
        %3389 = vbcast.lane.b32.xlu0 %v3375, %s3388
        %v3390 = vpop.permute.xlu0 %3389
        %v3391 = vlaneseq
        %v3392 = vshrl.u32 %v3391, 7
        %v3393 = vsub.s32 3, %v3392
        %v3394 = vrot.slane %v3179, %v3393
        %3396 = vbcast.lane.b32.xlu0 %v3394, 256
        %v3397 = vpop.permute.xlu0 %3396
        %s3399 = sor.u32 256, 8
        %3400 = vbcast.lane.b32.xlu0 %v3394, %s3399
        %v3401 = vpop.permute.xlu0 %3400
        %s3403 = sor.u32 256, 16
        %3404 = vbcast.lane.b32.xlu0 %v3394, %s3403
        %v3405 = vpop.permute.xlu0 %3404
        %s3407 = sor.u32 256, 24
        %3408 = vbcast.lane.b32.xlu0 %v3394, %s3407
        %v3409 = vpop.permute.xlu0 %3408
        %v3410 = vlaneseq
        %v3411 = vshrl.u32 %v3410, 7
        %v3412 = vsub.s32 4, %v3411
        %v3413 = vrot.slane %v3179, %v3412
        %3415 = vbcast.lane.b32.xlu0 %v3413, 256
        %v3416 = vpop.permute.xlu0 %3415
        %s3418 = sor.u32 256, 8
        %3419 = vbcast.lane.b32.xlu0 %v3413, %s3418
        %v3420 = vpop.permute.xlu0 %3419
        %s3422 = sor.u32 256, 16
        %3423 = vbcast.lane.b32.xlu0 %v3413, %s3422
        %v3424 = vpop.permute.xlu0 %3423
        %s3426 = sor.u32 256, 24
        %3427 = vbcast.lane.b32.xlu0 %v3413, %s3426
        %v3428 = vpop.permute.xlu0 %3427
        %v3429 = vlaneseq
        %v3430 = vshrl.u32 %v3429, 7
        %v3431 = vsub.s32 5, %v3430
        %v3432 = vrot.slane %v3179, %v3431
        %3434 = vbcast.lane.b32.xlu0 %v3432, 256
        %v3435 = vpop.permute.xlu0 %3434
        %s3437 = sor.u32 256, 8
        %3438 = vbcast.lane.b32.xlu0 %v3432, %s3437
        %v3439 = vpop.permute.xlu0 %3438
        %s3441 = sor.u32 256, 16
        %3442 = vbcast.lane.b32.xlu0 %v3432, %s3441
        %v3443 = vpop.permute.xlu0 %3442
        %s3445 = sor.u32 256, 24
        %3446 = vbcast.lane.b32.xlu0 %v3432, %s3445
        %v3447 = vpop.permute.xlu0 %3446
        %v3448 = vlaneseq
        %v3449 = vshrl.u32 %v3448, 7
        %v3450 = vsub.s32 6, %v3449
        %v3451 = vrot.slane %v3179, %v3450
        %3453 = vbcast.lane.b32.xlu0 %v3451, 256
        %v3454 = vpop.permute.xlu0 %3453
        %s3456 = sor.u32 256, 8
        %3457 = vbcast.lane.b32.xlu0 %v3451, %s3456
        %v3458 = vpop.permute.xlu0 %3457
        %s3460 = sor.u32 256, 16
        %3461 = vbcast.lane.b32.xlu0 %v3451, %s3460
        %v3462 = vpop.permute.xlu0 %3461
        %s3464 = sor.u32 256, 24
        %3465 = vbcast.lane.b32.xlu0 %v3451, %s3464
        %v3466 = vpop.permute.xlu0 %3465
        %v3467 = vlaneseq
        %v3468 = vshrl.u32 %v3467, 7
        %v3469 = vsub.s32 7, %v3468
        %v3470 = vrot.slane %v3179, %v3469
        %3472 = vbcast.lane.b32.xlu0 %v3470, 256
        %v3473 = vpop.permute.xlu0 %3472
        %s3475 = sor.u32 256, 8
        %3476 = vbcast.lane.b32.xlu0 %v3470, %s3475
        %v3477 = vpop.permute.xlu0 %3476
        %s3479 = sor.u32 256, 16
        %3480 = vbcast.lane.b32.xlu0 %v3470, %s3479
        %v3481 = vpop.permute.xlu0 %3480
        %s3483 = sor.u32 256, 24
        %3484 = vbcast.lane.b32.xlu0 %v3470, %s3483
        %v3485 = vpop.permute.xlu0 %3484
        %v3487 = vsel %vm1129, %v3021, 0
        %v3490 = vsel %vm1129, %v3022, 0
        %v3493 = vsel %vm1129, %v3023, 0
        %v3496 = vsel %vm1129, %v3024, 0
        %v3499 = vsel %vm1129, %v3025, 0
        %v3502 = vsel %vm1129, %v3026, 0
        %v3505 = vsel %vm1129, %v3027, 0
        %v3508 = vsel %vm1129, %v3028, 0
        %3510 = vmatprep.subr.mxu0 0.0
        %3511 = vmatpush1.msra.mxu0 %v3188
        %3512 = vmatprep.subr.mxu0 0.0
        %3513 = vmatpush1.msra.mxu0 %v3192
        %3514 = vmatprep.subr.mxu0 0.0
        %3515 = vmatpush1.msra.mxu0 %v3196
        %3516 = vmatprep.subr.mxu0 0.0
        %3517 = vmatpush1.msra.mxu0 %v3200
        %3518 = vmatprep.subr.mxu0 0.0
        %3519 = vmatpush1.msra.mxu0 %v3340
        %3520 = vmatprep.subr.mxu0 0.0
        %3521 = vmatpush1.msra.mxu0 %v3344
        %3522 = vmatprep.subr.mxu0 0.0
        %3523 = vmatpush1.msra.mxu0 %v3348
        %3524 = vmatprep.subr.mxu0 0.0
        %3525 = vmatpush1.msra.mxu0 %v3352
        %3526 = vmatprep.subr.mxu0 0.0
        %3527 = vmatpush1.msra.mxu0 0.0
        %3528 = vmatprep.subr.mxu0 0.0
        %3529 = vmatpush1.msra.mxu0 0.0
        %3530 = vmatprep.subr.mxu0 0.0
        %3531 = vmatpush1.msra.mxu0 0.0
        %3532 = vmatprep.subr.mxu0 0.0
        %3533 = vmatpush1.msra.mxu0 0.0
        %3534 = vmatprep.subr.mxu0 0.0
        %3535 = vmatpush1.msra.mxu0 0.0
        %3536 = vmatprep.subr.mxu0 0.0
        %3537 = vmatpush1.msra.mxu0 0.0
        %3538 = vmatprep.subr.mxu0 0.0
        %3539 = vmatpush1.msra.mxu0 0.0
        %3540 = vmatprep.subr.mxu0 0.0
        %3541 = vmatpush1.msra.mxu0 0.0
        %3542 = vmatprep.subr.mxu0 0.0
        %3543 = vmatpush1.msra.mxu0 0.0
        %3544 = vmatprep.subr.mxu0 0.0
        %3545 = vmatpush1.msra.mxu0 0.0
        %3546 = vmatprep.subr.mxu0 0.0
        %3547 = vmatpush1.msra.mxu0 0.0
        %3548 = vmatprep.subr.mxu0 0.0
        %3549 = vmatpush1.msra.mxu0 0.0
        %3550 = vmatprep.subr.mxu0 0.0
        %3551 = vmatpush1.msra.mxu0 0.0
        %3552 = vmatprep.subr.mxu0 0.0
        %3553 = vmatpush1.msra.mxu0 0.0
        %3554 = vmatprep.subr.mxu0 0.0
        %3555 = vmatpush1.msra.mxu0 0.0
        %3556 = vmatprep.subr.mxu0 0.0
        %3557 = vmatpush1.msra.mxu0 0.0
        %3558 = vmatprep.subr.mxu0 0.0
        %3559 = vmatpush1.msra.mxu0 0.0
        %3560 = vmatprep.subr.mxu0 0.0
        %3561 = vmatpush1.msra.mxu0 0.0
        %3562 = vmatprep.subr.mxu0 0.0
        %3563 = vmatpush1.msra.mxu0 0.0
        %3564 = vmatprep.subr.mxu0 0.0
        %3565 = vmatpush1.msra.mxu0 0.0
        %3566 = vmatprep.subr.mxu0 0.0
        %3567 = vmatpush1.msra.mxu0 0.0
        %3568 = vmatprep.subr.mxu0 0.0
        %3569 = vmatpush1.msra.mxu0 0.0
        %3570 = vmatprep.subr.mxu0 0.0
        %3571 = vmatpush1.msra.mxu0 0.0
        %3572 = vmatprep.subr.mxu0 0.0
        %3573 = vmatpush1.msra.mxu0 0.0
        %3574 = vmatprep.mubr.f32.mxu0 0.0
        %3575 = vmatmul.mubr.f32.gmra.mrb[0].mxu0 %v3487
        %v3576 = vpop.f32.mrb[0].mxu0
        %v3577 = vadd.f32 0.0, %v3576
        %v3578 = vpop.f32.mrb[0].mxu0
        %3579 = vmatprep.mubr.f32.mxu0 0.0
        %3580 = vmatmul.mubr.f32.gmra.mrb[0].mxu0 %v3490
        %v3581 = vpop.f32.mrb[0].mxu0
        %v3582 = vadd.f32 0.0, %v3581
        %v3583 = vpop.f32.mrb[0].mxu0
        %3584 = vmatprep.mubr.f32.mxu0 0.0
        %3585 = vmatmul.mubr.f32.gmra.mrb[0].mxu0 %v3493
        %v3586 = vpop.f32.mrb[0].mxu0
        %v3587 = vadd.f32 0.0, %v3586
        %v3588 = vpop.f32.mrb[0].mxu0
        %3589 = vmatprep.mubr.f32.mxu0 0.0
        %3590 = vmatmul.mubr.f32.gmra.mrb[0].mxu0 %v3496
        %v3591 = vpop.f32.mrb[0].mxu0
        %v3592 = vadd.f32 0.0, %v3591
        %v3593 = vpop.f32.mrb[0].mxu0
        %3594 = vmatprep.mubr.f32.mxu0 0.0
        %3595 = vmatmul.mubr.f32.gmra.mrb[0].mxu0 %v3499
        %v3596 = vpop.f32.mrb[0].mxu0
        %v3597 = vadd.f32 0.0, %v3596
        %v3598 = vpop.f32.mrb[0].mxu0
        %3599 = vmatprep.mubr.f32.mxu0 0.0
        %3600 = vmatmul.mubr.f32.gmra.mrb[0].mxu0 %v3502
        %v3601 = vpop.f32.mrb[0].mxu0
        %v3602 = vadd.f32 0.0, %v3601
        %v3603 = vpop.f32.mrb[0].mxu0
        %3604 = vmatprep.mubr.f32.mxu0 0.0
        %3605 = vmatmul.mubr.f32.gmra.mrb[0].mxu0 %v3505
        %v3606 = vpop.f32.mrb[0].mxu0
        %v3607 = vadd.f32 0.0, %v3606
        %v3608 = vpop.f32.mrb[0].mxu0
        %3609 = vmatprep.mubr.f32.mxu0 0.0
        %3610 = vmatmul.mubr.f32.gmra.mrb[0].mxu0 %v3508
        %v3611 = vpop.f32.mrb[0].mxu0
        %v3612 = vadd.f32 0.0, %v3611
        %v3613 = vpop.f32.mrb[0].mxu0
        %3614 = vdwg.mxu0
        %v3616 = vsel %vm1129, %v3029, 0
        %v3619 = vsel %vm1129, %v3030, 0
        %v3622 = vsel %vm1129, %v3031, 0
        %v3625 = vsel %vm1129, %v3032, 0
        %v3628 = vsel %vm1129, %v3033, 0
        %v3631 = vsel %vm1129, %v3034, 0
        %v3634 = vsel %vm1129, %v3035, 0
        %v3637 = vsel %vm1129, %v3036, 0
        %3639 = vmatprep.subr.mxu0 0.0
        %3640 = vmatpush1.msra.mxu0 %v3207
        %3641 = vmatprep.subr.mxu0 0.0
        %3642 = vmatpush1.msra.mxu0 %v3211
        %3643 = vmatprep.subr.mxu0 0.0
        %3644 = vmatpush1.msra.mxu0 %v3215
        %3645 = vmatprep.subr.mxu0 0.0
        %3646 = vmatpush1.msra.mxu0 %v3219
        %3647 = vmatprep.subr.mxu0 0.0
        %3648 = vmatpush1.msra.mxu0 %v3359
        %3649 = vmatprep.subr.mxu0 0.0
        %3650 = vmatpush1.msra.mxu0 %v3363
        %3651 = vmatprep.subr.mxu0 0.0
        %3652 = vmatpush1.msra.mxu0 %v3367
        %3653 = vmatprep.subr.mxu0 0.0
        %3654 = vmatpush1.msra.mxu0 %v3371
        %3655 = vmatprep.subr.mxu0 0.0
        %3656 = vmatpush1.msra.mxu0 0.0
        %3657 = vmatprep.subr.mxu0 0.0
        %3658 = vmatpush1.msra.mxu0 0.0
        %3659 = vmatprep.subr.mxu0 0.0
        %3660 = vmatpush1.msra.mxu0 0.0
        %3661 = vmatprep.subr.mxu0 0.0
        %3662 = vmatpush1.msra.mxu0 0.0
        %3663 = vmatprep.subr.mxu0 0.0
        %3664 = vmatpush1.msra.mxu0 0.0
        %3665 = vmatprep.subr.mxu0 0.0
        %3666 = vmatpush1.msra.mxu0 0.0
        %3667 = vmatprep.subr.mxu0 0.0
        %3668 = vmatpush1.msra.mxu0 0.0
        %3669 = vmatprep.subr.mxu0 0.0
        %3670 = vmatpush1.msra.mxu0 0.0
        %3671 = vmatprep.subr.mxu0 0.0
        %3672 = vmatpush1.msra.mxu0 0.0
        %3673 = vmatprep.subr.mxu0 0.0
        %3674 = vmatpush1.msra.mxu0 0.0
        %3675 = vmatprep.subr.mxu0 0.0
        %3676 = vmatpush1.msra.mxu0 0.0
        %3677 = vmatprep.subr.mxu0 0.0
        %3678 = vmatpush1.msra.mxu0 0.0
        %3679 = vmatprep.subr.mxu0 0.0
        %3680 = vmatpush1.msra.mxu0 0.0
        %3681 = vmatprep.subr.mxu0 0.0
        %3682 = vmatpush1.msra.mxu0 0.0
        %3683 = vmatprep.subr.mxu0 0.0
        %3684 = vmatpush1.msra.mxu0 0.0
        %3685 = vmatprep.subr.mxu0 0.0
        %3686 = vmatpush1.msra.mxu0 0.0
        %3687 = vmatprep.subr.mxu0 0.0
        %3688 = vmatpush1.msra.mxu0 0.0
        %3689 = vmatprep.subr.mxu0 0.0
        %3690 = vmatpush1.msra.mxu0 0.0
        %3691 = vmatprep.subr.mxu0 0.0
        %3692 = vmatpush1.msra.mxu0 0.0
        %3693 = vmatprep.subr.mxu0 0.0
        %3694 = vmatpush1.msra.mxu0 0.0
        %3695 = vmatprep.subr.mxu0 0.0
        %3696 = vmatpush1.msra.mxu0 0.0
        %3697 = vmatprep.subr.mxu0 0.0
        %3698 = vmatpush1.msra.mxu0 0.0
        %3699 = vmatprep.subr.mxu0 0.0
        %3700 = vmatpush1.msra.mxu0 0.0
        %3701 = vmatprep.subr.mxu0 0.0
        %3702 = vmatpush1.msra.mxu0 0.0
        %3703 = vmatprep.mubr.f32.mxu0 0.0
        %3704 = vmatmul.mubr.f32.gmra.mrb[0].mxu0 %v3616
        %v3705 = vpop.f32.mrb[0].mxu0
        %v3706 = vadd.f32 0.0, %v3705
        %v3707 = vpop.f32.mrb[0].mxu0
        %3708 = vmatprep.mubr.f32.mxu0 0.0
        %3709 = vmatmul.mubr.f32.gmra.mrb[0].mxu0 %v3619
        %v3710 = vpop.f32.mrb[0].mxu0
        %v3711 = vadd.f32 0.0, %v3710
        %v3712 = vpop.f32.mrb[0].mxu0
        %3713 = vmatprep.mubr.f32.mxu0 0.0
        %3714 = vmatmul.mubr.f32.gmra.mrb[0].mxu0 %v3622
        %v3715 = vpop.f32.mrb[0].mxu0
        %v3716 = vadd.f32 0.0, %v3715
        %v3717 = vpop.f32.mrb[0].mxu0
        %3718 = vmatprep.mubr.f32.mxu0 0.0
        %3719 = vmatmul.mubr.f32.gmra.mrb[0].mxu0 %v3625
        %v3720 = vpop.f32.mrb[0].mxu0
        %v3721 = vadd.f32 0.0, %v3720
        %v3722 = vpop.f32.mrb[0].mxu0
        %3723 = vmatprep.mubr.f32.mxu0 0.0
        %3724 = vmatmul.mubr.f32.gmra.mrb[0].mxu0 %v3628
        %v3725 = vpop.f32.mrb[0].mxu0
        %v3726 = vadd.f32 0.0, %v3725
        %v3727 = vpop.f32.mrb[0].mxu0
        %3728 = vmatprep.mubr.f32.mxu0 0.0
        %3729 = vmatmul.mubr.f32.gmra.mrb[0].mxu0 %v3631
        %v3730 = vpop.f32.mrb[0].mxu0
        %v3731 = vadd.f32 0.0, %v3730
        %v3732 = vpop.f32.mrb[0].mxu0
        %3733 = vmatprep.mubr.f32.mxu0 0.0
        %3734 = vmatmul.mubr.f32.gmra.mrb[0].mxu0 %v3634
        %v3735 = vpop.f32.mrb[0].mxu0
        %v3736 = vadd.f32 0.0, %v3735
        %v3737 = vpop.f32.mrb[0].mxu0
        %3738 = vmatprep.mubr.f32.mxu0 0.0
        %3739 = vmatmul.mubr.f32.gmra.mrb[0].mxu0 %v3637
        %v3740 = vpop.f32.mrb[0].mxu0
        %v3741 = vadd.f32 0.0, %v3740
        %v3742 = vpop.f32.mrb[0].mxu0
        %3743 = vdwg.mxu0
        %v3745 = vsel %vm1129, %v3037, 0
        %v3748 = vsel %vm1129, %v3038, 0
        %v3751 = vsel %vm1129, %v3039, 0
        %v3754 = vsel %vm1129, %v3040, 0
        %v3757 = vsel %vm1129, %v3041, 0
        %v3760 = vsel %vm1129, %v3042, 0
        %v3763 = vsel %vm1129, %v3043, 0
        %v3766 = vsel %vm1129, %v3044, 0
        %3768 = vmatprep.subr.mxu0 0.0
        %3769 = vmatpush1.msra.mxu0 %v3226
        %3770 = vmatprep.subr.mxu0 0.0
        %3771 = vmatpush1.msra.mxu0 %v3230
        %3772 = vmatprep.subr.mxu0 0.0
        %3773 = vmatpush1.msra.mxu0 %v3234
        %3774 = vmatprep.subr.mxu0 0.0
        %3775 = vmatpush1.msra.mxu0 %v3238
        %3776 = vmatprep.subr.mxu0 0.0
        %3777 = vmatpush1.msra.mxu0 %v3378
        %3778 = vmatprep.subr.mxu0 0.0
        %3779 = vmatpush1.msra.mxu0 %v3382
        %3780 = vmatprep.subr.mxu0 0.0
        %3781 = vmatpush1.msra.mxu0 %v3386
        %3782 = vmatprep.subr.mxu0 0.0
        %3783 = vmatpush1.msra.mxu0 %v3390
        %3784 = vmatprep.subr.mxu0 0.0
        %3785 = vmatpush1.msra.mxu0 0.0
        %3786 = vmatprep.subr.mxu0 0.0
        %3787 = vmatpush1.msra.mxu0 0.0
        %3788 = vmatprep.subr.mxu0 0.0
        %3789 = vmatpush1.msra.mxu0 0.0
        %3790 = vmatprep.subr.mxu0 0.0
        %3791 = vmatpush1.msra.mxu0 0.0
        %3792 = vmatprep.subr.mxu0 0.0
        %3793 = vmatpush1.msra.mxu0 0.0
        %3794 = vmatprep.subr.mxu0 0.0
        %3795 = vmatpush1.msra.mxu0 0.0
        %3796 = vmatprep.subr.mxu0 0.0
        %3797 = vmatpush1.msra.mxu0 0.0
        %3798 = vmatprep.subr.mxu0 0.0
        %3799 = vmatpush1.msra.mxu0 0.0
        %3800 = vmatprep.subr.mxu0 0.0
        %3801 = vmatpush1.msra.mxu0 0.0
        %3802 = vmatprep.subr.mxu0 0.0
        %3803 = vmatpush1.msra.mxu0 0.0
        %3804 = vmatprep.subr.mxu0 0.0
        %3805 = vmatpush1.msra.mxu0 0.0
        %3806 = vmatprep.subr.mxu0 0.0
        %3807 = vmatpush1.msra.mxu0 0.0
        %3808 = vmatprep.subr.mxu0 0.0
        %3809 = vmatpush1.msra.mxu0 0.0
        %3810 = vmatprep.subr.mxu0 0.0
        %3811 = vmatpush1.msra.mxu0 0.0
        %3812 = vmatprep.subr.mxu0 0.0
        %3813 = vmatpush1.msra.mxu0 0.0
        %3814 = vmatprep.subr.mxu0 0.0
        %3815 = vmatpush1.msra.mxu0 0.0
        %3816 = vmatprep.subr.mxu0 0.0
        %3817 = vmatpush1.msra.mxu0 0.0
        %3818 = vmatprep.subr.mxu0 0.0
        %3819 = vmatpush1.msra.mxu0 0.0
        %3820 = vmatprep.subr.mxu0 0.0
        %3821 = vmatpush1.msra.mxu0 0.0
        %3822 = vmatprep.subr.mxu0 0.0
        %3823 = vmatpush1.msra.mxu0 0.0
        %3824 = vmatprep.subr.mxu0 0.0
        %3825 = vmatpush1.msra.mxu0 0.0
        %3826 = vmatprep.subr.mxu0 0.0
        %3827 = vmatpush1.msra.mxu0 0.0
        %3828 = vmatprep.subr.mxu0 0.0
        %3829 = vmatpush1.msra.mxu0 0.0
        %3830 = vmatprep.subr.mxu0 0.0
        %3831 = vmatpush1.msra.mxu0 0.0
        %3832 = vmatprep.mubr.f32.mxu0 0.0
        %3833 = vmatmul.mubr.f32.gmra.mrb[0].mxu0 %v3745
        %v3834 = vpop.f32.mrb[0].mxu0
        %v3835 = vadd.f32 0.0, %v3834
        %v3836 = vpop.f32.mrb[0].mxu0
        %3837 = vmatprep.mubr.f32.mxu0 0.0
        %3838 = vmatmul.mubr.f32.gmra.mrb[0].mxu0 %v3748
        %v3839 = vpop.f32.mrb[0].mxu0
        %v3840 = vadd.f32 0.0, %v3839
        %v3841 = vpop.f32.mrb[0].mxu0
        %3842 = vmatprep.mubr.f32.mxu0 0.0
        %3843 = vmatmul.mubr.f32.gmra.mrb[0].mxu0 %v3751
        %v3844 = vpop.f32.mrb[0].mxu0
        %v3845 = vadd.f32 0.0, %v3844
        %v3846 = vpop.f32.mrb[0].mxu0
        %3847 = vmatprep.mubr.f32.mxu0 0.0
        %3848 = vmatmul.mubr.f32.gmra.mrb[0].mxu0 %v3754
        %v3849 = vpop.f32.mrb[0].mxu0
        %v3850 = vadd.f32 0.0, %v3849
        %v3851 = vpop.f32.mrb[0].mxu0
        %3852 = vmatprep.mubr.f32.mxu0 0.0
        %3853 = vmatmul.mubr.f32.gmra.mrb[0].mxu0 %v3757
        %v3854 = vpop.f32.mrb[0].mxu0
        %v3855 = vadd.f32 0.0, %v3854
        %v3856 = vpop.f32.mrb[0].mxu0
        %3857 = vmatprep.mubr.f32.mxu0 0.0
        %3858 = vmatmul.mubr.f32.gmra.mrb[0].mxu0 %v3760
        %v3859 = vpop.f32.mrb[0].mxu0
        %v3860 = vadd.f32 0.0, %v3859
        %v3861 = vpop.f32.mrb[0].mxu0
        %3862 = vmatprep.mubr.f32.mxu0 0.0
        %3863 = vmatmul.mubr.f32.gmra.mrb[0].mxu0 %v3763
        %v3864 = vpop.f32.mrb[0].mxu0
        %v3865 = vadd.f32 0.0, %v3864
        %v3866 = vpop.f32.mrb[0].mxu0
        %3867 = vmatprep.mubr.f32.mxu0 0.0
        %3868 = vmatmul.mubr.f32.gmra.mrb[0].mxu0 %v3766
        %v3869 = vpop.f32.mrb[0].mxu0
        %v3870 = vadd.f32 0.0, %v3869
        %v3871 = vpop.f32.mrb[0].mxu0
        %3872 = vdwg.mxu0
        %v3874 = vsel %vm1129, %v3045, 0
        %v3877 = vsel %vm1129, %v3046, 0
        %v3880 = vsel %vm1129, %v3047, 0
        %v3883 = vsel %vm1129, %v3048, 0
        %v3886 = vsel %vm1129, %v3049, 0
        %v3889 = vsel %vm1129, %v3050, 0
        %v3892 = vsel %vm1129, %v3051, 0
        %v3895 = vsel %vm1129, %v3052, 0
        %3897 = vmatprep.subr.mxu0 0.0
        %3898 = vmatpush1.msra.mxu0 %v3245
        %3899 = vmatprep.subr.mxu0 0.0
        %3900 = vmatpush1.msra.mxu0 %v3249
        %3901 = vmatprep.subr.mxu0 0.0
        %3902 = vmatpush1.msra.mxu0 %v3253
        %3903 = vmatprep.subr.mxu0 0.0
        %3904 = vmatpush1.msra.mxu0 %v3257
        %3905 = vmatprep.subr.mxu0 0.0
        %3906 = vmatpush1.msra.mxu0 %v3397
        %3907 = vmatprep.subr.mxu0 0.0
        %3908 = vmatpush1.msra.mxu0 %v3401
        %3909 = vmatprep.subr.mxu0 0.0
        %3910 = vmatpush1.msra.mxu0 %v3405
        %3911 = vmatprep.subr.mxu0 0.0
        %3912 = vmatpush1.msra.mxu0 %v3409
        %3913 = vmatprep.subr.mxu0 0.0
        %3914 = vmatpush1.msra.mxu0 0.0
        %3915 = vmatprep.subr.mxu0 0.0
        %3916 = vmatpush1.msra.mxu0 0.0
        %3917 = vmatprep.subr.mxu0 0.0
        %3918 = vmatpush1.msra.mxu0 0.0
        %3919 = vmatprep.subr.mxu0 0.0
        %3920 = vmatpush1.msra.mxu0 0.0
        %3921 = vmatprep.subr.mxu0 0.0
        %3922 = vmatpush1.msra.mxu0 0.0
        %3923 = vmatprep.subr.mxu0 0.0
        %3924 = vmatpush1.msra.mxu0 0.0
        %3925 = vmatprep.subr.mxu0 0.0
        %3926 = vmatpush1.msra.mxu0 0.0
        %3927 = vmatprep.subr.mxu0 0.0
        %3928 = vmatpush1.msra.mxu0 0.0
        %3929 = vmatprep.subr.mxu0 0.0
        %3930 = vmatpush1.msra.mxu0 0.0
        %3931 = vmatprep.subr.mxu0 0.0
        %3932 = vmatpush1.msra.mxu0 0.0
        %3933 = vmatprep.subr.mxu0 0.0
        %3934 = vmatpush1.msra.mxu0 0.0
        %3935 = vmatprep.subr.mxu0 0.0
        %3936 = vmatpush1.msra.mxu0 0.0
        %3937 = vmatprep.subr.mxu0 0.0
        %3938 = vmatpush1.msra.mxu0 0.0
        %3939 = vmatprep.subr.mxu0 0.0
        %3940 = vmatpush1.msra.mxu0 0.0
        %3941 = vmatprep.subr.mxu0 0.0
        %3942 = vmatpush1.msra.mxu0 0.0
        %3943 = vmatprep.subr.mxu0 0.0
        %3944 = vmatpush1.msra.mxu0 0.0
        %3945 = vmatprep.subr.mxu0 0.0
        %3946 = vmatpush1.msra.mxu0 0.0
        %3947 = vmatprep.subr.mxu0 0.0
        %3948 = vmatpush1.msra.mxu0 0.0
        %3949 = vmatprep.subr.mxu0 0.0
        %3950 = vmatpush1.msra.mxu0 0.0
        %3951 = vmatprep.subr.mxu0 0.0
        %3952 = vmatpush1.msra.mxu0 0.0
        %3953 = vmatprep.subr.mxu0 0.0
        %3954 = vmatpush1.msra.mxu0 0.0
        %3955 = vmatprep.subr.mxu0 0.0
        %3956 = vmatpush1.msra.mxu0 0.0
        %3957 = vmatprep.subr.mxu0 0.0
        %3958 = vmatpush1.msra.mxu0 0.0
        %3959 = vmatprep.subr.mxu0 0.0
        %3960 = vmatpush1.msra.mxu0 0.0
        %3961 = vmatprep.mubr.f32.mxu0 0.0
        %3962 = vmatmul.mubr.f32.gmra.mrb[0].mxu0 %v3874
        %v3963 = vpop.f32.mrb[0].mxu0
        %v3964 = vadd.f32 0.0, %v3963
        %v3965 = vpop.f32.mrb[0].mxu0
        %3966 = vmatprep.mubr.f32.mxu0 0.0
        %3967 = vmatmul.mubr.f32.gmra.mrb[0].mxu0 %v3877
        %v3968 = vpop.f32.mrb[0].mxu0
        %v3969 = vadd.f32 0.0, %v3968
        %v3970 = vpop.f32.mrb[0].mxu0
        %3971 = vmatprep.mubr.f32.mxu0 0.0
        %3972 = vmatmul.mubr.f32.gmra.mrb[0].mxu0 %v3880
        %v3973 = vpop.f32.mrb[0].mxu0
        %v3974 = vadd.f32 0.0, %v3973
        %v3975 = vpop.f32.mrb[0].mxu0
        %3976 = vmatprep.mubr.f32.mxu0 0.0
        %3977 = vmatmul.mubr.f32.gmra.mrb[0].mxu0 %v3883
        %v3978 = vpop.f32.mrb[0].mxu0
        %v3979 = vadd.f32 0.0, %v3978
        %v3980 = vpop.f32.mrb[0].mxu0
        %3981 = vmatprep.mubr.f32.mxu0 0.0
        %3982 = vmatmul.mubr.f32.gmra.mrb[0].mxu0 %v3886
        %v3983 = vpop.f32.mrb[0].mxu0
        %v3984 = vadd.f32 0.0, %v3983
        %v3985 = vpop.f32.mrb[0].mxu0
        %3986 = vmatprep.mubr.f32.mxu0 0.0
        %3987 = vmatmul.mubr.f32.gmra.mrb[0].mxu0 %v3889
        %v3988 = vpop.f32.mrb[0].mxu0
        %v3989 = vadd.f32 0.0, %v3988
        %v3990 = vpop.f32.mrb[0].mxu0
        %3991 = vmatprep.mubr.f32.mxu0 0.0
        %3992 = vmatmul.mubr.f32.gmra.mrb[0].mxu0 %v3892
        %v3993 = vpop.f32.mrb[0].mxu0
        %v3994 = vadd.f32 0.0, %v3993
        %v3995 = vpop.f32.mrb[0].mxu0
        %3996 = vmatprep.mubr.f32.mxu0 0.0
        %3997 = vmatmul.mubr.f32.gmra.mrb[0].mxu0 %v3895
        %v3998 = vpop.f32.mrb[0].mxu0
        %v3999 = vadd.f32 0.0, %v3998
        %v4000 = vpop.f32.mrb[0].mxu0
        %4001 = vdwg.mxu0
        %v4003 = vsel %vm1129, %v3053, 0
        %v4006 = vsel %vm1129, %v3054, 0
        %v4009 = vsel %vm1129, %v3055, 0
        %v4012 = vsel %vm1129, %v3056, 0
        %v4015 = vsel %vm1129, %v3057, 0
        %v4018 = vsel %vm1129, %v3058, 0
        %v4021 = vsel %vm1129, %v3059, 0
        %v4024 = vsel %vm1129, %v3060, 0
        %4026 = vmatprep.subr.mxu0 0.0
        %4027 = vmatpush1.msra.mxu0 %v3264
        %4028 = vmatprep.subr.mxu0 0.0
        %4029 = vmatpush1.msra.mxu0 %v3268
        %4030 = vmatprep.subr.mxu0 0.0
        %4031 = vmatpush1.msra.mxu0 %v3272
        %4032 = vmatprep.subr.mxu0 0.0
        %4033 = vmatpush1.msra.mxu0 %v3276
        %4034 = vmatprep.subr.mxu0 0.0
        %4035 = vmatpush1.msra.mxu0 %v3416
        %4036 = vmatprep.subr.mxu0 0.0
        %4037 = vmatpush1.msra.mxu0 %v3420
        %4038 = vmatprep.subr.mxu0 0.0
        %4039 = vmatpush1.msra.mxu0 %v3424
        %4040 = vmatprep.subr.mxu0 0.0
        %4041 = vmatpush1.msra.mxu0 %v3428
        %4042 = vmatprep.subr.mxu0 0.0
        %4043 = vmatpush1.msra.mxu0 0.0
        %4044 = vmatprep.subr.mxu0 0.0
        %4045 = vmatpush1.msra.mxu0 0.0
        %4046 = vmatprep.subr.mxu0 0.0
        %4047 = vmatpush1.msra.mxu0 0.0
        %4048 = vmatprep.subr.mxu0 0.0
        %4049 = vmatpush1.msra.mxu0 0.0
        %4050 = vmatprep.subr.mxu0 0.0
        %4051 = vmatpush1.msra.mxu0 0.0
        %4052 = vmatprep.subr.mxu0 0.0
        %4053 = vmatpush1.msra.mxu0 0.0
        %4054 = vmatprep.subr.mxu0 0.0
        %4055 = vmatpush1.msra.mxu0 0.0
        %4056 = vmatprep.subr.mxu0 0.0
        %4057 = vmatpush1.msra.mxu0 0.0
        %4058 = vmatprep.subr.mxu0 0.0
        %4059 = vmatpush1.msra.mxu0 0.0
        %4060 = vmatprep.subr.mxu0 0.0
        %4061 = vmatpush1.msra.mxu0 0.0
        %4062 = vmatprep.subr.mxu0 0.0
        %4063 = vmatpush1.msra.mxu0 0.0
        %4064 = vmatprep.subr.mxu0 0.0
        %4065 = vmatpush1.msra.mxu0 0.0
        %4066 = vmatprep.subr.mxu0 0.0
        %4067 = vmatpush1.msra.mxu0 0.0
        %4068 = vmatprep.subr.mxu0 0.0
        %4069 = vmatpush1.msra.mxu0 0.0
        %4070 = vmatprep.subr.mxu0 0.0
        %4071 = vmatpush1.msra.mxu0 0.0
        %4072 = vmatprep.subr.mxu0 0.0
        %4073 = vmatpush1.msra.mxu0 0.0
        %4074 = vmatprep.subr.mxu0 0.0
        %4075 = vmatpush1.msra.mxu0 0.0
        %4076 = vmatprep.subr.mxu0 0.0
        %4077 = vmatpush1.msra.mxu0 0.0
        %4078 = vmatprep.subr.mxu0 0.0
        %4079 = vmatpush1.msra.mxu0 0.0
        %4080 = vmatprep.subr.mxu0 0.0
        %4081 = vmatpush1.msra.mxu0 0.0
        %4082 = vmatprep.subr.mxu0 0.0
        %4083 = vmatpush1.msra.mxu0 0.0
        %4084 = vmatprep.subr.mxu0 0.0
        %4085 = vmatpush1.msra.mxu0 0.0
        %4086 = vmatprep.subr.mxu0 0.0
        %4087 = vmatpush1.msra.mxu0 0.0
        %4088 = vmatprep.subr.mxu0 0.0
        %4089 = vmatpush1.msra.mxu0 0.0
        %4090 = vmatprep.mubr.f32.mxu0 0.0
        %4091 = vmatmul.mubr.f32.gmra.mrb[0].mxu0 %v4003
        %v4092 = vpop.f32.mrb[0].mxu0
        %v4093 = vadd.f32 0.0, %v4092
        %v4094 = vpop.f32.mrb[0].mxu0
        %4095 = vmatprep.mubr.f32.mxu0 0.0
        %4096 = vmatmul.mubr.f32.gmra.mrb[0].mxu0 %v4006
        %v4097 = vpop.f32.mrb[0].mxu0
        %v4098 = vadd.f32 0.0, %v4097
        %v4099 = vpop.f32.mrb[0].mxu0
        %4100 = vmatprep.mubr.f32.mxu0 0.0
        %4101 = vmatmul.mubr.f32.gmra.mrb[0].mxu0 %v4009
        %v4102 = vpop.f32.mrb[0].mxu0
        %v4103 = vadd.f32 0.0, %v4102
        %v4104 = vpop.f32.mrb[0].mxu0
        %4105 = vmatprep.mubr.f32.mxu0 0.0
        %4106 = vmatmul.mubr.f32.gmra.mrb[0].mxu0 %v4012
        %v4107 = vpop.f32.mrb[0].mxu0
        %v4108 = vadd.f32 0.0, %v4107
        %v4109 = vpop.f32.mrb[0].mxu0
        %4110 = vmatprep.mubr.f32.mxu0 0.0
        %4111 = vmatmul.mubr.f32.gmra.mrb[0].mxu0 %v4015
        %v4112 = vpop.f32.mrb[0].mxu0
        %v4113 = vadd.f32 0.0, %v4112
        %v4114 = vpop.f32.mrb[0].mxu0
        %4115 = vmatprep.mubr.f32.mxu0 0.0
        %4116 = vmatmul.mubr.f32.gmra.mrb[0].mxu0 %v4018
        %v4117 = vpop.f32.mrb[0].mxu0
        %v4118 = vadd.f32 0.0, %v4117
        %v4119 = vpop.f32.mrb[0].mxu0
        %4120 = vmatprep.mubr.f32.mxu0 0.0
        %4121 = vmatmul.mubr.f32.gmra.mrb[0].mxu0 %v4021
        %v4122 = vpop.f32.mrb[0].mxu0
        %v4123 = vadd.f32 0.0, %v4122
        %v4124 = vpop.f32.mrb[0].mxu0
        %4125 = vmatprep.mubr.f32.mxu0 0.0
        %4126 = vmatmul.mubr.f32.gmra.mrb[0].mxu0 %v4024
        %v4127 = vpop.f32.mrb[0].mxu0
        %v4128 = vadd.f32 0.0, %v4127
        %v4129 = vpop.f32.mrb[0].mxu0
        %4130 = vdwg.mxu0
        %v4132 = vsel %vm1129, %v3061, 0
        %v4135 = vsel %vm1129, %v3062, 0
        %v4138 = vsel %vm1129, %v3063, 0
        %v4141 = vsel %vm1129, %v3064, 0
        %v4144 = vsel %vm1129, %v3065, 0
        %v4147 = vsel %vm1129, %v3066, 0
        %v4150 = vsel %vm1129, %v3067, 0
        %v4153 = vsel %vm1129, %v3068, 0
        %4155 = vmatprep.subr.mxu0 0.0
        %4156 = vmatpush1.msra.mxu0 %v3283
        %4157 = vmatprep.subr.mxu0 0.0
        %4158 = vmatpush1.msra.mxu0 %v3287
        %4159 = vmatprep.subr.mxu0 0.0
        %4160 = vmatpush1.msra.mxu0 %v3291
        %4161 = vmatprep.subr.mxu0 0.0
        %4162 = vmatpush1.msra.mxu0 %v3295
        %4163 = vmatprep.subr.mxu0 0.0
        %4164 = vmatpush1.msra.mxu0 %v3435
        %4165 = vmatprep.subr.mxu0 0.0
        %4166 = vmatpush1.msra.mxu0 %v3439
        %4167 = vmatprep.subr.mxu0 0.0
        %4168 = vmatpush1.msra.mxu0 %v3443
        %4169 = vmatprep.subr.mxu0 0.0
        %4170 = vmatpush1.msra.mxu0 %v3447
        %4171 = vmatprep.subr.mxu0 0.0
        %4172 = vmatpush1.msra.mxu0 0.0
        %4173 = vmatprep.subr.mxu0 0.0
        %4174 = vmatpush1.msra.mxu0 0.0
        %4175 = vmatprep.subr.mxu0 0.0
        %4176 = vmatpush1.msra.mxu0 0.0
        %4177 = vmatprep.subr.mxu0 0.0
        %4178 = vmatpush1.msra.mxu0 0.0
        %4179 = vmatprep.subr.mxu0 0.0
        %4180 = vmatpush1.msra.mxu0 0.0
        %4181 = vmatprep.subr.mxu0 0.0
        %4182 = vmatpush1.msra.mxu0 0.0
        %4183 = vmatprep.subr.mxu0 0.0
        %4184 = vmatpush1.msra.mxu0 0.0
        %4185 = vmatprep.subr.mxu0 0.0
        %4186 = vmatpush1.msra.mxu0 0.0
        %4187 = vmatprep.subr.mxu0 0.0
        %4188 = vmatpush1.msra.mxu0 0.0
        %4189 = vmatprep.subr.mxu0 0.0
        %4190 = vmatpush1.msra.mxu0 0.0
        %4191 = vmatprep.subr.mxu0 0.0
        %4192 = vmatpush1.msra.mxu0 0.0
        %4193 = vmatprep.subr.mxu0 0.0
        %4194 = vmatpush1.msra.mxu0 0.0
        %4195 = vmatprep.subr.mxu0 0.0
        %4196 = vmatpush1.msra.mxu0 0.0
        %4197 = vmatprep.subr.mxu0 0.0
        %4198 = vmatpush1.msra.mxu0 0.0
        %4199 = vmatprep.subr.mxu0 0.0
        %4200 = vmatpush1.msra.mxu0 0.0
        %4201 = vmatprep.subr.mxu0 0.0
        %4202 = vmatpush1.msra.mxu0 0.0
        %4203 = vmatprep.subr.mxu0 0.0
        %4204 = vmatpush1.msra.mxu0 0.0
        %4205 = vmatprep.subr.mxu0 0.0
        %4206 = vmatpush1.msra.mxu0 0.0
        %4207 = vmatprep.subr.mxu0 0.0
        %4208 = vmatpush1.msra.mxu0 0.0
        %4209 = vmatprep.subr.mxu0 0.0
        %4210 = vmatpush1.msra.mxu0 0.0
        %4211 = vmatprep.subr.mxu0 0.0
        %4212 = vmatpush1.msra.mxu0 0.0
        %4213 = vmatprep.subr.mxu0 0.0
        %4214 = vmatpush1.msra.mxu0 0.0
        %4215 = vmatprep.subr.mxu0 0.0
        %4216 = vmatpush1.msra.mxu0 0.0
        %4217 = vmatprep.subr.mxu0 0.0
        %4218 = vmatpush1.msra.mxu0 0.0
        %4219 = vmatprep.mubr.f32.mxu0 0.0
        %4220 = vmatmul.mubr.f32.gmra.mrb[0].mxu0 %v4132
        %v4221 = vpop.f32.mrb[0].mxu0
        %v4222 = vadd.f32 0.0, %v4221
        %v4223 = vpop.f32.mrb[0].mxu0
        %4224 = vmatprep.mubr.f32.mxu0 0.0
        %4225 = vmatmul.mubr.f32.gmra.mrb[0].mxu0 %v4135
        %v4226 = vpop.f32.mrb[0].mxu0
        %v4227 = vadd.f32 0.0, %v4226
        %v4228 = vpop.f32.mrb[0].mxu0
        %4229 = vmatprep.mubr.f32.mxu0 0.0
        %4230 = vmatmul.mubr.f32.gmra.mrb[0].mxu0 %v4138
        %v4231 = vpop.f32.mrb[0].mxu0
        %v4232 = vadd.f32 0.0, %v4231
        %v4233 = vpop.f32.mrb[0].mxu0
        %4234 = vmatprep.mubr.f32.mxu0 0.0
        %4235 = vmatmul.mubr.f32.gmra.mrb[0].mxu0 %v4141
        %v4236 = vpop.f32.mrb[0].mxu0
        %v4237 = vadd.f32 0.0, %v4236
        %v4238 = vpop.f32.mrb[0].mxu0
        %4239 = vmatprep.mubr.f32.mxu0 0.0
        %4240 = vmatmul.mubr.f32.gmra.mrb[0].mxu0 %v4144
        %v4241 = vpop.f32.mrb[0].mxu0
        %v4242 = vadd.f32 0.0, %v4241
        %v4243 = vpop.f32.mrb[0].mxu0
        %4244 = vmatprep.mubr.f32.mxu0 0.0
        %4245 = vmatmul.mubr.f32.gmra.mrb[0].mxu0 %v4147
        %v4246 = vpop.f32.mrb[0].mxu0
        %v4247 = vadd.f32 0.0, %v4246
        %v4248 = vpop.f32.mrb[0].mxu0
        %4249 = vmatprep.mubr.f32.mxu0 0.0
        %4250 = vmatmul.mubr.f32.gmra.mrb[0].mxu0 %v4150
        %v4251 = vpop.f32.mrb[0].mxu0
        %v4252 = vadd.f32 0.0, %v4251
        %v4253 = vpop.f32.mrb[0].mxu0
        %4254 = vmatprep.mubr.f32.mxu0 0.0
        %4255 = vmatmul.mubr.f32.gmra.mrb[0].mxu0 %v4153
        %v4256 = vpop.f32.mrb[0].mxu0
        %v4257 = vadd.f32 0.0, %v4256
        %v4258 = vpop.f32.mrb[0].mxu0
        %4259 = vdwg.mxu0
        %v4261 = vsel %vm1129, %v3069, 0
        %v4264 = vsel %vm1129, %v3070, 0
        %v4267 = vsel %vm1129, %v3071, 0
        %v4270 = vsel %vm1129, %v3072, 0
        %v4273 = vsel %vm1129, %v3073, 0
        %v4276 = vsel %vm1129, %v3074, 0
        %v4279 = vsel %vm1129, %v3075, 0
        %v4282 = vsel %vm1129, %v3076, 0
        %4284 = vmatprep.subr.mxu0 0.0
        %4285 = vmatpush1.msra.mxu0 %v3302
        %4286 = vmatprep.subr.mxu0 0.0
        %4287 = vmatpush1.msra.mxu0 %v3306
        %4288 = vmatprep.subr.mxu0 0.0
        %4289 = vmatpush1.msra.mxu0 %v3310
        %4290 = vmatprep.subr.mxu0 0.0
        %4291 = vmatpush1.msra.mxu0 %v3314
        %4292 = vmatprep.subr.mxu0 0.0
        %4293 = vmatpush1.msra.mxu0 %v3454
        %4294 = vmatprep.subr.mxu0 0.0
        %4295 = vmatpush1.msra.mxu0 %v3458
        %4296 = vmatprep.subr.mxu0 0.0
        %4297 = vmatpush1.msra.mxu0 %v3462
        %4298 = vmatprep.subr.mxu0 0.0
        %4299 = vmatpush1.msra.mxu0 %v3466
        %4300 = vmatprep.subr.mxu0 0.0
        %4301 = vmatpush1.msra.mxu0 0.0
        %4302 = vmatprep.subr.mxu0 0.0
        %4303 = vmatpush1.msra.mxu0 0.0
        %4304 = vmatprep.subr.mxu0 0.0
        %4305 = vmatpush1.msra.mxu0 0.0
        %4306 = vmatprep.subr.mxu0 0.0
        %4307 = vmatpush1.msra.mxu0 0.0
        %4308 = vmatprep.subr.mxu0 0.0
        %4309 = vmatpush1.msra.mxu0 0.0
        %4310 = vmatprep.subr.mxu0 0.0
        %4311 = vmatpush1.msra.mxu0 0.0
        %4312 = vmatprep.subr.mxu0 0.0
        %4313 = vmatpush1.msra.mxu0 0.0
        %4314 = vmatprep.subr.mxu0 0.0
        %4315 = vmatpush1.msra.mxu0 0.0
        %4316 = vmatprep.subr.mxu0 0.0
        %4317 = vmatpush1.msra.mxu0 0.0
        %4318 = vmatprep.subr.mxu0 0.0
        %4319 = vmatpush1.msra.mxu0 0.0
        %4320 = vmatprep.subr.mxu0 0.0
        %4321 = vmatpush1.msra.mxu0 0.0
        %4322 = vmatprep.subr.mxu0 0.0
        %4323 = vmatpush1.msra.mxu0 0.0
        %4324 = vmatprep.subr.mxu0 0.0
        %4325 = vmatpush1.msra.mxu0 0.0
        %4326 = vmatprep.subr.mxu0 0.0
        %4327 = vmatpush1.msra.mxu0 0.0
        %4328 = vmatprep.subr.mxu0 0.0
        %4329 = vmatpush1.msra.mxu0 0.0
        %4330 = vmatprep.subr.mxu0 0.0
        %4331 = vmatpush1.msra.mxu0 0.0
        %4332 = vmatprep.subr.mxu0 0.0
        %4333 = vmatpush1.msra.mxu0 0.0
        %4334 = vmatprep.subr.mxu0 0.0
        %4335 = vmatpush1.msra.mxu0 0.0
        %4336 = vmatprep.subr.mxu0 0.0
        %4337 = vmatpush1.msra.mxu0 0.0
        %4338 = vmatprep.subr.mxu0 0.0
        %4339 = vmatpush1.msra.mxu0 0.0
        %4340 = vmatprep.subr.mxu0 0.0
        %4341 = vmatpush1.msra.mxu0 0.0
        %4342 = vmatprep.subr.mxu0 0.0
        %4343 = vmatpush1.msra.mxu0 0.0
        %4344 = vmatprep.subr.mxu0 0.0
        %4345 = vmatpush1.msra.mxu0 0.0
        %4346 = vmatprep.subr.mxu0 0.0
        %4347 = vmatpush1.msra.mxu0 0.0
        %4348 = vmatprep.mubr.f32.mxu0 0.0
        %4349 = vmatmul.mubr.f32.gmra.mrb[0].mxu0 %v4261
        %v4350 = vpop.f32.mrb[0].mxu0
        %v4351 = vadd.f32 0.0, %v4350
        %v4352 = vpop.f32.mrb[0].mxu0
        %4353 = vmatprep.mubr.f32.mxu0 0.0
        %4354 = vmatmul.mubr.f32.gmra.mrb[0].mxu0 %v4264
        %v4355 = vpop.f32.mrb[0].mxu0
        %v4356 = vadd.f32 0.0, %v4355
        %v4357 = vpop.f32.mrb[0].mxu0
        %4358 = vmatprep.mubr.f32.mxu0 0.0
        %4359 = vmatmul.mubr.f32.gmra.mrb[0].mxu0 %v4267
        %v4360 = vpop.f32.mrb[0].mxu0
        %v4361 = vadd.f32 0.0, %v4360
        %v4362 = vpop.f32.mrb[0].mxu0
        %4363 = vmatprep.mubr.f32.mxu0 0.0
        %4364 = vmatmul.mubr.f32.gmra.mrb[0].mxu0 %v4270
        %v4365 = vpop.f32.mrb[0].mxu0
        %v4366 = vadd.f32 0.0, %v4365
        %v4367 = vpop.f32.mrb[0].mxu0
        %4368 = vmatprep.mubr.f32.mxu0 0.0
        %4369 = vmatmul.mubr.f32.gmra.mrb[0].mxu0 %v4273
        %v4370 = vpop.f32.mrb[0].mxu0
        %v4371 = vadd.f32 0.0, %v4370
        %v4372 = vpop.f32.mrb[0].mxu0
        %4373 = vmatprep.mubr.f32.mxu0 0.0
        %4374 = vmatmul.mubr.f32.gmra.mrb[0].mxu0 %v4276
        %v4375 = vpop.f32.mrb[0].mxu0
        %v4376 = vadd.f32 0.0, %v4375
        %v4377 = vpop.f32.mrb[0].mxu0
        %4378 = vmatprep.mubr.f32.mxu0 0.0
        %4379 = vmatmul.mubr.f32.gmra.mrb[0].mxu0 %v4279
        %v4380 = vpop.f32.mrb[0].mxu0
        %v4381 = vadd.f32 0.0, %v4380
        %v4382 = vpop.f32.mrb[0].mxu0
        %4383 = vmatprep.mubr.f32.mxu0 0.0
        %4384 = vmatmul.mubr.f32.gmra.mrb[0].mxu0 %v4282
        %v4385 = vpop.f32.mrb[0].mxu0
        %v4386 = vadd.f32 0.0, %v4385
        %v4387 = vpop.f32.mrb[0].mxu0
        %4388 = vdwg.mxu0
        %v4390 = vsel %vm1129, %v3077, 0
        %v4393 = vsel %vm1129, %v3078, 0
        %v4396 = vsel %vm1129, %v3079, 0
        %v4399 = vsel %vm1129, %v3080, 0
        %v4402 = vsel %vm1129, %v3081, 0
        %v4405 = vsel %vm1129, %v3082, 0
        %v4408 = vsel %vm1129, %v3083, 0
        %v4411 = vsel %vm1129, %v3084, 0
        %4413 = vmatprep.subr.mxu0 0.0
        %4414 = vmatpush1.msra.mxu0 %v3321
        %4415 = vmatprep.subr.mxu0 0.0
        %4416 = vmatpush1.msra.mxu0 %v3325
        %4417 = vmatprep.subr.mxu0 0.0
        %4418 = vmatpush1.msra.mxu0 %v3329
        %4419 = vmatprep.subr.mxu0 0.0
        %4420 = vmatpush1.msra.mxu0 %v3333
        %4421 = vmatprep.subr.mxu0 0.0
        %4422 = vmatpush1.msra.mxu0 %v3473
        %4423 = vmatprep.subr.mxu0 0.0
        %4424 = vmatpush1.msra.mxu0 %v3477
        %4425 = vmatprep.subr.mxu0 0.0
        %4426 = vmatpush1.msra.mxu0 %v3481
        %4427 = vmatprep.subr.mxu0 0.0
        %4428 = vmatpush1.msra.mxu0 %v3485
        %4429 = vmatprep.subr.mxu0 0.0
        %4430 = vmatpush1.msra.mxu0 0.0
        %4431 = vmatprep.subr.mxu0 0.0
        %4432 = vmatpush1.msra.mxu0 0.0
        %4433 = vmatprep.subr.mxu0 0.0
        %4434 = vmatpush1.msra.mxu0 0.0
        %4435 = vmatprep.subr.mxu0 0.0
        %4436 = vmatpush1.msra.mxu0 0.0
        %4437 = vmatprep.subr.mxu0 0.0
        %4438 = vmatpush1.msra.mxu0 0.0
        %4439 = vmatprep.subr.mxu0 0.0
        %4440 = vmatpush1.msra.mxu0 0.0
        %4441 = vmatprep.subr.mxu0 0.0
        %4442 = vmatpush1.msra.mxu0 0.0
        %4443 = vmatprep.subr.mxu0 0.0
        %4444 = vmatpush1.msra.mxu0 0.0
        %4445 = vmatprep.subr.mxu0 0.0
        %4446 = vmatpush1.msra.mxu0 0.0
        %4447 = vmatprep.subr.mxu0 0.0
        %4448 = vmatpush1.msra.mxu0 0.0
        %4449 = vmatprep.subr.mxu0 0.0
        %4450 = vmatpush1.msra.mxu0 0.0
        %4451 = vmatprep.subr.mxu0 0.0
        %4452 = vmatpush1.msra.mxu0 0.0
        %4453 = vmatprep.subr.mxu0 0.0
        %4454 = vmatpush1.msra.mxu0 0.0
        %4455 = vmatprep.subr.mxu0 0.0
        %4456 = vmatpush1.msra.mxu0 0.0
        %4457 = vmatprep.subr.mxu0 0.0
        %4458 = vmatpush1.msra.mxu0 0.0
        %4459 = vmatprep.subr.mxu0 0.0
        %4460 = vmatpush1.msra.mxu0 0.0
        %4461 = vmatprep.subr.mxu0 0.0
        %4462 = vmatpush1.msra.mxu0 0.0
        %4463 = vmatprep.subr.mxu0 0.0
        %4464 = vmatpush1.msra.mxu0 0.0
        %4465 = vmatprep.subr.mxu0 0.0
        %4466 = vmatpush1.msra.mxu0 0.0
        %4467 = vmatprep.subr.mxu0 0.0
        %4468 = vmatpush1.msra.mxu0 0.0
        %4469 = vmatprep.subr.mxu0 0.0
        %4470 = vmatpush1.msra.mxu0 0.0
        %4471 = vmatprep.subr.mxu0 0.0
        %4472 = vmatpush1.msra.mxu0 0.0
        %4473 = vmatprep.subr.mxu0 0.0
        %4474 = vmatpush1.msra.mxu0 0.0
        %4475 = vmatprep.subr.mxu0 0.0
        %4476 = vmatpush1.msra.mxu0 0.0
        %4477 = vmatprep.mubr.f32.mxu0 0.0
        %4478 = vmatmul.mubr.f32.gmra.mrb[0].mxu0 %v4390
        %v4479 = vpop.f32.mrb[0].mxu0
        %v4480 = vadd.f32 0.0, %v4479
        %v4481 = vpop.f32.mrb[0].mxu0
        %4482 = vmatprep.mubr.f32.mxu0 0.0
        %4483 = vmatmul.mubr.f32.gmra.mrb[0].mxu0 %v4393
        %v4484 = vpop.f32.mrb[0].mxu0
        %v4485 = vadd.f32 0.0, %v4484
        %v4486 = vpop.f32.mrb[0].mxu0
        %4487 = vmatprep.mubr.f32.mxu0 0.0
        %4488 = vmatmul.mubr.f32.gmra.mrb[0].mxu0 %v4396
        %v4489 = vpop.f32.mrb[0].mxu0
        %v4490 = vadd.f32 0.0, %v4489
        %v4491 = vpop.f32.mrb[0].mxu0
        %4492 = vmatprep.mubr.f32.mxu0 0.0
        %4493 = vmatmul.mubr.f32.gmra.mrb[0].mxu0 %v4399
        %v4494 = vpop.f32.mrb[0].mxu0
        %v4495 = vadd.f32 0.0, %v4494
        %v4496 = vpop.f32.mrb[0].mxu0
        %4497 = vmatprep.mubr.f32.mxu0 0.0
        %4498 = vmatmul.mubr.f32.gmra.mrb[0].mxu0 %v4402
        %v4499 = vpop.f32.mrb[0].mxu0
        %v4500 = vadd.f32 0.0, %v4499
        %v4501 = vpop.f32.mrb[0].mxu0
        %4502 = vmatprep.mubr.f32.mxu0 0.0
        %4503 = vmatmul.mubr.f32.gmra.mrb[0].mxu0 %v4405
        %v4504 = vpop.f32.mrb[0].mxu0
        %v4505 = vadd.f32 0.0, %v4504
        %v4506 = vpop.f32.mrb[0].mxu0
        %4507 = vmatprep.mubr.f32.mxu0 0.0
        %4508 = vmatmul.mubr.f32.gmra.mrb[0].mxu0 %v4408
        %v4509 = vpop.f32.mrb[0].mxu0
        %v4510 = vadd.f32 0.0, %v4509
        %v4511 = vpop.f32.mrb[0].mxu0
        %4512 = vmatprep.mubr.f32.mxu0 0.0
        %4513 = vmatmul.mubr.f32.gmra.mrb[0].mxu0 %v4411
        %v4514 = vpop.f32.mrb[0].mxu0
        %v4515 = vadd.f32 0.0, %v4514
        %v4516 = vpop.f32.mrb[0].mxu0
        %4517 = vdwg.mxu0
        %4582 = vset.pattern.permute.xlu0 0
        %4583 = vperm.xlu0 %4582, %v3577
        %v4584 = vpop.permute.xlu0 %4583
        %4585 = vset.pattern.permute.xlu0 0
        %4586 = vperm.xlu0 %4585, %v3582
        %v4587 = vpop.permute.xlu0 %4586
        %4588 = vset.pattern.permute.xlu0 0
        %4589 = vperm.xlu0 %4588, %v3587
        %v4590 = vpop.permute.xlu0 %4589
        %4591 = vset.pattern.permute.xlu0 0
        %4592 = vperm.xlu0 %4591, %v3592
        %v4593 = vpop.permute.xlu0 %4592
        %4594 = vset.pattern.permute.xlu0 0
        %4595 = vperm.xlu0 %4594, %v3597
        %v4596 = vpop.permute.xlu0 %4595
        %4597 = vset.pattern.permute.xlu0 0
        %4598 = vperm.xlu0 %4597, %v3602
        %v4599 = vpop.permute.xlu0 %4598
        %4600 = vset.pattern.permute.xlu0 0
        %4601 = vperm.xlu0 %4600, %v3607
        %v4602 = vpop.permute.xlu0 %4601
        %4603 = vset.pattern.permute.xlu0 0
        %4604 = vperm.xlu0 %4603, %v3612
        %v4605 = vpop.permute.xlu0 %4604
        %4606 = vset.pattern.permute.xlu0 0
        %4607 = vperm.xlu0 %4606, %v3706
        %v4608 = vpop.permute.xlu0 %4607
        %4609 = vset.pattern.permute.xlu0 0
        %4610 = vperm.xlu0 %4609, %v3711
        %v4611 = vpop.permute.xlu0 %4610
        %4612 = vset.pattern.permute.xlu0 0
        %4613 = vperm.xlu0 %4612, %v3716
        %v4614 = vpop.permute.xlu0 %4613
        %4615 = vset.pattern.permute.xlu0 0
        %4616 = vperm.xlu0 %4615, %v3721
        %v4617 = vpop.permute.xlu0 %4616
        %4618 = vset.pattern.permute.xlu0 0
        %4619 = vperm.xlu0 %4618, %v3726
        %v4620 = vpop.permute.xlu0 %4619
        %4621 = vset.pattern.permute.xlu0 0
        %4622 = vperm.xlu0 %4621, %v3731
        %v4623 = vpop.permute.xlu0 %4622
        %4624 = vset.pattern.permute.xlu0 0
        %4625 = vperm.xlu0 %4624, %v3736
        %v4626 = vpop.permute.xlu0 %4625
        %4627 = vset.pattern.permute.xlu0 0
        %4628 = vperm.xlu0 %4627, %v3741
        %v4629 = vpop.permute.xlu0 %4628
        %4630 = vset.pattern.permute.xlu0 0
        %4631 = vperm.xlu0 %4630, %v3835
        %v4632 = vpop.permute.xlu0 %4631
        %4633 = vset.pattern.permute.xlu0 0
        %4634 = vperm.xlu0 %4633, %v3840
        %v4635 = vpop.permute.xlu0 %4634
        %4636 = vset.pattern.permute.xlu0 0
        %4637 = vperm.xlu0 %4636, %v3845
        %v4638 = vpop.permute.xlu0 %4637
        %4639 = vset.pattern.permute.xlu0 0
        %4640 = vperm.xlu0 %4639, %v3850
        %v4641 = vpop.permute.xlu0 %4640
        %4642 = vset.pattern.permute.xlu0 0
        %4643 = vperm.xlu0 %4642, %v3855
        %v4644 = vpop.permute.xlu0 %4643
        %4645 = vset.pattern.permute.xlu0 0
        %4646 = vperm.xlu0 %4645, %v3860
        %v4647 = vpop.permute.xlu0 %4646
        %4648 = vset.pattern.permute.xlu0 0
        %4649 = vperm.xlu0 %4648, %v3865
        %v4650 = vpop.permute.xlu0 %4649
        %4651 = vset.pattern.permute.xlu0 0
        %4652 = vperm.xlu0 %4651, %v3870
        %v4653 = vpop.permute.xlu0 %4652
        %4654 = vset.pattern.permute.xlu0 0
        %4655 = vperm.xlu0 %4654, %v3964
        %v4656 = vpop.permute.xlu0 %4655
        %4657 = vset.pattern.permute.xlu0 0
        %4658 = vperm.xlu0 %4657, %v3969
        %v4659 = vpop.permute.xlu0 %4658
        %4660 = vset.pattern.permute.xlu0 0
        %4661 = vperm.xlu0 %4660, %v3974
        %v4662 = vpop.permute.xlu0 %4661
        %4663 = vset.pattern.permute.xlu0 0
        %4664 = vperm.xlu0 %4663, %v3979
        %v4665 = vpop.permute.xlu0 %4664
        %4666 = vset.pattern.permute.xlu0 0
        %4667 = vperm.xlu0 %4666, %v3984
        %v4668 = vpop.permute.xlu0 %4667
        %4669 = vset.pattern.permute.xlu0 0
        %4670 = vperm.xlu0 %4669, %v3989
        %v4671 = vpop.permute.xlu0 %4670
        %4672 = vset.pattern.permute.xlu0 0
        %4673 = vperm.xlu0 %4672, %v3994
        %v4674 = vpop.permute.xlu0 %4673
        %4675 = vset.pattern.permute.xlu0 0
        %4676 = vperm.xlu0 %4675, %v3999
        %v4677 = vpop.permute.xlu0 %4676
        %4678 = vset.pattern.permute.xlu0 0
        %4679 = vperm.xlu0 %4678, %v4093
        %v4680 = vpop.permute.xlu0 %4679
        %4681 = vset.pattern.permute.xlu0 0
        %4682 = vperm.xlu0 %4681, %v4098
        %v4683 = vpop.permute.xlu0 %4682
        %4684 = vset.pattern.permute.xlu0 0
        %4685 = vperm.xlu0 %4684, %v4103
        %v4686 = vpop.permute.xlu0 %4685
        %4687 = vset.pattern.permute.xlu0 0
        %4688 = vperm.xlu0 %4687, %v4108
        %v4689 = vpop.permute.xlu0 %4688
        %4690 = vset.pattern.permute.xlu0 0
        %4691 = vperm.xlu0 %4690, %v4113
        %v4692 = vpop.permute.xlu0 %4691
        %4693 = vset.pattern.permute.xlu0 0
        %4694 = vperm.xlu0 %4693, %v4118
        %v4695 = vpop.permute.xlu0 %4694
        %4696 = vset.pattern.permute.xlu0 0
        %4697 = vperm.xlu0 %4696, %v4123
        %v4698 = vpop.permute.xlu0 %4697
        %4699 = vset.pattern.permute.xlu0 0
        %4700 = vperm.xlu0 %4699, %v4128
        %v4701 = vpop.permute.xlu0 %4700
        %4702 = vset.pattern.permute.xlu0 0
        %4703 = vperm.xlu0 %4702, %v4222
        %v4704 = vpop.permute.xlu0 %4703
        %4705 = vset.pattern.permute.xlu0 0
        %4706 = vperm.xlu0 %4705, %v4227
        %v4707 = vpop.permute.xlu0 %4706
        %4708 = vset.pattern.permute.xlu0 0
        %4709 = vperm.xlu0 %4708, %v4232
        %v4710 = vpop.permute.xlu0 %4709
        %4711 = vset.pattern.permute.xlu0 0
        %4712 = vperm.xlu0 %4711, %v4237
        %v4713 = vpop.permute.xlu0 %4712
        %4714 = vset.pattern.permute.xlu0 0
        %4715 = vperm.xlu0 %4714, %v4242
        %v4716 = vpop.permute.xlu0 %4715
        %4717 = vset.pattern.permute.xlu0 0
        %4718 = vperm.xlu0 %4717, %v4247
        %v4719 = vpop.permute.xlu0 %4718
        %4720 = vset.pattern.permute.xlu0 0
        %4721 = vperm.xlu0 %4720, %v4252
        %v4722 = vpop.permute.xlu0 %4721
        %4723 = vset.pattern.permute.xlu0 0
        %4724 = vperm.xlu0 %4723, %v4257
        %v4725 = vpop.permute.xlu0 %4724
        %4726 = vset.pattern.permute.xlu0 0
        %4727 = vperm.xlu0 %4726, %v4351
        %v4728 = vpop.permute.xlu0 %4727
        %4729 = vset.pattern.permute.xlu0 0
        %4730 = vperm.xlu0 %4729, %v4356
        %v4731 = vpop.permute.xlu0 %4730
        %4732 = vset.pattern.permute.xlu0 0
        %4733 = vperm.xlu0 %4732, %v4361
        %v4734 = vpop.permute.xlu0 %4733
        %4735 = vset.pattern.permute.xlu0 0
        %4736 = vperm.xlu0 %4735, %v4366
        %v4737 = vpop.permute.xlu0 %4736
        %4738 = vset.pattern.permute.xlu0 0
        %4739 = vperm.xlu0 %4738, %v4371
        %v4740 = vpop.permute.xlu0 %4739
        %4741 = vset.pattern.permute.xlu0 0
        %4742 = vperm.xlu0 %4741, %v4376
        %v4743 = vpop.permute.xlu0 %4742
        %4744 = vset.pattern.permute.xlu0 0
        %4745 = vperm.xlu0 %4744, %v4381
        %v4746 = vpop.permute.xlu0 %4745
        %4747 = vset.pattern.permute.xlu0 0
        %4748 = vperm.xlu0 %4747, %v4386
        %v4749 = vpop.permute.xlu0 %4748
        %4750 = vset.pattern.permute.xlu0 0
        %4751 = vperm.xlu0 %4750, %v4480
        %v4752 = vpop.permute.xlu0 %4751
        %4753 = vset.pattern.permute.xlu0 0
        %4754 = vperm.xlu0 %4753, %v4485
        %v4755 = vpop.permute.xlu0 %4754
        %4756 = vset.pattern.permute.xlu0 0
        %4757 = vperm.xlu0 %4756, %v4490
        %v4758 = vpop.permute.xlu0 %4757
        %4759 = vset.pattern.permute.xlu0 0
        %4760 = vperm.xlu0 %4759, %v4495
        %v4761 = vpop.permute.xlu0 %4760
        %4762 = vset.pattern.permute.xlu0 0
        %4763 = vperm.xlu0 %4762, %v4500
        %v4764 = vpop.permute.xlu0 %4763
        %4765 = vset.pattern.permute.xlu0 0
        %4766 = vperm.xlu0 %4765, %v4505
        %v4767 = vpop.permute.xlu0 %4766
        %4768 = vset.pattern.permute.xlu0 0
        %4769 = vperm.xlu0 %4768, %v4510
        %v4770 = vpop.permute.xlu0 %4769
        %4771 = vset.pattern.permute.xlu0 0
        %4772 = vperm.xlu0 %4771, %v4515
        %v4773 = vpop.permute.xlu0 %4772
        %v4774 = vlaneseq
        %v4775 = vshrl.u32 %v4774, 7
        %v4776 = vsub.s32 %v2419, %v4775
        %v4777 = vrot.slane %v4584, %v4776
        %v4778 = vlaneseq
        %v4779 = vshrl.u32 %v4778, 7
        %v4780 = vsub.s32 %v2424, %v4779
        %v4781 = vrot.slane %v4587, %v4780
        %v4782 = vsel %vm2429, %v4781, %v4777
        %v4783 = vlaneseq
        %v4784 = vshrl.u32 %v4783, 7
        %v4785 = vsub.s32 %v2431, %v4784
        %v4786 = vrot.slane %v4590, %v4785
        %v4787 = vsel %vm2436, %v4786, %v4782
        %v4788 = vlaneseq
        %v4789 = vshrl.u32 %v4788, 7
        %v4790 = vsub.s32 %v2438, %v4789
        %v4791 = vrot.slane %v4593, %v4790
        %v4792 = vsel %vm2443, %v4791, %v4787
        %v4793 = vlaneseq
        %v4794 = vshrl.u32 %v4793, 7
        %v4795 = vsub.s32 %v2419, %v4794
        %v4796 = vrot.slane %v4596, %v4795
        %v4797 = vlaneseq
        %v4798 = vshrl.u32 %v4797, 7
        %v4799 = vsub.s32 %v2424, %v4798
        %v4800 = vrot.slane %v4599, %v4799
        %v4801 = vsel %vm2429, %v4800, %v4796
        %v4802 = vlaneseq
        %v4803 = vshrl.u32 %v4802, 7
        %v4804 = vsub.s32 %v2431, %v4803
        %v4805 = vrot.slane %v4602, %v4804
        %v4806 = vsel %vm2436, %v4805, %v4801
        %v4807 = vlaneseq
        %v4808 = vshrl.u32 %v4807, 7
        %v4809 = vsub.s32 %v2438, %v4808
        %v4810 = vrot.slane %v4605, %v4809
        %v4811 = vsel %vm2443, %v4810, %v4806
        %v4812 = vlaneseq
        %v4813 = vshrl.u32 %v4812, 7
        %v4814 = vsub.s32 %v2419, %v4813
        %v4815 = vrot.slane %v4608, %v4814
        %v4816 = vlaneseq
        %v4817 = vshrl.u32 %v4816, 7
        %v4818 = vsub.s32 %v2424, %v4817
        %v4819 = vrot.slane %v4611, %v4818
        %v4820 = vsel %vm2429, %v4819, %v4815
        %v4821 = vlaneseq
        %v4822 = vshrl.u32 %v4821, 7
        %v4823 = vsub.s32 %v2431, %v4822
        %v4824 = vrot.slane %v4614, %v4823
        %v4825 = vsel %vm2436, %v4824, %v4820
        %v4826 = vlaneseq
        %v4827 = vshrl.u32 %v4826, 7
        %v4828 = vsub.s32 %v2438, %v4827
        %v4829 = vrot.slane %v4617, %v4828
        %v4830 = vsel %vm2443, %v4829, %v4825
        %v4831 = vlaneseq
        %v4832 = vshrl.u32 %v4831, 7
        %v4833 = vsub.s32 %v2419, %v4832
        %v4834 = vrot.slane %v4620, %v4833
        %v4835 = vlaneseq
        %v4836 = vshrl.u32 %v4835, 7
        %v4837 = vsub.s32 %v2424, %v4836
        %v4838 = vrot.slane %v4623, %v4837
        %v4839 = vsel %vm2429, %v4838, %v4834
        %v4840 = vlaneseq
        %v4841 = vshrl.u32 %v4840, 7
        %v4842 = vsub.s32 %v2431, %v4841
        %v4843 = vrot.slane %v4626, %v4842
        %v4844 = vsel %vm2436, %v4843, %v4839
        %v4845 = vlaneseq
        %v4846 = vshrl.u32 %v4845, 7
        %v4847 = vsub.s32 %v2438, %v4846
        %v4848 = vrot.slane %v4629, %v4847
        %v4849 = vsel %vm2443, %v4848, %v4844
        %v4850 = vlaneseq
        %v4851 = vshrl.u32 %v4850, 7
        %v4852 = vsub.s32 %v2419, %v4851
        %v4853 = vrot.slane %v4632, %v4852
        %v4854 = vlaneseq
        %v4855 = vshrl.u32 %v4854, 7
        %v4856 = vsub.s32 %v2424, %v4855
        %v4857 = vrot.slane %v4635, %v4856
        %v4858 = vsel %vm2429, %v4857, %v4853
        %v4859 = vlaneseq
        %v4860 = vshrl.u32 %v4859, 7
        %v4861 = vsub.s32 %v2431, %v4860
        %v4862 = vrot.slane %v4638, %v4861
        %v4863 = vsel %vm2436, %v4862, %v4858
        %v4864 = vlaneseq
        %v4865 = vshrl.u32 %v4864, 7
        %v4866 = vsub.s32 %v2438, %v4865
        %v4867 = vrot.slane %v4641, %v4866
        %v4868 = vsel %vm2443, %v4867, %v4863
        %v4869 = vlaneseq
        %v4870 = vshrl.u32 %v4869, 7
        %v4871 = vsub.s32 %v2419, %v4870
        %v4872 = vrot.slane %v4644, %v4871
        %v4873 = vlaneseq
        %v4874 = vshrl.u32 %v4873, 7
        %v4875 = vsub.s32 %v2424, %v4874
        %v4876 = vrot.slane %v4647, %v4875
        %v4877 = vsel %vm2429, %v4876, %v4872
        %v4878 = vlaneseq
        %v4879 = vshrl.u32 %v4878, 7
        %v4880 = vsub.s32 %v2431, %v4879
        %v4881 = vrot.slane %v4650, %v4880
        %v4882 = vsel %vm2436, %v4881, %v4877
        %v4883 = vlaneseq
        %v4884 = vshrl.u32 %v4883, 7
        %v4885 = vsub.s32 %v2438, %v4884
        %v4886 = vrot.slane %v4653, %v4885
        %v4887 = vsel %vm2443, %v4886, %v4882
        %v4888 = vlaneseq
        %v4889 = vshrl.u32 %v4888, 7
        %v4890 = vsub.s32 %v2419, %v4889
        %v4891 = vrot.slane %v4656, %v4890
        %v4892 = vlaneseq
        %v4893 = vshrl.u32 %v4892, 7
        %v4894 = vsub.s32 %v2424, %v4893
        %v4895 = vrot.slane %v4659, %v4894
        %v4896 = vsel %vm2429, %v4895, %v4891
        %v4897 = vlaneseq
        %v4898 = vshrl.u32 %v4897, 7
        %v4899 = vsub.s32 %v2431, %v4898
        %v4900 = vrot.slane %v4662, %v4899
        %v4901 = vsel %vm2436, %v4900, %v4896
        %v4902 = vlaneseq
        %v4903 = vshrl.u32 %v4902, 7
        %v4904 = vsub.s32 %v2438, %v4903
        %v4905 = vrot.slane %v4665, %v4904
        %v4906 = vsel %vm2443, %v4905, %v4901
        %v4907 = vlaneseq
        %v4908 = vshrl.u32 %v4907, 7
        %v4909 = vsub.s32 %v2419, %v4908
        %v4910 = vrot.slane %v4668, %v4909
        %v4911 = vlaneseq
        %v4912 = vshrl.u32 %v4911, 7
        %v4913 = vsub.s32 %v2424, %v4912
        %v4914 = vrot.slane %v4671, %v4913
        %v4915 = vsel %vm2429, %v4914, %v4910
        %v4916 = vlaneseq
        %v4917 = vshrl.u32 %v4916, 7
        %v4918 = vsub.s32 %v2431, %v4917
        %v4919 = vrot.slane %v4674, %v4918
        %v4920 = vsel %vm2436, %v4919, %v4915
        %v4921 = vlaneseq
        %v4922 = vshrl.u32 %v4921, 7
        %v4923 = vsub.s32 %v2438, %v4922
        %v4924 = vrot.slane %v4677, %v4923
        %v4925 = vsel %vm2443, %v4924, %v4920
        %v4926 = vlaneseq
        %v4927 = vshrl.u32 %v4926, 7
        %v4928 = vsub.s32 %v2419, %v4927
        %v4929 = vrot.slane %v4680, %v4928
        %v4930 = vlaneseq
        %v4931 = vshrl.u32 %v4930, 7
        %v4932 = vsub.s32 %v2424, %v4931
        %v4933 = vrot.slane %v4683, %v4932
        %v4934 = vsel %vm2429, %v4933, %v4929
        %v4935 = vlaneseq
        %v4936 = vshrl.u32 %v4935, 7
        %v4937 = vsub.s32 %v2431, %v4936
        %v4938 = vrot.slane %v4686, %v4937
        %v4939 = vsel %vm2436, %v4938, %v4934
        %v4940 = vlaneseq
        %v4941 = vshrl.u32 %v4940, 7
        %v4942 = vsub.s32 %v2438, %v4941
        %v4943 = vrot.slane %v4689, %v4942
        %v4944 = vsel %vm2443, %v4943, %v4939
        %v4945 = vlaneseq
        %v4946 = vshrl.u32 %v4945, 7
        %v4947 = vsub.s32 %v2419, %v4946
        %v4948 = vrot.slane %v4692, %v4947
        %v4949 = vlaneseq
        %v4950 = vshrl.u32 %v4949, 7
        %v4951 = vsub.s32 %v2424, %v4950
        %v4952 = vrot.slane %v4695, %v4951
        %v4953 = vsel %vm2429, %v4952, %v4948
        %v4954 = vlaneseq
        %v4955 = vshrl.u32 %v4954, 7
        %v4956 = vsub.s32 %v2431, %v4955
        %v4957 = vrot.slane %v4698, %v4956
        %v4958 = vsel %vm2436, %v4957, %v4953
        %v4959 = vlaneseq
        %v4960 = vshrl.u32 %v4959, 7
        %v4961 = vsub.s32 %v2438, %v4960
        %v4962 = vrot.slane %v4701, %v4961
        %v4963 = vsel %vm2443, %v4962, %v4958
        %v4964 = vlaneseq
        %v4965 = vshrl.u32 %v4964, 7
        %v4966 = vsub.s32 %v2419, %v4965
        %v4967 = vrot.slane %v4704, %v4966
        %v4968 = vlaneseq
        %v4969 = vshrl.u32 %v4968, 7
        %v4970 = vsub.s32 %v2424, %v4969
        %v4971 = vrot.slane %v4707, %v4970
        %v4972 = vsel %vm2429, %v4971, %v4967
        %v4973 = vlaneseq
        %v4974 = vshrl.u32 %v4973, 7
        %v4975 = vsub.s32 %v2431, %v4974
        %v4976 = vrot.slane %v4710, %v4975
        %v4977 = vsel %vm2436, %v4976, %v4972
        %v4978 = vlaneseq
        %v4979 = vshrl.u32 %v4978, 7
        %v4980 = vsub.s32 %v2438, %v4979
        %v4981 = vrot.slane %v4713, %v4980
        %v4982 = vsel %vm2443, %v4981, %v4977
        %v4983 = vlaneseq
        %v4984 = vshrl.u32 %v4983, 7
        %v4985 = vsub.s32 %v2419, %v4984
        %v4986 = vrot.slane %v4716, %v4985
        %v4987 = vlaneseq
        %v4988 = vshrl.u32 %v4987, 7
        %v4989 = vsub.s32 %v2424, %v4988
        %v4990 = vrot.slane %v4719, %v4989
        %v4991 = vsel %vm2429, %v4990, %v4986
        %v4992 = vlaneseq
        %v4993 = vshrl.u32 %v4992, 7
        %v4994 = vsub.s32 %v2431, %v4993
        %v4995 = vrot.slane %v4722, %v4994
        %v4996 = vsel %vm2436, %v4995, %v4991
        %v4997 = vlaneseq
        %v4998 = vshrl.u32 %v4997, 7
        %v4999 = vsub.s32 %v2438, %v4998
        %v5000 = vrot.slane %v4725, %v4999
        %v5001 = vsel %vm2443, %v5000, %v4996
        %v5002 = vlaneseq
        %v5003 = vshrl.u32 %v5002, 7
        %v5004 = vsub.s32 %v2419, %v5003
        %v5005 = vrot.slane %v4728, %v5004
        %v5006 = vlaneseq
        %v5007 = vshrl.u32 %v5006, 7
        %v5008 = vsub.s32 %v2424, %v5007
        %v5009 = vrot.slane %v4731, %v5008
        %v5010 = vsel %vm2429, %v5009, %v5005
        %v5011 = vlaneseq
        %v5012 = vshrl.u32 %v5011, 7
        %v5013 = vsub.s32 %v2431, %v5012
        %v5014 = vrot.slane %v4734, %v5013
        %v5015 = vsel %vm2436, %v5014, %v5010
        %v5016 = vlaneseq
        %v5017 = vshrl.u32 %v5016, 7
        %v5018 = vsub.s32 %v2438, %v5017
        %v5019 = vrot.slane %v4737, %v5018
        %v5020 = vsel %vm2443, %v5019, %v5015
        %v5021 = vlaneseq
        %v5022 = vshrl.u32 %v5021, 7
        %v5023 = vsub.s32 %v2419, %v5022
        %v5024 = vrot.slane %v4740, %v5023
        %v5025 = vlaneseq
        %v5026 = vshrl.u32 %v5025, 7
        %v5027 = vsub.s32 %v2424, %v5026
        %v5028 = vrot.slane %v4743, %v5027
        %v5029 = vsel %vm2429, %v5028, %v5024
        %v5030 = vlaneseq
        %v5031 = vshrl.u32 %v5030, 7
        %v5032 = vsub.s32 %v2431, %v5031
        %v5033 = vrot.slane %v4746, %v5032
        %v5034 = vsel %vm2436, %v5033, %v5029
        %v5035 = vlaneseq
        %v5036 = vshrl.u32 %v5035, 7
        %v5037 = vsub.s32 %v2438, %v5036
        %v5038 = vrot.slane %v4749, %v5037
        %v5039 = vsel %vm2443, %v5038, %v5034
        %v5040 = vlaneseq
        %v5041 = vshrl.u32 %v5040, 7
        %v5042 = vsub.s32 %v2419, %v5041
        %v5043 = vrot.slane %v4752, %v5042
        %v5044 = vlaneseq
        %v5045 = vshrl.u32 %v5044, 7
        %v5046 = vsub.s32 %v2424, %v5045
        %v5047 = vrot.slane %v4755, %v5046
        %v5048 = vsel %vm2429, %v5047, %v5043
        %v5049 = vlaneseq
        %v5050 = vshrl.u32 %v5049, 7
        %v5051 = vsub.s32 %v2431, %v5050
        %v5052 = vrot.slane %v4758, %v5051
        %v5053 = vsel %vm2436, %v5052, %v5048
        %v5054 = vlaneseq
        %v5055 = vshrl.u32 %v5054, 7
        %v5056 = vsub.s32 %v2438, %v5055
        %v5057 = vrot.slane %v4761, %v5056
        %v5058 = vsel %vm2443, %v5057, %v5053
        %v5059 = vlaneseq
        %v5060 = vshrl.u32 %v5059, 7
        %v5061 = vsub.s32 %v2419, %v5060
        %v5062 = vrot.slane %v4764, %v5061
        %v5063 = vlaneseq
        %v5064 = vshrl.u32 %v5063, 7
        %v5065 = vsub.s32 %v2424, %v5064
        %v5066 = vrot.slane %v4767, %v5065
        %v5067 = vsel %vm2429, %v5066, %v5062
        %v5068 = vlaneseq
        %v5069 = vshrl.u32 %v5068, 7
        %v5070 = vsub.s32 %v2431, %v5069
        %v5071 = vrot.slane %v4770, %v5070
        %v5072 = vsel %vm2436, %v5071, %v5067
        %v5073 = vlaneseq
        %v5074 = vshrl.u32 %v5073, 7
        %v5075 = vsub.s32 %v2438, %v5074
        %v5076 = vrot.slane %v4773, %v5075
        %v5077 = vsel %vm2443, %v5076, %v5072
        %v5078 = vsel %vm2730, %v4811, %v4792
        %v5079 = vsel %vm2732, %v4830, %v5078
        %v5080 = vsel %vm2734, %v4849, %v5079
        %v5081 = vsel %vm2736, %v4868, %v5080
        %v5082 = vsel %vm2738, %v4887, %v5081
        %v5083 = vsel %vm2740, %v4906, %v5082
        %v5084 = vsel %vm2742, %v4925, %v5083
        %v5085 = vsel %vm2730, %v4963, %v4944
        %v5086 = vsel %vm2732, %v4982, %v5085
        %v5087 = vsel %vm2734, %v5001, %v5086
        %v5088 = vsel %vm2736, %v5020, %v5087
        %v5089 = vsel %vm2738, %v5039, %v5088
        %v5090 = vsel %vm2740, %v5058, %v5089
        %v5091 = vsel %vm2742, %v5077, %v5090
        %5094 = vxpose.xlu0.b32.start [1/16] %v5084, 128
        %5095 = vxpose.xlu0.b32.cont [2/16] %v5091, 128
        %5096 = vxpose.xlu0.b32.cont [3/16] 0.0, 128
        %5097 = vxpose.xlu0.b32.cont [4/16] 0.0, 128
        %5098 = vxpose.xlu0.b32.cont [5/16] 0.0, 128
        %5099 = vxpose.xlu0.b32.cont [6/16] 0.0, 128
        %5100 = vxpose.xlu0.b32.cont [7/16] 0.0, 128
        %5101 = vxpose.xlu0.b32.cont [8/16] 0.0, 128
        %5102 = vxpose.xlu0.b32.cont [9/16] 0.0, 128
        %5103 = vxpose.xlu0.b32.cont [10/16] 0.0, 128
        %5104 = vxpose.xlu0.b32.cont [11/16] 0.0, 128
        %5105 = vxpose.xlu0.b32.cont [12/16] 0.0, 128
        %5106 = vxpose.xlu0.b32.cont [13/16] 0.0, 128
        %5107 = vxpose.xlu0.b32.cont [14/16] 0.0, 128
        %5108 = vxpose.xlu0.b32.cont [15/16] 0.0, 128
        %5109 = vxpose.xlu0.b32.end [16/16] 0.0, 128
        %v5110 = vpop.trf.xlu0
        %v5111 = vpop.trf.xlu0
        %v5112 = vpop.trf.xlu0
        %v5113 = vpop.trf.xlu0
        %v5114 = vpop.trf.xlu0
        %v5115 = vpop.trf.xlu0
        %v5116 = vpop.trf.xlu0
        %v5117 = vpop.trf.xlu0
        %v5118 = vpop.trf.xlu0
        %v5119 = vpop.trf.xlu0
        %v5120 = vpop.trf.xlu0
        %v5121 = vpop.trf.xlu0
        %v5122 = vpop.trf.xlu0
        %v5123 = vpop.trf.xlu0
        %v5124 = vpop.trf.xlu0
        %v5125 = vpop.trf.xlu0
        %5127 = vset.pattern.permute.xlu0 0
        %5128 = vperm.xlu0 %5127, %v3091
        %v5129 = vpop.permute.xlu0 %5128
        %5132 = vset.pattern.permute.xlu0 0
        %5133 = vperm.xlu0 %5132, %v3092
        %v5134 = vpop.permute.xlu0 %5133
        %5137 = vset.pattern.permute.xlu0 0
        %5138 = vperm.xlu0 %5137, %v3093
        %v5139 = vpop.permute.xlu0 %5138
        %5142 = vset.pattern.permute.xlu0 0
        %5143 = vperm.xlu0 %5142, %v3094
        %v5144 = vpop.permute.xlu0 %5143
        %v5147 = vsel %vm2805, %v3086, 0
        %v5150 = vsel %vm2805, %v3087, 0
        %v5153 = vsel %vm2805, %v3088, 0
        %v5156 = vsel %vm2805, %v3089, 0
        %5158 = vmatprep.subr.mxu0 0.0
        %5159 = vmatpush1.msra.mxu0 %v3016
        %5160 = vmatprep.subr.mxu0 0.0
        %5161 = vmatpush1.msra.mxu0 %v3017
        %5162 = vmatprep.subr.mxu0 0.0
        %5163 = vmatpush1.msra.mxu0 %v3018
        %5164 = vmatprep.subr.mxu0 0.0
        %5165 = vmatpush1.msra.mxu0 %v3019
        %5166 = vmatprep.subr.mxu0 0.0
        %5167 = vmatpush1.msra.mxu0 0.0
        %5168 = vmatprep.subr.mxu0 0.0
        %5169 = vmatpush1.msra.mxu0 0.0
        %5170 = vmatprep.subr.mxu0 0.0
        %5171 = vmatpush1.msra.mxu0 0.0
        %5172 = vmatprep.subr.mxu0 0.0
        %5173 = vmatpush1.msra.mxu0 0.0
        %5174 = vmatprep.subr.mxu0 0.0
        %5175 = vmatpush1.msra.mxu0 0.0
        %5176 = vmatprep.subr.mxu0 0.0
        %5177 = vmatpush1.msra.mxu0 0.0
        %5178 = vmatprep.subr.mxu0 0.0
        %5179 = vmatpush1.msra.mxu0 0.0
        %5180 = vmatprep.subr.mxu0 0.0
        %5181 = vmatpush1.msra.mxu0 0.0
        %5182 = vmatprep.subr.mxu0 0.0
        %5183 = vmatpush1.msra.mxu0 0.0
        %5184 = vmatprep.subr.mxu0 0.0
        %5185 = vmatpush1.msra.mxu0 0.0
        %5186 = vmatprep.subr.mxu0 0.0
        %5187 = vmatpush1.msra.mxu0 0.0
        %5188 = vmatprep.subr.mxu0 0.0
        %5189 = vmatpush1.msra.mxu0 0.0
        %5190 = vmatprep.subr.mxu0 0.0
        %5191 = vmatpush1.msra.mxu0 0.0
        %5192 = vmatprep.subr.mxu0 0.0
        %5193 = vmatpush1.msra.mxu0 0.0
        %5194 = vmatprep.subr.mxu0 0.0
        %5195 = vmatpush1.msra.mxu0 0.0
        %5196 = vmatprep.subr.mxu0 0.0
        %5197 = vmatpush1.msra.mxu0 0.0
        %5198 = vmatprep.subr.mxu0 0.0
        %5199 = vmatpush1.msra.mxu0 0.0
        %5200 = vmatprep.subr.mxu0 0.0
        %5201 = vmatpush1.msra.mxu0 0.0
        %5202 = vmatprep.subr.mxu0 0.0
        %5203 = vmatpush1.msra.mxu0 0.0
        %5204 = vmatprep.subr.mxu0 0.0
        %5205 = vmatpush1.msra.mxu0 0.0
        %5206 = vmatprep.subr.mxu0 0.0
        %5207 = vmatpush1.msra.mxu0 0.0
        %5208 = vmatprep.subr.mxu0 0.0
        %5209 = vmatpush1.msra.mxu0 0.0
        %5210 = vmatprep.subr.mxu0 0.0
        %5211 = vmatpush1.msra.mxu0 0.0
        %5212 = vmatprep.subr.mxu0 0.0
        %5213 = vmatpush1.msra.mxu0 0.0
        %5214 = vmatprep.subr.mxu0 0.0
        %5215 = vmatpush1.msra.mxu0 0.0
        %5216 = vmatprep.subr.mxu0 0.0
        %5217 = vmatpush1.msra.mxu0 0.0
        %5218 = vmatprep.subr.mxu0 0.0
        %5219 = vmatpush1.msra.mxu0 0.0
        %5220 = vmatprep.subr.mxu0 0.0
        %5221 = vmatpush1.msra.mxu0 0.0
        %5222 = vmatprep.mubr.f32.mxu0 0.0
        %5223 = vmatmul.mubr.f32.gmra.mrb[0].mxu0 %v5147
        %v5224 = vpop.f32.mrb[0].mxu0
        %v5225 = vadd.f32 %v5129, %v5224
        %v5226 = vpop.f32.mrb[0].mxu0
        %5227 = vmatprep.mubr.f32.mxu0 0.0
        %5228 = vmatmul.mubr.f32.gmra.mrb[0].mxu0 %v5150
        %v5229 = vpop.f32.mrb[0].mxu0
        %v5230 = vadd.f32 %v5134, %v5229
        %v5231 = vpop.f32.mrb[0].mxu0
        %5232 = vmatprep.mubr.f32.mxu0 0.0
        %5233 = vmatmul.mubr.f32.gmra.mrb[0].mxu0 %v5153
        %v5234 = vpop.f32.mrb[0].mxu0
        %v5235 = vadd.f32 %v5139, %v5234
        %v5236 = vpop.f32.mrb[0].mxu0
        %5237 = vmatprep.mubr.f32.mxu0 0.0
        %5238 = vmatmul.mubr.f32.gmra.mrb[0].mxu0 %v5156
        %v5239 = vpop.f32.mrb[0].mxu0
        %v5240 = vadd.f32 %v5144, %v5239
        %v5241 = vpop.f32.mrb[0].mxu0
        %5242 = vdwg.mxu0
        %v5244 = vsel %vm731, %v5110, 0
        %v5247 = vsel %vm731, %v5111, 0
        %v5250 = vsel %vm731, %v5112, 0
        %v5253 = vsel %vm731, %v5113, 0
        %5255 = vmatprep.subr.mxu0 0.0
        %5256 = vmatpush1.msra.mxu0 %v657
        %5257 = vmatprep.subr.mxu0 0.0
        %5258 = vmatpush1.msra.mxu0 %v658
        %5259 = vmatprep.subr.mxu0 0.0
        %5260 = vmatpush1.msra.mxu0 0.0
        %5261 = vmatprep.subr.mxu0 0.0
        %5262 = vmatpush1.msra.mxu0 0.0
        %5263 = vmatprep.subr.mxu0 0.0
        %5264 = vmatpush1.msra.mxu0 0.0
        %5265 = vmatprep.subr.mxu0 0.0
        %5266 = vmatpush1.msra.mxu0 0.0
        %5267 = vmatprep.subr.mxu0 0.0
        %5268 = vmatpush1.msra.mxu0 0.0
        %5269 = vmatprep.subr.mxu0 0.0
        %5270 = vmatpush1.msra.mxu0 0.0
        %5271 = vmatprep.subr.mxu0 0.0
        %5272 = vmatpush1.msra.mxu0 0.0
        %5273 = vmatprep.subr.mxu0 0.0
        %5274 = vmatpush1.msra.mxu0 0.0
        %5275 = vmatprep.subr.mxu0 0.0
        %5276 = vmatpush1.msra.mxu0 0.0
        %5277 = vmatprep.subr.mxu0 0.0
        %5278 = vmatpush1.msra.mxu0 0.0
        %5279 = vmatprep.subr.mxu0 0.0
        %5280 = vmatpush1.msra.mxu0 0.0
        %5281 = vmatprep.subr.mxu0 0.0
        %5282 = vmatpush1.msra.mxu0 0.0
        %5283 = vmatprep.subr.mxu0 0.0
        %5284 = vmatpush1.msra.mxu0 0.0
        %5285 = vmatprep.subr.mxu0 0.0
        %5286 = vmatpush1.msra.mxu0 0.0
        %5287 = vmatprep.subr.mxu0 0.0
        %5288 = vmatpush1.msra.mxu0 0.0
        %5289 = vmatprep.subr.mxu0 0.0
        %5290 = vmatpush1.msra.mxu0 0.0
        %5291 = vmatprep.subr.mxu0 0.0
        %5292 = vmatpush1.msra.mxu0 0.0
        %5293 = vmatprep.subr.mxu0 0.0
        %5294 = vmatpush1.msra.mxu0 0.0
        %5295 = vmatprep.subr.mxu0 0.0
        %5296 = vmatpush1.msra.mxu0 0.0
        %5297 = vmatprep.subr.mxu0 0.0
        %5298 = vmatpush1.msra.mxu0 0.0
        %5299 = vmatprep.subr.mxu0 0.0
        %5300 = vmatpush1.msra.mxu0 0.0
        %5301 = vmatprep.subr.mxu0 0.0
        %5302 = vmatpush1.msra.mxu0 0.0
        %5303 = vmatprep.subr.mxu0 0.0
        %5304 = vmatpush1.msra.mxu0 0.0
        %5305 = vmatprep.subr.mxu0 0.0
        %5306 = vmatpush1.msra.mxu0 0.0
        %5307 = vmatprep.subr.mxu0 0.0
        %5308 = vmatpush1.msra.mxu0 0.0
        %5309 = vmatprep.subr.mxu0 0.0
        %5310 = vmatpush1.msra.mxu0 0.0
        %5311 = vmatprep.subr.mxu0 0.0
        %5312 = vmatpush1.msra.mxu0 0.0
        %5313 = vmatprep.subr.mxu0 0.0
        %5314 = vmatpush1.msra.mxu0 0.0
        %5315 = vmatprep.subr.mxu0 0.0
        %5316 = vmatpush1.msra.mxu0 0.0
        %5317 = vmatprep.subr.mxu0 0.0
        %5318 = vmatpush1.msra.mxu0 0.0
        %5319 = vmatprep.mubr.f32.mxu0 0.0
        %5320 = vmatmul.mubr.f32.gmra.mrb[0].mxu0 %v5244
        %v5321 = vpop.f32.mrb[0].mxu0
        %v5322 = vadd.f32 %v5225, %v5321
        %v5323 = vpop.f32.mrb[0].mxu0
        %5324 = vmatprep.mubr.f32.mxu0 0.0
        %5325 = vmatmul.mubr.f32.gmra.mrb[0].mxu0 %v5247
        %v5326 = vpop.f32.mrb[0].mxu0
        %v5327 = vadd.f32 %v5230, %v5326
        %v5328 = vpop.f32.mrb[0].mxu0
        %5329 = vmatprep.mubr.f32.mxu0 0.0
        %5330 = vmatmul.mubr.f32.gmra.mrb[0].mxu0 %v5250
        %v5331 = vpop.f32.mrb[0].mxu0
        %v5332 = vadd.f32 %v5235, %v5331
        %v5333 = vpop.f32.mrb[0].mxu0
        %5334 = vmatprep.mubr.f32.mxu0 0.0
        %5335 = vmatmul.mubr.f32.gmra.mrb[0].mxu0 %v5253
        %v5336 = vpop.f32.mrb[0].mxu0
        %v5337 = vadd.f32 %v5240, %v5336
        %v5338 = vpop.f32.mrb[0].mxu0
        %5339 = vdwg.mxu0
        %v5340 = vmul.f32 %v5322, 0.5
        %v5341 = vmul.f32 %v5327, 0.5
        %v5342 = vmul.f32 %v5332, 0.5
        %v5343 = vmul.f32 %v5337, 0.5
        %v5344 = vmul.f32 %v5322, 0.70710677
        %v5345 = vmul.f32 %v5327, 0.70710677
        %v5346 = vmul.f32 %v5332, 0.70710677
        %v5347 = vmul.f32 %v5337, 0.70710677
        %v5348 = verf.f32.pop %v5344
        %v5349 = verf.f32.pop %v5345
        %v5350 = verf.f32.pop %v5346
        %v5351 = verf.f32.pop %v5347
        %v5352 = vadd.f32 %v5348, 1.0
        %v5353 = vadd.f32 %v5349, 1.0
        %v5354 = vadd.f32 %v5350, 1.0
        %v5355 = vadd.f32 %v5351, 1.0
        %v5356 = vmul.f32 %v5340, %v5352
        %v5357 = vmul.f32 %v5341, %v5353
        %v5358 = vmul.f32 %v5342, %v5354
        %v5359 = vmul.f32 %v5343, %v5355
        %s5360 = scalar_lea.vmem [#allocation3], 1024
        %v5361 = vld [vmem:[%s5360] sm:$0xff]
        %v5362 = vld [vmem:[%s5360 + $0x8] sm:$0xff]
        %v5363 = vld [vmem:[%s5360 + $0x10] sm:$0xff]
        %v5364 = vld [vmem:[%s5360 + $0x18] sm:$0xff]
        %v5365 = vld [vmem:[%s5360 + $0x20] sm:$0xff]
        %v5366 = vld [vmem:[%s5360 + $0x28] sm:$0xff]
        %v5367 = vld [vmem:[%s5360 + $0x30] sm:$0xff]
        %v5368 = vld [vmem:[%s5360 + $0x38] sm:$0xff]
        %v5369 = vld [vmem:[%s5360 + $0x40] sm:$0xff]
        %v5370 = vld [vmem:[%s5360 + $0x48] sm:$0xff]
        %v5371 = vld [vmem:[%s5360 + $0x50] sm:$0xff]
        %v5372 = vld [vmem:[%s5360 + $0x58] sm:$0xff]
        %v5373 = vld [vmem:[%s5360 + $0x60] sm:$0xff]
        %v5374 = vld [vmem:[%s5360 + $0x68] sm:$0xff]
        %v5375 = vld [vmem:[%s5360 + $0x70] sm:$0xff]
        %v5376 = vld [vmem:[%s5360 + $0x78] sm:$0xff]
        %v5377 = vld [vmem:[%s5360 + $0x80] sm:$0xff]
        %v5378 = vld [vmem:[%s5360 + $0x88] sm:$0xff]
        %v5379 = vld [vmem:[%s5360 + $0x90] sm:$0xff]
        %v5380 = vld [vmem:[%s5360 + $0x98] sm:$0xff]
        %v5381 = vld [vmem:[%s5360 + $0xa0] sm:$0xff]
        %v5382 = vld [vmem:[%s5360 + $0xa8] sm:$0xff]
        %v5383 = vld [vmem:[%s5360 + $0xb0] sm:$0xff]
        %v5384 = vld [vmem:[%s5360 + $0xb8] sm:$0xff]
        %v5385 = vld [vmem:[%s5360 + $0xc0] sm:$0xff]
        %v5386 = vld [vmem:[%s5360 + $0xc8] sm:$0xff]
        %v5387 = vld [vmem:[%s5360 + $0xd0] sm:$0xff]
        %v5388 = vld [vmem:[%s5360 + $0xd8] sm:$0xff]
        %v5389 = vld [vmem:[%s5360 + $0xe0] sm:$0xff]
        %v5390 = vld [vmem:[%s5360 + $0xe8] sm:$0xff]
        %v5391 = vld [vmem:[%s5360 + $0xf0] sm:$0xff]
        %v5392 = vld [vmem:[%s5360 + $0xf8] sm:$0xff]
        %v5393 = vld [vmem:[%s5360 + $0x100] sm:$0xff]
        %v5394 = vld [vmem:[%s5360 + $0x108] sm:$0xff]
        %v5395 = vld [vmem:[%s5360 + $0x110] sm:$0xff]
        %v5396 = vld [vmem:[%s5360 + $0x118] sm:$0xff]
        %v5397 = vld [vmem:[%s5360 + $0x120] sm:$0xff]
        %v5398 = vld [vmem:[%s5360 + $0x128] sm:$0xff]
        %v5399 = vld [vmem:[%s5360 + $0x130] sm:$0xff]
        %v5400 = vld [vmem:[%s5360 + $0x138] sm:$0xff]
        %v5401 = vld [vmem:[%s5360 + $0x140] sm:$0xff]
        %v5402 = vld [vmem:[%s5360 + $0x148] sm:$0xff]
        %v5403 = vld [vmem:[%s5360 + $0x150] sm:$0xff]
        %v5404 = vld [vmem:[%s5360 + $0x158] sm:$0xff]
        %v5405 = vld [vmem:[%s5360 + $0x160] sm:$0xff]
        %v5406 = vld [vmem:[%s5360 + $0x168] sm:$0xff]
        %v5407 = vld [vmem:[%s5360 + $0x170] sm:$0xff]
        %v5408 = vld [vmem:[%s5360 + $0x178] sm:$0xff]
        %v5409 = vld [vmem:[%s5360 + $0x180] sm:$0xff]
        %v5410 = vld [vmem:[%s5360 + $0x188] sm:$0xff]
        %v5411 = vld [vmem:[%s5360 + $0x190] sm:$0xff]
        %v5412 = vld [vmem:[%s5360 + $0x198] sm:$0xff]
        %v5413 = vld [vmem:[%s5360 + $0x1a0] sm:$0xff]
        %v5414 = vld [vmem:[%s5360 + $0x1a8] sm:$0xff]
        %v5415 = vld [vmem:[%s5360 + $0x1b0] sm:$0xff]
        %v5416 = vld [vmem:[%s5360 + $0x1b8] sm:$0xff]
        %v5417 = vld [vmem:[%s5360 + $0x1c0] sm:$0xff]
        %v5418 = vld [vmem:[%s5360 + $0x1c8] sm:$0xff]
        %v5419 = vld [vmem:[%s5360 + $0x1d0] sm:$0xff]
        %v5420 = vld [vmem:[%s5360 + $0x1d8] sm:$0xff]
        %v5421 = vld [vmem:[%s5360 + $0x1e0] sm:$0xff]
        %v5422 = vld [vmem:[%s5360 + $0x1e8] sm:$0xff]
        %v5423 = vld [vmem:[%s5360 + $0x1f0] sm:$0xff]
        %v5424 = vld [vmem:[%s5360 + $0x1f8] sm:$0xff]
        %s5425 = scalar_lea.vmem %s8, 64
        %v5426 = vld [vmem:[%s5425] sm:$0xff]
        %v5427 = vld [vmem:[%s5425 + $0x8] sm:$0xff]
        %v5428 = vld [vmem:[%s5425 + $0x10] sm:$0xff]
        %v5429 = vld [vmem:[%s5425 + $0x18] sm:$0xff]
        %s5430 = scalar_lea.vmem %s9, 64
        %v5431 = vld [vmem:[%s5430] sm:$0xff]
        %v5432 = vld [vmem:[%s5430 + $0x8] sm:$0xff]
        %v5433 = vld [vmem:[%s5430 + $0x10] sm:$0xff]
        %v5434 = vld [vmem:[%s5430 + $0x18] sm:$0xff]
        %v5436 = vsel %vm731, %v5356, 0
        %v5439 = vsel %vm731, %v5357, 0
        %v5442 = vsel %vm731, %v5358, 0
        %v5445 = vsel %vm731, %v5359, 0
        %5447 = vmatprep.subr.mxu0 0.0
        %5448 = vmatpush1.xpose.msra.mxu0 %v5436
        %5449 = vmatprep.subr.mxu0 0.0
        %5450 = vmatpush1.xpose.msra.mxu0 %v5439
        %5451 = vmatprep.subr.mxu0 0.0
        %5452 = vmatpush1.xpose.msra.mxu0 %v5442
        %5453 = vmatprep.subr.mxu0 0.0
        %5454 = vmatpush1.xpose.msra.mxu0 %v5445
        %5455 = vmatprep.subr.mxu0 0.0
        %5456 = vmatpush1.xpose.msra.mxu0 0.0
        %5457 = vmatprep.subr.mxu0 0.0
        %5458 = vmatpush1.xpose.msra.mxu0 0.0
        %5459 = vmatprep.subr.mxu0 0.0
        %5460 = vmatpush1.xpose.msra.mxu0 0.0
        %5461 = vmatprep.subr.mxu0 0.0
        %5462 = vmatpush1.xpose.msra.mxu0 0.0
        %5463 = vmatprep.subr.mxu0 0.0
        %5464 = vmatpush1.xpose.msra.mxu0 0.0
        %5465 = vmatprep.subr.mxu0 0.0
        %5466 = vmatpush1.xpose.msra.mxu0 0.0
        %5467 = vmatprep.subr.mxu0 0.0
        %5468 = vmatpush1.xpose.msra.mxu0 0.0
        %5469 = vmatprep.subr.mxu0 0.0
        %5470 = vmatpush1.xpose.msra.mxu0 0.0
        %5471 = vmatprep.subr.mxu0 0.0
        %5472 = vmatpush1.xpose.msra.mxu0 0.0
        %5473 = vmatprep.subr.mxu0 0.0
        %5474 = vmatpush1.xpose.msra.mxu0 0.0
        %5475 = vmatprep.subr.mxu0 0.0
        %5476 = vmatpush1.xpose.msra.mxu0 0.0
        %5477 = vmatprep.subr.mxu0 0.0
        %5478 = vmatpush1.xpose.msra.mxu0 0.0
        %5479 = vmatprep.subr.mxu0 0.0
        %5480 = vmatpush1.xpose.msra.mxu0 0.0
        %5481 = vmatprep.subr.mxu0 0.0
        %5482 = vmatpush1.xpose.msra.mxu0 0.0
        %5483 = vmatprep.subr.mxu0 0.0
        %5484 = vmatpush1.xpose.msra.mxu0 0.0
        %5485 = vmatprep.subr.mxu0 0.0
        %5486 = vmatpush1.xpose.msra.mxu0 0.0
        %5487 = vmatprep.subr.mxu0 0.0
        %5488 = vmatpush1.xpose.msra.mxu0 0.0
        %5489 = vmatprep.subr.mxu0 0.0
        %5490 = vmatpush1.xpose.msra.mxu0 0.0
        %5491 = vmatprep.subr.mxu0 0.0
        %5492 = vmatpush1.xpose.msra.mxu0 0.0
        %5493 = vmatprep.subr.mxu0 0.0
        %5494 = vmatpush1.xpose.msra.mxu0 0.0
        %5495 = vmatprep.subr.mxu0 0.0
        %5496 = vmatpush1.xpose.msra.mxu0 0.0
        %5497 = vmatprep.subr.mxu0 0.0
        %5498 = vmatpush1.xpose.msra.mxu0 0.0
        %5499 = vmatprep.subr.mxu0 0.0
        %5500 = vmatpush1.xpose.msra.mxu0 0.0
        %5501 = vmatprep.subr.mxu0 0.0
        %5502 = vmatpush1.xpose.msra.mxu0 0.0
        %5503 = vmatprep.subr.mxu0 0.0
        %5504 = vmatpush1.xpose.msra.mxu0 0.0
        %5505 = vmatprep.subr.mxu0 0.0
        %5506 = vmatpush1.xpose.msra.mxu0 0.0
        %5507 = vmatprep.subr.mxu0 0.0
        %5508 = vmatpush1.xpose.msra.mxu0 0.0
        %5509 = vmatprep.subr.mxu0 0.0
        %5510 = vmatpush1.xpose.msra.mxu0 0.0
        %5511 = vmatprep.mubr.f32.mxu0 0.0
        %5512 = vmatmul.mubr.f32.gmra.mrb[0].mxu0 %v733
        %v5513 = vpop.f32.mrb[0].mxu0
        %v5514 = vadd.f32 0.0, %v5513
        %v5515 = vpop.f32.mrb[0].mxu0
        %5516 = vmatprep.mubr.f32.mxu0 0.0
        %5517 = vmatmul.mubr.f32.gmra.mrb[0].mxu0 %v736
        %v5518 = vpop.f32.mrb[0].mxu0
        %v5519 = vadd.f32 0.0, %v5518
        %v5520 = vpop.f32.mrb[0].mxu0
        %5521 = vdwg.mxu0
        %v5522 = vlaneseq
        %v5523 = vshrl.u32 %v5522, 7
        %v5524 = vsub.s32 0, %v5523
        %v5525 = vrot.slane %v5514, %v5524
        %5527 = vbcast.lane.b32.xlu0 %v5525, 256
        %v5528 = vpop.permute.xlu0 %5527
        %s5530 = sor.u32 256, 8
        %5531 = vbcast.lane.b32.xlu0 %v5525, %s5530
        %v5532 = vpop.permute.xlu0 %5531
        %s5534 = sor.u32 256, 16
        %5535 = vbcast.lane.b32.xlu0 %v5525, %s5534
        %v5536 = vpop.permute.xlu0 %5535
        %s5538 = sor.u32 256, 24
        %5539 = vbcast.lane.b32.xlu0 %v5525, %s5538
        %v5540 = vpop.permute.xlu0 %5539
        %v5541 = vlaneseq
        %v5542 = vshrl.u32 %v5541, 7
        %v5543 = vsub.s32 1, %v5542
        %v5544 = vrot.slane %v5514, %v5543
        %5546 = vbcast.lane.b32.xlu0 %v5544, 256
        %v5547 = vpop.permute.xlu0 %5546
        %s5549 = sor.u32 256, 8
        %5550 = vbcast.lane.b32.xlu0 %v5544, %s5549
        %v5551 = vpop.permute.xlu0 %5550
        %s5553 = sor.u32 256, 16
        %5554 = vbcast.lane.b32.xlu0 %v5544, %s5553
        %v5555 = vpop.permute.xlu0 %5554
        %s5557 = sor.u32 256, 24
        %5558 = vbcast.lane.b32.xlu0 %v5544, %s5557
        %v5559 = vpop.permute.xlu0 %5558
        %v5560 = vlaneseq
        %v5561 = vshrl.u32 %v5560, 7
        %v5562 = vsub.s32 2, %v5561
        %v5563 = vrot.slane %v5514, %v5562
        %5565 = vbcast.lane.b32.xlu0 %v5563, 256
        %v5566 = vpop.permute.xlu0 %5565
        %s5568 = sor.u32 256, 8
        %5569 = vbcast.lane.b32.xlu0 %v5563, %s5568
        %v5570 = vpop.permute.xlu0 %5569
        %s5572 = sor.u32 256, 16
        %5573 = vbcast.lane.b32.xlu0 %v5563, %s5572
        %v5574 = vpop.permute.xlu0 %5573
        %s5576 = sor.u32 256, 24
        %5577 = vbcast.lane.b32.xlu0 %v5563, %s5576
        %v5578 = vpop.permute.xlu0 %5577
        %v5579 = vlaneseq
        %v5580 = vshrl.u32 %v5579, 7
        %v5581 = vsub.s32 3, %v5580
        %v5582 = vrot.slane %v5514, %v5581
        %5584 = vbcast.lane.b32.xlu0 %v5582, 256
        %v5585 = vpop.permute.xlu0 %5584
        %s5587 = sor.u32 256, 8
        %5588 = vbcast.lane.b32.xlu0 %v5582, %s5587
        %v5589 = vpop.permute.xlu0 %5588
        %s5591 = sor.u32 256, 16
        %5592 = vbcast.lane.b32.xlu0 %v5582, %s5591
        %v5593 = vpop.permute.xlu0 %5592
        %s5595 = sor.u32 256, 24
        %5596 = vbcast.lane.b32.xlu0 %v5582, %s5595
        %v5597 = vpop.permute.xlu0 %5596
        %v5598 = vlaneseq
        %v5599 = vshrl.u32 %v5598, 7
        %v5600 = vsub.s32 4, %v5599
        %v5601 = vrot.slane %v5514, %v5600
        %5603 = vbcast.lane.b32.xlu0 %v5601, 256
        %v5604 = vpop.permute.xlu0 %5603
        %s5606 = sor.u32 256, 8
        %5607 = vbcast.lane.b32.xlu0 %v5601, %s5606
        %v5608 = vpop.permute.xlu0 %5607
        %s5610 = sor.u32 256, 16
        %5611 = vbcast.lane.b32.xlu0 %v5601, %s5610
        %v5612 = vpop.permute.xlu0 %5611
        %s5614 = sor.u32 256, 24
        %5615 = vbcast.lane.b32.xlu0 %v5601, %s5614
        %v5616 = vpop.permute.xlu0 %5615
        %v5617 = vlaneseq
        %v5618 = vshrl.u32 %v5617, 7
        %v5619 = vsub.s32 5, %v5618
        %v5620 = vrot.slane %v5514, %v5619
        %5622 = vbcast.lane.b32.xlu0 %v5620, 256
        %v5623 = vpop.permute.xlu0 %5622
        %s5625 = sor.u32 256, 8
        %5626 = vbcast.lane.b32.xlu0 %v5620, %s5625
        %v5627 = vpop.permute.xlu0 %5626
        %s5629 = sor.u32 256, 16
        %5630 = vbcast.lane.b32.xlu0 %v5620, %s5629
        %v5631 = vpop.permute.xlu0 %5630
        %s5633 = sor.u32 256, 24
        %5634 = vbcast.lane.b32.xlu0 %v5620, %s5633
        %v5635 = vpop.permute.xlu0 %5634
        %v5636 = vlaneseq
        %v5637 = vshrl.u32 %v5636, 7
        %v5638 = vsub.s32 6, %v5637
        %v5639 = vrot.slane %v5514, %v5638
        %5641 = vbcast.lane.b32.xlu0 %v5639, 256
        %v5642 = vpop.permute.xlu0 %5641
        %s5644 = sor.u32 256, 8
        %5645 = vbcast.lane.b32.xlu0 %v5639, %s5644
        %v5646 = vpop.permute.xlu0 %5645
        %s5648 = sor.u32 256, 16
        %5649 = vbcast.lane.b32.xlu0 %v5639, %s5648
        %v5650 = vpop.permute.xlu0 %5649
        %s5652 = sor.u32 256, 24
        %5653 = vbcast.lane.b32.xlu0 %v5639, %s5652
        %v5654 = vpop.permute.xlu0 %5653
        %v5655 = vlaneseq
        %v5656 = vshrl.u32 %v5655, 7
        %v5657 = vsub.s32 7, %v5656
        %v5658 = vrot.slane %v5514, %v5657
        %5660 = vbcast.lane.b32.xlu0 %v5658, 256
        %v5661 = vpop.permute.xlu0 %5660
        %s5663 = sor.u32 256, 8
        %5664 = vbcast.lane.b32.xlu0 %v5658, %s5663
        %v5665 = vpop.permute.xlu0 %5664
        %s5667 = sor.u32 256, 16
        %5668 = vbcast.lane.b32.xlu0 %v5658, %s5667
        %v5669 = vpop.permute.xlu0 %5668
        %s5671 = sor.u32 256, 24
        %5672 = vbcast.lane.b32.xlu0 %v5658, %s5671
        %v5673 = vpop.permute.xlu0 %5672
        %v5674 = vlaneseq
        %v5675 = vshrl.u32 %v5674, 7
        %v5676 = vsub.s32 0, %v5675
        %v5677 = vrot.slane %v5519, %v5676
        %5679 = vbcast.lane.b32.xlu0 %v5677, 256
        %v5680 = vpop.permute.xlu0 %5679
        %s5682 = sor.u32 256, 8
        %5683 = vbcast.lane.b32.xlu0 %v5677, %s5682
        %v5684 = vpop.permute.xlu0 %5683
        %s5686 = sor.u32 256, 16
        %5687 = vbcast.lane.b32.xlu0 %v5677, %s5686
        %v5688 = vpop.permute.xlu0 %5687
        %s5690 = sor.u32 256, 24
        %5691 = vbcast.lane.b32.xlu0 %v5677, %s5690
        %v5692 = vpop.permute.xlu0 %5691
        %v5693 = vlaneseq
        %v5694 = vshrl.u32 %v5693, 7
        %v5695 = vsub.s32 1, %v5694
        %v5696 = vrot.slane %v5519, %v5695
        %5698 = vbcast.lane.b32.xlu0 %v5696, 256
        %v5699 = vpop.permute.xlu0 %5698
        %s5701 = sor.u32 256, 8
        %5702 = vbcast.lane.b32.xlu0 %v5696, %s5701
        %v5703 = vpop.permute.xlu0 %5702
        %s5705 = sor.u32 256, 16
        %5706 = vbcast.lane.b32.xlu0 %v5696, %s5705
        %v5707 = vpop.permute.xlu0 %5706
        %s5709 = sor.u32 256, 24
        %5710 = vbcast.lane.b32.xlu0 %v5696, %s5709
        %v5711 = vpop.permute.xlu0 %5710
        %v5712 = vlaneseq
        %v5713 = vshrl.u32 %v5712, 7
        %v5714 = vsub.s32 2, %v5713
        %v5715 = vrot.slane %v5519, %v5714
        %5717 = vbcast.lane.b32.xlu0 %v5715, 256
        %v5718 = vpop.permute.xlu0 %5717
        %s5720 = sor.u32 256, 8
        %5721 = vbcast.lane.b32.xlu0 %v5715, %s5720
        %v5722 = vpop.permute.xlu0 %5721
        %s5724 = sor.u32 256, 16
        %5725 = vbcast.lane.b32.xlu0 %v5715, %s5724
        %v5726 = vpop.permute.xlu0 %5725
        %s5728 = sor.u32 256, 24
        %5729 = vbcast.lane.b32.xlu0 %v5715, %s5728
        %v5730 = vpop.permute.xlu0 %5729
        %v5731 = vlaneseq
        %v5732 = vshrl.u32 %v5731, 7
        %v5733 = vsub.s32 3, %v5732
        %v5734 = vrot.slane %v5519, %v5733
        %5736 = vbcast.lane.b32.xlu0 %v5734, 256
        %v5737 = vpop.permute.xlu0 %5736
        %s5739 = sor.u32 256, 8
        %5740 = vbcast.lane.b32.xlu0 %v5734, %s5739
        %v5741 = vpop.permute.xlu0 %5740
        %s5743 = sor.u32 256, 16
        %5744 = vbcast.lane.b32.xlu0 %v5734, %s5743
        %v5745 = vpop.permute.xlu0 %5744
        %s5747 = sor.u32 256, 24
        %5748 = vbcast.lane.b32.xlu0 %v5734, %s5747
        %v5749 = vpop.permute.xlu0 %5748
        %v5750 = vlaneseq
        %v5751 = vshrl.u32 %v5750, 7
        %v5752 = vsub.s32 4, %v5751
        %v5753 = vrot.slane %v5519, %v5752
        %5755 = vbcast.lane.b32.xlu0 %v5753, 256
        %v5756 = vpop.permute.xlu0 %5755
        %s5758 = sor.u32 256, 8
        %5759 = vbcast.lane.b32.xlu0 %v5753, %s5758
        %v5760 = vpop.permute.xlu0 %5759
        %s5762 = sor.u32 256, 16
        %5763 = vbcast.lane.b32.xlu0 %v5753, %s5762
        %v5764 = vpop.permute.xlu0 %5763
        %s5766 = sor.u32 256, 24
        %5767 = vbcast.lane.b32.xlu0 %v5753, %s5766
        %v5768 = vpop.permute.xlu0 %5767
        %v5769 = vlaneseq
        %v5770 = vshrl.u32 %v5769, 7
        %v5771 = vsub.s32 5, %v5770
        %v5772 = vrot.slane %v5519, %v5771
        %5774 = vbcast.lane.b32.xlu0 %v5772, 256
        %v5775 = vpop.permute.xlu0 %5774
        %s5777 = sor.u32 256, 8
        %5778 = vbcast.lane.b32.xlu0 %v5772, %s5777
        %v5779 = vpop.permute.xlu0 %5778
        %s5781 = sor.u32 256, 16
        %5782 = vbcast.lane.b32.xlu0 %v5772, %s5781
        %v5783 = vpop.permute.xlu0 %5782
        %s5785 = sor.u32 256, 24
        %5786 = vbcast.lane.b32.xlu0 %v5772, %s5785
        %v5787 = vpop.permute.xlu0 %5786
        %v5788 = vlaneseq
        %v5789 = vshrl.u32 %v5788, 7
        %v5790 = vsub.s32 6, %v5789
        %v5791 = vrot.slane %v5519, %v5790
        %5793 = vbcast.lane.b32.xlu0 %v5791, 256
        %v5794 = vpop.permute.xlu0 %5793
        %s5796 = sor.u32 256, 8
        %5797 = vbcast.lane.b32.xlu0 %v5791, %s5796
        %v5798 = vpop.permute.xlu0 %5797
        %s5800 = sor.u32 256, 16
        %5801 = vbcast.lane.b32.xlu0 %v5791, %s5800
        %v5802 = vpop.permute.xlu0 %5801
        %s5804 = sor.u32 256, 24
        %5805 = vbcast.lane.b32.xlu0 %v5791, %s5804
        %v5806 = vpop.permute.xlu0 %5805
        %v5807 = vlaneseq
        %v5808 = vshrl.u32 %v5807, 7
        %v5809 = vsub.s32 7, %v5808
        %v5810 = vrot.slane %v5519, %v5809
        %5812 = vbcast.lane.b32.xlu0 %v5810, 256
        %v5813 = vpop.permute.xlu0 %5812
        %s5815 = sor.u32 256, 8
        %5816 = vbcast.lane.b32.xlu0 %v5810, %s5815
        %v5817 = vpop.permute.xlu0 %5816
        %s5819 = sor.u32 256, 16
        %5820 = vbcast.lane.b32.xlu0 %v5810, %s5819
        %v5821 = vpop.permute.xlu0 %5820
        %s5823 = sor.u32 256, 24
        %5824 = vbcast.lane.b32.xlu0 %v5810, %s5823
        %v5825 = vpop.permute.xlu0 %5824
        %v5827 = vsel %vm1129, %v5361, 0
        %v5830 = vsel %vm1129, %v5362, 0
        %v5833 = vsel %vm1129, %v5363, 0
        %v5836 = vsel %vm1129, %v5364, 0
        %v5839 = vsel %vm1129, %v5365, 0
        %v5842 = vsel %vm1129, %v5366, 0
        %v5845 = vsel %vm1129, %v5367, 0
        %v5848 = vsel %vm1129, %v5368, 0
        %5850 = vmatprep.subr.mxu0 0.0
        %5851 = vmatpush1.msra.mxu0 %v5528
        %5852 = vmatprep.subr.mxu0 0.0
        %5853 = vmatpush1.msra.mxu0 %v5532
        %5854 = vmatprep.subr.mxu0 0.0
        %5855 = vmatpush1.msra.mxu0 %v5536
        %5856 = vmatprep.subr.mxu0 0.0
        %5857 = vmatpush1.msra.mxu0 %v5540
        %5858 = vmatprep.subr.mxu0 0.0
        %5859 = vmatpush1.msra.mxu0 %v5680
        %5860 = vmatprep.subr.mxu0 0.0
        %5861 = vmatpush1.msra.mxu0 %v5684
        %5862 = vmatprep.subr.mxu0 0.0
        %5863 = vmatpush1.msra.mxu0 %v5688
        %5864 = vmatprep.subr.mxu0 0.0
        %5865 = vmatpush1.msra.mxu0 %v5692
        %5866 = vmatprep.subr.mxu0 0.0
        %5867 = vmatpush1.msra.mxu0 0.0
        %5868 = vmatprep.subr.mxu0 0.0
        %5869 = vmatpush1.msra.mxu0 0.0
        %5870 = vmatprep.subr.mxu0 0.0
        %5871 = vmatpush1.msra.mxu0 0.0
        %5872 = vmatprep.subr.mxu0 0.0
        %5873 = vmatpush1.msra.mxu0 0.0
        %5874 = vmatprep.subr.mxu0 0.0
        %5875 = vmatpush1.msra.mxu0 0.0
        %5876 = vmatprep.subr.mxu0 0.0
        %5877 = vmatpush1.msra.mxu0 0.0
        %5878 = vmatprep.subr.mxu0 0.0
        %5879 = vmatpush1.msra.mxu0 0.0
        %5880 = vmatprep.subr.mxu0 0.0
        %5881 = vmatpush1.msra.mxu0 0.0
        %5882 = vmatprep.subr.mxu0 0.0
        %5883 = vmatpush1.msra.mxu0 0.0
        %5884 = vmatprep.subr.mxu0 0.0
        %5885 = vmatpush1.msra.mxu0 0.0
        %5886 = vmatprep.subr.mxu0 0.0
        %5887 = vmatpush1.msra.mxu0 0.0
        %5888 = vmatprep.subr.mxu0 0.0
        %5889 = vmatpush1.msra.mxu0 0.0
        %5890 = vmatprep.subr.mxu0 0.0
        %5891 = vmatpush1.msra.mxu0 0.0
        %5892 = vmatprep.subr.mxu0 0.0
        %5893 = vmatpush1.msra.mxu0 0.0
        %5894 = vmatprep.subr.mxu0 0.0
        %5895 = vmatpush1.msra.mxu0 0.0
        %5896 = vmatprep.subr.mxu0 0.0
        %5897 = vmatpush1.msra.mxu0 0.0
        %5898 = vmatprep.subr.mxu0 0.0
        %5899 = vmatpush1.msra.mxu0 0.0
        %5900 = vmatprep.subr.mxu0 0.0
        %5901 = vmatpush1.msra.mxu0 0.0
        %5902 = vmatprep.subr.mxu0 0.0
        %5903 = vmatpush1.msra.mxu0 0.0
        %5904 = vmatprep.subr.mxu0 0.0
        %5905 = vmatpush1.msra.mxu0 0.0
        %5906 = vmatprep.subr.mxu0 0.0
        %5907 = vmatpush1.msra.mxu0 0.0
        %5908 = vmatprep.subr.mxu0 0.0
        %5909 = vmatpush1.msra.mxu0 0.0
        %5910 = vmatprep.subr.mxu0 0.0
        %5911 = vmatpush1.msra.mxu0 0.0
        %5912 = vmatprep.subr.mxu0 0.0
        %5913 = vmatpush1.msra.mxu0 0.0
        %5914 = vmatprep.mubr.f32.mxu0 0.0
        %5915 = vmatmul.mubr.f32.gmra.mrb[0].mxu0 %v5827
        %v5916 = vpop.f32.mrb[0].mxu0
        %v5917 = vadd.f32 0.0, %v5916
        %v5918 = vpop.f32.mrb[0].mxu0
        %5919 = vmatprep.mubr.f32.mxu0 0.0
        %5920 = vmatmul.mubr.f32.gmra.mrb[0].mxu0 %v5830
        %v5921 = vpop.f32.mrb[0].mxu0
        %v5922 = vadd.f32 0.0, %v5921
        %v5923 = vpop.f32.mrb[0].mxu0
        %5924 = vmatprep.mubr.f32.mxu0 0.0
        %5925 = vmatmul.mubr.f32.gmra.mrb[0].mxu0 %v5833
        %v5926 = vpop.f32.mrb[0].mxu0
        %v5927 = vadd.f32 0.0, %v5926
        %v5928 = vpop.f32.mrb[0].mxu0
        %5929 = vmatprep.mubr.f32.mxu0 0.0
        %5930 = vmatmul.mubr.f32.gmra.mrb[0].mxu0 %v5836
        %v5931 = vpop.f32.mrb[0].mxu0
        %v5932 = vadd.f32 0.0, %v5931
        %v5933 = vpop.f32.mrb[0].mxu0
        %5934 = vmatprep.mubr.f32.mxu0 0.0
        %5935 = vmatmul.mubr.f32.gmra.mrb[0].mxu0 %v5839
        %v5936 = vpop.f32.mrb[0].mxu0
        %v5937 = vadd.f32 0.0, %v5936
        %v5938 = vpop.f32.mrb[0].mxu0
        %5939 = vmatprep.mubr.f32.mxu0 0.0
        %5940 = vmatmul.mubr.f32.gmra.mrb[0].mxu0 %v5842
        %v5941 = vpop.f32.mrb[0].mxu0
        %v5942 = vadd.f32 0.0, %v5941
        %v5943 = vpop.f32.mrb[0].mxu0
        %5944 = vmatprep.mubr.f32.mxu0 0.0
        %5945 = vmatmul.mubr.f32.gmra.mrb[0].mxu0 %v5845
        %v5946 = vpop.f32.mrb[0].mxu0
        %v5947 = vadd.f32 0.0, %v5946
        %v5948 = vpop.f32.mrb[0].mxu0
        %5949 = vmatprep.mubr.f32.mxu0 0.0
        %5950 = vmatmul.mubr.f32.gmra.mrb[0].mxu0 %v5848
        %v5951 = vpop.f32.mrb[0].mxu0
        %v5952 = vadd.f32 0.0, %v5951
        %v5953 = vpop.f32.mrb[0].mxu0
        %5954 = vdwg.mxu0
        %v5956 = vsel %vm1129, %v5369, 0
        %v5959 = vsel %vm1129, %v5370, 0
        %v5962 = vsel %vm1129, %v5371, 0
        %v5965 = vsel %vm1129, %v5372, 0
        %v5968 = vsel %vm1129, %v5373, 0
        %v5971 = vsel %vm1129, %v5374, 0
        %v5974 = vsel %vm1129, %v5375, 0
        %v5977 = vsel %vm1129, %v5376, 0
        %5979 = vmatprep.subr.mxu0 0.0
        %5980 = vmatpush1.msra.mxu0 %v5547
        %5981 = vmatprep.subr.mxu0 0.0
        %5982 = vmatpush1.msra.mxu0 %v5551
        %5983 = vmatprep.subr.mxu0 0.0
        %5984 = vmatpush1.msra.mxu0 %v5555
        %5985 = vmatprep.subr.mxu0 0.0
        %5986 = vmatpush1.msra.mxu0 %v5559
        %5987 = vmatprep.subr.mxu0 0.0
        %5988 = vmatpush1.msra.mxu0 %v5699
        %5989 = vmatprep.subr.mxu0 0.0
        %5990 = vmatpush1.msra.mxu0 %v5703
        %5991 = vmatprep.subr.mxu0 0.0
        %5992 = vmatpush1.msra.mxu0 %v5707
        %5993 = vmatprep.subr.mxu0 0.0
        %5994 = vmatpush1.msra.mxu0 %v5711
        %5995 = vmatprep.subr.mxu0 0.0
        %5996 = vmatpush1.msra.mxu0 0.0
        %5997 = vmatprep.subr.mxu0 0.0
        %5998 = vmatpush1.msra.mxu0 0.0
        %5999 = vmatprep.subr.mxu0 0.0
        %6000 = vmatpush1.msra.mxu0 0.0
        %6001 = vmatprep.subr.mxu0 0.0
        %6002 = vmatpush1.msra.mxu0 0.0
        %6003 = vmatprep.subr.mxu0 0.0
        %6004 = vmatpush1.msra.mxu0 0.0
        %6005 = vmatprep.subr.mxu0 0.0
        %6006 = vmatpush1.msra.mxu0 0.0
        %6007 = vmatprep.subr.mxu0 0.0
        %6008 = vmatpush1.msra.mxu0 0.0
        %6009 = vmatprep.subr.mxu0 0.0
        %6010 = vmatpush1.msra.mxu0 0.0
        %6011 = vmatprep.subr.mxu0 0.0
        %6012 = vmatpush1.msra.mxu0 0.0
        %6013 = vmatprep.subr.mxu0 0.0
        %6014 = vmatpush1.msra.mxu0 0.0
        %6015 = vmatprep.subr.mxu0 0.0
        %6016 = vmatpush1.msra.mxu0 0.0
        %6017 = vmatprep.subr.mxu0 0.0
        %6018 = vmatpush1.msra.mxu0 0.0
        %6019 = vmatprep.subr.mxu0 0.0
        %6020 = vmatpush1.msra.mxu0 0.0
        %6021 = vmatprep.subr.mxu0 0.0
        %6022 = vmatpush1.msra.mxu0 0.0
        %6023 = vmatprep.subr.mxu0 0.0
        %6024 = vmatpush1.msra.mxu0 0.0
        %6025 = vmatprep.subr.mxu0 0.0
        %6026 = vmatpush1.msra.mxu0 0.0
        %6027 = vmatprep.subr.mxu0 0.0
        %6028 = vmatpush1.msra.mxu0 0.0
        %6029 = vmatprep.subr.mxu0 0.0
        %6030 = vmatpush1.msra.mxu0 0.0
        %6031 = vmatprep.subr.mxu0 0.0
        %6032 = vmatpush1.msra.mxu0 0.0
        %6033 = vmatprep.subr.mxu0 0.0
        %6034 = vmatpush1.msra.mxu0 0.0
        %6035 = vmatprep.subr.mxu0 0.0
        %6036 = vmatpush1.msra.mxu0 0.0
        %6037 = vmatprep.subr.mxu0 0.0
        %6038 = vmatpush1.msra.mxu0 0.0
        %6039 = vmatprep.subr.mxu0 0.0
        %6040 = vmatpush1.msra.mxu0 0.0
        %6041 = vmatprep.subr.mxu0 0.0
        %6042 = vmatpush1.msra.mxu0 0.0
        %6043 = vmatprep.mubr.f32.mxu0 0.0
        %6044 = vmatmul.mubr.f32.gmra.mrb[0].mxu0 %v5956
        %v6045 = vpop.f32.mrb[0].mxu0
        %v6046 = vadd.f32 0.0, %v6045
        %v6047 = vpop.f32.mrb[0].mxu0
        %6048 = vmatprep.mubr.f32.mxu0 0.0
        %6049 = vmatmul.mubr.f32.gmra.mrb[0].mxu0 %v5959
        %v6050 = vpop.f32.mrb[0].mxu0
        %v6051 = vadd.f32 0.0, %v6050
        %v6052 = vpop.f32.mrb[0].mxu0
        %6053 = vmatprep.mubr.f32.mxu0 0.0
        %6054 = vmatmul.mubr.f32.gmra.mrb[0].mxu0 %v5962
        %v6055 = vpop.f32.mrb[0].mxu0
        %v6056 = vadd.f32 0.0, %v6055
        %v6057 = vpop.f32.mrb[0].mxu0
        %6058 = vmatprep.mubr.f32.mxu0 0.0
        %6059 = vmatmul.mubr.f32.gmra.mrb[0].mxu0 %v5965
        %v6060 = vpop.f32.mrb[0].mxu0
        %v6061 = vadd.f32 0.0, %v6060
        %v6062 = vpop.f32.mrb[0].mxu0
        %6063 = vmatprep.mubr.f32.mxu0 0.0
        %6064 = vmatmul.mubr.f32.gmra.mrb[0].mxu0 %v5968
        %v6065 = vpop.f32.mrb[0].mxu0
        %v6066 = vadd.f32 0.0, %v6065
        %v6067 = vpop.f32.mrb[0].mxu0
        %6068 = vmatprep.mubr.f32.mxu0 0.0
        %6069 = vmatmul.mubr.f32.gmra.mrb[0].mxu0 %v5971
        %v6070 = vpop.f32.mrb[0].mxu0
        %v6071 = vadd.f32 0.0, %v6070
        %v6072 = vpop.f32.mrb[0].mxu0
        %6073 = vmatprep.mubr.f32.mxu0 0.0
        %6074 = vmatmul.mubr.f32.gmra.mrb[0].mxu0 %v5974
        %v6075 = vpop.f32.mrb[0].mxu0
        %v6076 = vadd.f32 0.0, %v6075
        %v6077 = vpop.f32.mrb[0].mxu0
        %6078 = vmatprep.mubr.f32.mxu0 0.0
        %6079 = vmatmul.mubr.f32.gmra.mrb[0].mxu0 %v5977
        %v6080 = vpop.f32.mrb[0].mxu0
        %v6081 = vadd.f32 0.0, %v6080
        %v6082 = vpop.f32.mrb[0].mxu0
        %6083 = vdwg.mxu0
        %v6085 = vsel %vm1129, %v5377, 0
        %v6088 = vsel %vm1129, %v5378, 0
        %v6091 = vsel %vm1129, %v5379, 0
        %v6094 = vsel %vm1129, %v5380, 0
        %v6097 = vsel %vm1129, %v5381, 0
        %v6100 = vsel %vm1129, %v5382, 0
        %v6103 = vsel %vm1129, %v5383, 0
        %v6106 = vsel %vm1129, %v5384, 0
        %6108 = vmatprep.subr.mxu0 0.0
        %6109 = vmatpush1.msra.mxu0 %v5566
        %6110 = vmatprep.subr.mxu0 0.0
        %6111 = vmatpush1.msra.mxu0 %v5570
        %6112 = vmatprep.subr.mxu0 0.0
        %6113 = vmatpush1.msra.mxu0 %v5574
        %6114 = vmatprep.subr.mxu0 0.0
        %6115 = vmatpush1.msra.mxu0 %v5578
        %6116 = vmatprep.subr.mxu0 0.0
        %6117 = vmatpush1.msra.mxu0 %v5718
        %6118 = vmatprep.subr.mxu0 0.0
        %6119 = vmatpush1.msra.mxu0 %v5722
        %6120 = vmatprep.subr.mxu0 0.0
        %6121 = vmatpush1.msra.mxu0 %v5726
        %6122 = vmatprep.subr.mxu0 0.0
        %6123 = vmatpush1.msra.mxu0 %v5730
        %6124 = vmatprep.subr.mxu0 0.0
        %6125 = vmatpush1.msra.mxu0 0.0
        %6126 = vmatprep.subr.mxu0 0.0
        %6127 = vmatpush1.msra.mxu0 0.0
        %6128 = vmatprep.subr.mxu0 0.0
        %6129 = vmatpush1.msra.mxu0 0.0
        %6130 = vmatprep.subr.mxu0 0.0
        %6131 = vmatpush1.msra.mxu0 0.0
        %6132 = vmatprep.subr.mxu0 0.0
        %6133 = vmatpush1.msra.mxu0 0.0
        %6134 = vmatprep.subr.mxu0 0.0
        %6135 = vmatpush1.msra.mxu0 0.0
        %6136 = vmatprep.subr.mxu0 0.0
        %6137 = vmatpush1.msra.mxu0 0.0
        %6138 = vmatprep.subr.mxu0 0.0
        %6139 = vmatpush1.msra.mxu0 0.0
        %6140 = vmatprep.subr.mxu0 0.0
        %6141 = vmatpush1.msra.mxu0 0.0
        %6142 = vmatprep.subr.mxu0 0.0
        %6143 = vmatpush1.msra.mxu0 0.0
        %6144 = vmatprep.subr.mxu0 0.0
        %6145 = vmatpush1.msra.mxu0 0.0
        %6146 = vmatprep.subr.mxu0 0.0
        %6147 = vmatpush1.msra.mxu0 0.0
        %6148 = vmatprep.subr.mxu0 0.0
        %6149 = vmatpush1.msra.mxu0 0.0
        %6150 = vmatprep.subr.mxu0 0.0
        %6151 = vmatpush1.msra.mxu0 0.0
        %6152 = vmatprep.subr.mxu0 0.0
        %6153 = vmatpush1.msra.mxu0 0.0
        %6154 = vmatprep.subr.mxu0 0.0
        %6155 = vmatpush1.msra.mxu0 0.0
        %6156 = vmatprep.subr.mxu0 0.0
        %6157 = vmatpush1.msra.mxu0 0.0
        %6158 = vmatprep.subr.mxu0 0.0
        %6159 = vmatpush1.msra.mxu0 0.0
        %6160 = vmatprep.subr.mxu0 0.0
        %6161 = vmatpush1.msra.mxu0 0.0
        %6162 = vmatprep.subr.mxu0 0.0
        %6163 = vmatpush1.msra.mxu0 0.0
        %6164 = vmatprep.subr.mxu0 0.0
        %6165 = vmatpush1.msra.mxu0 0.0
        %6166 = vmatprep.subr.mxu0 0.0
        %6167 = vmatpush1.msra.mxu0 0.0
        %6168 = vmatprep.subr.mxu0 0.0
        %6169 = vmatpush1.msra.mxu0 0.0
        %6170 = vmatprep.subr.mxu0 0.0
        %6171 = vmatpush1.msra.mxu0 0.0
        %6172 = vmatprep.mubr.f32.mxu0 0.0
        %6173 = vmatmul.mubr.f32.gmra.mrb[0].mxu0 %v6085
        %v6174 = vpop.f32.mrb[0].mxu0
        %v6175 = vadd.f32 0.0, %v6174
        %v6176 = vpop.f32.mrb[0].mxu0
        %6177 = vmatprep.mubr.f32.mxu0 0.0
        %6178 = vmatmul.mubr.f32.gmra.mrb[0].mxu0 %v6088
        %v6179 = vpop.f32.mrb[0].mxu0
        %v6180 = vadd.f32 0.0, %v6179
        %v6181 = vpop.f32.mrb[0].mxu0
        %6182 = vmatprep.mubr.f32.mxu0 0.0
        %6183 = vmatmul.mubr.f32.gmra.mrb[0].mxu0 %v6091
        %v6184 = vpop.f32.mrb[0].mxu0
        %v6185 = vadd.f32 0.0, %v6184
        %v6186 = vpop.f32.mrb[0].mxu0
        %6187 = vmatprep.mubr.f32.mxu0 0.0
        %6188 = vmatmul.mubr.f32.gmra.mrb[0].mxu0 %v6094
        %v6189 = vpop.f32.mrb[0].mxu0
        %v6190 = vadd.f32 0.0, %v6189
        %v6191 = vpop.f32.mrb[0].mxu0
        %6192 = vmatprep.mubr.f32.mxu0 0.0
        %6193 = vmatmul.mubr.f32.gmra.mrb[0].mxu0 %v6097
        %v6194 = vpop.f32.mrb[0].mxu0
        %v6195 = vadd.f32 0.0, %v6194
        %v6196 = vpop.f32.mrb[0].mxu0
        %6197 = vmatprep.mubr.f32.mxu0 0.0
        %6198 = vmatmul.mubr.f32.gmra.mrb[0].mxu0 %v6100
        %v6199 = vpop.f32.mrb[0].mxu0
        %v6200 = vadd.f32 0.0, %v6199
        %v6201 = vpop.f32.mrb[0].mxu0
        %6202 = vmatprep.mubr.f32.mxu0 0.0
        %6203 = vmatmul.mubr.f32.gmra.mrb[0].mxu0 %v6103
        %v6204 = vpop.f32.mrb[0].mxu0
        %v6205 = vadd.f32 0.0, %v6204
        %v6206 = vpop.f32.mrb[0].mxu0
        %6207 = vmatprep.mubr.f32.mxu0 0.0
        %6208 = vmatmul.mubr.f32.gmra.mrb[0].mxu0 %v6106
        %v6209 = vpop.f32.mrb[0].mxu0
        %v6210 = vadd.f32 0.0, %v6209
        %v6211 = vpop.f32.mrb[0].mxu0
        %6212 = vdwg.mxu0
        %v6214 = vsel %vm1129, %v5385, 0
        %v6217 = vsel %vm1129, %v5386, 0
        %v6220 = vsel %vm1129, %v5387, 0
        %v6223 = vsel %vm1129, %v5388, 0
        %v6226 = vsel %vm1129, %v5389, 0
        %v6229 = vsel %vm1129, %v5390, 0
        %v6232 = vsel %vm1129, %v5391, 0
        %v6235 = vsel %vm1129, %v5392, 0
        %6237 = vmatprep.subr.mxu0 0.0
        %6238 = vmatpush1.msra.mxu0 %v5585
        %6239 = vmatprep.subr.mxu0 0.0
        %6240 = vmatpush1.msra.mxu0 %v5589
        %6241 = vmatprep.subr.mxu0 0.0
        %6242 = vmatpush1.msra.mxu0 %v5593
        %6243 = vmatprep.subr.mxu0 0.0
        %6244 = vmatpush1.msra.mxu0 %v5597
        %6245 = vmatprep.subr.mxu0 0.0
        %6246 = vmatpush1.msra.mxu0 %v5737
        %6247 = vmatprep.subr.mxu0 0.0
        %6248 = vmatpush1.msra.mxu0 %v5741
        %6249 = vmatprep.subr.mxu0 0.0
        %6250 = vmatpush1.msra.mxu0 %v5745
        %6251 = vmatprep.subr.mxu0 0.0
        %6252 = vmatpush1.msra.mxu0 %v5749
        %6253 = vmatprep.subr.mxu0 0.0
        %6254 = vmatpush1.msra.mxu0 0.0
        %6255 = vmatprep.subr.mxu0 0.0
        %6256 = vmatpush1.msra.mxu0 0.0
        %6257 = vmatprep.subr.mxu0 0.0
        %6258 = vmatpush1.msra.mxu0 0.0
        %6259 = vmatprep.subr.mxu0 0.0
        %6260 = vmatpush1.msra.mxu0 0.0
        %6261 = vmatprep.subr.mxu0 0.0
        %6262 = vmatpush1.msra.mxu0 0.0
        %6263 = vmatprep.subr.mxu0 0.0
        %6264 = vmatpush1.msra.mxu0 0.0
        %6265 = vmatprep.subr.mxu0 0.0
        %6266 = vmatpush1.msra.mxu0 0.0
        %6267 = vmatprep.subr.mxu0 0.0
        %6268 = vmatpush1.msra.mxu0 0.0
        %6269 = vmatprep.subr.mxu0 0.0
        %6270 = vmatpush1.msra.mxu0 0.0
        %6271 = vmatprep.subr.mxu0 0.0
        %6272 = vmatpush1.msra.mxu0 0.0
        %6273 = vmatprep.subr.mxu0 0.0
        %6274 = vmatpush1.msra.mxu0 0.0
        %6275 = vmatprep.subr.mxu0 0.0
        %6276 = vmatpush1.msra.mxu0 0.0
        %6277 = vmatprep.subr.mxu0 0.0
        %6278 = vmatpush1.msra.mxu0 0.0
        %6279 = vmatprep.subr.mxu0 0.0
        %6280 = vmatpush1.msra.mxu0 0.0
        %6281 = vmatprep.subr.mxu0 0.0
        %6282 = vmatpush1.msra.mxu0 0.0
        %6283 = vmatprep.subr.mxu0 0.0
        %6284 = vmatpush1.msra.mxu0 0.0
        %6285 = vmatprep.subr.mxu0 0.0
        %6286 = vmatpush1.msra.mxu0 0.0
        %6287 = vmatprep.subr.mxu0 0.0
        %6288 = vmatpush1.msra.mxu0 0.0
        %6289 = vmatprep.subr.mxu0 0.0
        %6290 = vmatpush1.msra.mxu0 0.0
        %6291 = vmatprep.subr.mxu0 0.0
        %6292 = vmatpush1.msra.mxu0 0.0
        %6293 = vmatprep.subr.mxu0 0.0
        %6294 = vmatpush1.msra.mxu0 0.0
        %6295 = vmatprep.subr.mxu0 0.0
        %6296 = vmatpush1.msra.mxu0 0.0
        %6297 = vmatprep.subr.mxu0 0.0
        %6298 = vmatpush1.msra.mxu0 0.0
        %6299 = vmatprep.subr.mxu0 0.0
        %6300 = vmatpush1.msra.mxu0 0.0
        %6301 = vmatprep.mubr.f32.mxu0 0.0
        %6302 = vmatmul.mubr.f32.gmra.mrb[0].mxu0 %v6214
        %v6303 = vpop.f32.mrb[0].mxu0
        %v6304 = vadd.f32 0.0, %v6303
        %v6305 = vpop.f32.mrb[0].mxu0
        %6306 = vmatprep.mubr.f32.mxu0 0.0
        %6307 = vmatmul.mubr.f32.gmra.mrb[0].mxu0 %v6217
        %v6308 = vpop.f32.mrb[0].mxu0
        %v6309 = vadd.f32 0.0, %v6308
        %v6310 = vpop.f32.mrb[0].mxu0
        %6311 = vmatprep.mubr.f32.mxu0 0.0
        %6312 = vmatmul.mubr.f32.gmra.mrb[0].mxu0 %v6220
        %v6313 = vpop.f32.mrb[0].mxu0
        %v6314 = vadd.f32 0.0, %v6313
        %v6315 = vpop.f32.mrb[0].mxu0
        %6316 = vmatprep.mubr.f32.mxu0 0.0
        %6317 = vmatmul.mubr.f32.gmra.mrb[0].mxu0 %v6223
        %v6318 = vpop.f32.mrb[0].mxu0
        %v6319 = vadd.f32 0.0, %v6318
        %v6320 = vpop.f32.mrb[0].mxu0
        %6321 = vmatprep.mubr.f32.mxu0 0.0
        %6322 = vmatmul.mubr.f32.gmra.mrb[0].mxu0 %v6226
        %v6323 = vpop.f32.mrb[0].mxu0
        %v6324 = vadd.f32 0.0, %v6323
        %v6325 = vpop.f32.mrb[0].mxu0
        %6326 = vmatprep.mubr.f32.mxu0 0.0
        %6327 = vmatmul.mubr.f32.gmra.mrb[0].mxu0 %v6229
        %v6328 = vpop.f32.mrb[0].mxu0
        %v6329 = vadd.f32 0.0, %v6328
        %v6330 = vpop.f32.mrb[0].mxu0
        %6331 = vmatprep.mubr.f32.mxu0 0.0
        %6332 = vmatmul.mubr.f32.gmra.mrb[0].mxu0 %v6232
        %v6333 = vpop.f32.mrb[0].mxu0
        %v6334 = vadd.f32 0.0, %v6333
        %v6335 = vpop.f32.mrb[0].mxu0
        %6336 = vmatprep.mubr.f32.mxu0 0.0
        %6337 = vmatmul.mubr.f32.gmra.mrb[0].mxu0 %v6235
        %v6338 = vpop.f32.mrb[0].mxu0
        %v6339 = vadd.f32 0.0, %v6338
        %v6340 = vpop.f32.mrb[0].mxu0
        %6341 = vdwg.mxu0
        %v6343 = vsel %vm1129, %v5393, 0
        %v6346 = vsel %vm1129, %v5394, 0
        %v6349 = vsel %vm1129, %v5395, 0
        %v6352 = vsel %vm1129, %v5396, 0
        %v6355 = vsel %vm1129, %v5397, 0
        %v6358 = vsel %vm1129, %v5398, 0
        %v6361 = vsel %vm1129, %v5399, 0
        %v6364 = vsel %vm1129, %v5400, 0
        %6366 = vmatprep.subr.mxu0 0.0
        %6367 = vmatpush1.msra.mxu0 %v5604
        %6368 = vmatprep.subr.mxu0 0.0
        %6369 = vmatpush1.msra.mxu0 %v5608
        %6370 = vmatprep.subr.mxu0 0.0
        %6371 = vmatpush1.msra.mxu0 %v5612
        %6372 = vmatprep.subr.mxu0 0.0
        %6373 = vmatpush1.msra.mxu0 %v5616
        %6374 = vmatprep.subr.mxu0 0.0
        %6375 = vmatpush1.msra.mxu0 %v5756
        %6376 = vmatprep.subr.mxu0 0.0
        %6377 = vmatpush1.msra.mxu0 %v5760
        %6378 = vmatprep.subr.mxu0 0.0
        %6379 = vmatpush1.msra.mxu0 %v5764
        %6380 = vmatprep.subr.mxu0 0.0
        %6381 = vmatpush1.msra.mxu0 %v5768
        %6382 = vmatprep.subr.mxu0 0.0
        %6383 = vmatpush1.msra.mxu0 0.0
        %6384 = vmatprep.subr.mxu0 0.0
        %6385 = vmatpush1.msra.mxu0 0.0
        %6386 = vmatprep.subr.mxu0 0.0
        %6387 = vmatpush1.msra.mxu0 0.0
        %6388 = vmatprep.subr.mxu0 0.0
        %6389 = vmatpush1.msra.mxu0 0.0
        %6390 = vmatprep.subr.mxu0 0.0
        %6391 = vmatpush1.msra.mxu0 0.0
        %6392 = vmatprep.subr.mxu0 0.0
        %6393 = vmatpush1.msra.mxu0 0.0
        %6394 = vmatprep.subr.mxu0 0.0
        %6395 = vmatpush1.msra.mxu0 0.0
        %6396 = vmatprep.subr.mxu0 0.0
        %6397 = vmatpush1.msra.mxu0 0.0
        %6398 = vmatprep.subr.mxu0 0.0
        %6399 = vmatpush1.msra.mxu0 0.0
        %6400 = vmatprep.subr.mxu0 0.0
        %6401 = vmatpush1.msra.mxu0 0.0
        %6402 = vmatprep.subr.mxu0 0.0
        %6403 = vmatpush1.msra.mxu0 0.0
        %6404 = vmatprep.subr.mxu0 0.0
        %6405 = vmatpush1.msra.mxu0 0.0
        %6406 = vmatprep.subr.mxu0 0.0
        %6407 = vmatpush1.msra.mxu0 0.0
        %6408 = vmatprep.subr.mxu0 0.0
        %6409 = vmatpush1.msra.mxu0 0.0
        %6410 = vmatprep.subr.mxu0 0.0
        %6411 = vmatpush1.msra.mxu0 0.0
        %6412 = vmatprep.subr.mxu0 0.0
        %6413 = vmatpush1.msra.mxu0 0.0
        %6414 = vmatprep.subr.mxu0 0.0
        %6415 = vmatpush1.msra.mxu0 0.0
        %6416 = vmatprep.subr.mxu0 0.0
        %6417 = vmatpush1.msra.mxu0 0.0
        %6418 = vmatprep.subr.mxu0 0.0
        %6419 = vmatpush1.msra.mxu0 0.0
        %6420 = vmatprep.subr.mxu0 0.0
        %6421 = vmatpush1.msra.mxu0 0.0
        %6422 = vmatprep.subr.mxu0 0.0
        %6423 = vmatpush1.msra.mxu0 0.0
        %6424 = vmatprep.subr.mxu0 0.0
        %6425 = vmatpush1.msra.mxu0 0.0
        %6426 = vmatprep.subr.mxu0 0.0
        %6427 = vmatpush1.msra.mxu0 0.0
        %6428 = vmatprep.subr.mxu0 0.0
        %6429 = vmatpush1.msra.mxu0 0.0
        %6430 = vmatprep.mubr.f32.mxu0 0.0
        %6431 = vmatmul.mubr.f32.gmra.mrb[0].mxu0 %v6343
        %v6432 = vpop.f32.mrb[0].mxu0
        %v6433 = vadd.f32 0.0, %v6432
        %v6434 = vpop.f32.mrb[0].mxu0
        %6435 = vmatprep.mubr.f32.mxu0 0.0
        %6436 = vmatmul.mubr.f32.gmra.mrb[0].mxu0 %v6346
        %v6437 = vpop.f32.mrb[0].mxu0
        %v6438 = vadd.f32 0.0, %v6437
        %v6439 = vpop.f32.mrb[0].mxu0
        %6440 = vmatprep.mubr.f32.mxu0 0.0
        %6441 = vmatmul.mubr.f32.gmra.mrb[0].mxu0 %v6349
        %v6442 = vpop.f32.mrb[0].mxu0
        %v6443 = vadd.f32 0.0, %v6442
        %v6444 = vpop.f32.mrb[0].mxu0
        %6445 = vmatprep.mubr.f32.mxu0 0.0
        %6446 = vmatmul.mubr.f32.gmra.mrb[0].mxu0 %v6352
        %v6447 = vpop.f32.mrb[0].mxu0
        %v6448 = vadd.f32 0.0, %v6447
        %v6449 = vpop.f32.mrb[0].mxu0
        %6450 = vmatprep.mubr.f32.mxu0 0.0
        %6451 = vmatmul.mubr.f32.gmra.mrb[0].mxu0 %v6355
        %v6452 = vpop.f32.mrb[0].mxu0
        %v6453 = vadd.f32 0.0, %v6452
        %v6454 = vpop.f32.mrb[0].mxu0
        %6455 = vmatprep.mubr.f32.mxu0 0.0
        %6456 = vmatmul.mubr.f32.gmra.mrb[0].mxu0 %v6358
        %v6457 = vpop.f32.mrb[0].mxu0
        %v6458 = vadd.f32 0.0, %v6457
        %v6459 = vpop.f32.mrb[0].mxu0
        %6460 = vmatprep.mubr.f32.mxu0 0.0
        %6461 = vmatmul.mubr.f32.gmra.mrb[0].mxu0 %v6361
        %v6462 = vpop.f32.mrb[0].mxu0
        %v6463 = vadd.f32 0.0, %v6462
        %v6464 = vpop.f32.mrb[0].mxu0
        %6465 = vmatprep.mubr.f32.mxu0 0.0
        %6466 = vmatmul.mubr.f32.gmra.mrb[0].mxu0 %v6364
        %v6467 = vpop.f32.mrb[0].mxu0
        %v6468 = vadd.f32 0.0, %v6467
        %v6469 = vpop.f32.mrb[0].mxu0
        %6470 = vdwg.mxu0
        %v6472 = vsel %vm1129, %v5401, 0
        %v6475 = vsel %vm1129, %v5402, 0
        %v6478 = vsel %vm1129, %v5403, 0
        %v6481 = vsel %vm1129, %v5404, 0
        %v6484 = vsel %vm1129, %v5405, 0
        %v6487 = vsel %vm1129, %v5406, 0
        %v6490 = vsel %vm1129, %v5407, 0
        %v6493 = vsel %vm1129, %v5408, 0
        %6495 = vmatprep.subr.mxu0 0.0
        %6496 = vmatpush1.msra.mxu0 %v5623
        %6497 = vmatprep.subr.mxu0 0.0
        %6498 = vmatpush1.msra.mxu0 %v5627
        %6499 = vmatprep.subr.mxu0 0.0
        %6500 = vmatpush1.msra.mxu0 %v5631
        %6501 = vmatprep.subr.mxu0 0.0
        %6502 = vmatpush1.msra.mxu0 %v5635
        %6503 = vmatprep.subr.mxu0 0.0
        %6504 = vmatpush1.msra.mxu0 %v5775
        %6505 = vmatprep.subr.mxu0 0.0
        %6506 = vmatpush1.msra.mxu0 %v5779
        %6507 = vmatprep.subr.mxu0 0.0
        %6508 = vmatpush1.msra.mxu0 %v5783
        %6509 = vmatprep.subr.mxu0 0.0
        %6510 = vmatpush1.msra.mxu0 %v5787
        %6511 = vmatprep.subr.mxu0 0.0
        %6512 = vmatpush1.msra.mxu0 0.0
        %6513 = vmatprep.subr.mxu0 0.0
        %6514 = vmatpush1.msra.mxu0 0.0
        %6515 = vmatprep.subr.mxu0 0.0
        %6516 = vmatpush1.msra.mxu0 0.0
        %6517 = vmatprep.subr.mxu0 0.0
        %6518 = vmatpush1.msra.mxu0 0.0
        %6519 = vmatprep.subr.mxu0 0.0
        %6520 = vmatpush1.msra.mxu0 0.0
        %6521 = vmatprep.subr.mxu0 0.0
        %6522 = vmatpush1.msra.mxu0 0.0
        %6523 = vmatprep.subr.mxu0 0.0
        %6524 = vmatpush1.msra.mxu0 0.0
        %6525 = vmatprep.subr.mxu0 0.0
        %6526 = vmatpush1.msra.mxu0 0.0
        %6527 = vmatprep.subr.mxu0 0.0
        %6528 = vmatpush1.msra.mxu0 0.0
        %6529 = vmatprep.subr.mxu0 0.0
        %6530 = vmatpush1.msra.mxu0 0.0
        %6531 = vmatprep.subr.mxu0 0.0
        %6532 = vmatpush1.msra.mxu0 0.0
        %6533 = vmatprep.subr.mxu0 0.0
        %6534 = vmatpush1.msra.mxu0 0.0
        %6535 = vmatprep.subr.mxu0 0.0
        %6536 = vmatpush1.msra.mxu0 0.0
        %6537 = vmatprep.subr.mxu0 0.0
        %6538 = vmatpush1.msra.mxu0 0.0
        %6539 = vmatprep.subr.mxu0 0.0
        %6540 = vmatpush1.msra.mxu0 0.0
        %6541 = vmatprep.subr.mxu0 0.0
        %6542 = vmatpush1.msra.mxu0 0.0
        %6543 = vmatprep.subr.mxu0 0.0
        %6544 = vmatpush1.msra.mxu0 0.0
        %6545 = vmatprep.subr.mxu0 0.0
        %6546 = vmatpush1.msra.mxu0 0.0
        %6547 = vmatprep.subr.mxu0 0.0
        %6548 = vmatpush1.msra.mxu0 0.0
        %6549 = vmatprep.subr.mxu0 0.0
        %6550 = vmatpush1.msra.mxu0 0.0
        %6551 = vmatprep.subr.mxu0 0.0
        %6552 = vmatpush1.msra.mxu0 0.0
        %6553 = vmatprep.subr.mxu0 0.0
        %6554 = vmatpush1.msra.mxu0 0.0
        %6555 = vmatprep.subr.mxu0 0.0
        %6556 = vmatpush1.msra.mxu0 0.0
        %6557 = vmatprep.subr.mxu0 0.0
        %6558 = vmatpush1.msra.mxu0 0.0
        %6559 = vmatprep.mubr.f32.mxu0 0.0
        %6560 = vmatmul.mubr.f32.gmra.mrb[0].mxu0 %v6472
        %v6561 = vpop.f32.mrb[0].mxu0
        %v6562 = vadd.f32 0.0, %v6561
        %v6563 = vpop.f32.mrb[0].mxu0
        %6564 = vmatprep.mubr.f32.mxu0 0.0
        %6565 = vmatmul.mubr.f32.gmra.mrb[0].mxu0 %v6475
        %v6566 = vpop.f32.mrb[0].mxu0
        %v6567 = vadd.f32 0.0, %v6566
        %v6568 = vpop.f32.mrb[0].mxu0
        %6569 = vmatprep.mubr.f32.mxu0 0.0
        %6570 = vmatmul.mubr.f32.gmra.mrb[0].mxu0 %v6478
        %v6571 = vpop.f32.mrb[0].mxu0
        %v6572 = vadd.f32 0.0, %v6571
        %v6573 = vpop.f32.mrb[0].mxu0
        %6574 = vmatprep.mubr.f32.mxu0 0.0
        %6575 = vmatmul.mubr.f32.gmra.mrb[0].mxu0 %v6481
        %v6576 = vpop.f32.mrb[0].mxu0
        %v6577 = vadd.f32 0.0, %v6576
        %v6578 = vpop.f32.mrb[0].mxu0
        %6579 = vmatprep.mubr.f32.mxu0 0.0
        %6580 = vmatmul.mubr.f32.gmra.mrb[0].mxu0 %v6484
        %v6581 = vpop.f32.mrb[0].mxu0
        %v6582 = vadd.f32 0.0, %v6581
        %v6583 = vpop.f32.mrb[0].mxu0
        %6584 = vmatprep.mubr.f32.mxu0 0.0
        %6585 = vmatmul.mubr.f32.gmra.mrb[0].mxu0 %v6487
        %v6586 = vpop.f32.mrb[0].mxu0
        %v6587 = vadd.f32 0.0, %v6586
        %v6588 = vpop.f32.mrb[0].mxu0
        %6589 = vmatprep.mubr.f32.mxu0 0.0
        %6590 = vmatmul.mubr.f32.gmra.mrb[0].mxu0 %v6490
        %v6591 = vpop.f32.mrb[0].mxu0
        %v6592 = vadd.f32 0.0, %v6591
        %v6593 = vpop.f32.mrb[0].mxu0
        %6594 = vmatprep.mubr.f32.mxu0 0.0
        %6595 = vmatmul.mubr.f32.gmra.mrb[0].mxu0 %v6493
        %v6596 = vpop.f32.mrb[0].mxu0
        %v6597 = vadd.f32 0.0, %v6596
        %v6598 = vpop.f32.mrb[0].mxu0
        %6599 = vdwg.mxu0
        %v6601 = vsel %vm1129, %v5409, 0
        %v6604 = vsel %vm1129, %v5410, 0
        %v6607 = vsel %vm1129, %v5411, 0
        %v6610 = vsel %vm1129, %v5412, 0
        %v6613 = vsel %vm1129, %v5413, 0
        %v6616 = vsel %vm1129, %v5414, 0
        %v6619 = vsel %vm1129, %v5415, 0
        %v6622 = vsel %vm1129, %v5416, 0
        %6624 = vmatprep.subr.mxu0 0.0
        %6625 = vmatpush1.msra.mxu0 %v5642
        %6626 = vmatprep.subr.mxu0 0.0
        %6627 = vmatpush1.msra.mxu0 %v5646
        %6628 = vmatprep.subr.mxu0 0.0
        %6629 = vmatpush1.msra.mxu0 %v5650
        %6630 = vmatprep.subr.mxu0 0.0
        %6631 = vmatpush1.msra.mxu0 %v5654
        %6632 = vmatprep.subr.mxu0 0.0
        %6633 = vmatpush1.msra.mxu0 %v5794
        %6634 = vmatprep.subr.mxu0 0.0
        %6635 = vmatpush1.msra.mxu0 %v5798
        %6636 = vmatprep.subr.mxu0 0.0
        %6637 = vmatpush1.msra.mxu0 %v5802
        %6638 = vmatprep.subr.mxu0 0.0
        %6639 = vmatpush1.msra.mxu0 %v5806
        %6640 = vmatprep.subr.mxu0 0.0
        %6641 = vmatpush1.msra.mxu0 0.0
        %6642 = vmatprep.subr.mxu0 0.0
        %6643 = vmatpush1.msra.mxu0 0.0
        %6644 = vmatprep.subr.mxu0 0.0
        %6645 = vmatpush1.msra.mxu0 0.0
        %6646 = vmatprep.subr.mxu0 0.0
        %6647 = vmatpush1.msra.mxu0 0.0
        %6648 = vmatprep.subr.mxu0 0.0
        %6649 = vmatpush1.msra.mxu0 0.0
        %6650 = vmatprep.subr.mxu0 0.0
        %6651 = vmatpush1.msra.mxu0 0.0
        %6652 = vmatprep.subr.mxu0 0.0
        %6653 = vmatpush1.msra.mxu0 0.0
        %6654 = vmatprep.subr.mxu0 0.0
        %6655 = vmatpush1.msra.mxu0 0.0
        %6656 = vmatprep.subr.mxu0 0.0
        %6657 = vmatpush1.msra.mxu0 0.0
        %6658 = vmatprep.subr.mxu0 0.0
        %6659 = vmatpush1.msra.mxu0 0.0
        %6660 = vmatprep.subr.mxu0 0.0
        %6661 = vmatpush1.msra.mxu0 0.0
        %6662 = vmatprep.subr.mxu0 0.0
        %6663 = vmatpush1.msra.mxu0 0.0
        %6664 = vmatprep.subr.mxu0 0.0
        %6665 = vmatpush1.msra.mxu0 0.0
        %6666 = vmatprep.subr.mxu0 0.0
        %6667 = vmatpush1.msra.mxu0 0.0
        %6668 = vmatprep.subr.mxu0 0.0
        %6669 = vmatpush1.msra.mxu0 0.0
        %6670 = vmatprep.subr.mxu0 0.0
        %6671 = vmatpush1.msra.mxu0 0.0
        %6672 = vmatprep.subr.mxu0 0.0
        %6673 = vmatpush1.msra.mxu0 0.0
        %6674 = vmatprep.subr.mxu0 0.0
        %6675 = vmatpush1.msra.mxu0 0.0
        %6676 = vmatprep.subr.mxu0 0.0
        %6677 = vmatpush1.msra.mxu0 0.0
        %6678 = vmatprep.subr.mxu0 0.0
        %6679 = vmatpush1.msra.mxu0 0.0
        %6680 = vmatprep.subr.mxu0 0.0
        %6681 = vmatpush1.msra.mxu0 0.0
        %6682 = vmatprep.subr.mxu0 0.0
        %6683 = vmatpush1.msra.mxu0 0.0
        %6684 = vmatprep.subr.mxu0 0.0
        %6685 = vmatpush1.msra.mxu0 0.0
        %6686 = vmatprep.subr.mxu0 0.0
        %6687 = vmatpush1.msra.mxu0 0.0
        %6688 = vmatprep.mubr.f32.mxu0 0.0
        %6689 = vmatmul.mubr.f32.gmra.mrb[0].mxu0 %v6601
        %v6690 = vpop.f32.mrb[0].mxu0
        %v6691 = vadd.f32 0.0, %v6690
        %v6692 = vpop.f32.mrb[0].mxu0
        %6693 = vmatprep.mubr.f32.mxu0 0.0
        %6694 = vmatmul.mubr.f32.gmra.mrb[0].mxu0 %v6604
        %v6695 = vpop.f32.mrb[0].mxu0
        %v6696 = vadd.f32 0.0, %v6695
        %v6697 = vpop.f32.mrb[0].mxu0
        %6698 = vmatprep.mubr.f32.mxu0 0.0
        %6699 = vmatmul.mubr.f32.gmra.mrb[0].mxu0 %v6607
        %v6700 = vpop.f32.mrb[0].mxu0
        %v6701 = vadd.f32 0.0, %v6700
        %v6702 = vpop.f32.mrb[0].mxu0
        %6703 = vmatprep.mubr.f32.mxu0 0.0
        %6704 = vmatmul.mubr.f32.gmra.mrb[0].mxu0 %v6610
        %v6705 = vpop.f32.mrb[0].mxu0
        %v6706 = vadd.f32 0.0, %v6705
        %v6707 = vpop.f32.mrb[0].mxu0
        %6708 = vmatprep.mubr.f32.mxu0 0.0
        %6709 = vmatmul.mubr.f32.gmra.mrb[0].mxu0 %v6613
        %v6710 = vpop.f32.mrb[0].mxu0
        %v6711 = vadd.f32 0.0, %v6710
        %v6712 = vpop.f32.mrb[0].mxu0
        %6713 = vmatprep.mubr.f32.mxu0 0.0
        %6714 = vmatmul.mubr.f32.gmra.mrb[0].mxu0 %v6616
        %v6715 = vpop.f32.mrb[0].mxu0
        %v6716 = vadd.f32 0.0, %v6715
        %v6717 = vpop.f32.mrb[0].mxu0
        %6718 = vmatprep.mubr.f32.mxu0 0.0
        %6719 = vmatmul.mubr.f32.gmra.mrb[0].mxu0 %v6619
        %v6720 = vpop.f32.mrb[0].mxu0
        %v6721 = vadd.f32 0.0, %v6720
        %v6722 = vpop.f32.mrb[0].mxu0
        %6723 = vmatprep.mubr.f32.mxu0 0.0
        %6724 = vmatmul.mubr.f32.gmra.mrb[0].mxu0 %v6622
        %v6725 = vpop.f32.mrb[0].mxu0
        %v6726 = vadd.f32 0.0, %v6725
        %v6727 = vpop.f32.mrb[0].mxu0
        %6728 = vdwg.mxu0
        %v6730 = vsel %vm1129, %v5417, 0
        %v6733 = vsel %vm1129, %v5418, 0
        %v6736 = vsel %vm1129, %v5419, 0
        %v6739 = vsel %vm1129, %v5420, 0
        %v6742 = vsel %vm1129, %v5421, 0
        %v6745 = vsel %vm1129, %v5422, 0
        %v6748 = vsel %vm1129, %v5423, 0
        %v6751 = vsel %vm1129, %v5424, 0
        %6753 = vmatprep.subr.mxu0 0.0
        %6754 = vmatpush1.msra.mxu0 %v5661
        %6755 = vmatprep.subr.mxu0 0.0
        %6756 = vmatpush1.msra.mxu0 %v5665
        %6757 = vmatprep.subr.mxu0 0.0
        %6758 = vmatpush1.msra.mxu0 %v5669
        %6759 = vmatprep.subr.mxu0 0.0
        %6760 = vmatpush1.msra.mxu0 %v5673
        %6761 = vmatprep.subr.mxu0 0.0
        %6762 = vmatpush1.msra.mxu0 %v5813
        %6763 = vmatprep.subr.mxu0 0.0
        %6764 = vmatpush1.msra.mxu0 %v5817
        %6765 = vmatprep.subr.mxu0 0.0
        %6766 = vmatpush1.msra.mxu0 %v5821
        %6767 = vmatprep.subr.mxu0 0.0
        %6768 = vmatpush1.msra.mxu0 %v5825
        %6769 = vmatprep.subr.mxu0 0.0
        %6770 = vmatpush1.msra.mxu0 0.0
        %6771 = vmatprep.subr.mxu0 0.0
        %6772 = vmatpush1.msra.mxu0 0.0
        %6773 = vmatprep.subr.mxu0 0.0
        %6774 = vmatpush1.msra.mxu0 0.0
        %6775 = vmatprep.subr.mxu0 0.0
        %6776 = vmatpush1.msra.mxu0 0.0
        %6777 = vmatprep.subr.mxu0 0.0
        %6778 = vmatpush1.msra.mxu0 0.0
        %6779 = vmatprep.subr.mxu0 0.0
        %6780 = vmatpush1.msra.mxu0 0.0
        %6781 = vmatprep.subr.mxu0 0.0
        %6782 = vmatpush1.msra.mxu0 0.0
        %6783 = vmatprep.subr.mxu0 0.0
        %6784 = vmatpush1.msra.mxu0 0.0
        %6785 = vmatprep.subr.mxu0 0.0
        %6786 = vmatpush1.msra.mxu0 0.0
        %6787 = vmatprep.subr.mxu0 0.0
        %6788 = vmatpush1.msra.mxu0 0.0
        %6789 = vmatprep.subr.mxu0 0.0
        %6790 = vmatpush1.msra.mxu0 0.0
        %6791 = vmatprep.subr.mxu0 0.0
        %6792 = vmatpush1.msra.mxu0 0.0
        %6793 = vmatprep.subr.mxu0 0.0
        %6794 = vmatpush1.msra.mxu0 0.0
        %6795 = vmatprep.subr.mxu0 0.0
        %6796 = vmatpush1.msra.mxu0 0.0
        %6797 = vmatprep.subr.mxu0 0.0
        %6798 = vmatpush1.msra.mxu0 0.0
        %6799 = vmatprep.subr.mxu0 0.0
        %6800 = vmatpush1.msra.mxu0 0.0
        %6801 = vmatprep.subr.mxu0 0.0
        %6802 = vmatpush1.msra.mxu0 0.0
        %6803 = vmatprep.subr.mxu0 0.0
        %6804 = vmatpush1.msra.mxu0 0.0
        %6805 = vmatprep.subr.mxu0 0.0
        %6806 = vmatpush1.msra.mxu0 0.0
        %6807 = vmatprep.subr.mxu0 0.0
        %6808 = vmatpush1.msra.mxu0 0.0
        %6809 = vmatprep.subr.mxu0 0.0
        %6810 = vmatpush1.msra.mxu0 0.0
        %6811 = vmatprep.subr.mxu0 0.0
        %6812 = vmatpush1.msra.mxu0 0.0
        %6813 = vmatprep.subr.mxu0 0.0
        %6814 = vmatpush1.msra.mxu0 0.0
        %6815 = vmatprep.subr.mxu0 0.0
        %6816 = vmatpush1.msra.mxu0 0.0
        %6817 = vmatprep.mubr.f32.mxu0 0.0
        %6818 = vmatmul.mubr.f32.gmra.mrb[0].mxu0 %v6730
        %v6819 = vpop.f32.mrb[0].mxu0
        %v6820 = vadd.f32 0.0, %v6819
        %v6821 = vpop.f32.mrb[0].mxu0
        %6822 = vmatprep.mubr.f32.mxu0 0.0
        %6823 = vmatmul.mubr.f32.gmra.mrb[0].mxu0 %v6733
        %v6824 = vpop.f32.mrb[0].mxu0
        %v6825 = vadd.f32 0.0, %v6824
        %v6826 = vpop.f32.mrb[0].mxu0
        %6827 = vmatprep.mubr.f32.mxu0 0.0
        %6828 = vmatmul.mubr.f32.gmra.mrb[0].mxu0 %v6736
        %v6829 = vpop.f32.mrb[0].mxu0
        %v6830 = vadd.f32 0.0, %v6829
        %v6831 = vpop.f32.mrb[0].mxu0
        %6832 = vmatprep.mubr.f32.mxu0 0.0
        %6833 = vmatmul.mubr.f32.gmra.mrb[0].mxu0 %v6739
        %v6834 = vpop.f32.mrb[0].mxu0
        %v6835 = vadd.f32 0.0, %v6834
        %v6836 = vpop.f32.mrb[0].mxu0
        %6837 = vmatprep.mubr.f32.mxu0 0.0
        %6838 = vmatmul.mubr.f32.gmra.mrb[0].mxu0 %v6742
        %v6839 = vpop.f32.mrb[0].mxu0
        %v6840 = vadd.f32 0.0, %v6839
        %v6841 = vpop.f32.mrb[0].mxu0
        %6842 = vmatprep.mubr.f32.mxu0 0.0
        %6843 = vmatmul.mubr.f32.gmra.mrb[0].mxu0 %v6745
        %v6844 = vpop.f32.mrb[0].mxu0
        %v6845 = vadd.f32 0.0, %v6844
        %v6846 = vpop.f32.mrb[0].mxu0
        %6847 = vmatprep.mubr.f32.mxu0 0.0
        %6848 = vmatmul.mubr.f32.gmra.mrb[0].mxu0 %v6748
        %v6849 = vpop.f32.mrb[0].mxu0
        %v6850 = vadd.f32 0.0, %v6849
        %v6851 = vpop.f32.mrb[0].mxu0
        %6852 = vmatprep.mubr.f32.mxu0 0.0
        %6853 = vmatmul.mubr.f32.gmra.mrb[0].mxu0 %v6751
        %v6854 = vpop.f32.mrb[0].mxu0
        %v6855 = vadd.f32 0.0, %v6854
        %v6856 = vpop.f32.mrb[0].mxu0
        %6857 = vdwg.mxu0
        %6922 = vset.pattern.permute.xlu0 0
        %6923 = vperm.xlu0 %6922, %v5917
        %v6924 = vpop.permute.xlu0 %6923
        %6925 = vset.pattern.permute.xlu0 0
        %6926 = vperm.xlu0 %6925, %v5922
        %v6927 = vpop.permute.xlu0 %6926
        %6928 = vset.pattern.permute.xlu0 0
        %6929 = vperm.xlu0 %6928, %v5927
        %v6930 = vpop.permute.xlu0 %6929
        %6931 = vset.pattern.permute.xlu0 0
        %6932 = vperm.xlu0 %6931, %v5932
        %v6933 = vpop.permute.xlu0 %6932
        %6934 = vset.pattern.permute.xlu0 0
        %6935 = vperm.xlu0 %6934, %v5937
        %v6936 = vpop.permute.xlu0 %6935
        %6937 = vset.pattern.permute.xlu0 0
        %6938 = vperm.xlu0 %6937, %v5942
        %v6939 = vpop.permute.xlu0 %6938
        %6940 = vset.pattern.permute.xlu0 0
        %6941 = vperm.xlu0 %6940, %v5947
        %v6942 = vpop.permute.xlu0 %6941
        %6943 = vset.pattern.permute.xlu0 0
        %6944 = vperm.xlu0 %6943, %v5952
        %v6945 = vpop.permute.xlu0 %6944
        %6946 = vset.pattern.permute.xlu0 0
        %6947 = vperm.xlu0 %6946, %v6046
        %v6948 = vpop.permute.xlu0 %6947
        %6949 = vset.pattern.permute.xlu0 0
        %6950 = vperm.xlu0 %6949, %v6051
        %v6951 = vpop.permute.xlu0 %6950
        %6952 = vset.pattern.permute.xlu0 0
        %6953 = vperm.xlu0 %6952, %v6056
        %v6954 = vpop.permute.xlu0 %6953
        %6955 = vset.pattern.permute.xlu0 0
        %6956 = vperm.xlu0 %6955, %v6061
        %v6957 = vpop.permute.xlu0 %6956
        %6958 = vset.pattern.permute.xlu0 0
        %6959 = vperm.xlu0 %6958, %v6066
        %v6960 = vpop.permute.xlu0 %6959
        %6961 = vset.pattern.permute.xlu0 0
        %6962 = vperm.xlu0 %6961, %v6071
        %v6963 = vpop.permute.xlu0 %6962
        %6964 = vset.pattern.permute.xlu0 0
        %6965 = vperm.xlu0 %6964, %v6076
        %v6966 = vpop.permute.xlu0 %6965
        %6967 = vset.pattern.permute.xlu0 0
        %6968 = vperm.xlu0 %6967, %v6081
        %v6969 = vpop.permute.xlu0 %6968
        %6970 = vset.pattern.permute.xlu0 0
        %6971 = vperm.xlu0 %6970, %v6175
        %v6972 = vpop.permute.xlu0 %6971
        %6973 = vset.pattern.permute.xlu0 0
        %6974 = vperm.xlu0 %6973, %v6180
        %v6975 = vpop.permute.xlu0 %6974
        %6976 = vset.pattern.permute.xlu0 0
        %6977 = vperm.xlu0 %6976, %v6185
        %v6978 = vpop.permute.xlu0 %6977
        %6979 = vset.pattern.permute.xlu0 0
        %6980 = vperm.xlu0 %6979, %v6190
        %v6981 = vpop.permute.xlu0 %6980
        %6982 = vset.pattern.permute.xlu0 0
        %6983 = vperm.xlu0 %6982, %v6195
        %v6984 = vpop.permute.xlu0 %6983
        %6985 = vset.pattern.permute.xlu0 0
        %6986 = vperm.xlu0 %6985, %v6200
        %v6987 = vpop.permute.xlu0 %6986
        %6988 = vset.pattern.permute.xlu0 0
        %6989 = vperm.xlu0 %6988, %v6205
        %v6990 = vpop.permute.xlu0 %6989
        %6991 = vset.pattern.permute.xlu0 0
        %6992 = vperm.xlu0 %6991, %v6210
        %v6993 = vpop.permute.xlu0 %6992
        %6994 = vset.pattern.permute.xlu0 0
        %6995 = vperm.xlu0 %6994, %v6304
        %v6996 = vpop.permute.xlu0 %6995
        %6997 = vset.pattern.permute.xlu0 0
        %6998 = vperm.xlu0 %6997, %v6309
        %v6999 = vpop.permute.xlu0 %6998
        %7000 = vset.pattern.permute.xlu0 0
        %7001 = vperm.xlu0 %7000, %v6314
        %v7002 = vpop.permute.xlu0 %7001
        %7003 = vset.pattern.permute.xlu0 0
        %7004 = vperm.xlu0 %7003, %v6319
        %v7005 = vpop.permute.xlu0 %7004
        %7006 = vset.pattern.permute.xlu0 0
        %7007 = vperm.xlu0 %7006, %v6324
        %v7008 = vpop.permute.xlu0 %7007
        %7009 = vset.pattern.permute.xlu0 0
        %7010 = vperm.xlu0 %7009, %v6329
        %v7011 = vpop.permute.xlu0 %7010
        %7012 = vset.pattern.permute.xlu0 0
        %7013 = vperm.xlu0 %7012, %v6334
        %v7014 = vpop.permute.xlu0 %7013
        %7015 = vset.pattern.permute.xlu0 0
        %7016 = vperm.xlu0 %7015, %v6339
        %v7017 = vpop.permute.xlu0 %7016
        %7018 = vset.pattern.permute.xlu0 0
        %7019 = vperm.xlu0 %7018, %v6433
        %v7020 = vpop.permute.xlu0 %7019
        %7021 = vset.pattern.permute.xlu0 0
        %7022 = vperm.xlu0 %7021, %v6438
        %v7023 = vpop.permute.xlu0 %7022
        %7024 = vset.pattern.permute.xlu0 0
        %7025 = vperm.xlu0 %7024, %v6443
        %v7026 = vpop.permute.xlu0 %7025
        %7027 = vset.pattern.permute.xlu0 0
        %7028 = vperm.xlu0 %7027, %v6448
        %v7029 = vpop.permute.xlu0 %7028
        %7030 = vset.pattern.permute.xlu0 0
        %7031 = vperm.xlu0 %7030, %v6453
        %v7032 = vpop.permute.xlu0 %7031
        %7033 = vset.pattern.permute.xlu0 0
        %7034 = vperm.xlu0 %7033, %v6458
        %v7035 = vpop.permute.xlu0 %7034
        %7036 = vset.pattern.permute.xlu0 0
        %7037 = vperm.xlu0 %7036, %v6463
        %v7038 = vpop.permute.xlu0 %7037
        %7039 = vset.pattern.permute.xlu0 0
        %7040 = vperm.xlu0 %7039, %v6468
        %v7041 = vpop.permute.xlu0 %7040
        %7042 = vset.pattern.permute.xlu0 0
        %7043 = vperm.xlu0 %7042, %v6562
        %v7044 = vpop.permute.xlu0 %7043
        %7045 = vset.pattern.permute.xlu0 0
        %7046 = vperm.xlu0 %7045, %v6567
        %v7047 = vpop.permute.xlu0 %7046
        %7048 = vset.pattern.permute.xlu0 0
        %7049 = vperm.xlu0 %7048, %v6572
        %v7050 = vpop.permute.xlu0 %7049
        %7051 = vset.pattern.permute.xlu0 0
        %7052 = vperm.xlu0 %7051, %v6577
        %v7053 = vpop.permute.xlu0 %7052
        %7054 = vset.pattern.permute.xlu0 0
        %7055 = vperm.xlu0 %7054, %v6582
        %v7056 = vpop.permute.xlu0 %7055
        %7057 = vset.pattern.permute.xlu0 0
        %7058 = vperm.xlu0 %7057, %v6587
        %v7059 = vpop.permute.xlu0 %7058
        %7060 = vset.pattern.permute.xlu0 0
        %7061 = vperm.xlu0 %7060, %v6592
        %v7062 = vpop.permute.xlu0 %7061
        %7063 = vset.pattern.permute.xlu0 0
        %7064 = vperm.xlu0 %7063, %v6597
        %v7065 = vpop.permute.xlu0 %7064
        %7066 = vset.pattern.permute.xlu0 0
        %7067 = vperm.xlu0 %7066, %v6691
        %v7068 = vpop.permute.xlu0 %7067
        %7069 = vset.pattern.permute.xlu0 0
        %7070 = vperm.xlu0 %7069, %v6696
        %v7071 = vpop.permute.xlu0 %7070
        %7072 = vset.pattern.permute.xlu0 0
        %7073 = vperm.xlu0 %7072, %v6701
        %v7074 = vpop.permute.xlu0 %7073
        %7075 = vset.pattern.permute.xlu0 0
        %7076 = vperm.xlu0 %7075, %v6706
        %v7077 = vpop.permute.xlu0 %7076
        %7078 = vset.pattern.permute.xlu0 0
        %7079 = vperm.xlu0 %7078, %v6711
        %v7080 = vpop.permute.xlu0 %7079
        %7081 = vset.pattern.permute.xlu0 0
        %7082 = vperm.xlu0 %7081, %v6716
        %v7083 = vpop.permute.xlu0 %7082
        %7084 = vset.pattern.permute.xlu0 0
        %7085 = vperm.xlu0 %7084, %v6721
        %v7086 = vpop.permute.xlu0 %7085
        %7087 = vset.pattern.permute.xlu0 0
        %7088 = vperm.xlu0 %7087, %v6726
        %v7089 = vpop.permute.xlu0 %7088
        %7090 = vset.pattern.permute.xlu0 0
        %7091 = vperm.xlu0 %7090, %v6820
        %v7092 = vpop.permute.xlu0 %7091
        %7093 = vset.pattern.permute.xlu0 0
        %7094 = vperm.xlu0 %7093, %v6825
        %v7095 = vpop.permute.xlu0 %7094
        %7096 = vset.pattern.permute.xlu0 0
        %7097 = vperm.xlu0 %7096, %v6830
        %v7098 = vpop.permute.xlu0 %7097
        %7099 = vset.pattern.permute.xlu0 0
        %7100 = vperm.xlu0 %7099, %v6835
        %v7101 = vpop.permute.xlu0 %7100
        %7102 = vset.pattern.permute.xlu0 0
        %7103 = vperm.xlu0 %7102, %v6840
        %v7104 = vpop.permute.xlu0 %7103
        %7105 = vset.pattern.permute.xlu0 0
        %7106 = vperm.xlu0 %7105, %v6845
        %v7107 = vpop.permute.xlu0 %7106
        %7108 = vset.pattern.permute.xlu0 0
        %7109 = vperm.xlu0 %7108, %v6850
        %v7110 = vpop.permute.xlu0 %7109
        %7111 = vset.pattern.permute.xlu0 0
        %7112 = vperm.xlu0 %7111, %v6855
        %v7113 = vpop.permute.xlu0 %7112
        %v7114 = vlaneseq
        %v7115 = vshrl.u32 %v7114, 7
        %v7116 = vsub.s32 %v2419, %v7115
        %v7117 = vrot.slane %v6924, %v7116
        %v7118 = vlaneseq
        %v7119 = vshrl.u32 %v7118, 7
        %v7120 = vsub.s32 %v2424, %v7119
        %v7121 = vrot.slane %v6927, %v7120
        %v7122 = vsel %vm2429, %v7121, %v7117
        %v7123 = vlaneseq
        %v7124 = vshrl.u32 %v7123, 7
        %v7125 = vsub.s32 %v2431, %v7124
        %v7126 = vrot.slane %v6930, %v7125
        %v7127 = vsel %vm2436, %v7126, %v7122
        %v7128 = vlaneseq
        %v7129 = vshrl.u32 %v7128, 7
        %v7130 = vsub.s32 %v2438, %v7129
        %v7131 = vrot.slane %v6933, %v7130
        %v7132 = vsel %vm2443, %v7131, %v7127
        %v7133 = vlaneseq
        %v7134 = vshrl.u32 %v7133, 7
        %v7135 = vsub.s32 %v2419, %v7134
        %v7136 = vrot.slane %v6936, %v7135
        %v7137 = vlaneseq
        %v7138 = vshrl.u32 %v7137, 7
        %v7139 = vsub.s32 %v2424, %v7138
        %v7140 = vrot.slane %v6939, %v7139
        %v7141 = vsel %vm2429, %v7140, %v7136
        %v7142 = vlaneseq
        %v7143 = vshrl.u32 %v7142, 7
        %v7144 = vsub.s32 %v2431, %v7143
        %v7145 = vrot.slane %v6942, %v7144
        %v7146 = vsel %vm2436, %v7145, %v7141
        %v7147 = vlaneseq
        %v7148 = vshrl.u32 %v7147, 7
        %v7149 = vsub.s32 %v2438, %v7148
        %v7150 = vrot.slane %v6945, %v7149
        %v7151 = vsel %vm2443, %v7150, %v7146
        %v7152 = vlaneseq
        %v7153 = vshrl.u32 %v7152, 7
        %v7154 = vsub.s32 %v2419, %v7153
        %v7155 = vrot.slane %v6948, %v7154
        %v7156 = vlaneseq
        %v7157 = vshrl.u32 %v7156, 7
        %v7158 = vsub.s32 %v2424, %v7157
        %v7159 = vrot.slane %v6951, %v7158
        %v7160 = vsel %vm2429, %v7159, %v7155
        %v7161 = vlaneseq
        %v7162 = vshrl.u32 %v7161, 7
        %v7163 = vsub.s32 %v2431, %v7162
        %v7164 = vrot.slane %v6954, %v7163
        %v7165 = vsel %vm2436, %v7164, %v7160
        %v7166 = vlaneseq
        %v7167 = vshrl.u32 %v7166, 7
        %v7168 = vsub.s32 %v2438, %v7167
        %v7169 = vrot.slane %v6957, %v7168
        %v7170 = vsel %vm2443, %v7169, %v7165
        %v7171 = vlaneseq
        %v7172 = vshrl.u32 %v7171, 7
        %v7173 = vsub.s32 %v2419, %v7172
        %v7174 = vrot.slane %v6960, %v7173
        %v7175 = vlaneseq
        %v7176 = vshrl.u32 %v7175, 7
        %v7177 = vsub.s32 %v2424, %v7176
        %v7178 = vrot.slane %v6963, %v7177
        %v7179 = vsel %vm2429, %v7178, %v7174
        %v7180 = vlaneseq
        %v7181 = vshrl.u32 %v7180, 7
        %v7182 = vsub.s32 %v2431, %v7181
        %v7183 = vrot.slane %v6966, %v7182
        %v7184 = vsel %vm2436, %v7183, %v7179
        %v7185 = vlaneseq
        %v7186 = vshrl.u32 %v7185, 7
        %v7187 = vsub.s32 %v2438, %v7186
        %v7188 = vrot.slane %v6969, %v7187
        %v7189 = vsel %vm2443, %v7188, %v7184
        %v7190 = vlaneseq
        %v7191 = vshrl.u32 %v7190, 7
        %v7192 = vsub.s32 %v2419, %v7191
        %v7193 = vrot.slane %v6972, %v7192
        %v7194 = vlaneseq
        %v7195 = vshrl.u32 %v7194, 7
        %v7196 = vsub.s32 %v2424, %v7195
        %v7197 = vrot.slane %v6975, %v7196
        %v7198 = vsel %vm2429, %v7197, %v7193
        %v7199 = vlaneseq
        %v7200 = vshrl.u32 %v7199, 7
        %v7201 = vsub.s32 %v2431, %v7200
        %v7202 = vrot.slane %v6978, %v7201
        %v7203 = vsel %vm2436, %v7202, %v7198
        %v7204 = vlaneseq
        %v7205 = vshrl.u32 %v7204, 7
        %v7206 = vsub.s32 %v2438, %v7205
        %v7207 = vrot.slane %v6981, %v7206
        %v7208 = vsel %vm2443, %v7207, %v7203
        %v7209 = vlaneseq
        %v7210 = vshrl.u32 %v7209, 7
        %v7211 = vsub.s32 %v2419, %v7210
        %v7212 = vrot.slane %v6984, %v7211
        %v7213 = vlaneseq
        %v7214 = vshrl.u32 %v7213, 7
        %v7215 = vsub.s32 %v2424, %v7214
        %v7216 = vrot.slane %v6987, %v7215
        %v7217 = vsel %vm2429, %v7216, %v7212
        %v7218 = vlaneseq
        %v7219 = vshrl.u32 %v7218, 7
        %v7220 = vsub.s32 %v2431, %v7219
        %v7221 = vrot.slane %v6990, %v7220
        %v7222 = vsel %vm2436, %v7221, %v7217
        %v7223 = vlaneseq
        %v7224 = vshrl.u32 %v7223, 7
        %v7225 = vsub.s32 %v2438, %v7224
        %v7226 = vrot.slane %v6993, %v7225
        %v7227 = vsel %vm2443, %v7226, %v7222
        %v7228 = vlaneseq
        %v7229 = vshrl.u32 %v7228, 7
        %v7230 = vsub.s32 %v2419, %v7229
        %v7231 = vrot.slane %v6996, %v7230
        %v7232 = vlaneseq
        %v7233 = vshrl.u32 %v7232, 7
        %v7234 = vsub.s32 %v2424, %v7233
        %v7235 = vrot.slane %v6999, %v7234
        %v7236 = vsel %vm2429, %v7235, %v7231
        %v7237 = vlaneseq
        %v7238 = vshrl.u32 %v7237, 7
        %v7239 = vsub.s32 %v2431, %v7238
        %v7240 = vrot.slane %v7002, %v7239
        %v7241 = vsel %vm2436, %v7240, %v7236
        %v7242 = vlaneseq
        %v7243 = vshrl.u32 %v7242, 7
        %v7244 = vsub.s32 %v2438, %v7243
        %v7245 = vrot.slane %v7005, %v7244
        %v7246 = vsel %vm2443, %v7245, %v7241
        %v7247 = vlaneseq
        %v7248 = vshrl.u32 %v7247, 7
        %v7249 = vsub.s32 %v2419, %v7248
        %v7250 = vrot.slane %v7008, %v7249
        %v7251 = vlaneseq
        %v7252 = vshrl.u32 %v7251, 7
        %v7253 = vsub.s32 %v2424, %v7252
        %v7254 = vrot.slane %v7011, %v7253
        %v7255 = vsel %vm2429, %v7254, %v7250
        %v7256 = vlaneseq
        %v7257 = vshrl.u32 %v7256, 7
        %v7258 = vsub.s32 %v2431, %v7257
        %v7259 = vrot.slane %v7014, %v7258
        %v7260 = vsel %vm2436, %v7259, %v7255
        %v7261 = vlaneseq
        %v7262 = vshrl.u32 %v7261, 7
        %v7263 = vsub.s32 %v2438, %v7262
        %v7264 = vrot.slane %v7017, %v7263
        %v7265 = vsel %vm2443, %v7264, %v7260
        %v7266 = vlaneseq
        %v7267 = vshrl.u32 %v7266, 7
        %v7268 = vsub.s32 %v2419, %v7267
        %v7269 = vrot.slane %v7020, %v7268
        %v7270 = vlaneseq
        %v7271 = vshrl.u32 %v7270, 7
        %v7272 = vsub.s32 %v2424, %v7271
        %v7273 = vrot.slane %v7023, %v7272
        %v7274 = vsel %vm2429, %v7273, %v7269
        %v7275 = vlaneseq
        %v7276 = vshrl.u32 %v7275, 7
        %v7277 = vsub.s32 %v2431, %v7276
        %v7278 = vrot.slane %v7026, %v7277
        %v7279 = vsel %vm2436, %v7278, %v7274
        %v7280 = vlaneseq
        %v7281 = vshrl.u32 %v7280, 7
        %v7282 = vsub.s32 %v2438, %v7281
        %v7283 = vrot.slane %v7029, %v7282
        %v7284 = vsel %vm2443, %v7283, %v7279
        %v7285 = vlaneseq
        %v7286 = vshrl.u32 %v7285, 7
        %v7287 = vsub.s32 %v2419, %v7286
        %v7288 = vrot.slane %v7032, %v7287
        %v7289 = vlaneseq
        %v7290 = vshrl.u32 %v7289, 7
        %v7291 = vsub.s32 %v2424, %v7290
        %v7292 = vrot.slane %v7035, %v7291
        %v7293 = vsel %vm2429, %v7292, %v7288
        %v7294 = vlaneseq
        %v7295 = vshrl.u32 %v7294, 7
        %v7296 = vsub.s32 %v2431, %v7295
        %v7297 = vrot.slane %v7038, %v7296
        %v7298 = vsel %vm2436, %v7297, %v7293
        %v7299 = vlaneseq
        %v7300 = vshrl.u32 %v7299, 7
        %v7301 = vsub.s32 %v2438, %v7300
        %v7302 = vrot.slane %v7041, %v7301
        %v7303 = vsel %vm2443, %v7302, %v7298
        %v7304 = vlaneseq
        %v7305 = vshrl.u32 %v7304, 7
        %v7306 = vsub.s32 %v2419, %v7305
        %v7307 = vrot.slane %v7044, %v7306
        %v7308 = vlaneseq
        %v7309 = vshrl.u32 %v7308, 7
        %v7310 = vsub.s32 %v2424, %v7309
        %v7311 = vrot.slane %v7047, %v7310
        %v7312 = vsel %vm2429, %v7311, %v7307
        %v7313 = vlaneseq
        %v7314 = vshrl.u32 %v7313, 7
        %v7315 = vsub.s32 %v2431, %v7314
        %v7316 = vrot.slane %v7050, %v7315
        %v7317 = vsel %vm2436, %v7316, %v7312
        %v7318 = vlaneseq
        %v7319 = vshrl.u32 %v7318, 7
        %v7320 = vsub.s32 %v2438, %v7319
        %v7321 = vrot.slane %v7053, %v7320
        %v7322 = vsel %vm2443, %v7321, %v7317
        %v7323 = vlaneseq
        %v7324 = vshrl.u32 %v7323, 7
        %v7325 = vsub.s32 %v2419, %v7324
        %v7326 = vrot.slane %v7056, %v7325
        %v7327 = vlaneseq
        %v7328 = vshrl.u32 %v7327, 7
        %v7329 = vsub.s32 %v2424, %v7328
        %v7330 = vrot.slane %v7059, %v7329
        %v7331 = vsel %vm2429, %v7330, %v7326
        %v7332 = vlaneseq
        %v7333 = vshrl.u32 %v7332, 7
        %v7334 = vsub.s32 %v2431, %v7333
        %v7335 = vrot.slane %v7062, %v7334
        %v7336 = vsel %vm2436, %v7335, %v7331
        %v7337 = vlaneseq
        %v7338 = vshrl.u32 %v7337, 7
        %v7339 = vsub.s32 %v2438, %v7338
        %v7340 = vrot.slane %v7065, %v7339
        %v7341 = vsel %vm2443, %v7340, %v7336
        %v7342 = vlaneseq
        %v7343 = vshrl.u32 %v7342, 7
        %v7344 = vsub.s32 %v2419, %v7343
        %v7345 = vrot.slane %v7068, %v7344
        %v7346 = vlaneseq
        %v7347 = vshrl.u32 %v7346, 7
        %v7348 = vsub.s32 %v2424, %v7347
        %v7349 = vrot.slane %v7071, %v7348
        %v7350 = vsel %vm2429, %v7349, %v7345
        %v7351 = vlaneseq
        %v7352 = vshrl.u32 %v7351, 7
        %v7353 = vsub.s32 %v2431, %v7352
        %v7354 = vrot.slane %v7074, %v7353
        %v7355 = vsel %vm2436, %v7354, %v7350
        %v7356 = vlaneseq
        %v7357 = vshrl.u32 %v7356, 7
        %v7358 = vsub.s32 %v2438, %v7357
        %v7359 = vrot.slane %v7077, %v7358
        %v7360 = vsel %vm2443, %v7359, %v7355
        %v7361 = vlaneseq
        %v7362 = vshrl.u32 %v7361, 7
        %v7363 = vsub.s32 %v2419, %v7362
        %v7364 = vrot.slane %v7080, %v7363
        %v7365 = vlaneseq
        %v7366 = vshrl.u32 %v7365, 7
        %v7367 = vsub.s32 %v2424, %v7366
        %v7368 = vrot.slane %v7083, %v7367
        %v7369 = vsel %vm2429, %v7368, %v7364
        %v7370 = vlaneseq
        %v7371 = vshrl.u32 %v7370, 7
        %v7372 = vsub.s32 %v2431, %v7371
        %v7373 = vrot.slane %v7086, %v7372
        %v7374 = vsel %vm2436, %v7373, %v7369
        %v7375 = vlaneseq
        %v7376 = vshrl.u32 %v7375, 7
        %v7377 = vsub.s32 %v2438, %v7376
        %v7378 = vrot.slane %v7089, %v7377
        %v7379 = vsel %vm2443, %v7378, %v7374
        %v7380 = vlaneseq
        %v7381 = vshrl.u32 %v7380, 7
        %v7382 = vsub.s32 %v2419, %v7381
        %v7383 = vrot.slane %v7092, %v7382
        %v7384 = vlaneseq
        %v7385 = vshrl.u32 %v7384, 7
        %v7386 = vsub.s32 %v2424, %v7385
        %v7387 = vrot.slane %v7095, %v7386
        %v7388 = vsel %vm2429, %v7387, %v7383
        %v7389 = vlaneseq
        %v7390 = vshrl.u32 %v7389, 7
        %v7391 = vsub.s32 %v2431, %v7390
        %v7392 = vrot.slane %v7098, %v7391
        %v7393 = vsel %vm2436, %v7392, %v7388
        %v7394 = vlaneseq
        %v7395 = vshrl.u32 %v7394, 7
        %v7396 = vsub.s32 %v2438, %v7395
        %v7397 = vrot.slane %v7101, %v7396
        %v7398 = vsel %vm2443, %v7397, %v7393
        %v7399 = vlaneseq
        %v7400 = vshrl.u32 %v7399, 7
        %v7401 = vsub.s32 %v2419, %v7400
        %v7402 = vrot.slane %v7104, %v7401
        %v7403 = vlaneseq
        %v7404 = vshrl.u32 %v7403, 7
        %v7405 = vsub.s32 %v2424, %v7404
        %v7406 = vrot.slane %v7107, %v7405
        %v7407 = vsel %vm2429, %v7406, %v7402
        %v7408 = vlaneseq
        %v7409 = vshrl.u32 %v7408, 7
        %v7410 = vsub.s32 %v2431, %v7409
        %v7411 = vrot.slane %v7110, %v7410
        %v7412 = vsel %vm2436, %v7411, %v7407
        %v7413 = vlaneseq
        %v7414 = vshrl.u32 %v7413, 7
        %v7415 = vsub.s32 %v2438, %v7414
        %v7416 = vrot.slane %v7113, %v7415
        %v7417 = vsel %vm2443, %v7416, %v7412
        %v7418 = vsel %vm2730, %v7151, %v7132
        %v7419 = vsel %vm2732, %v7170, %v7418
        %v7420 = vsel %vm2734, %v7189, %v7419
        %v7421 = vsel %vm2736, %v7208, %v7420
        %v7422 = vsel %vm2738, %v7227, %v7421
        %v7423 = vsel %vm2740, %v7246, %v7422
        %v7424 = vsel %vm2742, %v7265, %v7423
        %v7425 = vsel %vm2730, %v7303, %v7284
        %v7426 = vsel %vm2732, %v7322, %v7425
        %v7427 = vsel %vm2734, %v7341, %v7426
        %v7428 = vsel %vm2736, %v7360, %v7427
        %v7429 = vsel %vm2738, %v7379, %v7428
        %v7430 = vsel %vm2740, %v7398, %v7429
        %v7431 = vsel %vm2742, %v7417, %v7430
        %7434 = vxpose.xlu0.b32.start [1/16] %v7424, 128
        %7435 = vxpose.xlu0.b32.cont [2/16] %v7431, 128
        %7436 = vxpose.xlu0.b32.cont [3/16] 0.0, 128
        %7437 = vxpose.xlu0.b32.cont [4/16] 0.0, 128
        %7438 = vxpose.xlu0.b32.cont [5/16] 0.0, 128
        %7439 = vxpose.xlu0.b32.cont [6/16] 0.0, 128
        %7440 = vxpose.xlu0.b32.cont [7/16] 0.0, 128
        %7441 = vxpose.xlu0.b32.cont [8/16] 0.0, 128
        %7442 = vxpose.xlu0.b32.cont [9/16] 0.0, 128
        %7443 = vxpose.xlu0.b32.cont [10/16] 0.0, 128
        %7444 = vxpose.xlu0.b32.cont [11/16] 0.0, 128
        %7445 = vxpose.xlu0.b32.cont [12/16] 0.0, 128
        %7446 = vxpose.xlu0.b32.cont [13/16] 0.0, 128
        %7447 = vxpose.xlu0.b32.cont [14/16] 0.0, 128
        %7448 = vxpose.xlu0.b32.cont [15/16] 0.0, 128
        %7449 = vxpose.xlu0.b32.end [16/16] 0.0, 128
        %v7450 = vpop.trf.xlu0
        %v7451 = vpop.trf.xlu0
        %v7452 = vpop.trf.xlu0
        %v7453 = vpop.trf.xlu0
        %v7454 = vpop.trf.xlu0
        %v7455 = vpop.trf.xlu0
        %v7456 = vpop.trf.xlu0
        %v7457 = vpop.trf.xlu0
        %v7458 = vpop.trf.xlu0
        %v7459 = vpop.trf.xlu0
        %v7460 = vpop.trf.xlu0
        %v7461 = vpop.trf.xlu0
        %v7462 = vpop.trf.xlu0
        %v7463 = vpop.trf.xlu0
        %v7464 = vpop.trf.xlu0
        %v7465 = vpop.trf.xlu0
        %7467 = vset.pattern.permute.xlu0 0
        %7468 = vperm.xlu0 %7467, %v5431
        %v7469 = vpop.permute.xlu0 %7468
        %7472 = vset.pattern.permute.xlu0 0
        %7473 = vperm.xlu0 %7472, %v5432
        %v7474 = vpop.permute.xlu0 %7473
        %7477 = vset.pattern.permute.xlu0 0
        %7478 = vperm.xlu0 %7477, %v5433
        %v7479 = vpop.permute.xlu0 %7478
        %7482 = vset.pattern.permute.xlu0 0
        %7483 = vperm.xlu0 %7482, %v5434
        %v7484 = vpop.permute.xlu0 %7483
        %v7487 = vsel %vm2805, %v5426, 0
        %v7490 = vsel %vm2805, %v5427, 0
        %v7493 = vsel %vm2805, %v5428, 0
        %v7496 = vsel %vm2805, %v5429, 0
        %7498 = vmatprep.subr.mxu0 0.0
        %7499 = vmatpush1.msra.mxu0 %v5356
        %7500 = vmatprep.subr.mxu0 0.0
        %7501 = vmatpush1.msra.mxu0 %v5357
        %7502 = vmatprep.subr.mxu0 0.0
        %7503 = vmatpush1.msra.mxu0 %v5358
        %7504 = vmatprep.subr.mxu0 0.0
        %7505 = vmatpush1.msra.mxu0 %v5359
        %7506 = vmatprep.subr.mxu0 0.0
        %7507 = vmatpush1.msra.mxu0 0.0
        %7508 = vmatprep.subr.mxu0 0.0
        %7509 = vmatpush1.msra.mxu0 0.0
        %7510 = vmatprep.subr.mxu0 0.0
        %7511 = vmatpush1.msra.mxu0 0.0
        %7512 = vmatprep.subr.mxu0 0.0
        %7513 = vmatpush1.msra.mxu0 0.0
        %7514 = vmatprep.subr.mxu0 0.0
        %7515 = vmatpush1.msra.mxu0 0.0
        %7516 = vmatprep.subr.mxu0 0.0
        %7517 = vmatpush1.msra.mxu0 0.0
        %7518 = vmatprep.subr.mxu0 0.0
        %7519 = vmatpush1.msra.mxu0 0.0
        %7520 = vmatprep.subr.mxu0 0.0
        %7521 = vmatpush1.msra.mxu0 0.0
        %7522 = vmatprep.subr.mxu0 0.0
        %7523 = vmatpush1.msra.mxu0 0.0
        %7524 = vmatprep.subr.mxu0 0.0
        %7525 = vmatpush1.msra.mxu0 0.0
        %7526 = vmatprep.subr.mxu0 0.0
        %7527 = vmatpush1.msra.mxu0 0.0
        %7528 = vmatprep.subr.mxu0 0.0
        %7529 = vmatpush1.msra.mxu0 0.0
        %7530 = vmatprep.subr.mxu0 0.0
        %7531 = vmatpush1.msra.mxu0 0.0
        %7532 = vmatprep.subr.mxu0 0.0
        %7533 = vmatpush1.msra.mxu0 0.0
        %7534 = vmatprep.subr.mxu0 0.0
        %7535 = vmatpush1.msra.mxu0 0.0
        %7536 = vmatprep.subr.mxu0 0.0
        %7537 = vmatpush1.msra.mxu0 0.0
        %7538 = vmatprep.subr.mxu0 0.0
        %7539 = vmatpush1.msra.mxu0 0.0
        %7540 = vmatprep.subr.mxu0 0.0
        %7541 = vmatpush1.msra.mxu0 0.0
        %7542 = vmatprep.subr.mxu0 0.0
        %7543 = vmatpush1.msra.mxu0 0.0
        %7544 = vmatprep.subr.mxu0 0.0
        %7545 = vmatpush1.msra.mxu0 0.0
        %7546 = vmatprep.subr.mxu0 0.0
        %7547 = vmatpush1.msra.mxu0 0.0
        %7548 = vmatprep.subr.mxu0 0.0
        %7549 = vmatpush1.msra.mxu0 0.0
        %7550 = vmatprep.subr.mxu0 0.0
        %7551 = vmatpush1.msra.mxu0 0.0
        %7552 = vmatprep.subr.mxu0 0.0
        %7553 = vmatpush1.msra.mxu0 0.0
        %7554 = vmatprep.subr.mxu0 0.0
        %7555 = vmatpush1.msra.mxu0 0.0
        %7556 = vmatprep.subr.mxu0 0.0
        %7557 = vmatpush1.msra.mxu0 0.0
        %7558 = vmatprep.subr.mxu0 0.0
        %7559 = vmatpush1.msra.mxu0 0.0
        %7560 = vmatprep.subr.mxu0 0.0
        %7561 = vmatpush1.msra.mxu0 0.0
        %7562 = vmatprep.mubr.f32.mxu0 0.0
        %7563 = vmatmul.mubr.f32.gmra.mrb[0].mxu0 %v7487
        %v7564 = vpop.f32.mrb[0].mxu0
        %v7565 = vadd.f32 %v7469, %v7564
        %v7566 = vpop.f32.mrb[0].mxu0
        %7567 = vmatprep.mubr.f32.mxu0 0.0
        %7568 = vmatmul.mubr.f32.gmra.mrb[0].mxu0 %v7490
        %v7569 = vpop.f32.mrb[0].mxu0
        %v7570 = vadd.f32 %v7474, %v7569
        %v7571 = vpop.f32.mrb[0].mxu0
        %7572 = vmatprep.mubr.f32.mxu0 0.0
        %7573 = vmatmul.mubr.f32.gmra.mrb[0].mxu0 %v7493
        %v7574 = vpop.f32.mrb[0].mxu0
        %v7575 = vadd.f32 %v7479, %v7574
        %v7576 = vpop.f32.mrb[0].mxu0
        %7577 = vmatprep.mubr.f32.mxu0 0.0
        %7578 = vmatmul.mubr.f32.gmra.mrb[0].mxu0 %v7496
        %v7579 = vpop.f32.mrb[0].mxu0
        %v7580 = vadd.f32 %v7484, %v7579
        %v7581 = vpop.f32.mrb[0].mxu0
        %7582 = vdwg.mxu0
        %v7584 = vsel %vm731, %v7450, 0
        %v7587 = vsel %vm731, %v7451, 0
        %v7590 = vsel %vm731, %v7452, 0
        %v7593 = vsel %vm731, %v7453, 0
        %7595 = vmatprep.subr.mxu0 0.0
        %7596 = vmatpush1.msra.mxu0 %v657
        %7597 = vmatprep.subr.mxu0 0.0
        %7598 = vmatpush1.msra.mxu0 %v658
        %7599 = vmatprep.subr.mxu0 0.0
        %7600 = vmatpush1.msra.mxu0 0.0
        %7601 = vmatprep.subr.mxu0 0.0
        %7602 = vmatpush1.msra.mxu0 0.0
        %7603 = vmatprep.subr.mxu0 0.0
        %7604 = vmatpush1.msra.mxu0 0.0
        %7605 = vmatprep.subr.mxu0 0.0
        %7606 = vmatpush1.msra.mxu0 0.0
        %7607 = vmatprep.subr.mxu0 0.0
        %7608 = vmatpush1.msra.mxu0 0.0
        %7609 = vmatprep.subr.mxu0 0.0
        %7610 = vmatpush1.msra.mxu0 0.0
        %7611 = vmatprep.subr.mxu0 0.0
        %7612 = vmatpush1.msra.mxu0 0.0
        %7613 = vmatprep.subr.mxu0 0.0
        %7614 = vmatpush1.msra.mxu0 0.0
        %7615 = vmatprep.subr.mxu0 0.0
        %7616 = vmatpush1.msra.mxu0 0.0
        %7617 = vmatprep.subr.mxu0 0.0
        %7618 = vmatpush1.msra.mxu0 0.0
        %7619 = vmatprep.subr.mxu0 0.0
        %7620 = vmatpush1.msra.mxu0 0.0
        %7621 = vmatprep.subr.mxu0 0.0
        %7622 = vmatpush1.msra.mxu0 0.0
        %7623 = vmatprep.subr.mxu0 0.0
        %7624 = vmatpush1.msra.mxu0 0.0
        %7625 = vmatprep.subr.mxu0 0.0
        %7626 = vmatpush1.msra.mxu0 0.0
        %7627 = vmatprep.subr.mxu0 0.0
        %7628 = vmatpush1.msra.mxu0 0.0
        %7629 = vmatprep.subr.mxu0 0.0
        %7630 = vmatpush1.msra.mxu0 0.0
        %7631 = vmatprep.subr.mxu0 0.0
        %7632 = vmatpush1.msra.mxu0 0.0
        %7633 = vmatprep.subr.mxu0 0.0
        %7634 = vmatpush1.msra.mxu0 0.0
        %7635 = vmatprep.subr.mxu0 0.0
        %7636 = vmatpush1.msra.mxu0 0.0
        %7637 = vmatprep.subr.mxu0 0.0
        %7638 = vmatpush1.msra.mxu0 0.0
        %7639 = vmatprep.subr.mxu0 0.0
        %7640 = vmatpush1.msra.mxu0 0.0
        %7641 = vmatprep.subr.mxu0 0.0
        %7642 = vmatpush1.msra.mxu0 0.0
        %7643 = vmatprep.subr.mxu0 0.0
        %7644 = vmatpush1.msra.mxu0 0.0
        %7645 = vmatprep.subr.mxu0 0.0
        %7646 = vmatpush1.msra.mxu0 0.0
        %7647 = vmatprep.subr.mxu0 0.0
        %7648 = vmatpush1.msra.mxu0 0.0
        %7649 = vmatprep.subr.mxu0 0.0
        %7650 = vmatpush1.msra.mxu0 0.0
        %7651 = vmatprep.subr.mxu0 0.0
        %7652 = vmatpush1.msra.mxu0 0.0
        %7653 = vmatprep.subr.mxu0 0.0
        %7654 = vmatpush1.msra.mxu0 0.0
        %7655 = vmatprep.subr.mxu0 0.0
        %7656 = vmatpush1.msra.mxu0 0.0
        %7657 = vmatprep.subr.mxu0 0.0
        %7658 = vmatpush1.msra.mxu0 0.0
        %7659 = vmatprep.mubr.f32.mxu0 0.0
        %7660 = vmatmul.mubr.f32.gmra.mrb[0].mxu0 %v7584
        %v7661 = vpop.f32.mrb[0].mxu0
        %v7662 = vadd.f32 %v7565, %v7661
        %v7663 = vpop.f32.mrb[0].mxu0
        %7664 = vmatprep.mubr.f32.mxu0 0.0
        %7665 = vmatmul.mubr.f32.gmra.mrb[0].mxu0 %v7587
        %v7666 = vpop.f32.mrb[0].mxu0
        %v7667 = vadd.f32 %v7570, %v7666
        %v7668 = vpop.f32.mrb[0].mxu0
        %7669 = vmatprep.mubr.f32.mxu0 0.0
        %7670 = vmatmul.mubr.f32.gmra.mrb[0].mxu0 %v7590
        %v7671 = vpop.f32.mrb[0].mxu0
        %v7672 = vadd.f32 %v7575, %v7671
        %v7673 = vpop.f32.mrb[0].mxu0
        %7674 = vmatprep.mubr.f32.mxu0 0.0
        %7675 = vmatmul.mubr.f32.gmra.mrb[0].mxu0 %v7593
        %v7676 = vpop.f32.mrb[0].mxu0
        %v7677 = vadd.f32 %v7580, %v7676
        %v7678 = vpop.f32.mrb[0].mxu0
        %7679 = vdwg.mxu0
        %v7680 = vmul.f32 %v7662, 0.5
        %v7681 = vmul.f32 %v7667, 0.5
        %v7682 = vmul.f32 %v7672, 0.5
        %v7683 = vmul.f32 %v7677, 0.5
        %v7684 = vmul.f32 %v7662, 0.70710677
        %v7685 = vmul.f32 %v7667, 0.70710677
        %v7686 = vmul.f32 %v7672, 0.70710677
        %v7687 = vmul.f32 %v7677, 0.70710677
        %v7688 = verf.f32.pop %v7684
        %v7689 = verf.f32.pop %v7685
        %v7690 = verf.f32.pop %v7686
        %v7691 = verf.f32.pop %v7687
        %v7692 = vadd.f32 %v7688, 1.0
        %v7693 = vadd.f32 %v7689, 1.0
        %v7694 = vadd.f32 %v7690, 1.0
        %v7695 = vadd.f32 %v7691, 1.0
        %v7696 = vmul.f32 %v7680, %v7692
        %v7697 = vmul.f32 %v7681, %v7693
        %v7698 = vmul.f32 %v7682, %v7694
        %v7699 = vmul.f32 %v7683, %v7695
        %s7700 = scalar_lea.vmem [#allocation3], 1536
        %v7701 = vld [vmem:[%s7700] sm:$0xff]
        %v7702 = vld [vmem:[%s7700 + $0x8] sm:$0xff]
        %v7703 = vld [vmem:[%s7700 + $0x10] sm:$0xff]
        %v7704 = vld [vmem:[%s7700 + $0x18] sm:$0xff]
        %v7705 = vld [vmem:[%s7700 + $0x20] sm:$0xff]
        %v7706 = vld [vmem:[%s7700 + $0x28] sm:$0xff]
        %v7707 = vld [vmem:[%s7700 + $0x30] sm:$0xff]
        %v7708 = vld [vmem:[%s7700 + $0x38] sm:$0xff]
        %v7709 = vld [vmem:[%s7700 + $0x40] sm:$0xff]
        %v7710 = vld [vmem:[%s7700 + $0x48] sm:$0xff]
        %v7711 = vld [vmem:[%s7700 + $0x50] sm:$0xff]
        %v7712 = vld [vmem:[%s7700 + $0x58] sm:$0xff]
        %v7713 = vld [vmem:[%s7700 + $0x60] sm:$0xff]
        %v7714 = vld [vmem:[%s7700 + $0x68] sm:$0xff]
        %v7715 = vld [vmem:[%s7700 + $0x70] sm:$0xff]
        %v7716 = vld [vmem:[%s7700 + $0x78] sm:$0xff]
        %v7717 = vld [vmem:[%s7700 + $0x80] sm:$0xff]
        %v7718 = vld [vmem:[%s7700 + $0x88] sm:$0xff]
        %v7719 = vld [vmem:[%s7700 + $0x90] sm:$0xff]
        %v7720 = vld [vmem:[%s7700 + $0x98] sm:$0xff]
        %v7721 = vld [vmem:[%s7700 + $0xa0] sm:$0xff]
        %v7722 = vld [vmem:[%s7700 + $0xa8] sm:$0xff]
        %v7723 = vld [vmem:[%s7700 + $0xb0] sm:$0xff]
        %v7724 = vld [vmem:[%s7700 + $0xb8] sm:$0xff]
        %v7725 = vld [vmem:[%s7700 + $0xc0] sm:$0xff]
        %v7726 = vld [vmem:[%s7700 + $0xc8] sm:$0xff]
        %v7727 = vld [vmem:[%s7700 + $0xd0] sm:$0xff]
        %v7728 = vld [vmem:[%s7700 + $0xd8] sm:$0xff]
        %v7729 = vld [vmem:[%s7700 + $0xe0] sm:$0xff]
        %v7730 = vld [vmem:[%s7700 + $0xe8] sm:$0xff]
        %v7731 = vld [vmem:[%s7700 + $0xf0] sm:$0xff]
        %v7732 = vld [vmem:[%s7700 + $0xf8] sm:$0xff]
        %v7733 = vld [vmem:[%s7700 + $0x100] sm:$0xff]
        %v7734 = vld [vmem:[%s7700 + $0x108] sm:$0xff]
        %v7735 = vld [vmem:[%s7700 + $0x110] sm:$0xff]
        %v7736 = vld [vmem:[%s7700 + $0x118] sm:$0xff]
        %v7737 = vld [vmem:[%s7700 + $0x120] sm:$0xff]
        %v7738 = vld [vmem:[%s7700 + $0x128] sm:$0xff]
        %v7739 = vld [vmem:[%s7700 + $0x130] sm:$0xff]
        %v7740 = vld [vmem:[%s7700 + $0x138] sm:$0xff]
        %v7741 = vld [vmem:[%s7700 + $0x140] sm:$0xff]
        %v7742 = vld [vmem:[%s7700 + $0x148] sm:$0xff]
        %v7743 = vld [vmem:[%s7700 + $0x150] sm:$0xff]
        %v7744 = vld [vmem:[%s7700 + $0x158] sm:$0xff]
        %v7745 = vld [vmem:[%s7700 + $0x160] sm:$0xff]
        %v7746 = vld [vmem:[%s7700 + $0x168] sm:$0xff]
        %v7747 = vld [vmem:[%s7700 + $0x170] sm:$0xff]
        %v7748 = vld [vmem:[%s7700 + $0x178] sm:$0xff]
        %v7749 = vld [vmem:[%s7700 + $0x180] sm:$0xff]
        %v7750 = vld [vmem:[%s7700 + $0x188] sm:$0xff]
        %v7751 = vld [vmem:[%s7700 + $0x190] sm:$0xff]
        %v7752 = vld [vmem:[%s7700 + $0x198] sm:$0xff]
        %v7753 = vld [vmem:[%s7700 + $0x1a0] sm:$0xff]
        %v7754 = vld [vmem:[%s7700 + $0x1a8] sm:$0xff]
        %v7755 = vld [vmem:[%s7700 + $0x1b0] sm:$0xff]
        %v7756 = vld [vmem:[%s7700 + $0x1b8] sm:$0xff]
        %v7757 = vld [vmem:[%s7700 + $0x1c0] sm:$0xff]
        %v7758 = vld [vmem:[%s7700 + $0x1c8] sm:$0xff]
        %v7759 = vld [vmem:[%s7700 + $0x1d0] sm:$0xff]
        %v7760 = vld [vmem:[%s7700 + $0x1d8] sm:$0xff]
        %v7761 = vld [vmem:[%s7700 + $0x1e0] sm:$0xff]
        %v7762 = vld [vmem:[%s7700 + $0x1e8] sm:$0xff]
        %v7763 = vld [vmem:[%s7700 + $0x1f0] sm:$0xff]
        %v7764 = vld [vmem:[%s7700 + $0x1f8] sm:$0xff]
        %s7765 = scalar_lea.vmem %s8, 96
        %v7766 = vld [vmem:[%s7765] sm:$0xff]
        %v7767 = vld [vmem:[%s7765 + $0x8] sm:$0xff]
        %v7768 = vld [vmem:[%s7765 + $0x10] sm:$0xff]
        %v7769 = vld [vmem:[%s7765 + $0x18] sm:$0xff]
        %s7770 = scalar_lea.vmem %s9, 96
        %v7771 = vld [vmem:[%s7770] sm:$0xff]
        %v7772 = vld [vmem:[%s7770 + $0x8] sm:$0xff]
        %v7773 = vld [vmem:[%s7770 + $0x10] sm:$0xff]
        %v7774 = vld [vmem:[%s7770 + $0x18] sm:$0xff]
        %v7776 = vsel %vm731, %v7696, 0
        %v7779 = vsel %vm731, %v7697, 0
        %v7782 = vsel %vm731, %v7698, 0
        %v7785 = vsel %vm731, %v7699, 0
        %7787 = vmatprep.subr.mxu0 0.0
        %7788 = vmatpush1.xpose.msra.mxu0 %v7776
        %7789 = vmatprep.subr.mxu0 0.0
        %7790 = vmatpush1.xpose.msra.mxu0 %v7779
        %7791 = vmatprep.subr.mxu0 0.0
        %7792 = vmatpush1.xpose.msra.mxu0 %v7782
        %7793 = vmatprep.subr.mxu0 0.0
        %7794 = vmatpush1.xpose.msra.mxu0 %v7785
        %7795 = vmatprep.subr.mxu0 0.0
        %7796 = vmatpush1.xpose.msra.mxu0 0.0
        %7797 = vmatprep.subr.mxu0 0.0
        %7798 = vmatpush1.xpose.msra.mxu0 0.0
        %7799 = vmatprep.subr.mxu0 0.0
        %7800 = vmatpush1.xpose.msra.mxu0 0.0
        %7801 = vmatprep.subr.mxu0 0.0
        %7802 = vmatpush1.xpose.msra.mxu0 0.0
        %7803 = vmatprep.subr.mxu0 0.0
        %7804 = vmatpush1.xpose.msra.mxu0 0.0
        %7805 = vmatprep.subr.mxu0 0.0
        %7806 = vmatpush1.xpose.msra.mxu0 0.0
        %7807 = vmatprep.subr.mxu0 0.0
        %7808 = vmatpush1.xpose.msra.mxu0 0.0
        %7809 = vmatprep.subr.mxu0 0.0
        %7810 = vmatpush1.xpose.msra.mxu0 0.0
        %7811 = vmatprep.subr.mxu0 0.0
        %7812 = vmatpush1.xpose.msra.mxu0 0.0
        %7813 = vmatprep.subr.mxu0 0.0
        %7814 = vmatpush1.xpose.msra.mxu0 0.0
        %7815 = vmatprep.subr.mxu0 0.0
        %7816 = vmatpush1.xpose.msra.mxu0 0.0
        %7817 = vmatprep.subr.mxu0 0.0
        %7818 = vmatpush1.xpose.msra.mxu0 0.0
        %7819 = vmatprep.subr.mxu0 0.0
        %7820 = vmatpush1.xpose.msra.mxu0 0.0
        %7821 = vmatprep.subr.mxu0 0.0
        %7822 = vmatpush1.xpose.msra.mxu0 0.0
        %7823 = vmatprep.subr.mxu0 0.0
        %7824 = vmatpush1.xpose.msra.mxu0 0.0
        %7825 = vmatprep.subr.mxu0 0.0
        %7826 = vmatpush1.xpose.msra.mxu0 0.0
        %7827 = vmatprep.subr.mxu0 0.0
        %7828 = vmatpush1.xpose.msra.mxu0 0.0
        %7829 = vmatprep.subr.mxu0 0.0
        %7830 = vmatpush1.xpose.msra.mxu0 0.0
        %7831 = vmatprep.subr.mxu0 0.0
        %7832 = vmatpush1.xpose.msra.mxu0 0.0
        %7833 = vmatprep.subr.mxu0 0.0
        %7834 = vmatpush1.xpose.msra.mxu0 0.0
        %7835 = vmatprep.subr.mxu0 0.0
        %7836 = vmatpush1.xpose.msra.mxu0 0.0
        %7837 = vmatprep.subr.mxu0 0.0
        %7838 = vmatpush1.xpose.msra.mxu0 0.0
        %7839 = vmatprep.subr.mxu0 0.0
        %7840 = vmatpush1.xpose.msra.mxu0 0.0
        %7841 = vmatprep.subr.mxu0 0.0
        %7842 = vmatpush1.xpose.msra.mxu0 0.0
        %7843 = vmatprep.subr.mxu0 0.0
        %7844 = vmatpush1.xpose.msra.mxu0 0.0
        %7845 = vmatprep.subr.mxu0 0.0
        %7846 = vmatpush1.xpose.msra.mxu0 0.0
        %7847 = vmatprep.subr.mxu0 0.0
        %7848 = vmatpush1.xpose.msra.mxu0 0.0
        %7849 = vmatprep.subr.mxu0 0.0
        %7850 = vmatpush1.xpose.msra.mxu0 0.0
        %7851 = vmatprep.mubr.f32.mxu0 0.0
        %7852 = vmatmul.mubr.f32.gmra.mrb[0].mxu0 %v733
        %v7853 = vpop.f32.mrb[0].mxu0
        %v7854 = vadd.f32 0.0, %v7853
        %v7855 = vpop.f32.mrb[0].mxu0
        %7856 = vmatprep.mubr.f32.mxu0 0.0
        %7857 = vmatmul.mubr.f32.gmra.mrb[0].mxu0 %v736
        %v7858 = vpop.f32.mrb[0].mxu0
        %v7859 = vadd.f32 0.0, %v7858
        %v7860 = vpop.f32.mrb[0].mxu0
        %7861 = vdwg.mxu0
        %v7862 = vlaneseq
        %v7863 = vshrl.u32 %v7862, 7
        %v7864 = vsub.s32 0, %v7863
        %v7865 = vrot.slane %v7854, %v7864
        %7867 = vbcast.lane.b32.xlu0 %v7865, 256
        %v7868 = vpop.permute.xlu0 %7867
        %s7870 = sor.u32 256, 8
        %7871 = vbcast.lane.b32.xlu0 %v7865, %s7870
        %v7872 = vpop.permute.xlu0 %7871
        %s7874 = sor.u32 256, 16
        %7875 = vbcast.lane.b32.xlu0 %v7865, %s7874
        %v7876 = vpop.permute.xlu0 %7875
        %s7878 = sor.u32 256, 24
        %7879 = vbcast.lane.b32.xlu0 %v7865, %s7878
        %v7880 = vpop.permute.xlu0 %7879
        %v7881 = vlaneseq
        %v7882 = vshrl.u32 %v7881, 7
        %v7883 = vsub.s32 1, %v7882
        %v7884 = vrot.slane %v7854, %v7883
        %7886 = vbcast.lane.b32.xlu0 %v7884, 256
        %v7887 = vpop.permute.xlu0 %7886
        %s7889 = sor.u32 256, 8
        %7890 = vbcast.lane.b32.xlu0 %v7884, %s7889
        %v7891 = vpop.permute.xlu0 %7890
        %s7893 = sor.u32 256, 16
        %7894 = vbcast.lane.b32.xlu0 %v7884, %s7893
        %v7895 = vpop.permute.xlu0 %7894
        %s7897 = sor.u32 256, 24
        %7898 = vbcast.lane.b32.xlu0 %v7884, %s7897
        %v7899 = vpop.permute.xlu0 %7898
        %v7900 = vlaneseq
        %v7901 = vshrl.u32 %v7900, 7
        %v7902 = vsub.s32 2, %v7901
        %v7903 = vrot.slane %v7854, %v7902
        %7905 = vbcast.lane.b32.xlu0 %v7903, 256
        %v7906 = vpop.permute.xlu0 %7905
        %s7908 = sor.u32 256, 8
        %7909 = vbcast.lane.b32.xlu0 %v7903, %s7908
        %v7910 = vpop.permute.xlu0 %7909
        %s7912 = sor.u32 256, 16
        %7913 = vbcast.lane.b32.xlu0 %v7903, %s7912
        %v7914 = vpop.permute.xlu0 %7913
        %s7916 = sor.u32 256, 24
        %7917 = vbcast.lane.b32.xlu0 %v7903, %s7916
        %v7918 = vpop.permute.xlu0 %7917
        %v7919 = vlaneseq
        %v7920 = vshrl.u32 %v7919, 7
        %v7921 = vsub.s32 3, %v7920
        %v7922 = vrot.slane %v7854, %v7921
        %7924 = vbcast.lane.b32.xlu0 %v7922, 256
        %v7925 = vpop.permute.xlu0 %7924
        %s7927 = sor.u32 256, 8
        %7928 = vbcast.lane.b32.xlu0 %v7922, %s7927
        %v7929 = vpop.permute.xlu0 %7928
        %s7931 = sor.u32 256, 16
        %7932 = vbcast.lane.b32.xlu0 %v7922, %s7931
        %v7933 = vpop.permute.xlu0 %7932
        %s7935 = sor.u32 256, 24
        %7936 = vbcast.lane.b32.xlu0 %v7922, %s7935
        %v7937 = vpop.permute.xlu0 %7936
        %v7938 = vlaneseq
        %v7939 = vshrl.u32 %v7938, 7
        %v7940 = vsub.s32 4, %v7939
        %v7941 = vrot.slane %v7854, %v7940
        %7943 = vbcast.lane.b32.xlu0 %v7941, 256
        %v7944 = vpop.permute.xlu0 %7943
        %s7946 = sor.u32 256, 8
        %7947 = vbcast.lane.b32.xlu0 %v7941, %s7946
        %v7948 = vpop.permute.xlu0 %7947
        %s7950 = sor.u32 256, 16
        %7951 = vbcast.lane.b32.xlu0 %v7941, %s7950
        %v7952 = vpop.permute.xlu0 %7951
        %s7954 = sor.u32 256, 24
        %7955 = vbcast.lane.b32.xlu0 %v7941, %s7954
        %v7956 = vpop.permute.xlu0 %7955
        %v7957 = vlaneseq
        %v7958 = vshrl.u32 %v7957, 7
        %v7959 = vsub.s32 5, %v7958
        %v7960 = vrot.slane %v7854, %v7959
        %7962 = vbcast.lane.b32.xlu0 %v7960, 256
        %v7963 = vpop.permute.xlu0 %7962
        %s7965 = sor.u32 256, 8
        %7966 = vbcast.lane.b32.xlu0 %v7960, %s7965
        %v7967 = vpop.permute.xlu0 %7966
        %s7969 = sor.u32 256, 16
        %7970 = vbcast.lane.b32.xlu0 %v7960, %s7969
        %v7971 = vpop.permute.xlu0 %7970
        %s7973 = sor.u32 256, 24
        %7974 = vbcast.lane.b32.xlu0 %v7960, %s7973
        %v7975 = vpop.permute.xlu0 %7974
        %v7976 = vlaneseq
        %v7977 = vshrl.u32 %v7976, 7
        %v7978 = vsub.s32 6, %v7977
        %v7979 = vrot.slane %v7854, %v7978
        %7981 = vbcast.lane.b32.xlu0 %v7979, 256
        %v7982 = vpop.permute.xlu0 %7981
        %s7984 = sor.u32 256, 8
        %7985 = vbcast.lane.b32.xlu0 %v7979, %s7984
        %v7986 = vpop.permute.xlu0 %7985
        %s7988 = sor.u32 256, 16
        %7989 = vbcast.lane.b32.xlu0 %v7979, %s7988
        %v7990 = vpop.permute.xlu0 %7989
        %s7992 = sor.u32 256, 24
        %7993 = vbcast.lane.b32.xlu0 %v7979, %s7992
        %v7994 = vpop.permute.xlu0 %7993
        %v7995 = vlaneseq
        %v7996 = vshrl.u32 %v7995, 7
        %v7997 = vsub.s32 7, %v7996
        %v7998 = vrot.slane %v7854, %v7997
        %8000 = vbcast.lane.b32.xlu0 %v7998, 256
        %v8001 = vpop.permute.xlu0 %8000
        %s8003 = sor.u32 256, 8
        %8004 = vbcast.lane.b32.xlu0 %v7998, %s8003
        %v8005 = vpop.permute.xlu0 %8004
        %s8007 = sor.u32 256, 16
        %8008 = vbcast.lane.b32.xlu0 %v7998, %s8007
        %v8009 = vpop.permute.xlu0 %8008
        %s8011 = sor.u32 256, 24
        %8012 = vbcast.lane.b32.xlu0 %v7998, %s8011
        %v8013 = vpop.permute.xlu0 %8012
        %v8014 = vlaneseq
        %v8015 = vshrl.u32 %v8014, 7
        %v8016 = vsub.s32 0, %v8015
        %v8017 = vrot.slane %v7859, %v8016
        %8019 = vbcast.lane.b32.xlu0 %v8017, 256
        %v8020 = vpop.permute.xlu0 %8019
        %s8022 = sor.u32 256, 8
        %8023 = vbcast.lane.b32.xlu0 %v8017, %s8022
        %v8024 = vpop.permute.xlu0 %8023
        %s8026 = sor.u32 256, 16
        %8027 = vbcast.lane.b32.xlu0 %v8017, %s8026
        %v8028 = vpop.permute.xlu0 %8027
        %s8030 = sor.u32 256, 24
        %8031 = vbcast.lane.b32.xlu0 %v8017, %s8030
        %v8032 = vpop.permute.xlu0 %8031
        %v8033 = vlaneseq
        %v8034 = vshrl.u32 %v8033, 7
        %v8035 = vsub.s32 1, %v8034
        %v8036 = vrot.slane %v7859, %v8035
        %8038 = vbcast.lane.b32.xlu0 %v8036, 256
        %v8039 = vpop.permute.xlu0 %8038
        %s8041 = sor.u32 256, 8
        %8042 = vbcast.lane.b32.xlu0 %v8036, %s8041
        %v8043 = vpop.permute.xlu0 %8042
        %s8045 = sor.u32 256, 16
        %8046 = vbcast.lane.b32.xlu0 %v8036, %s8045
        %v8047 = vpop.permute.xlu0 %8046
        %s8049 = sor.u32 256, 24
        %8050 = vbcast.lane.b32.xlu0 %v8036, %s8049
        %v8051 = vpop.permute.xlu0 %8050
        %v8052 = vlaneseq
        %v8053 = vshrl.u32 %v8052, 7
        %v8054 = vsub.s32 2, %v8053
        %v8055 = vrot.slane %v7859, %v8054
        %8057 = vbcast.lane.b32.xlu0 %v8055, 256
        %v8058 = vpop.permute.xlu0 %8057
        %s8060 = sor.u32 256, 8
        %8061 = vbcast.lane.b32.xlu0 %v8055, %s8060
        %v8062 = vpop.permute.xlu0 %8061
        %s8064 = sor.u32 256, 16
        %8065 = vbcast.lane.b32.xlu0 %v8055, %s8064
        %v8066 = vpop.permute.xlu0 %8065
        %s8068 = sor.u32 256, 24
        %8069 = vbcast.lane.b32.xlu0 %v8055, %s8068
        %v8070 = vpop.permute.xlu0 %8069
        %v8071 = vlaneseq
        %v8072 = vshrl.u32 %v8071, 7
        %v8073 = vsub.s32 3, %v8072
        %v8074 = vrot.slane %v7859, %v8073
        %8076 = vbcast.lane.b32.xlu0 %v8074, 256
        %v8077 = vpop.permute.xlu0 %8076
        %s8079 = sor.u32 256, 8
        %8080 = vbcast.lane.b32.xlu0 %v8074, %s8079
        %v8081 = vpop.permute.xlu0 %8080
        %s8083 = sor.u32 256, 16
        %8084 = vbcast.lane.b32.xlu0 %v8074, %s8083
        %v8085 = vpop.permute.xlu0 %8084
        %s8087 = sor.u32 256, 24
        %8088 = vbcast.lane.b32.xlu0 %v8074, %s8087
        %v8089 = vpop.permute.xlu0 %8088
        %v8090 = vlaneseq
        %v8091 = vshrl.u32 %v8090, 7
        %v8092 = vsub.s32 4, %v8091
        %v8093 = vrot.slane %v7859, %v8092
        %8095 = vbcast.lane.b32.xlu0 %v8093, 256
        %v8096 = vpop.permute.xlu0 %8095
        %s8098 = sor.u32 256, 8
        %8099 = vbcast.lane.b32.xlu0 %v8093, %s8098
        %v8100 = vpop.permute.xlu0 %8099
        %s8102 = sor.u32 256, 16
        %8103 = vbcast.lane.b32.xlu0 %v8093, %s8102
        %v8104 = vpop.permute.xlu0 %8103
        %s8106 = sor.u32 256, 24
        %8107 = vbcast.lane.b32.xlu0 %v8093, %s8106
        %v8108 = vpop.permute.xlu0 %8107
        %v8109 = vlaneseq
        %v8110 = vshrl.u32 %v8109, 7
        %v8111 = vsub.s32 5, %v8110
        %v8112 = vrot.slane %v7859, %v8111
        %8114 = vbcast.lane.b32.xlu0 %v8112, 256
        %v8115 = vpop.permute.xlu0 %8114
        %s8117 = sor.u32 256, 8
        %8118 = vbcast.lane.b32.xlu0 %v8112, %s8117
        %v8119 = vpop.permute.xlu0 %8118
        %s8121 = sor.u32 256, 16
        %8122 = vbcast.lane.b32.xlu0 %v8112, %s8121
        %v8123 = vpop.permute.xlu0 %8122
        %s8125 = sor.u32 256, 24
        %8126 = vbcast.lane.b32.xlu0 %v8112, %s8125
        %v8127 = vpop.permute.xlu0 %8126
        %v8128 = vlaneseq
        %v8129 = vshrl.u32 %v8128, 7
        %v8130 = vsub.s32 6, %v8129
        %v8131 = vrot.slane %v7859, %v8130
        %8133 = vbcast.lane.b32.xlu0 %v8131, 256
        %v8134 = vpop.permute.xlu0 %8133
        %s8136 = sor.u32 256, 8
        %8137 = vbcast.lane.b32.xlu0 %v8131, %s8136
        %v8138 = vpop.permute.xlu0 %8137
        %s8140 = sor.u32 256, 16
        %8141 = vbcast.lane.b32.xlu0 %v8131, %s8140
        %v8142 = vpop.permute.xlu0 %8141
        %s8144 = sor.u32 256, 24
        %8145 = vbcast.lane.b32.xlu0 %v8131, %s8144
        %v8146 = vpop.permute.xlu0 %8145
        %v8147 = vlaneseq
        %v8148 = vshrl.u32 %v8147, 7
        %v8149 = vsub.s32 7, %v8148
        %v8150 = vrot.slane %v7859, %v8149
        %8152 = vbcast.lane.b32.xlu0 %v8150, 256
        %v8153 = vpop.permute.xlu0 %8152
        %s8155 = sor.u32 256, 8
        %8156 = vbcast.lane.b32.xlu0 %v8150, %s8155
        %v8157 = vpop.permute.xlu0 %8156
        %s8159 = sor.u32 256, 16
        %8160 = vbcast.lane.b32.xlu0 %v8150, %s8159
        %v8161 = vpop.permute.xlu0 %8160
        %s8163 = sor.u32 256, 24
        %8164 = vbcast.lane.b32.xlu0 %v8150, %s8163
        %v8165 = vpop.permute.xlu0 %8164
        %v8167 = vsel %vm1129, %v7701, 0
        %v8170 = vsel %vm1129, %v7702, 0
        %v8173 = vsel %vm1129, %v7703, 0
        %v8176 = vsel %vm1129, %v7704, 0
        %v8179 = vsel %vm1129, %v7705, 0
        %v8182 = vsel %vm1129, %v7706, 0
        %v8185 = vsel %vm1129, %v7707, 0
        %v8188 = vsel %vm1129, %v7708, 0
        %8190 = vmatprep.subr.mxu0 0.0
        %8191 = vmatpush1.msra.mxu0 %v7868
        %8192 = vmatprep.subr.mxu0 0.0
        %8193 = vmatpush1.msra.mxu0 %v7872
        %8194 = vmatprep.subr.mxu0 0.0
        %8195 = vmatpush1.msra.mxu0 %v7876
        %8196 = vmatprep.subr.mxu0 0.0
        %8197 = vmatpush1.msra.mxu0 %v7880
        %8198 = vmatprep.subr.mxu0 0.0
        %8199 = vmatpush1.msra.mxu0 %v8020
        %8200 = vmatprep.subr.mxu0 0.0
        %8201 = vmatpush1.msra.mxu0 %v8024
        %8202 = vmatprep.subr.mxu0 0.0
        %8203 = vmatpush1.msra.mxu0 %v8028
        %8204 = vmatprep.subr.mxu0 0.0
        %8205 = vmatpush1.msra.mxu0 %v8032
        %8206 = vmatprep.subr.mxu0 0.0
        %8207 = vmatpush1.msra.mxu0 0.0
        %8208 = vmatprep.subr.mxu0 0.0
        %8209 = vmatpush1.msra.mxu0 0.0
        %8210 = vmatprep.subr.mxu0 0.0
        %8211 = vmatpush1.msra.mxu0 0.0
        %8212 = vmatprep.subr.mxu0 0.0
        %8213 = vmatpush1.msra.mxu0 0.0
        %8214 = vmatprep.subr.mxu0 0.0
        %8215 = vmatpush1.msra.mxu0 0.0
        %8216 = vmatprep.subr.mxu0 0.0
        %8217 = vmatpush1.msra.mxu0 0.0
        %8218 = vmatprep.subr.mxu0 0.0
        %8219 = vmatpush1.msra.mxu0 0.0
        %8220 = vmatprep.subr.mxu0 0.0
        %8221 = vmatpush1.msra.mxu0 0.0
        %8222 = vmatprep.subr.mxu0 0.0
        %8223 = vmatpush1.msra.mxu0 0.0
        %8224 = vmatprep.subr.mxu0 0.0
        %8225 = vmatpush1.msra.mxu0 0.0
        %8226 = vmatprep.subr.mxu0 0.0
        %8227 = vmatpush1.msra.mxu0 0.0
        %8228 = vmatprep.subr.mxu0 0.0
        %8229 = vmatpush1.msra.mxu0 0.0
        %8230 = vmatprep.subr.mxu0 0.0
        %8231 = vmatpush1.msra.mxu0 0.0
        %8232 = vmatprep.subr.mxu0 0.0
        %8233 = vmatpush1.msra.mxu0 0.0
        %8234 = vmatprep.subr.mxu0 0.0
        %8235 = vmatpush1.msra.mxu0 0.0
        %8236 = vmatprep.subr.mxu0 0.0
        %8237 = vmatpush1.msra.mxu0 0.0
        %8238 = vmatprep.subr.mxu0 0.0
        %8239 = vmatpush1.msra.mxu0 0.0
        %8240 = vmatprep.subr.mxu0 0.0
        %8241 = vmatpush1.msra.mxu0 0.0
        %8242 = vmatprep.subr.mxu0 0.0
        %8243 = vmatpush1.msra.mxu0 0.0
        %8244 = vmatprep.subr.mxu0 0.0
        %8245 = vmatpush1.msra.mxu0 0.0
        %8246 = vmatprep.subr.mxu0 0.0
        %8247 = vmatpush1.msra.mxu0 0.0
        %8248 = vmatprep.subr.mxu0 0.0
        %8249 = vmatpush1.msra.mxu0 0.0
        %8250 = vmatprep.subr.mxu0 0.0
        %8251 = vmatpush1.msra.mxu0 0.0
        %8252 = vmatprep.subr.mxu0 0.0
        %8253 = vmatpush1.msra.mxu0 0.0
        %8254 = vmatprep.mubr.f32.mxu0 0.0
        %8255 = vmatmul.mubr.f32.gmra.mrb[0].mxu0 %v8167
        %v8256 = vpop.f32.mrb[0].mxu0
        %v8257 = vadd.f32 0.0, %v8256
        %v8258 = vpop.f32.mrb[0].mxu0
        %8259 = vmatprep.mubr.f32.mxu0 0.0
        %8260 = vmatmul.mubr.f32.gmra.mrb[0].mxu0 %v8170
        %v8261 = vpop.f32.mrb[0].mxu0
        %v8262 = vadd.f32 0.0, %v8261
        %v8263 = vpop.f32.mrb[0].mxu0
        %8264 = vmatprep.mubr.f32.mxu0 0.0
        %8265 = vmatmul.mubr.f32.gmra.mrb[0].mxu0 %v8173
        %v8266 = vpop.f32.mrb[0].mxu0
        %v8267 = vadd.f32 0.0, %v8266
        %v8268 = vpop.f32.mrb[0].mxu0
        %8269 = vmatprep.mubr.f32.mxu0 0.0
        %8270 = vmatmul.mubr.f32.gmra.mrb[0].mxu0 %v8176
        %v8271 = vpop.f32.mrb[0].mxu0
        %v8272 = vadd.f32 0.0, %v8271
        %v8273 = vpop.f32.mrb[0].mxu0
        %8274 = vmatprep.mubr.f32.mxu0 0.0
        %8275 = vmatmul.mubr.f32.gmra.mrb[0].mxu0 %v8179
        %v8276 = vpop.f32.mrb[0].mxu0
        %v8277 = vadd.f32 0.0, %v8276
        %v8278 = vpop.f32.mrb[0].mxu0
        %8279 = vmatprep.mubr.f32.mxu0 0.0
        %8280 = vmatmul.mubr.f32.gmra.mrb[0].mxu0 %v8182
        %v8281 = vpop.f32.mrb[0].mxu0
        %v8282 = vadd.f32 0.0, %v8281
        %v8283 = vpop.f32.mrb[0].mxu0
        %8284 = vmatprep.mubr.f32.mxu0 0.0
        %8285 = vmatmul.mubr.f32.gmra.mrb[0].mxu0 %v8185
        %v8286 = vpop.f32.mrb[0].mxu0
        %v8287 = vadd.f32 0.0, %v8286
        %v8288 = vpop.f32.mrb[0].mxu0
        %8289 = vmatprep.mubr.f32.mxu0 0.0
        %8290 = vmatmul.mubr.f32.gmra.mrb[0].mxu0 %v8188
        %v8291 = vpop.f32.mrb[0].mxu0
        %v8292 = vadd.f32 0.0, %v8291
        %v8293 = vpop.f32.mrb[0].mxu0
        %8294 = vdwg.mxu0
        %v8296 = vsel %vm1129, %v7709, 0
        %v8299 = vsel %vm1129, %v7710, 0
        %v8302 = vsel %vm1129, %v7711, 0
        %v8305 = vsel %vm1129, %v7712, 0
        %v8308 = vsel %vm1129, %v7713, 0
        %v8311 = vsel %vm1129, %v7714, 0
        %v8314 = vsel %vm1129, %v7715, 0
        %v8317 = vsel %vm1129, %v7716, 0
        %8319 = vmatprep.subr.mxu0 0.0
        %8320 = vmatpush1.msra.mxu0 %v7887
        %8321 = vmatprep.subr.mxu0 0.0
        %8322 = vmatpush1.msra.mxu0 %v7891
        %8323 = vmatprep.subr.mxu0 0.0
        %8324 = vmatpush1.msra.mxu0 %v7895
        %8325 = vmatprep.subr.mxu0 0.0
        %8326 = vmatpush1.msra.mxu0 %v7899
        %8327 = vmatprep.subr.mxu0 0.0
        %8328 = vmatpush1.msra.mxu0 %v8039
        %8329 = vmatprep.subr.mxu0 0.0
        %8330 = vmatpush1.msra.mxu0 %v8043
        %8331 = vmatprep.subr.mxu0 0.0
        %8332 = vmatpush1.msra.mxu0 %v8047
        %8333 = vmatprep.subr.mxu0 0.0
        %8334 = vmatpush1.msra.mxu0 %v8051
        %8335 = vmatprep.subr.mxu0 0.0
        %8336 = vmatpush1.msra.mxu0 0.0
        %8337 = vmatprep.subr.mxu0 0.0
        %8338 = vmatpush1.msra.mxu0 0.0
        %8339 = vmatprep.subr.mxu0 0.0
        %8340 = vmatpush1.msra.mxu0 0.0
        %8341 = vmatprep.subr.mxu0 0.0
        %8342 = vmatpush1.msra.mxu0 0.0
        %8343 = vmatprep.subr.mxu0 0.0
        %8344 = vmatpush1.msra.mxu0 0.0
        %8345 = vmatprep.subr.mxu0 0.0
        %8346 = vmatpush1.msra.mxu0 0.0
        %8347 = vmatprep.subr.mxu0 0.0
        %8348 = vmatpush1.msra.mxu0 0.0
        %8349 = vmatprep.subr.mxu0 0.0
        %8350 = vmatpush1.msra.mxu0 0.0
        %8351 = vmatprep.subr.mxu0 0.0
        %8352 = vmatpush1.msra.mxu0 0.0
        %8353 = vmatprep.subr.mxu0 0.0
        %8354 = vmatpush1.msra.mxu0 0.0
        %8355 = vmatprep.subr.mxu0 0.0
        %8356 = vmatpush1.msra.mxu0 0.0
        %8357 = vmatprep.subr.mxu0 0.0
        %8358 = vmatpush1.msra.mxu0 0.0
        %8359 = vmatprep.subr.mxu0 0.0
        %8360 = vmatpush1.msra.mxu0 0.0
        %8361 = vmatprep.subr.mxu0 0.0
        %8362 = vmatpush1.msra.mxu0 0.0
        %8363 = vmatprep.subr.mxu0 0.0
        %8364 = vmatpush1.msra.mxu0 0.0
        %8365 = vmatprep.subr.mxu0 0.0
        %8366 = vmatpush1.msra.mxu0 0.0
        %8367 = vmatprep.subr.mxu0 0.0
        %8368 = vmatpush1.msra.mxu0 0.0
        %8369 = vmatprep.subr.mxu0 0.0
        %8370 = vmatpush1.msra.mxu0 0.0
        %8371 = vmatprep.subr.mxu0 0.0
        %8372 = vmatpush1.msra.mxu0 0.0
        %8373 = vmatprep.subr.mxu0 0.0
        %8374 = vmatpush1.msra.mxu0 0.0
        %8375 = vmatprep.subr.mxu0 0.0
        %8376 = vmatpush1.msra.mxu0 0.0
        %8377 = vmatprep.subr.mxu0 0.0
        %8378 = vmatpush1.msra.mxu0 0.0
        %8379 = vmatprep.subr.mxu0 0.0
        %8380 = vmatpush1.msra.mxu0 0.0
        %8381 = vmatprep.subr.mxu0 0.0
        %8382 = vmatpush1.msra.mxu0 0.0
        %8383 = vmatprep.mubr.f32.mxu0 0.0
        %8384 = vmatmul.mubr.f32.gmra.mrb[0].mxu0 %v8296
        %v8385 = vpop.f32.mrb[0].mxu0
        %v8386 = vadd.f32 0.0, %v8385
        %v8387 = vpop.f32.mrb[0].mxu0
        %8388 = vmatprep.mubr.f32.mxu0 0.0
        %8389 = vmatmul.mubr.f32.gmra.mrb[0].mxu0 %v8299
        %v8390 = vpop.f32.mrb[0].mxu0
        %v8391 = vadd.f32 0.0, %v8390
        %v8392 = vpop.f32.mrb[0].mxu0
        %8393 = vmatprep.mubr.f32.mxu0 0.0
        %8394 = vmatmul.mubr.f32.gmra.mrb[0].mxu0 %v8302
        %v8395 = vpop.f32.mrb[0].mxu0
        %v8396 = vadd.f32 0.0, %v8395
        %v8397 = vpop.f32.mrb[0].mxu0
        %8398 = vmatprep.mubr.f32.mxu0 0.0
        %8399 = vmatmul.mubr.f32.gmra.mrb[0].mxu0 %v8305
        %v8400 = vpop.f32.mrb[0].mxu0
        %v8401 = vadd.f32 0.0, %v8400
        %v8402 = vpop.f32.mrb[0].mxu0
        %8403 = vmatprep.mubr.f32.mxu0 0.0
        %8404 = vmatmul.mubr.f32.gmra.mrb[0].mxu0 %v8308
        %v8405 = vpop.f32.mrb[0].mxu0
        %v8406 = vadd.f32 0.0, %v8405
        %v8407 = vpop.f32.mrb[0].mxu0
        %8408 = vmatprep.mubr.f32.mxu0 0.0
        %8409 = vmatmul.mubr.f32.gmra.mrb[0].mxu0 %v8311
        %v8410 = vpop.f32.mrb[0].mxu0
        %v8411 = vadd.f32 0.0, %v8410
        %v8412 = vpop.f32.mrb[0].mxu0
        %8413 = vmatprep.mubr.f32.mxu0 0.0
        %8414 = vmatmul.mubr.f32.gmra.mrb[0].mxu0 %v8314
        %v8415 = vpop.f32.mrb[0].mxu0
        %v8416 = vadd.f32 0.0, %v8415
        %v8417 = vpop.f32.mrb[0].mxu0
        %8418 = vmatprep.mubr.f32.mxu0 0.0
        %8419 = vmatmul.mubr.f32.gmra.mrb[0].mxu0 %v8317
        %v8420 = vpop.f32.mrb[0].mxu0
        %v8421 = vadd.f32 0.0, %v8420
        %v8422 = vpop.f32.mrb[0].mxu0
        %8423 = vdwg.mxu0
        %v8425 = vsel %vm1129, %v7717, 0
        %v8428 = vsel %vm1129, %v7718, 0
        %v8431 = vsel %vm1129, %v7719, 0
        %v8434 = vsel %vm1129, %v7720, 0
        %v8437 = vsel %vm1129, %v7721, 0
        %v8440 = vsel %vm1129, %v7722, 0
        %v8443 = vsel %vm1129, %v7723, 0
        %v8446 = vsel %vm1129, %v7724, 0
        %8448 = vmatprep.subr.mxu0 0.0
        %8449 = vmatpush1.msra.mxu0 %v7906
        %8450 = vmatprep.subr.mxu0 0.0
        %8451 = vmatpush1.msra.mxu0 %v7910
        %8452 = vmatprep.subr.mxu0 0.0
        %8453 = vmatpush1.msra.mxu0 %v7914
        %8454 = vmatprep.subr.mxu0 0.0
        %8455 = vmatpush1.msra.mxu0 %v7918
        %8456 = vmatprep.subr.mxu0 0.0
        %8457 = vmatpush1.msra.mxu0 %v8058
        %8458 = vmatprep.subr.mxu0 0.0
        %8459 = vmatpush1.msra.mxu0 %v8062
        %8460 = vmatprep.subr.mxu0 0.0
        %8461 = vmatpush1.msra.mxu0 %v8066
        %8462 = vmatprep.subr.mxu0 0.0
        %8463 = vmatpush1.msra.mxu0 %v8070
        %8464 = vmatprep.subr.mxu0 0.0
        %8465 = vmatpush1.msra.mxu0 0.0
        %8466 = vmatprep.subr.mxu0 0.0
        %8467 = vmatpush1.msra.mxu0 0.0
        %8468 = vmatprep.subr.mxu0 0.0
        %8469 = vmatpush1.msra.mxu0 0.0
        %8470 = vmatprep.subr.mxu0 0.0
        %8471 = vmatpush1.msra.mxu0 0.0
        %8472 = vmatprep.subr.mxu0 0.0
        %8473 = vmatpush1.msra.mxu0 0.0
        %8474 = vmatprep.subr.mxu0 0.0
        %8475 = vmatpush1.msra.mxu0 0.0
        %8476 = vmatprep.subr.mxu0 0.0
        %8477 = vmatpush1.msra.mxu0 0.0
        %8478 = vmatprep.subr.mxu0 0.0
        %8479 = vmatpush1.msra.mxu0 0.0
        %8480 = vmatprep.subr.mxu0 0.0
        %8481 = vmatpush1.msra.mxu0 0.0
        %8482 = vmatprep.subr.mxu0 0.0
        %8483 = vmatpush1.msra.mxu0 0.0
        %8484 = vmatprep.subr.mxu0 0.0
        %8485 = vmatpush1.msra.mxu0 0.0
        %8486 = vmatprep.subr.mxu0 0.0
        %8487 = vmatpush1.msra.mxu0 0.0
        %8488 = vmatprep.subr.mxu0 0.0
        %8489 = vmatpush1.msra.mxu0 0.0
        %8490 = vmatprep.subr.mxu0 0.0
        %8491 = vmatpush1.msra.mxu0 0.0
        %8492 = vmatprep.subr.mxu0 0.0
        %8493 = vmatpush1.msra.mxu0 0.0
        %8494 = vmatprep.subr.mxu0 0.0
        %8495 = vmatpush1.msra.mxu0 0.0
        %8496 = vmatprep.subr.mxu0 0.0
        %8497 = vmatpush1.msra.mxu0 0.0
        %8498 = vmatprep.subr.mxu0 0.0
        %8499 = vmatpush1.msra.mxu0 0.0
        %8500 = vmatprep.subr.mxu0 0.0
        %8501 = vmatpush1.msra.mxu0 0.0
        %8502 = vmatprep.subr.mxu0 0.0
        %8503 = vmatpush1.msra.mxu0 0.0
        %8504 = vmatprep.subr.mxu0 0.0
        %8505 = vmatpush1.msra.mxu0 0.0
        %8506 = vmatprep.subr.mxu0 0.0
        %8507 = vmatpush1.msra.mxu0 0.0
        %8508 = vmatprep.subr.mxu0 0.0
        %8509 = vmatpush1.msra.mxu0 0.0
        %8510 = vmatprep.subr.mxu0 0.0
        %8511 = vmatpush1.msra.mxu0 0.0
        %8512 = vmatprep.mubr.f32.mxu0 0.0
        %8513 = vmatmul.mubr.f32.gmra.mrb[0].mxu0 %v8425
        %v8514 = vpop.f32.mrb[0].mxu0
        %v8515 = vadd.f32 0.0, %v8514
        %v8516 = vpop.f32.mrb[0].mxu0
        %8517 = vmatprep.mubr.f32.mxu0 0.0
        %8518 = vmatmul.mubr.f32.gmra.mrb[0].mxu0 %v8428
        %v8519 = vpop.f32.mrb[0].mxu0
        %v8520 = vadd.f32 0.0, %v8519
        %v8521 = vpop.f32.mrb[0].mxu0
        %8522 = vmatprep.mubr.f32.mxu0 0.0
        %8523 = vmatmul.mubr.f32.gmra.mrb[0].mxu0 %v8431
        %v8524 = vpop.f32.mrb[0].mxu0
        %v8525 = vadd.f32 0.0, %v8524
        %v8526 = vpop.f32.mrb[0].mxu0
        %8527 = vmatprep.mubr.f32.mxu0 0.0
        %8528 = vmatmul.mubr.f32.gmra.mrb[0].mxu0 %v8434
        %v8529 = vpop.f32.mrb[0].mxu0
        %v8530 = vadd.f32 0.0, %v8529
        %v8531 = vpop.f32.mrb[0].mxu0
        %8532 = vmatprep.mubr.f32.mxu0 0.0
        %8533 = vmatmul.mubr.f32.gmra.mrb[0].mxu0 %v8437
        %v8534 = vpop.f32.mrb[0].mxu0
        %v8535 = vadd.f32 0.0, %v8534
        %v8536 = vpop.f32.mrb[0].mxu0
        %8537 = vmatprep.mubr.f32.mxu0 0.0
        %8538 = vmatmul.mubr.f32.gmra.mrb[0].mxu0 %v8440
        %v8539 = vpop.f32.mrb[0].mxu0
        %v8540 = vadd.f32 0.0, %v8539
        %v8541 = vpop.f32.mrb[0].mxu0
        %8542 = vmatprep.mubr.f32.mxu0 0.0
        %8543 = vmatmul.mubr.f32.gmra.mrb[0].mxu0 %v8443
        %v8544 = vpop.f32.mrb[0].mxu0
        %v8545 = vadd.f32 0.0, %v8544
        %v8546 = vpop.f32.mrb[0].mxu0
        %8547 = vmatprep.mubr.f32.mxu0 0.0
        %8548 = vmatmul.mubr.f32.gmra.mrb[0].mxu0 %v8446
        %v8549 = vpop.f32.mrb[0].mxu0
        %v8550 = vadd.f32 0.0, %v8549
        %v8551 = vpop.f32.mrb[0].mxu0
        %8552 = vdwg.mxu0
        %v8554 = vsel %vm1129, %v7725, 0
        %v8557 = vsel %vm1129, %v7726, 0
        %v8560 = vsel %vm1129, %v7727, 0
        %v8563 = vsel %vm1129, %v7728, 0
        %v8566 = vsel %vm1129, %v7729, 0
        %v8569 = vsel %vm1129, %v7730, 0
        %v8572 = vsel %vm1129, %v7731, 0
        %v8575 = vsel %vm1129, %v7732, 0
        %8577 = vmatprep.subr.mxu0 0.0
        %8578 = vmatpush1.msra.mxu0 %v7925
        %8579 = vmatprep.subr.mxu0 0.0
        %8580 = vmatpush1.msra.mxu0 %v7929
        %8581 = vmatprep.subr.mxu0 0.0
        %8582 = vmatpush1.msra.mxu0 %v7933
        %8583 = vmatprep.subr.mxu0 0.0
        %8584 = vmatpush1.msra.mxu0 %v7937
        %8585 = vmatprep.subr.mxu0 0.0
        %8586 = vmatpush1.msra.mxu0 %v8077
        %8587 = vmatprep.subr.mxu0 0.0
        %8588 = vmatpush1.msra.mxu0 %v8081
        %8589 = vmatprep.subr.mxu0 0.0
        %8590 = vmatpush1.msra.mxu0 %v8085
        %8591 = vmatprep.subr.mxu0 0.0
        %8592 = vmatpush1.msra.mxu0 %v8089
        %8593 = vmatprep.subr.mxu0 0.0
        %8594 = vmatpush1.msra.mxu0 0.0
        %8595 = vmatprep.subr.mxu0 0.0
        %8596 = vmatpush1.msra.mxu0 0.0
        %8597 = vmatprep.subr.mxu0 0.0
        %8598 = vmatpush1.msra.mxu0 0.0
        %8599 = vmatprep.subr.mxu0 0.0
        %8600 = vmatpush1.msra.mxu0 0.0
        %8601 = vmatprep.subr.mxu0 0.0
        %8602 = vmatpush1.msra.mxu0 0.0
        %8603 = vmatprep.subr.mxu0 0.0
        %8604 = vmatpush1.msra.mxu0 0.0
        %8605 = vmatprep.subr.mxu0 0.0
        %8606 = vmatpush1.msra.mxu0 0.0
        %8607 = vmatprep.subr.mxu0 0.0
        %8608 = vmatpush1.msra.mxu0 0.0
        %8609 = vmatprep.subr.mxu0 0.0
        %8610 = vmatpush1.msra.mxu0 0.0
        %8611 = vmatprep.subr.mxu0 0.0
        %8612 = vmatpush1.msra.mxu0 0.0
        %8613 = vmatprep.subr.mxu0 0.0
        %8614 = vmatpush1.msra.mxu0 0.0
        %8615 = vmatprep.subr.mxu0 0.0
        %8616 = vmatpush1.msra.mxu0 0.0
        %8617 = vmatprep.subr.mxu0 0.0
        %8618 = vmatpush1.msra.mxu0 0.0
        %8619 = vmatprep.subr.mxu0 0.0
        %8620 = vmatpush1.msra.mxu0 0.0
        %8621 = vmatprep.subr.mxu0 0.0
        %8622 = vmatpush1.msra.mxu0 0.0
        %8623 = vmatprep.subr.mxu0 0.0
        %8624 = vmatpush1.msra.mxu0 0.0
        %8625 = vmatprep.subr.mxu0 0.0
        %8626 = vmatpush1.msra.mxu0 0.0
        %8627 = vmatprep.subr.mxu0 0.0
        %8628 = vmatpush1.msra.mxu0 0.0
        %8629 = vmatprep.subr.mxu0 0.0
        %8630 = vmatpush1.msra.mxu0 0.0
        %8631 = vmatprep.subr.mxu0 0.0
        %8632 = vmatpush1.msra.mxu0 0.0
        %8633 = vmatprep.subr.mxu0 0.0
        %8634 = vmatpush1.msra.mxu0 0.0
        %8635 = vmatprep.subr.mxu0 0.0
        %8636 = vmatpush1.msra.mxu0 0.0
        %8637 = vmatprep.subr.mxu0 0.0
        %8638 = vmatpush1.msra.mxu0 0.0
        %8639 = vmatprep.subr.mxu0 0.0
        %8640 = vmatpush1.msra.mxu0 0.0
        %8641 = vmatprep.mubr.f32.mxu0 0.0
        %8642 = vmatmul.mubr.f32.gmra.mrb[0].mxu0 %v8554
        %v8643 = vpop.f32.mrb[0].mxu0
        %v8644 = vadd.f32 0.0, %v8643
        %v8645 = vpop.f32.mrb[0].mxu0
        %8646 = vmatprep.mubr.f32.mxu0 0.0
        %8647 = vmatmul.mubr.f32.gmra.mrb[0].mxu0 %v8557
        %v8648 = vpop.f32.mrb[0].mxu0
        %v8649 = vadd.f32 0.0, %v8648
        %v8650 = vpop.f32.mrb[0].mxu0
        %8651 = vmatprep.mubr.f32.mxu0 0.0
        %8652 = vmatmul.mubr.f32.gmra.mrb[0].mxu0 %v8560
        %v8653 = vpop.f32.mrb[0].mxu0
        %v8654 = vadd.f32 0.0, %v8653
        %v8655 = vpop.f32.mrb[0].mxu0
        %8656 = vmatprep.mubr.f32.mxu0 0.0
        %8657 = vmatmul.mubr.f32.gmra.mrb[0].mxu0 %v8563
        %v8658 = vpop.f32.mrb[0].mxu0
        %v8659 = vadd.f32 0.0, %v8658
        %v8660 = vpop.f32.mrb[0].mxu0
        %8661 = vmatprep.mubr.f32.mxu0 0.0
        %8662 = vmatmul.mubr.f32.gmra.mrb[0].mxu0 %v8566
        %v8663 = vpop.f32.mrb[0].mxu0
        %v8664 = vadd.f32 0.0, %v8663
        %v8665 = vpop.f32.mrb[0].mxu0
        %8666 = vmatprep.mubr.f32.mxu0 0.0
        %8667 = vmatmul.mubr.f32.gmra.mrb[0].mxu0 %v8569
        %v8668 = vpop.f32.mrb[0].mxu0
        %v8669 = vadd.f32 0.0, %v8668
        %v8670 = vpop.f32.mrb[0].mxu0
        %8671 = vmatprep.mubr.f32.mxu0 0.0
        %8672 = vmatmul.mubr.f32.gmra.mrb[0].mxu0 %v8572
        %v8673 = vpop.f32.mrb[0].mxu0
        %v8674 = vadd.f32 0.0, %v8673
        %v8675 = vpop.f32.mrb[0].mxu0
        %8676 = vmatprep.mubr.f32.mxu0 0.0
        %8677 = vmatmul.mubr.f32.gmra.mrb[0].mxu0 %v8575
        %v8678 = vpop.f32.mrb[0].mxu0
        %v8679 = vadd.f32 0.0, %v8678
        %v8680 = vpop.f32.mrb[0].mxu0
        %8681 = vdwg.mxu0
        %v8683 = vsel %vm1129, %v7733, 0
        %v8686 = vsel %vm1129, %v7734, 0
        %v8689 = vsel %vm1129, %v7735, 0
        %v8692 = vsel %vm1129, %v7736, 0
        %v8695 = vsel %vm1129, %v7737, 0
        %v8698 = vsel %vm1129, %v7738, 0
        %v8701 = vsel %vm1129, %v7739, 0
        %v8704 = vsel %vm1129, %v7740, 0
        %8706 = vmatprep.subr.mxu0 0.0
        %8707 = vmatpush1.msra.mxu0 %v7944
        %8708 = vmatprep.subr.mxu0 0.0
        %8709 = vmatpush1.msra.mxu0 %v7948
        %8710 = vmatprep.subr.mxu0 0.0
        %8711 = vmatpush1.msra.mxu0 %v7952
        %8712 = vmatprep.subr.mxu0 0.0
        %8713 = vmatpush1.msra.mxu0 %v7956
        %8714 = vmatprep.subr.mxu0 0.0
        %8715 = vmatpush1.msra.mxu0 %v8096
        %8716 = vmatprep.subr.mxu0 0.0
        %8717 = vmatpush1.msra.mxu0 %v8100
        %8718 = vmatprep.subr.mxu0 0.0
        %8719 = vmatpush1.msra.mxu0 %v8104
        %8720 = vmatprep.subr.mxu0 0.0
        %8721 = vmatpush1.msra.mxu0 %v8108
        %8722 = vmatprep.subr.mxu0 0.0
        %8723 = vmatpush1.msra.mxu0 0.0
        %8724 = vmatprep.subr.mxu0 0.0
        %8725 = vmatpush1.msra.mxu0 0.0
        %8726 = vmatprep.subr.mxu0 0.0
        %8727 = vmatpush1.msra.mxu0 0.0
        %8728 = vmatprep.subr.mxu0 0.0
        %8729 = vmatpush1.msra.mxu0 0.0
        %8730 = vmatprep.subr.mxu0 0.0
        %8731 = vmatpush1.msra.mxu0 0.0
        %8732 = vmatprep.subr.mxu0 0.0
        %8733 = vmatpush1.msra.mxu0 0.0
        %8734 = vmatprep.subr.mxu0 0.0
        %8735 = vmatpush1.msra.mxu0 0.0
        %8736 = vmatprep.subr.mxu0 0.0
        %8737 = vmatpush1.msra.mxu0 0.0
        %8738 = vmatprep.subr.mxu0 0.0
        %8739 = vmatpush1.msra.mxu0 0.0
        %8740 = vmatprep.subr.mxu0 0.0
        %8741 = vmatpush1.msra.mxu0 0.0
        %8742 = vmatprep.subr.mxu0 0.0
        %8743 = vmatpush1.msra.mxu0 0.0
        %8744 = vmatprep.subr.mxu0 0.0
        %8745 = vmatpush1.msra.mxu0 0.0
        %8746 = vmatprep.subr.mxu0 0.0
        %8747 = vmatpush1.msra.mxu0 0.0
        %8748 = vmatprep.subr.mxu0 0.0
        %8749 = vmatpush1.msra.mxu0 0.0
        %8750 = vmatprep.subr.mxu0 0.0
        %8751 = vmatpush1.msra.mxu0 0.0
        %8752 = vmatprep.subr.mxu0 0.0
        %8753 = vmatpush1.msra.mxu0 0.0
        %8754 = vmatprep.subr.mxu0 0.0
        %8755 = vmatpush1.msra.mxu0 0.0
        %8756 = vmatprep.subr.mxu0 0.0
        %8757 = vmatpush1.msra.mxu0 0.0
        %8758 = vmatprep.subr.mxu0 0.0
        %8759 = vmatpush1.msra.mxu0 0.0
        %8760 = vmatprep.subr.mxu0 0.0
        %8761 = vmatpush1.msra.mxu0 0.0
        %8762 = vmatprep.subr.mxu0 0.0
        %8763 = vmatpush1.msra.mxu0 0.0
        %8764 = vmatprep.subr.mxu0 0.0
        %8765 = vmatpush1.msra.mxu0 0.0
        %8766 = vmatprep.subr.mxu0 0.0
        %8767 = vmatpush1.msra.mxu0 0.0
        %8768 = vmatprep.subr.mxu0 0.0
        %8769 = vmatpush1.msra.mxu0 0.0
        %8770 = vmatprep.mubr.f32.mxu0 0.0
        %8771 = vmatmul.mubr.f32.gmra.mrb[0].mxu0 %v8683
        %v8772 = vpop.f32.mrb[0].mxu0
        %v8773 = vadd.f32 0.0, %v8772
        %v8774 = vpop.f32.mrb[0].mxu0
        %8775 = vmatprep.mubr.f32.mxu0 0.0
        %8776 = vmatmul.mubr.f32.gmra.mrb[0].mxu0 %v8686
        %v8777 = vpop.f32.mrb[0].mxu0
        %v8778 = vadd.f32 0.0, %v8777
        %v8779 = vpop.f32.mrb[0].mxu0
        %8780 = vmatprep.mubr.f32.mxu0 0.0
        %8781 = vmatmul.mubr.f32.gmra.mrb[0].mxu0 %v8689
        %v8782 = vpop.f32.mrb[0].mxu0
        %v8783 = vadd.f32 0.0, %v8782
        %v8784 = vpop.f32.mrb[0].mxu0
        %8785 = vmatprep.mubr.f32.mxu0 0.0
        %8786 = vmatmul.mubr.f32.gmra.mrb[0].mxu0 %v8692
        %v8787 = vpop.f32.mrb[0].mxu0
        %v8788 = vadd.f32 0.0, %v8787
        %v8789 = vpop.f32.mrb[0].mxu0
        %8790 = vmatprep.mubr.f32.mxu0 0.0
        %8791 = vmatmul.mubr.f32.gmra.mrb[0].mxu0 %v8695
        %v8792 = vpop.f32.mrb[0].mxu0
        %v8793 = vadd.f32 0.0, %v8792
        %v8794 = vpop.f32.mrb[0].mxu0
        %8795 = vmatprep.mubr.f32.mxu0 0.0
        %8796 = vmatmul.mubr.f32.gmra.mrb[0].mxu0 %v8698
        %v8797 = vpop.f32.mrb[0].mxu0
        %v8798 = vadd.f32 0.0, %v8797
        %v8799 = vpop.f32.mrb[0].mxu0
        %8800 = vmatprep.mubr.f32.mxu0 0.0
        %8801 = vmatmul.mubr.f32.gmra.mrb[0].mxu0 %v8701
        %v8802 = vpop.f32.mrb[0].mxu0
        %v8803 = vadd.f32 0.0, %v8802
        %v8804 = vpop.f32.mrb[0].mxu0
        %8805 = vmatprep.mubr.f32.mxu0 0.0
        %8806 = vmatmul.mubr.f32.gmra.mrb[0].mxu0 %v8704
        %v8807 = vpop.f32.mrb[0].mxu0
        %v8808 = vadd.f32 0.0, %v8807
        %v8809 = vpop.f32.mrb[0].mxu0
        %8810 = vdwg.mxu0
        %v8812 = vsel %vm1129, %v7741, 0
        %v8815 = vsel %vm1129, %v7742, 0
        %v8818 = vsel %vm1129, %v7743, 0
        %v8821 = vsel %vm1129, %v7744, 0
        %v8824 = vsel %vm1129, %v7745, 0
        %v8827 = vsel %vm1129, %v7746, 0
        %v8830 = vsel %vm1129, %v7747, 0
        %v8833 = vsel %vm1129, %v7748, 0
        %8835 = vmatprep.subr.mxu0 0.0
        %8836 = vmatpush1.msra.mxu0 %v7963
        %8837 = vmatprep.subr.mxu0 0.0
        %8838 = vmatpush1.msra.mxu0 %v7967
        %8839 = vmatprep.subr.mxu0 0.0
        %8840 = vmatpush1.msra.mxu0 %v7971
        %8841 = vmatprep.subr.mxu0 0.0
        %8842 = vmatpush1.msra.mxu0 %v7975
        %8843 = vmatprep.subr.mxu0 0.0
        %8844 = vmatpush1.msra.mxu0 %v8115
        %8845 = vmatprep.subr.mxu0 0.0
        %8846 = vmatpush1.msra.mxu0 %v8119
        %8847 = vmatprep.subr.mxu0 0.0
        %8848 = vmatpush1.msra.mxu0 %v8123
        %8849 = vmatprep.subr.mxu0 0.0
        %8850 = vmatpush1.msra.mxu0 %v8127
        %8851 = vmatprep.subr.mxu0 0.0
        %8852 = vmatpush1.msra.mxu0 0.0
        %8853 = vmatprep.subr.mxu0 0.0
        %8854 = vmatpush1.msra.mxu0 0.0
        %8855 = vmatprep.subr.mxu0 0.0
        %8856 = vmatpush1.msra.mxu0 0.0
        %8857 = vmatprep.subr.mxu0 0.0
        %8858 = vmatpush1.msra.mxu0 0.0
        %8859 = vmatprep.subr.mxu0 0.0
        %8860 = vmatpush1.msra.mxu0 0.0
        %8861 = vmatprep.subr.mxu0 0.0
        %8862 = vmatpush1.msra.mxu0 0.0
        %8863 = vmatprep.subr.mxu0 0.0
        %8864 = vmatpush1.msra.mxu0 0.0
        %8865 = vmatprep.subr.mxu0 0.0
        %8866 = vmatpush1.msra.mxu0 0.0
        %8867 = vmatprep.subr.mxu0 0.0
        %8868 = vmatpush1.msra.mxu0 0.0
        %8869 = vmatprep.subr.mxu0 0.0
        %8870 = vmatpush1.msra.mxu0 0.0
        %8871 = vmatprep.subr.mxu0 0.0
        %8872 = vmatpush1.msra.mxu0 0.0
        %8873 = vmatprep.subr.mxu0 0.0
        %8874 = vmatpush1.msra.mxu0 0.0
        %8875 = vmatprep.subr.mxu0 0.0
        %8876 = vmatpush1.msra.mxu0 0.0
        %8877 = vmatprep.subr.mxu0 0.0
        %8878 = vmatpush1.msra.mxu0 0.0
        %8879 = vmatprep.subr.mxu0 0.0
        %8880 = vmatpush1.msra.mxu0 0.0
        %8881 = vmatprep.subr.mxu0 0.0
        %8882 = vmatpush1.msra.mxu0 0.0
        %8883 = vmatprep.subr.mxu0 0.0
        %8884 = vmatpush1.msra.mxu0 0.0
        %8885 = vmatprep.subr.mxu0 0.0
        %8886 = vmatpush1.msra.mxu0 0.0
        %8887 = vmatprep.subr.mxu0 0.0
        %8888 = vmatpush1.msra.mxu0 0.0
        %8889 = vmatprep.subr.mxu0 0.0
        %8890 = vmatpush1.msra.mxu0 0.0
        %8891 = vmatprep.subr.mxu0 0.0
        %8892 = vmatpush1.msra.mxu0 0.0
        %8893 = vmatprep.subr.mxu0 0.0
        %8894 = vmatpush1.msra.mxu0 0.0
        %8895 = vmatprep.subr.mxu0 0.0
        %8896 = vmatpush1.msra.mxu0 0.0
        %8897 = vmatprep.subr.mxu0 0.0
        %8898 = vmatpush1.msra.mxu0 0.0
        %8899 = vmatprep.mubr.f32.mxu0 0.0
        %8900 = vmatmul.mubr.f32.gmra.mrb[0].mxu0 %v8812
        %v8901 = vpop.f32.mrb[0].mxu0
        %v8902 = vadd.f32 0.0, %v8901
        %v8903 = vpop.f32.mrb[0].mxu0
        %8904 = vmatprep.mubr.f32.mxu0 0.0
        %8905 = vmatmul.mubr.f32.gmra.mrb[0].mxu0 %v8815
        %v8906 = vpop.f32.mrb[0].mxu0
        %v8907 = vadd.f32 0.0, %v8906
        %v8908 = vpop.f32.mrb[0].mxu0
        %8909 = vmatprep.mubr.f32.mxu0 0.0
        %8910 = vmatmul.mubr.f32.gmra.mrb[0].mxu0 %v8818
        %v8911 = vpop.f32.mrb[0].mxu0
        %v8912 = vadd.f32 0.0, %v8911
        %v8913 = vpop.f32.mrb[0].mxu0
        %8914 = vmatprep.mubr.f32.mxu0 0.0
        %8915 = vmatmul.mubr.f32.gmra.mrb[0].mxu0 %v8821
        %v8916 = vpop.f32.mrb[0].mxu0
        %v8917 = vadd.f32 0.0, %v8916
        %v8918 = vpop.f32.mrb[0].mxu0
        %8919 = vmatprep.mubr.f32.mxu0 0.0
        %8920 = vmatmul.mubr.f32.gmra.mrb[0].mxu0 %v8824
        %v8921 = vpop.f32.mrb[0].mxu0
        %v8922 = vadd.f32 0.0, %v8921
        %v8923 = vpop.f32.mrb[0].mxu0
        %8924 = vmatprep.mubr.f32.mxu0 0.0
        %8925 = vmatmul.mubr.f32.gmra.mrb[0].mxu0 %v8827
        %v8926 = vpop.f32.mrb[0].mxu0
        %v8927 = vadd.f32 0.0, %v8926
        %v8928 = vpop.f32.mrb[0].mxu0
        %8929 = vmatprep.mubr.f32.mxu0 0.0
        %8930 = vmatmul.mubr.f32.gmra.mrb[0].mxu0 %v8830
        %v8931 = vpop.f32.mrb[0].mxu0
        %v8932 = vadd.f32 0.0, %v8931
        %v8933 = vpop.f32.mrb[0].mxu0
        %8934 = vmatprep.mubr.f32.mxu0 0.0
        %8935 = vmatmul.mubr.f32.gmra.mrb[0].mxu0 %v8833
        %v8936 = vpop.f32.mrb[0].mxu0
        %v8937 = vadd.f32 0.0, %v8936
        %v8938 = vpop.f32.mrb[0].mxu0
        %8939 = vdwg.mxu0
        %v8941 = vsel %vm1129, %v7749, 0
        %v8944 = vsel %vm1129, %v7750, 0
        %v8947 = vsel %vm1129, %v7751, 0
        %v8950 = vsel %vm1129, %v7752, 0
        %v8953 = vsel %vm1129, %v7753, 0
        %v8956 = vsel %vm1129, %v7754, 0
        %v8959 = vsel %vm1129, %v7755, 0
        %v8962 = vsel %vm1129, %v7756, 0
        %8964 = vmatprep.subr.mxu0 0.0
        %8965 = vmatpush1.msra.mxu0 %v7982
        %8966 = vmatprep.subr.mxu0 0.0
        %8967 = vmatpush1.msra.mxu0 %v7986
        %8968 = vmatprep.subr.mxu0 0.0
        %8969 = vmatpush1.msra.mxu0 %v7990
        %8970 = vmatprep.subr.mxu0 0.0
        %8971 = vmatpush1.msra.mxu0 %v7994
        %8972 = vmatprep.subr.mxu0 0.0
        %8973 = vmatpush1.msra.mxu0 %v8134
        %8974 = vmatprep.subr.mxu0 0.0
        %8975 = vmatpush1.msra.mxu0 %v8138
        %8976 = vmatprep.subr.mxu0 0.0
        %8977 = vmatpush1.msra.mxu0 %v8142
        %8978 = vmatprep.subr.mxu0 0.0
        %8979 = vmatpush1.msra.mxu0 %v8146
        %8980 = vmatprep.subr.mxu0 0.0
        %8981 = vmatpush1.msra.mxu0 0.0
        %8982 = vmatprep.subr.mxu0 0.0
        %8983 = vmatpush1.msra.mxu0 0.0
        %8984 = vmatprep.subr.mxu0 0.0
        %8985 = vmatpush1.msra.mxu0 0.0
        %8986 = vmatprep.subr.mxu0 0.0
        %8987 = vmatpush1.msra.mxu0 0.0
        %8988 = vmatprep.subr.mxu0 0.0
        %8989 = vmatpush1.msra.mxu0 0.0
        %8990 = vmatprep.subr.mxu0 0.0
        %8991 = vmatpush1.msra.mxu0 0.0
        %8992 = vmatprep.subr.mxu0 0.0
        %8993 = vmatpush1.msra.mxu0 0.0
        %8994 = vmatprep.subr.mxu0 0.0
        %8995 = vmatpush1.msra.mxu0 0.0
        %8996 = vmatprep.subr.mxu0 0.0
        %8997 = vmatpush1.msra.mxu0 0.0
        %8998 = vmatprep.subr.mxu0 0.0
        %8999 = vmatpush1.msra.mxu0 0.0
        %9000 = vmatprep.subr.mxu0 0.0
        %9001 = vmatpush1.msra.mxu0 0.0
        %9002 = vmatprep.subr.mxu0 0.0
        %9003 = vmatpush1.msra.mxu0 0.0
        %9004 = vmatprep.subr.mxu0 0.0
        %9005 = vmatpush1.msra.mxu0 0.0
        %9006 = vmatprep.subr.mxu0 0.0
        %9007 = vmatpush1.msra.mxu0 0.0
        %9008 = vmatprep.subr.mxu0 0.0
        %9009 = vmatpush1.msra.mxu0 0.0
        %9010 = vmatprep.subr.mxu0 0.0
        %9011 = vmatpush1.msra.mxu0 0.0
        %9012 = vmatprep.subr.mxu0 0.0
        %9013 = vmatpush1.msra.mxu0 0.0
        %9014 = vmatprep.subr.mxu0 0.0
        %9015 = vmatpush1.msra.mxu0 0.0
        %9016 = vmatprep.subr.mxu0 0.0
        %9017 = vmatpush1.msra.mxu0 0.0
        %9018 = vmatprep.subr.mxu0 0.0
        %9019 = vmatpush1.msra.mxu0 0.0
        %9020 = vmatprep.subr.mxu0 0.0
        %9021 = vmatpush1.msra.mxu0 0.0
        %9022 = vmatprep.subr.mxu0 0.0
        %9023 = vmatpush1.msra.mxu0 0.0
        %9024 = vmatprep.subr.mxu0 0.0
        %9025 = vmatpush1.msra.mxu0 0.0
        %9026 = vmatprep.subr.mxu0 0.0
        %9027 = vmatpush1.msra.mxu0 0.0
        %9028 = vmatprep.mubr.f32.mxu0 0.0
        %9029 = vmatmul.mubr.f32.gmra.mrb[0].mxu0 %v8941
        %v9030 = vpop.f32.mrb[0].mxu0
        %v9031 = vadd.f32 0.0, %v9030
        %v9032 = vpop.f32.mrb[0].mxu0
        %9033 = vmatprep.mubr.f32.mxu0 0.0
        %9034 = vmatmul.mubr.f32.gmra.mrb[0].mxu0 %v8944
        %v9035 = vpop.f32.mrb[0].mxu0
        %v9036 = vadd.f32 0.0, %v9035
        %v9037 = vpop.f32.mrb[0].mxu0
        %9038 = vmatprep.mubr.f32.mxu0 0.0
        %9039 = vmatmul.mubr.f32.gmra.mrb[0].mxu0 %v8947
        %v9040 = vpop.f32.mrb[0].mxu0
        %v9041 = vadd.f32 0.0, %v9040
        %v9042 = vpop.f32.mrb[0].mxu0
        %9043 = vmatprep.mubr.f32.mxu0 0.0
        %9044 = vmatmul.mubr.f32.gmra.mrb[0].mxu0 %v8950
        %v9045 = vpop.f32.mrb[0].mxu0
        %v9046 = vadd.f32 0.0, %v9045
        %v9047 = vpop.f32.mrb[0].mxu0
        %9048 = vmatprep.mubr.f32.mxu0 0.0
        %9049 = vmatmul.mubr.f32.gmra.mrb[0].mxu0 %v8953
        %v9050 = vpop.f32.mrb[0].mxu0
        %v9051 = vadd.f32 0.0, %v9050
        %v9052 = vpop.f32.mrb[0].mxu0
        %9053 = vmatprep.mubr.f32.mxu0 0.0
        %9054 = vmatmul.mubr.f32.gmra.mrb[0].mxu0 %v8956
        %v9055 = vpop.f32.mrb[0].mxu0
        %v9056 = vadd.f32 0.0, %v9055
        %v9057 = vpop.f32.mrb[0].mxu0
        %9058 = vmatprep.mubr.f32.mxu0 0.0
        %9059 = vmatmul.mubr.f32.gmra.mrb[0].mxu0 %v8959
        %v9060 = vpop.f32.mrb[0].mxu0
        %v9061 = vadd.f32 0.0, %v9060
        %v9062 = vpop.f32.mrb[0].mxu0
        %9063 = vmatprep.mubr.f32.mxu0 0.0
        %9064 = vmatmul.mubr.f32.gmra.mrb[0].mxu0 %v8962
        %v9065 = vpop.f32.mrb[0].mxu0
        %v9066 = vadd.f32 0.0, %v9065
        %v9067 = vpop.f32.mrb[0].mxu0
        %9068 = vdwg.mxu0
        %v9070 = vsel %vm1129, %v7757, 0
        %v9073 = vsel %vm1129, %v7758, 0
        %v9076 = vsel %vm1129, %v7759, 0
        %v9079 = vsel %vm1129, %v7760, 0
        %v9082 = vsel %vm1129, %v7761, 0
        %v9085 = vsel %vm1129, %v7762, 0
        %v9088 = vsel %vm1129, %v7763, 0
        %v9091 = vsel %vm1129, %v7764, 0
        %9093 = vmatprep.subr.mxu0 0.0
        %9094 = vmatpush1.msra.mxu0 %v8001
        %9095 = vmatprep.subr.mxu0 0.0
        %9096 = vmatpush1.msra.mxu0 %v8005
        %9097 = vmatprep.subr.mxu0 0.0
        %9098 = vmatpush1.msra.mxu0 %v8009
        %9099 = vmatprep.subr.mxu0 0.0
        %9100 = vmatpush1.msra.mxu0 %v8013
        %9101 = vmatprep.subr.mxu0 0.0
        %9102 = vmatpush1.msra.mxu0 %v8153
        %9103 = vmatprep.subr.mxu0 0.0
        %9104 = vmatpush1.msra.mxu0 %v8157
        %9105 = vmatprep.subr.mxu0 0.0
        %9106 = vmatpush1.msra.mxu0 %v8161
        %9107 = vmatprep.subr.mxu0 0.0
        %9108 = vmatpush1.msra.mxu0 %v8165
        %9109 = vmatprep.subr.mxu0 0.0
        %9110 = vmatpush1.msra.mxu0 0.0
        %9111 = vmatprep.subr.mxu0 0.0
        %9112 = vmatpush1.msra.mxu0 0.0
        %9113 = vmatprep.subr.mxu0 0.0
        %9114 = vmatpush1.msra.mxu0 0.0
        %9115 = vmatprep.subr.mxu0 0.0
        %9116 = vmatpush1.msra.mxu0 0.0
        %9117 = vmatprep.subr.mxu0 0.0
        %9118 = vmatpush1.msra.mxu0 0.0
        %9119 = vmatprep.subr.mxu0 0.0
        %9120 = vmatpush1.msra.mxu0 0.0
        %9121 = vmatprep.subr.mxu0 0.0
        %9122 = vmatpush1.msra.mxu0 0.0
        %9123 = vmatprep.subr.mxu0 0.0
        %9124 = vmatpush1.msra.mxu0 0.0
        %9125 = vmatprep.subr.mxu0 0.0
        %9126 = vmatpush1.msra.mxu0 0.0
        %9127 = vmatprep.subr.mxu0 0.0
        %9128 = vmatpush1.msra.mxu0 0.0
        %9129 = vmatprep.subr.mxu0 0.0
        %9130 = vmatpush1.msra.mxu0 0.0
        %9131 = vmatprep.subr.mxu0 0.0
        %9132 = vmatpush1.msra.mxu0 0.0
        %9133 = vmatprep.subr.mxu0 0.0
        %9134 = vmatpush1.msra.mxu0 0.0
        %9135 = vmatprep.subr.mxu0 0.0
        %9136 = vmatpush1.msra.mxu0 0.0
        %9137 = vmatprep.subr.mxu0 0.0
        %9138 = vmatpush1.msra.mxu0 0.0
        %9139 = vmatprep.subr.mxu0 0.0
        %9140 = vmatpush1.msra.mxu0 0.0
        %9141 = vmatprep.subr.mxu0 0.0
        %9142 = vmatpush1.msra.mxu0 0.0
        %9143 = vmatprep.subr.mxu0 0.0
        %9144 = vmatpush1.msra.mxu0 0.0
        %9145 = vmatprep.subr.mxu0 0.0
        %9146 = vmatpush1.msra.mxu0 0.0
        %9147 = vmatprep.subr.mxu0 0.0
        %9148 = vmatpush1.msra.mxu0 0.0
        %9149 = vmatprep.subr.mxu0 0.0
        %9150 = vmatpush1.msra.mxu0 0.0
        %9151 = vmatprep.subr.mxu0 0.0
        %9152 = vmatpush1.msra.mxu0 0.0
        %9153 = vmatprep.subr.mxu0 0.0
        %9154 = vmatpush1.msra.mxu0 0.0
        %9155 = vmatprep.subr.mxu0 0.0
        %9156 = vmatpush1.msra.mxu0 0.0
        %9157 = vmatprep.mubr.f32.mxu0 0.0
        %9158 = vmatmul.mubr.f32.gmra.mrb[0].mxu0 %v9070
        %v9159 = vpop.f32.mrb[0].mxu0
        %v9160 = vadd.f32 0.0, %v9159
        %v9161 = vpop.f32.mrb[0].mxu0
        %9162 = vmatprep.mubr.f32.mxu0 0.0
        %9163 = vmatmul.mubr.f32.gmra.mrb[0].mxu0 %v9073
        %v9164 = vpop.f32.mrb[0].mxu0
        %v9165 = vadd.f32 0.0, %v9164
        %v9166 = vpop.f32.mrb[0].mxu0
        %9167 = vmatprep.mubr.f32.mxu0 0.0
        %9168 = vmatmul.mubr.f32.gmra.mrb[0].mxu0 %v9076
        %v9169 = vpop.f32.mrb[0].mxu0
        %v9170 = vadd.f32 0.0, %v9169
        %v9171 = vpop.f32.mrb[0].mxu0
        %9172 = vmatprep.mubr.f32.mxu0 0.0
        %9173 = vmatmul.mubr.f32.gmra.mrb[0].mxu0 %v9079
        %v9174 = vpop.f32.mrb[0].mxu0
        %v9175 = vadd.f32 0.0, %v9174
        %v9176 = vpop.f32.mrb[0].mxu0
        %9177 = vmatprep.mubr.f32.mxu0 0.0
        %9178 = vmatmul.mubr.f32.gmra.mrb[0].mxu0 %v9082
        %v9179 = vpop.f32.mrb[0].mxu0
        %v9180 = vadd.f32 0.0, %v9179
        %v9181 = vpop.f32.mrb[0].mxu0
        %9182 = vmatprep.mubr.f32.mxu0 0.0
        %9183 = vmatmul.mubr.f32.gmra.mrb[0].mxu0 %v9085
        %v9184 = vpop.f32.mrb[0].mxu0
        %v9185 = vadd.f32 0.0, %v9184
        %v9186 = vpop.f32.mrb[0].mxu0
        %9187 = vmatprep.mubr.f32.mxu0 0.0
        %9188 = vmatmul.mubr.f32.gmra.mrb[0].mxu0 %v9088
        %v9189 = vpop.f32.mrb[0].mxu0
        %v9190 = vadd.f32 0.0, %v9189
        %v9191 = vpop.f32.mrb[0].mxu0
        %9192 = vmatprep.mubr.f32.mxu0 0.0
        %9193 = vmatmul.mubr.f32.gmra.mrb[0].mxu0 %v9091
        %v9194 = vpop.f32.mrb[0].mxu0
        %v9195 = vadd.f32 0.0, %v9194
        %v9196 = vpop.f32.mrb[0].mxu0
        %9197 = vdwg.mxu0
        %9262 = vset.pattern.permute.xlu0 0
        %9263 = vperm.xlu0 %9262, %v8257
        %v9264 = vpop.permute.xlu0 %9263
        %9265 = vset.pattern.permute.xlu0 0
        %9266 = vperm.xlu0 %9265, %v8262
        %v9267 = vpop.permute.xlu0 %9266
        %9268 = vset.pattern.permute.xlu0 0
        %9269 = vperm.xlu0 %9268, %v8267
        %v9270 = vpop.permute.xlu0 %9269
        %9271 = vset.pattern.permute.xlu0 0
        %9272 = vperm.xlu0 %9271, %v8272
        %v9273 = vpop.permute.xlu0 %9272
        %9274 = vset.pattern.permute.xlu0 0
        %9275 = vperm.xlu0 %9274, %v8277
        %v9276 = vpop.permute.xlu0 %9275
        %9277 = vset.pattern.permute.xlu0 0
        %9278 = vperm.xlu0 %9277, %v8282
        %v9279 = vpop.permute.xlu0 %9278
        %9280 = vset.pattern.permute.xlu0 0
        %9281 = vperm.xlu0 %9280, %v8287
        %v9282 = vpop.permute.xlu0 %9281
        %9283 = vset.pattern.permute.xlu0 0
        %9284 = vperm.xlu0 %9283, %v8292
        %v9285 = vpop.permute.xlu0 %9284
        %9286 = vset.pattern.permute.xlu0 0
        %9287 = vperm.xlu0 %9286, %v8386
        %v9288 = vpop.permute.xlu0 %9287
        %9289 = vset.pattern.permute.xlu0 0
        %9290 = vperm.xlu0 %9289, %v8391
        %v9291 = vpop.permute.xlu0 %9290
        %9292 = vset.pattern.permute.xlu0 0
        %9293 = vperm.xlu0 %9292, %v8396
        %v9294 = vpop.permute.xlu0 %9293
        %9295 = vset.pattern.permute.xlu0 0
        %9296 = vperm.xlu0 %9295, %v8401
        %v9297 = vpop.permute.xlu0 %9296
        %9298 = vset.pattern.permute.xlu0 0
        %9299 = vperm.xlu0 %9298, %v8406
        %v9300 = vpop.permute.xlu0 %9299
        %9301 = vset.pattern.permute.xlu0 0
        %9302 = vperm.xlu0 %9301, %v8411
        %v9303 = vpop.permute.xlu0 %9302
        %9304 = vset.pattern.permute.xlu0 0
        %9305 = vperm.xlu0 %9304, %v8416
        %v9306 = vpop.permute.xlu0 %9305
        %9307 = vset.pattern.permute.xlu0 0
        %9308 = vperm.xlu0 %9307, %v8421
        %v9309 = vpop.permute.xlu0 %9308
        %9310 = vset.pattern.permute.xlu0 0
        %9311 = vperm.xlu0 %9310, %v8515
        %v9312 = vpop.permute.xlu0 %9311
        %9313 = vset.pattern.permute.xlu0 0
        %9314 = vperm.xlu0 %9313, %v8520
        %v9315 = vpop.permute.xlu0 %9314
        %9316 = vset.pattern.permute.xlu0 0
        %9317 = vperm.xlu0 %9316, %v8525
        %v9318 = vpop.permute.xlu0 %9317
        %9319 = vset.pattern.permute.xlu0 0
        %9320 = vperm.xlu0 %9319, %v8530
        %v9321 = vpop.permute.xlu0 %9320
        %9322 = vset.pattern.permute.xlu0 0
        %9323 = vperm.xlu0 %9322, %v8535
        %v9324 = vpop.permute.xlu0 %9323
        %9325 = vset.pattern.permute.xlu0 0
        %9326 = vperm.xlu0 %9325, %v8540
        %v9327 = vpop.permute.xlu0 %9326
        %9328 = vset.pattern.permute.xlu0 0
        %9329 = vperm.xlu0 %9328, %v8545
        %v9330 = vpop.permute.xlu0 %9329
        %9331 = vset.pattern.permute.xlu0 0
        %9332 = vperm.xlu0 %9331, %v8550
        %v9333 = vpop.permute.xlu0 %9332
        %9334 = vset.pattern.permute.xlu0 0
        %9335 = vperm.xlu0 %9334, %v8644
        %v9336 = vpop.permute.xlu0 %9335
        %9337 = vset.pattern.permute.xlu0 0
        %9338 = vperm.xlu0 %9337, %v8649
        %v9339 = vpop.permute.xlu0 %9338
        %9340 = vset.pattern.permute.xlu0 0
        %9341 = vperm.xlu0 %9340, %v8654
        %v9342 = vpop.permute.xlu0 %9341
        %9343 = vset.pattern.permute.xlu0 0
        %9344 = vperm.xlu0 %9343, %v8659
        %v9345 = vpop.permute.xlu0 %9344
        %9346 = vset.pattern.permute.xlu0 0
        %9347 = vperm.xlu0 %9346, %v8664
        %v9348 = vpop.permute.xlu0 %9347
        %9349 = vset.pattern.permute.xlu0 0
        %9350 = vperm.xlu0 %9349, %v8669
        %v9351 = vpop.permute.xlu0 %9350
        %9352 = vset.pattern.permute.xlu0 0
        %9353 = vperm.xlu0 %9352, %v8674
        %v9354 = vpop.permute.xlu0 %9353
        %9355 = vset.pattern.permute.xlu0 0
        %9356 = vperm.xlu0 %9355, %v8679
        %v9357 = vpop.permute.xlu0 %9356
        %9358 = vset.pattern.permute.xlu0 0
        %9359 = vperm.xlu0 %9358, %v8773
        %v9360 = vpop.permute.xlu0 %9359
        %9361 = vset.pattern.permute.xlu0 0
        %9362 = vperm.xlu0 %9361, %v8778
        %v9363 = vpop.permute.xlu0 %9362
        %9364 = vset.pattern.permute.xlu0 0
        %9365 = vperm.xlu0 %9364, %v8783
        %v9366 = vpop.permute.xlu0 %9365
        %9367 = vset.pattern.permute.xlu0 0
        %9368 = vperm.xlu0 %9367, %v8788
        %v9369 = vpop.permute.xlu0 %9368
        %9370 = vset.pattern.permute.xlu0 0
        %9371 = vperm.xlu0 %9370, %v8793
        %v9372 = vpop.permute.xlu0 %9371
        %9373 = vset.pattern.permute.xlu0 0
        %9374 = vperm.xlu0 %9373, %v8798
        %v9375 = vpop.permute.xlu0 %9374
        %9376 = vset.pattern.permute.xlu0 0
        %9377 = vperm.xlu0 %9376, %v8803
        %v9378 = vpop.permute.xlu0 %9377
        %9379 = vset.pattern.permute.xlu0 0
        %9380 = vperm.xlu0 %9379, %v8808
        %v9381 = vpop.permute.xlu0 %9380
        %9382 = vset.pattern.permute.xlu0 0
        %9383 = vperm.xlu0 %9382, %v8902
        %v9384 = vpop.permute.xlu0 %9383
        %9385 = vset.pattern.permute.xlu0 0
        %9386 = vperm.xlu0 %9385, %v8907
        %v9387 = vpop.permute.xlu0 %9386
        %9388 = vset.pattern.permute.xlu0 0
        %9389 = vperm.xlu0 %9388, %v8912
        %v9390 = vpop.permute.xlu0 %9389
        %9391 = vset.pattern.permute.xlu0 0
        %9392 = vperm.xlu0 %9391, %v8917
        %v9393 = vpop.permute.xlu0 %9392
        %9394 = vset.pattern.permute.xlu0 0
        %9395 = vperm.xlu0 %9394, %v8922
        %v9396 = vpop.permute.xlu0 %9395
        %9397 = vset.pattern.permute.xlu0 0
        %9398 = vperm.xlu0 %9397, %v8927
        %v9399 = vpop.permute.xlu0 %9398
        %9400 = vset.pattern.permute.xlu0 0
        %9401 = vperm.xlu0 %9400, %v8932
        %v9402 = vpop.permute.xlu0 %9401
        %9403 = vset.pattern.permute.xlu0 0
        %9404 = vperm.xlu0 %9403, %v8937
        %v9405 = vpop.permute.xlu0 %9404
        %9406 = vset.pattern.permute.xlu0 0
        %9407 = vperm.xlu0 %9406, %v9031
        %v9408 = vpop.permute.xlu0 %9407
        %9409 = vset.pattern.permute.xlu0 0
        %9410 = vperm.xlu0 %9409, %v9036
        %v9411 = vpop.permute.xlu0 %9410
        %9412 = vset.pattern.permute.xlu0 0
        %9413 = vperm.xlu0 %9412, %v9041
        %v9414 = vpop.permute.xlu0 %9413
        %9415 = vset.pattern.permute.xlu0 0
        %9416 = vperm.xlu0 %9415, %v9046
        %v9417 = vpop.permute.xlu0 %9416
        %9418 = vset.pattern.permute.xlu0 0
        %9419 = vperm.xlu0 %9418, %v9051
        %v9420 = vpop.permute.xlu0 %9419
        %9421 = vset.pattern.permute.xlu0 0
        %9422 = vperm.xlu0 %9421, %v9056
        %v9423 = vpop.permute.xlu0 %9422
        %9424 = vset.pattern.permute.xlu0 0
        %9425 = vperm.xlu0 %9424, %v9061
        %v9426 = vpop.permute.xlu0 %9425
        %9427 = vset.pattern.permute.xlu0 0
        %9428 = vperm.xlu0 %9427, %v9066
        %v9429 = vpop.permute.xlu0 %9428
        %9430 = vset.pattern.permute.xlu0 0
        %9431 = vperm.xlu0 %9430, %v9160
        %v9432 = vpop.permute.xlu0 %9431
        %9433 = vset.pattern.permute.xlu0 0
        %9434 = vperm.xlu0 %9433, %v9165
        %v9435 = vpop.permute.xlu0 %9434
        %9436 = vset.pattern.permute.xlu0 0
        %9437 = vperm.xlu0 %9436, %v9170
        %v9438 = vpop.permute.xlu0 %9437
        %9439 = vset.pattern.permute.xlu0 0
        %9440 = vperm.xlu0 %9439, %v9175
        %v9441 = vpop.permute.xlu0 %9440
        %9442 = vset.pattern.permute.xlu0 0
        %9443 = vperm.xlu0 %9442, %v9180
        %v9444 = vpop.permute.xlu0 %9443
        %9445 = vset.pattern.permute.xlu0 0
        %9446 = vperm.xlu0 %9445, %v9185
        %v9447 = vpop.permute.xlu0 %9446
        %9448 = vset.pattern.permute.xlu0 0
        %9449 = vperm.xlu0 %9448, %v9190
        %v9450 = vpop.permute.xlu0 %9449
        %9451 = vset.pattern.permute.xlu0 0
        %9452 = vperm.xlu0 %9451, %v9195
        %v9453 = vpop.permute.xlu0 %9452
        %v9454 = vlaneseq
        %v9455 = vshrl.u32 %v9454, 7
        %v9456 = vsub.s32 %v2419, %v9455
        %v9457 = vrot.slane %v9264, %v9456
        %v9458 = vlaneseq
        %v9459 = vshrl.u32 %v9458, 7
        %v9460 = vsub.s32 %v2424, %v9459
        %v9461 = vrot.slane %v9267, %v9460
        %v9462 = vsel %vm2429, %v9461, %v9457
        %v9463 = vlaneseq
        %v9464 = vshrl.u32 %v9463, 7
        %v9465 = vsub.s32 %v2431, %v9464
        %v9466 = vrot.slane %v9270, %v9465
        %v9467 = vsel %vm2436, %v9466, %v9462
        %v9468 = vlaneseq
        %v9469 = vshrl.u32 %v9468, 7
        %v9470 = vsub.s32 %v2438, %v9469
        %v9471 = vrot.slane %v9273, %v9470
        %v9472 = vsel %vm2443, %v9471, %v9467
        %v9473 = vlaneseq
        %v9474 = vshrl.u32 %v9473, 7
        %v9475 = vsub.s32 %v2419, %v9474
        %v9476 = vrot.slane %v9276, %v9475
        %v9477 = vlaneseq
        %v9478 = vshrl.u32 %v9477, 7
        %v9479 = vsub.s32 %v2424, %v9478
        %v9480 = vrot.slane %v9279, %v9479
        %v9481 = vsel %vm2429, %v9480, %v9476
        %v9482 = vlaneseq
        %v9483 = vshrl.u32 %v9482, 7
        %v9484 = vsub.s32 %v2431, %v9483
        %v9485 = vrot.slane %v9282, %v9484
        %v9486 = vsel %vm2436, %v9485, %v9481
        %v9487 = vlaneseq
        %v9488 = vshrl.u32 %v9487, 7
        %v9489 = vsub.s32 %v2438, %v9488
        %v9490 = vrot.slane %v9285, %v9489
        %v9491 = vsel %vm2443, %v9490, %v9486
        %v9492 = vlaneseq
        %v9493 = vshrl.u32 %v9492, 7
        %v9494 = vsub.s32 %v2419, %v9493
        %v9495 = vrot.slane %v9288, %v9494
        %v9496 = vlaneseq
        %v9497 = vshrl.u32 %v9496, 7
        %v9498 = vsub.s32 %v2424, %v9497
        %v9499 = vrot.slane %v9291, %v9498
        %v9500 = vsel %vm2429, %v9499, %v9495
        %v9501 = vlaneseq
        %v9502 = vshrl.u32 %v9501, 7
        %v9503 = vsub.s32 %v2431, %v9502
        %v9504 = vrot.slane %v9294, %v9503
        %v9505 = vsel %vm2436, %v9504, %v9500
        %v9506 = vlaneseq
        %v9507 = vshrl.u32 %v9506, 7
        %v9508 = vsub.s32 %v2438, %v9507
        %v9509 = vrot.slane %v9297, %v9508
        %v9510 = vsel %vm2443, %v9509, %v9505
        %v9511 = vlaneseq
        %v9512 = vshrl.u32 %v9511, 7
        %v9513 = vsub.s32 %v2419, %v9512
        %v9514 = vrot.slane %v9300, %v9513
        %v9515 = vlaneseq
        %v9516 = vshrl.u32 %v9515, 7
        %v9517 = vsub.s32 %v2424, %v9516
        %v9518 = vrot.slane %v9303, %v9517
        %v9519 = vsel %vm2429, %v9518, %v9514
        %v9520 = vlaneseq
        %v9521 = vshrl.u32 %v9520, 7
        %v9522 = vsub.s32 %v2431, %v9521
        %v9523 = vrot.slane %v9306, %v9522
        %v9524 = vsel %vm2436, %v9523, %v9519
        %v9525 = vlaneseq
        %v9526 = vshrl.u32 %v9525, 7
        %v9527 = vsub.s32 %v2438, %v9526
        %v9528 = vrot.slane %v9309, %v9527
        %v9529 = vsel %vm2443, %v9528, %v9524
        %v9530 = vlaneseq
        %v9531 = vshrl.u32 %v9530, 7
        %v9532 = vsub.s32 %v2419, %v9531
        %v9533 = vrot.slane %v9312, %v9532
        %v9534 = vlaneseq
        %v9535 = vshrl.u32 %v9534, 7
        %v9536 = vsub.s32 %v2424, %v9535
        %v9537 = vrot.slane %v9315, %v9536
        %v9538 = vsel %vm2429, %v9537, %v9533
        %v9539 = vlaneseq
        %v9540 = vshrl.u32 %v9539, 7
        %v9541 = vsub.s32 %v2431, %v9540
        %v9542 = vrot.slane %v9318, %v9541
        %v9543 = vsel %vm2436, %v9542, %v9538
        %v9544 = vlaneseq
        %v9545 = vshrl.u32 %v9544, 7
        %v9546 = vsub.s32 %v2438, %v9545
        %v9547 = vrot.slane %v9321, %v9546
        %v9548 = vsel %vm2443, %v9547, %v9543
        %v9549 = vlaneseq
        %v9550 = vshrl.u32 %v9549, 7
        %v9551 = vsub.s32 %v2419, %v9550
        %v9552 = vrot.slane %v9324, %v9551
        %v9553 = vlaneseq
        %v9554 = vshrl.u32 %v9553, 7
        %v9555 = vsub.s32 %v2424, %v9554
        %v9556 = vrot.slane %v9327, %v9555
        %v9557 = vsel %vm2429, %v9556, %v9552
        %v9558 = vlaneseq
        %v9559 = vshrl.u32 %v9558, 7
        %v9560 = vsub.s32 %v2431, %v9559
        %v9561 = vrot.slane %v9330, %v9560
        %v9562 = vsel %vm2436, %v9561, %v9557
        %v9563 = vlaneseq
        %v9564 = vshrl.u32 %v9563, 7
        %v9565 = vsub.s32 %v2438, %v9564
        %v9566 = vrot.slane %v9333, %v9565
        %v9567 = vsel %vm2443, %v9566, %v9562
        %v9568 = vlaneseq
        %v9569 = vshrl.u32 %v9568, 7
        %v9570 = vsub.s32 %v2419, %v9569
        %v9571 = vrot.slane %v9336, %v9570
        %v9572 = vlaneseq
        %v9573 = vshrl.u32 %v9572, 7
        %v9574 = vsub.s32 %v2424, %v9573
        %v9575 = vrot.slane %v9339, %v9574
        %v9576 = vsel %vm2429, %v9575, %v9571
        %v9577 = vlaneseq
        %v9578 = vshrl.u32 %v9577, 7
        %v9579 = vsub.s32 %v2431, %v9578
        %v9580 = vrot.slane %v9342, %v9579
        %v9581 = vsel %vm2436, %v9580, %v9576
        %v9582 = vlaneseq
        %v9583 = vshrl.u32 %v9582, 7
        %v9584 = vsub.s32 %v2438, %v9583
        %v9585 = vrot.slane %v9345, %v9584
        %v9586 = vsel %vm2443, %v9585, %v9581
        %v9587 = vlaneseq
        %v9588 = vshrl.u32 %v9587, 7
        %v9589 = vsub.s32 %v2419, %v9588
        %v9590 = vrot.slane %v9348, %v9589
        %v9591 = vlaneseq
        %v9592 = vshrl.u32 %v9591, 7
        %v9593 = vsub.s32 %v2424, %v9592
        %v9594 = vrot.slane %v9351, %v9593
        %v9595 = vsel %vm2429, %v9594, %v9590
        %v9596 = vlaneseq
        %v9597 = vshrl.u32 %v9596, 7
        %v9598 = vsub.s32 %v2431, %v9597
        %v9599 = vrot.slane %v9354, %v9598
        %v9600 = vsel %vm2436, %v9599, %v9595
        %v9601 = vlaneseq
        %v9602 = vshrl.u32 %v9601, 7
        %v9603 = vsub.s32 %v2438, %v9602
        %v9604 = vrot.slane %v9357, %v9603
        %v9605 = vsel %vm2443, %v9604, %v9600
        %v9606 = vlaneseq
        %v9607 = vshrl.u32 %v9606, 7
        %v9608 = vsub.s32 %v2419, %v9607
        %v9609 = vrot.slane %v9360, %v9608
        %v9610 = vlaneseq
        %v9611 = vshrl.u32 %v9610, 7
        %v9612 = vsub.s32 %v2424, %v9611
        %v9613 = vrot.slane %v9363, %v9612
        %v9614 = vsel %vm2429, %v9613, %v9609
        %v9615 = vlaneseq
        %v9616 = vshrl.u32 %v9615, 7
        %v9617 = vsub.s32 %v2431, %v9616
        %v9618 = vrot.slane %v9366, %v9617
        %v9619 = vsel %vm2436, %v9618, %v9614
        %v9620 = vlaneseq
        %v9621 = vshrl.u32 %v9620, 7
        %v9622 = vsub.s32 %v2438, %v9621
        %v9623 = vrot.slane %v9369, %v9622
        %v9624 = vsel %vm2443, %v9623, %v9619
        %v9625 = vlaneseq
        %v9626 = vshrl.u32 %v9625, 7
        %v9627 = vsub.s32 %v2419, %v9626
        %v9628 = vrot.slane %v9372, %v9627
        %v9629 = vlaneseq
        %v9630 = vshrl.u32 %v9629, 7
        %v9631 = vsub.s32 %v2424, %v9630
        %v9632 = vrot.slane %v9375, %v9631
        %v9633 = vsel %vm2429, %v9632, %v9628
        %v9634 = vlaneseq
        %v9635 = vshrl.u32 %v9634, 7
        %v9636 = vsub.s32 %v2431, %v9635
        %v9637 = vrot.slane %v9378, %v9636
        %v9638 = vsel %vm2436, %v9637, %v9633
        %v9639 = vlaneseq
        %v9640 = vshrl.u32 %v9639, 7
        %v9641 = vsub.s32 %v2438, %v9640
        %v9642 = vrot.slane %v9381, %v9641
        %v9643 = vsel %vm2443, %v9642, %v9638
        %v9644 = vlaneseq
        %v9645 = vshrl.u32 %v9644, 7
        %v9646 = vsub.s32 %v2419, %v9645
        %v9647 = vrot.slane %v9384, %v9646
        %v9648 = vlaneseq
        %v9649 = vshrl.u32 %v9648, 7
        %v9650 = vsub.s32 %v2424, %v9649
        %v9651 = vrot.slane %v9387, %v9650
        %v9652 = vsel %vm2429, %v9651, %v9647
        %v9653 = vlaneseq
        %v9654 = vshrl.u32 %v9653, 7
        %v9655 = vsub.s32 %v2431, %v9654
        %v9656 = vrot.slane %v9390, %v9655
        %v9657 = vsel %vm2436, %v9656, %v9652
        %v9658 = vlaneseq
        %v9659 = vshrl.u32 %v9658, 7
        %v9660 = vsub.s32 %v2438, %v9659
        %v9661 = vrot.slane %v9393, %v9660
        %v9662 = vsel %vm2443, %v9661, %v9657
        %v9663 = vlaneseq
        %v9664 = vshrl.u32 %v9663, 7
        %v9665 = vsub.s32 %v2419, %v9664
        %v9666 = vrot.slane %v9396, %v9665
        %v9667 = vlaneseq
        %v9668 = vshrl.u32 %v9667, 7
        %v9669 = vsub.s32 %v2424, %v9668
        %v9670 = vrot.slane %v9399, %v9669
        %v9671 = vsel %vm2429, %v9670, %v9666
        %v9672 = vlaneseq
        %v9673 = vshrl.u32 %v9672, 7
        %v9674 = vsub.s32 %v2431, %v9673
        %v9675 = vrot.slane %v9402, %v9674
        %v9676 = vsel %vm2436, %v9675, %v9671
        %v9677 = vlaneseq
        %v9678 = vshrl.u32 %v9677, 7
        %v9679 = vsub.s32 %v2438, %v9678
        %v9680 = vrot.slane %v9405, %v9679
        %v9681 = vsel %vm2443, %v9680, %v9676
        %v9682 = vlaneseq
        %v9683 = vshrl.u32 %v9682, 7
        %v9684 = vsub.s32 %v2419, %v9683
        %v9685 = vrot.slane %v9408, %v9684
        %v9686 = vlaneseq
        %v9687 = vshrl.u32 %v9686, 7
        %v9688 = vsub.s32 %v2424, %v9687
        %v9689 = vrot.slane %v9411, %v9688
        %v9690 = vsel %vm2429, %v9689, %v9685
        %v9691 = vlaneseq
        %v9692 = vshrl.u32 %v9691, 7
        %v9693 = vsub.s32 %v2431, %v9692
        %v9694 = vrot.slane %v9414, %v9693
        %v9695 = vsel %vm2436, %v9694, %v9690
        %v9696 = vlaneseq
        %v9697 = vshrl.u32 %v9696, 7
        %v9698 = vsub.s32 %v2438, %v9697
        %v9699 = vrot.slane %v9417, %v9698
        %v9700 = vsel %vm2443, %v9699, %v9695
        %v9701 = vlaneseq
        %v9702 = vshrl.u32 %v9701, 7
        %v9703 = vsub.s32 %v2419, %v9702
        %v9704 = vrot.slane %v9420, %v9703
        %v9705 = vlaneseq
        %v9706 = vshrl.u32 %v9705, 7
        %v9707 = vsub.s32 %v2424, %v9706
        %v9708 = vrot.slane %v9423, %v9707
        %v9709 = vsel %vm2429, %v9708, %v9704
        %v9710 = vlaneseq
        %v9711 = vshrl.u32 %v9710, 7
        %v9712 = vsub.s32 %v2431, %v9711
        %v9713 = vrot.slane %v9426, %v9712
        %v9714 = vsel %vm2436, %v9713, %v9709
        %v9715 = vlaneseq
        %v9716 = vshrl.u32 %v9715, 7
        %v9717 = vsub.s32 %v2438, %v9716
        %v9718 = vrot.slane %v9429, %v9717
        %v9719 = vsel %vm2443, %v9718, %v9714
        %v9720 = vlaneseq
        %v9721 = vshrl.u32 %v9720, 7
        %v9722 = vsub.s32 %v2419, %v9721
        %v9723 = vrot.slane %v9432, %v9722
        %v9724 = vlaneseq
        %v9725 = vshrl.u32 %v9724, 7
        %v9726 = vsub.s32 %v2424, %v9725
        %v9727 = vrot.slane %v9435, %v9726
        %v9728 = vsel %vm2429, %v9727, %v9723
        %v9729 = vlaneseq
        %v9730 = vshrl.u32 %v9729, 7
        %v9731 = vsub.s32 %v2431, %v9730
        %v9732 = vrot.slane %v9438, %v9731
        %v9733 = vsel %vm2436, %v9732, %v9728
        %v9734 = vlaneseq
        %v9735 = vshrl.u32 %v9734, 7
        %v9736 = vsub.s32 %v2438, %v9735
        %v9737 = vrot.slane %v9441, %v9736
        %v9738 = vsel %vm2443, %v9737, %v9733
        %v9739 = vlaneseq
        %v9740 = vshrl.u32 %v9739, 7
        %v9741 = vsub.s32 %v2419, %v9740
        %v9742 = vrot.slane %v9444, %v9741
        %v9743 = vlaneseq
        %v9744 = vshrl.u32 %v9743, 7
        %v9745 = vsub.s32 %v2424, %v9744
        %v9746 = vrot.slane %v9447, %v9745
        %v9747 = vsel %vm2429, %v9746, %v9742
        %v9748 = vlaneseq
        %v9749 = vshrl.u32 %v9748, 7
        %v9750 = vsub.s32 %v2431, %v9749
        %v9751 = vrot.slane %v9450, %v9750
        %v9752 = vsel %vm2436, %v9751, %v9747
        %v9753 = vlaneseq
        %v9754 = vshrl.u32 %v9753, 7
        %v9755 = vsub.s32 %v2438, %v9754
        %v9756 = vrot.slane %v9453, %v9755
        %v9757 = vsel %vm2443, %v9756, %v9752
        %v9758 = vsel %vm2730, %v9491, %v9472
        %v9759 = vsel %vm2732, %v9510, %v9758
        %v9760 = vsel %vm2734, %v9529, %v9759
        %v9761 = vsel %vm2736, %v9548, %v9760
        %v9762 = vsel %vm2738, %v9567, %v9761
        %v9763 = vsel %vm2740, %v9586, %v9762
        %v9764 = vsel %vm2742, %v9605, %v9763
        %v9765 = vsel %vm2730, %v9643, %v9624
        %v9766 = vsel %vm2732, %v9662, %v9765
        %v9767 = vsel %vm2734, %v9681, %v9766
        %v9768 = vsel %vm2736, %v9700, %v9767
        %v9769 = vsel %vm2738, %v9719, %v9768
        %v9770 = vsel %vm2740, %v9738, %v9769
        %v9771 = vsel %vm2742, %v9757, %v9770
        %9774 = vxpose.xlu0.b32.start [1/16] %v9764, 128
        %9775 = vxpose.xlu0.b32.cont [2/16] %v9771, 128
        %9776 = vxpose.xlu0.b32.cont [3/16] 0.0, 128
        %9777 = vxpose.xlu0.b32.cont [4/16] 0.0, 128
        %9778 = vxpose.xlu0.b32.cont [5/16] 0.0, 128
        %9779 = vxpose.xlu0.b32.cont [6/16] 0.0, 128
        %9780 = vxpose.xlu0.b32.cont [7/16] 0.0, 128
        %9781 = vxpose.xlu0.b32.cont [8/16] 0.0, 128
        %9782 = vxpose.xlu0.b32.cont [9/16] 0.0, 128
        %9783 = vxpose.xlu0.b32.cont [10/16] 0.0, 128
        %9784 = vxpose.xlu0.b32.cont [11/16] 0.0, 128
        %9785 = vxpose.xlu0.b32.cont [12/16] 0.0, 128
        %9786 = vxpose.xlu0.b32.cont [13/16] 0.0, 128
        %9787 = vxpose.xlu0.b32.cont [14/16] 0.0, 128
        %9788 = vxpose.xlu0.b32.cont [15/16] 0.0, 128
        %9789 = vxpose.xlu0.b32.end [16/16] 0.0, 128
        %v9790 = vpop.trf.xlu0
        %v9791 = vpop.trf.xlu0
        %v9792 = vpop.trf.xlu0
        %v9793 = vpop.trf.xlu0
        %v9794 = vpop.trf.xlu0
        %v9795 = vpop.trf.xlu0
        %v9796 = vpop.trf.xlu0
        %v9797 = vpop.trf.xlu0
        %v9798 = vpop.trf.xlu0
        %v9799 = vpop.trf.xlu0
        %v9800 = vpop.trf.xlu0
        %v9801 = vpop.trf.xlu0
        %v9802 = vpop.trf.xlu0
        %v9803 = vpop.trf.xlu0
        %v9804 = vpop.trf.xlu0
        %v9805 = vpop.trf.xlu0
        %9807 = vset.pattern.permute.xlu0 0
        %9808 = vperm.xlu0 %9807, %v7771
        %v9809 = vpop.permute.xlu0 %9808
        %9812 = vset.pattern.permute.xlu0 0
        %9813 = vperm.xlu0 %9812, %v7772
        %v9814 = vpop.permute.xlu0 %9813
        %9817 = vset.pattern.permute.xlu0 0
        %9818 = vperm.xlu0 %9817, %v7773
        %v9819 = vpop.permute.xlu0 %9818
        %9822 = vset.pattern.permute.xlu0 0
        %9823 = vperm.xlu0 %9822, %v7774
        %v9824 = vpop.permute.xlu0 %9823
        %v9827 = vsel %vm2805, %v7766, 0
        %v9830 = vsel %vm2805, %v7767, 0
        %v9833 = vsel %vm2805, %v7768, 0
        %v9836 = vsel %vm2805, %v7769, 0
        %9838 = vmatprep.subr.mxu0 0.0
        %9839 = vmatpush1.msra.mxu0 %v7696
        %9840 = vmatprep.subr.mxu0 0.0
        %9841 = vmatpush1.msra.mxu0 %v7697
        %9842 = vmatprep.subr.mxu0 0.0
        %9843 = vmatpush1.msra.mxu0 %v7698
        %9844 = vmatprep.subr.mxu0 0.0
        %9845 = vmatpush1.msra.mxu0 %v7699
        %9846 = vmatprep.subr.mxu0 0.0
        %9847 = vmatpush1.msra.mxu0 0.0
        %9848 = vmatprep.subr.mxu0 0.0
        %9849 = vmatpush1.msra.mxu0 0.0
        %9850 = vmatprep.subr.mxu0 0.0
        %9851 = vmatpush1.msra.mxu0 0.0
        %9852 = vmatprep.subr.mxu0 0.0
        %9853 = vmatpush1.msra.mxu0 0.0
        %9854 = vmatprep.subr.mxu0 0.0
        %9855 = vmatpush1.msra.mxu0 0.0
        %9856 = vmatprep.subr.mxu0 0.0
        %9857 = vmatpush1.msra.mxu0 0.0
        %9858 = vmatprep.subr.mxu0 0.0
        %9859 = vmatpush1.msra.mxu0 0.0
        %9860 = vmatprep.subr.mxu0 0.0
        %9861 = vmatpush1.msra.mxu0 0.0
        %9862 = vmatprep.subr.mxu0 0.0
        %9863 = vmatpush1.msra.mxu0 0.0
        %9864 = vmatprep.subr.mxu0 0.0
        %9865 = vmatpush1.msra.mxu0 0.0
        %9866 = vmatprep.subr.mxu0 0.0
        %9867 = vmatpush1.msra.mxu0 0.0
        %9868 = vmatprep.subr.mxu0 0.0
        %9869 = vmatpush1.msra.mxu0 0.0
        %9870 = vmatprep.subr.mxu0 0.0
        %9871 = vmatpush1.msra.mxu0 0.0
        %9872 = vmatprep.subr.mxu0 0.0
        %9873 = vmatpush1.msra.mxu0 0.0
        %9874 = vmatprep.subr.mxu0 0.0
        %9875 = vmatpush1.msra.mxu0 0.0
        %9876 = vmatprep.subr.mxu0 0.0
        %9877 = vmatpush1.msra.mxu0 0.0
        %9878 = vmatprep.subr.mxu0 0.0
        %9879 = vmatpush1.msra.mxu0 0.0
        %9880 = vmatprep.subr.mxu0 0.0
        %9881 = vmatpush1.msra.mxu0 0.0
        %9882 = vmatprep.subr.mxu0 0.0
        %9883 = vmatpush1.msra.mxu0 0.0
        %9884 = vmatprep.subr.mxu0 0.0
        %9885 = vmatpush1.msra.mxu0 0.0
        %9886 = vmatprep.subr.mxu0 0.0
        %9887 = vmatpush1.msra.mxu0 0.0
        %9888 = vmatprep.subr.mxu0 0.0
        %9889 = vmatpush1.msra.mxu0 0.0
        %9890 = vmatprep.subr.mxu0 0.0
        %9891 = vmatpush1.msra.mxu0 0.0
        %9892 = vmatprep.subr.mxu0 0.0
        %9893 = vmatpush1.msra.mxu0 0.0
        %9894 = vmatprep.subr.mxu0 0.0
        %9895 = vmatpush1.msra.mxu0 0.0
        %9896 = vmatprep.subr.mxu0 0.0
        %9897 = vmatpush1.msra.mxu0 0.0
        %9898 = vmatprep.subr.mxu0 0.0
        %9899 = vmatpush1.msra.mxu0 0.0
        %9900 = vmatprep.subr.mxu0 0.0
        %9901 = vmatpush1.msra.mxu0 0.0
        %9902 = vmatprep.mubr.f32.mxu0 0.0
        %9903 = vmatmul.mubr.f32.gmra.mrb[0].mxu0 %v9827
        %v9904 = vpop.f32.mrb[0].mxu0
        %v9905 = vadd.f32 %v9809, %v9904
        %v9906 = vpop.f32.mrb[0].mxu0
        %9907 = vmatprep.mubr.f32.mxu0 0.0
        %9908 = vmatmul.mubr.f32.gmra.mrb[0].mxu0 %v9830
        %v9909 = vpop.f32.mrb[0].mxu0
        %v9910 = vadd.f32 %v9814, %v9909
        %v9911 = vpop.f32.mrb[0].mxu0
        %9912 = vmatprep.mubr.f32.mxu0 0.0
        %9913 = vmatmul.mubr.f32.gmra.mrb[0].mxu0 %v9833
        %v9914 = vpop.f32.mrb[0].mxu0
        %v9915 = vadd.f32 %v9819, %v9914
        %v9916 = vpop.f32.mrb[0].mxu0
        %9917 = vmatprep.mubr.f32.mxu0 0.0
        %9918 = vmatmul.mubr.f32.gmra.mrb[0].mxu0 %v9836
        %v9919 = vpop.f32.mrb[0].mxu0
        %v9920 = vadd.f32 %v9824, %v9919
        %v9921 = vpop.f32.mrb[0].mxu0
        %9922 = vdwg.mxu0
        %v9924 = vsel %vm731, %v9790, 0
        %v9927 = vsel %vm731, %v9791, 0
        %v9930 = vsel %vm731, %v9792, 0
        %v9933 = vsel %vm731, %v9793, 0
        %9935 = vmatprep.subr.mxu0 0.0
        %9936 = vmatpush1.msra.mxu0 %v657
        %9937 = vmatprep.subr.mxu0 0.0
        %9938 = vmatpush1.msra.mxu0 %v658
        %9939 = vmatprep.subr.mxu0 0.0
        %9940 = vmatpush1.msra.mxu0 0.0
        %9941 = vmatprep.subr.mxu0 0.0
        %9942 = vmatpush1.msra.mxu0 0.0
        %9943 = vmatprep.subr.mxu0 0.0
        %9944 = vmatpush1.msra.mxu0 0.0
        %9945 = vmatprep.subr.mxu0 0.0
        %9946 = vmatpush1.msra.mxu0 0.0
        %9947 = vmatprep.subr.mxu0 0.0
        %9948 = vmatpush1.msra.mxu0 0.0
        %9949 = vmatprep.subr.mxu0 0.0
        %9950 = vmatpush1.msra.mxu0 0.0
        %9951 = vmatprep.subr.mxu0 0.0
        %9952 = vmatpush1.msra.mxu0 0.0
        %9953 = vmatprep.subr.mxu0 0.0
        %9954 = vmatpush1.msra.mxu0 0.0
        %9955 = vmatprep.subr.mxu0 0.0
        %9956 = vmatpush1.msra.mxu0 0.0
        %9957 = vmatprep.subr.mxu0 0.0
        %9958 = vmatpush1.msra.mxu0 0.0
        %9959 = vmatprep.subr.mxu0 0.0
        %9960 = vmatpush1.msra.mxu0 0.0
        %9961 = vmatprep.subr.mxu0 0.0
        %9962 = vmatpush1.msra.mxu0 0.0
        %9963 = vmatprep.subr.mxu0 0.0
        %9964 = vmatpush1.msra.mxu0 0.0
        %9965 = vmatprep.subr.mxu0 0.0
        %9966 = vmatpush1.msra.mxu0 0.0
        %9967 = vmatprep.subr.mxu0 0.0
        %9968 = vmatpush1.msra.mxu0 0.0
        %9969 = vmatprep.subr.mxu0 0.0
        %9970 = vmatpush1.msra.mxu0 0.0
        %9971 = vmatprep.subr.mxu0 0.0
        %9972 = vmatpush1.msra.mxu0 0.0
        %9973 = vmatprep.subr.mxu0 0.0
        %9974 = vmatpush1.msra.mxu0 0.0
        %9975 = vmatprep.subr.mxu0 0.0
        %9976 = vmatpush1.msra.mxu0 0.0
        %9977 = vmatprep.subr.mxu0 0.0
        %9978 = vmatpush1.msra.mxu0 0.0
        %9979 = vmatprep.subr.mxu0 0.0
        %9980 = vmatpush1.msra.mxu0 0.0
        %9981 = vmatprep.subr.mxu0 0.0
        %9982 = vmatpush1.msra.mxu0 0.0
        %9983 = vmatprep.subr.mxu0 0.0
        %9984 = vmatpush1.msra.mxu0 0.0
        %9985 = vmatprep.subr.mxu0 0.0
        %9986 = vmatpush1.msra.mxu0 0.0
        %9987 = vmatprep.subr.mxu0 0.0
        %9988 = vmatpush1.msra.mxu0 0.0
        %9989 = vmatprep.subr.mxu0 0.0
        %9990 = vmatpush1.msra.mxu0 0.0
        %9991 = vmatprep.subr.mxu0 0.0
        %9992 = vmatpush1.msra.mxu0 0.0
        %9993 = vmatprep.subr.mxu0 0.0
        %9994 = vmatpush1.msra.mxu0 0.0
        %9995 = vmatprep.subr.mxu0 0.0
        %9996 = vmatpush1.msra.mxu0 0.0
        %9997 = vmatprep.subr.mxu0 0.0
        %9998 = vmatpush1.msra.mxu0 0.0
        %9999 = vmatprep.mubr.f32.mxu0 0.0
        %10000 = vmatmul.mubr.f32.gmra.mrb[0].mxu0 %v9924
        %v10001 = vpop.f32.mrb[0].mxu0
        %v10002 = vadd.f32 %v9905, %v10001
        %v10003 = vpop.f32.mrb[0].mxu0
        %10004 = vmatprep.mubr.f32.mxu0 0.0
        %10005 = vmatmul.mubr.f32.gmra.mrb[0].mxu0 %v9927
        %v10006 = vpop.f32.mrb[0].mxu0
        %v10007 = vadd.f32 %v9910, %v10006
        %v10008 = vpop.f32.mrb[0].mxu0
        %10009 = vmatprep.mubr.f32.mxu0 0.0
        %10010 = vmatmul.mubr.f32.gmra.mrb[0].mxu0 %v9930
        %v10011 = vpop.f32.mrb[0].mxu0
        %v10012 = vadd.f32 %v9915, %v10011
        %v10013 = vpop.f32.mrb[0].mxu0
        %10014 = vmatprep.mubr.f32.mxu0 0.0
        %10015 = vmatmul.mubr.f32.gmra.mrb[0].mxu0 %v9933
        %v10016 = vpop.f32.mrb[0].mxu0
        %v10017 = vadd.f32 %v9920, %v10016
        %v10018 = vpop.f32.mrb[0].mxu0
        %10019 = vdwg.mxu0
        %v10020 = vld [vmem:[%s10] sm:$0xff]
        %v10021 = vld [vmem:[%s10 + $0x8] sm:$0xff]
        %v10022 = vld [vmem:[%s10 + $0x10] sm:$0xff]
        %v10023 = vld [vmem:[%s10 + $0x18] sm:$0xff]
        %v10024 = vld [vmem:[%s10 + $0x20] sm:$0xff]
        %v10025 = vld [vmem:[%s10 + $0x28] sm:$0xff]
        %v10026 = vld [vmem:[%s10 + $0x30] sm:$0xff]
        %v10027 = vld [vmem:[%s10 + $0x38] sm:$0xff]
        %v10028 = vld [vmem:[%s10 + $0x40] sm:$0xff]
        %v10029 = vld [vmem:[%s10 + $0x48] sm:$0xff]
        %v10030 = vld [vmem:[%s10 + $0x50] sm:$0xff]
        %v10031 = vld [vmem:[%s10 + $0x58] sm:$0xff]
        %v10032 = vld [vmem:[%s10 + $0x60] sm:$0xff]
        %v10033 = vld [vmem:[%s10 + $0x68] sm:$0xff]
        %v10034 = vld [vmem:[%s10 + $0x70] sm:$0xff]
        %v10035 = vld [vmem:[%s10 + $0x78] sm:$0xff]
        %v10036 = vld [vmem:[%s11] sm:$0xff]
        %v10037 = vld [vmem:[%s11 + $0x8] sm:$0xff]
        %v10038 = vld [vmem:[%s11 + $0x10] sm:$0xff]
        %v10039 = vld [vmem:[%s11 + $0x18] sm:$0xff]
        %v10040 = vld [vmem:[%s11 + $0x20] sm:$0xff]
        %v10041 = vld [vmem:[%s11 + $0x28] sm:$0xff]
        %v10042 = vld [vmem:[%s11 + $0x30] sm:$0xff]
        %v10043 = vld [vmem:[%s11 + $0x38] sm:$0xff]
        %v10044 = vld [vmem:[%s11 + $0x40] sm:$0xff]
        %v10045 = vld [vmem:[%s11 + $0x48] sm:$0xff]
        %v10046 = vld [vmem:[%s11 + $0x50] sm:$0xff]
        %v10047 = vld [vmem:[%s11 + $0x58] sm:$0xff]
        %v10048 = vld [vmem:[%s11 + $0x60] sm:$0xff]
        %v10049 = vld [vmem:[%s11 + $0x68] sm:$0xff]
        %v10050 = vld [vmem:[%s11 + $0x70] sm:$0xff]
        %v10051 = vld [vmem:[%s11 + $0x78] sm:$0xff]
        %10053 = vset.pattern.permute.xlu0 0
        %10054 = vperm.xlu0 %10053, %v10036
        %v10055 = vpop.permute.xlu0 %10054
        %10058 = vset.pattern.permute.xlu0 0
        %10059 = vperm.xlu0 %10058, %v10037
        %v10060 = vpop.permute.xlu0 %10059
        %10063 = vset.pattern.permute.xlu0 0
        %10064 = vperm.xlu0 %10063, %v10038
        %v10065 = vpop.permute.xlu0 %10064
        %10068 = vset.pattern.permute.xlu0 0
        %10069 = vperm.xlu0 %10068, %v10039
        %v10070 = vpop.permute.xlu0 %10069
        %10073 = vset.pattern.permute.xlu0 0
        %10074 = vperm.xlu0 %10073, %v10040
        %v10075 = vpop.permute.xlu0 %10074
        %10078 = vset.pattern.permute.xlu0 0
        %10079 = vperm.xlu0 %10078, %v10041
        %v10080 = vpop.permute.xlu0 %10079
        %10083 = vset.pattern.permute.xlu0 0
        %10084 = vperm.xlu0 %10083, %v10042
        %v10085 = vpop.permute.xlu0 %10084
        %10088 = vset.pattern.permute.xlu0 0
        %10089 = vperm.xlu0 %10088, %v10043
        %v10090 = vpop.permute.xlu0 %10089
        %10093 = vset.pattern.permute.xlu0 0
        %10094 = vperm.xlu0 %10093, %v10044
        %v10095 = vpop.permute.xlu0 %10094
        %10098 = vset.pattern.permute.xlu0 0
        %10099 = vperm.xlu0 %10098, %v10045
        %v10100 = vpop.permute.xlu0 %10099
        %10103 = vset.pattern.permute.xlu0 0
        %10104 = vperm.xlu0 %10103, %v10046
        %v10105 = vpop.permute.xlu0 %10104
        %10108 = vset.pattern.permute.xlu0 0
        %10109 = vperm.xlu0 %10108, %v10047
        %v10110 = vpop.permute.xlu0 %10109
        %10113 = vset.pattern.permute.xlu0 0
        %10114 = vperm.xlu0 %10113, %v10048
        %v10115 = vpop.permute.xlu0 %10114
        %10118 = vset.pattern.permute.xlu0 0
        %10119 = vperm.xlu0 %10118, %v10049
        %v10120 = vpop.permute.xlu0 %10119
        %10123 = vset.pattern.permute.xlu0 0
        %10124 = vperm.xlu0 %10123, %v10050
        %v10125 = vpop.permute.xlu0 %10124
        %10128 = vset.pattern.permute.xlu0 0
        %10129 = vperm.xlu0 %10128, %v10051
        %v10130 = vpop.permute.xlu0 %10129
        %v10133 = vsel %vm2805, %v10020, 0
        %v10136 = vsel %vm2805, %v10021, 0
        %v10139 = vsel %vm2805, %v10022, 0
        %v10142 = vsel %vm2805, %v10023, 0
        %v10145 = vsel %vm2805, %v10024, 0
        %v10148 = vsel %vm2805, %v10025, 0
        %v10151 = vsel %vm2805, %v10026, 0
        %v10154 = vsel %vm2805, %v10027, 0
        %v10157 = vsel %vm2805, %v10028, 0
        %v10160 = vsel %vm2805, %v10029, 0
        %v10163 = vsel %vm2805, %v10030, 0
        %v10166 = vsel %vm2805, %v10031, 0
        %v10169 = vsel %vm2805, %v10032, 0
        %v10172 = vsel %vm2805, %v10033, 0
        %v10175 = vsel %vm2805, %v10034, 0
        %v10178 = vsel %vm2805, %v10035, 0
        %10180 = vmatprep.subr.mxu0 0.0
        %10181 = vmatpush1.msra.mxu0 %v10002
        %10182 = vmatprep.subr.mxu0 0.0
        %10183 = vmatpush1.msra.mxu0 %v10007
        %10184 = vmatprep.subr.mxu0 0.0
        %10185 = vmatpush1.msra.mxu0 %v10012
        %10186 = vmatprep.subr.mxu0 0.0
        %10187 = vmatpush1.msra.mxu0 %v10017
        %10188 = vmatprep.subr.mxu0 0.0
        %10189 = vmatpush1.msra.mxu0 0.0
        %10190 = vmatprep.subr.mxu0 0.0
        %10191 = vmatpush1.msra.mxu0 0.0
        %10192 = vmatprep.subr.mxu0 0.0
        %10193 = vmatpush1.msra.mxu0 0.0
        %10194 = vmatprep.subr.mxu0 0.0
        %10195 = vmatpush1.msra.mxu0 0.0
        %10196 = vmatprep.subr.mxu0 0.0
        %10197 = vmatpush1.msra.mxu0 0.0
        %10198 = vmatprep.subr.mxu0 0.0
        %10199 = vmatpush1.msra.mxu0 0.0
        %10200 = vmatprep.subr.mxu0 0.0
        %10201 = vmatpush1.msra.mxu0 0.0
        %10202 = vmatprep.subr.mxu0 0.0
        %10203 = vmatpush1.msra.mxu0 0.0
        %10204 = vmatprep.subr.mxu0 0.0
        %10205 = vmatpush1.msra.mxu0 0.0
        %10206 = vmatprep.subr.mxu0 0.0
        %10207 = vmatpush1.msra.mxu0 0.0
        %10208 = vmatprep.subr.mxu0 0.0
        %10209 = vmatpush1.msra.mxu0 0.0
        %10210 = vmatprep.subr.mxu0 0.0
        %10211 = vmatpush1.msra.mxu0 0.0
        %10212 = vmatprep.subr.mxu0 0.0
        %10213 = vmatpush1.msra.mxu0 0.0
        %10214 = vmatprep.subr.mxu0 0.0
        %10215 = vmatpush1.msra.mxu0 0.0
        %10216 = vmatprep.subr.mxu0 0.0
        %10217 = vmatpush1.msra.mxu0 0.0
        %10218 = vmatprep.subr.mxu0 0.0
        %10219 = vmatpush1.msra.mxu0 0.0
        %10220 = vmatprep.subr.mxu0 0.0
        %10221 = vmatpush1.msra.mxu0 0.0
        %10222 = vmatprep.subr.mxu0 0.0
        %10223 = vmatpush1.msra.mxu0 0.0
        %10224 = vmatprep.subr.mxu0 0.0
        %10225 = vmatpush1.msra.mxu0 0.0
        %10226 = vmatprep.subr.mxu0 0.0
        %10227 = vmatpush1.msra.mxu0 0.0
        %10228 = vmatprep.subr.mxu0 0.0
        %10229 = vmatpush1.msra.mxu0 0.0
        %10230 = vmatprep.subr.mxu0 0.0
        %10231 = vmatpush1.msra.mxu0 0.0
        %10232 = vmatprep.subr.mxu0 0.0
        %10233 = vmatpush1.msra.mxu0 0.0
        %10234 = vmatprep.subr.mxu0 0.0
        %10235 = vmatpush1.msra.mxu0 0.0
        %10236 = vmatprep.subr.mxu0 0.0
        %10237 = vmatpush1.msra.mxu0 0.0
        %10238 = vmatprep.subr.mxu0 0.0
        %10239 = vmatpush1.msra.mxu0 0.0
        %10240 = vmatprep.subr.mxu0 0.0
        %10241 = vmatpush1.msra.mxu0 0.0
        %10242 = vmatprep.subr.mxu0 0.0
        %10243 = vmatpush1.msra.mxu0 0.0
        %10244 = vmatprep.mubr.f32.mxu0 0.0
        %10245 = vmatmul.mubr.f32.gmra.mrb[0].mxu0 %v10133
        %v10246 = vpop.f32.mrb[0].mxu0
        %v10247 = vadd.f32 %v10055, %v10246
        %v10248 = vpop.f32.mrb[0].mxu0
        %10249 = vmatprep.mubr.f32.mxu0 0.0
        %10250 = vmatmul.mubr.f32.gmra.mrb[0].mxu0 %v10136
        %v10251 = vpop.f32.mrb[0].mxu0
        %v10252 = vadd.f32 %v10060, %v10251
        %v10253 = vpop.f32.mrb[0].mxu0
        %10254 = vmatprep.mubr.f32.mxu0 0.0
        %10255 = vmatmul.mubr.f32.gmra.mrb[0].mxu0 %v10139
        %v10256 = vpop.f32.mrb[0].mxu0
        %v10257 = vadd.f32 %v10065, %v10256
        %v10258 = vpop.f32.mrb[0].mxu0
        %10259 = vmatprep.mubr.f32.mxu0 0.0
        %10260 = vmatmul.mubr.f32.gmra.mrb[0].mxu0 %v10142
        %v10261 = vpop.f32.mrb[0].mxu0
        %v10262 = vadd.f32 %v10070, %v10261
        %v10263 = vpop.f32.mrb[0].mxu0
        %10264 = vmatprep.mubr.f32.mxu0 0.0
        %10265 = vmatmul.mubr.f32.gmra.mrb[0].mxu0 %v10145
        %v10266 = vpop.f32.mrb[0].mxu0
        %v10267 = vadd.f32 %v10075, %v10266
        %v10268 = vpop.f32.mrb[0].mxu0
        %10269 = vmatprep.mubr.f32.mxu0 0.0
        %10270 = vmatmul.mubr.f32.gmra.mrb[0].mxu0 %v10148
        %v10271 = vpop.f32.mrb[0].mxu0
        %v10272 = vadd.f32 %v10080, %v10271
        %v10273 = vpop.f32.mrb[0].mxu0
        %10274 = vmatprep.mubr.f32.mxu0 0.0
        %10275 = vmatmul.mubr.f32.gmra.mrb[0].mxu0 %v10151
        %v10276 = vpop.f32.mrb[0].mxu0
        %v10277 = vadd.f32 %v10085, %v10276
        %v10278 = vpop.f32.mrb[0].mxu0
        %10279 = vmatprep.mubr.f32.mxu0 0.0
        %10280 = vmatmul.mubr.f32.gmra.mrb[0].mxu0 %v10154
        %v10281 = vpop.f32.mrb[0].mxu0
        %v10282 = vadd.f32 %v10090, %v10281
        %v10283 = vpop.f32.mrb[0].mxu0
        %10284 = vmatprep.mubr.f32.mxu0 0.0
        %10285 = vmatmul.mubr.f32.gmra.mrb[0].mxu0 %v10157
        %v10286 = vpop.f32.mrb[0].mxu0
        %v10287 = vadd.f32 %v10095, %v10286
        %v10288 = vpop.f32.mrb[0].mxu0
        %10289 = vmatprep.mubr.f32.mxu0 0.0
        %10290 = vmatmul.mubr.f32.gmra.mrb[0].mxu0 %v10160
        %v10291 = vpop.f32.mrb[0].mxu0
        %v10292 = vadd.f32 %v10100, %v10291
        %v10293 = vpop.f32.mrb[0].mxu0
        %10294 = vmatprep.mubr.f32.mxu0 0.0
        %10295 = vmatmul.mubr.f32.gmra.mrb[0].mxu0 %v10163
        %v10296 = vpop.f32.mrb[0].mxu0
        %v10297 = vadd.f32 %v10105, %v10296
        %v10298 = vpop.f32.mrb[0].mxu0
        %10299 = vmatprep.mubr.f32.mxu0 0.0
        %10300 = vmatmul.mubr.f32.gmra.mrb[0].mxu0 %v10166
        %v10301 = vpop.f32.mrb[0].mxu0
        %v10302 = vadd.f32 %v10110, %v10301
        %v10303 = vpop.f32.mrb[0].mxu0
        %10304 = vmatprep.mubr.f32.mxu0 0.0
        %10305 = vmatmul.mubr.f32.gmra.mrb[0].mxu0 %v10169
        %v10306 = vpop.f32.mrb[0].mxu0
        %v10307 = vadd.f32 %v10115, %v10306
        %v10308 = vpop.f32.mrb[0].mxu0
        %10309 = vmatprep.mubr.f32.mxu0 0.0
        %10310 = vmatmul.mubr.f32.gmra.mrb[0].mxu0 %v10172
        %v10311 = vpop.f32.mrb[0].mxu0
        %v10312 = vadd.f32 %v10120, %v10311
        %v10313 = vpop.f32.mrb[0].mxu0
        %10314 = vmatprep.mubr.f32.mxu0 0.0
        %10315 = vmatmul.mubr.f32.gmra.mrb[0].mxu0 %v10175
        %v10316 = vpop.f32.mrb[0].mxu0
        %v10317 = vadd.f32 %v10125, %v10316
        %v10318 = vpop.f32.mrb[0].mxu0
        %10319 = vmatprep.mubr.f32.mxu0 0.0
        %10320 = vmatmul.mubr.f32.gmra.mrb[0].mxu0 %v10178
        %v10321 = vpop.f32.mrb[0].mxu0
        %v10322 = vadd.f32 %v10130, %v10321
        %v10323 = vpop.f32.mrb[0].mxu0
        %10324 = vdwg.mxu0
        %v10325 = vmul.f32 %v10247, 0.5
        %v10326 = vmul.f32 %v10252, 0.5
        %v10327 = vmul.f32 %v10257, 0.5
        %v10328 = vmul.f32 %v10262, 0.5
        %v10329 = vmul.f32 %v10267, 0.5
        %v10330 = vmul.f32 %v10272, 0.5
        %v10331 = vmul.f32 %v10277, 0.5
        %v10332 = vmul.f32 %v10282, 0.5
        %v10333 = vmul.f32 %v10287, 0.5
        %v10334 = vmul.f32 %v10292, 0.5
        %v10335 = vmul.f32 %v10297, 0.5
        %v10336 = vmul.f32 %v10302, 0.5
        %v10337 = vmul.f32 %v10307, 0.5
        %v10338 = vmul.f32 %v10312, 0.5
        %v10339 = vmul.f32 %v10317, 0.5
        %v10340 = vmul.f32 %v10322, 0.5
        %v10341 = vmul.f32 %v10247, 0.70710677
        %v10342 = vmul.f32 %v10252, 0.70710677
        %v10343 = vmul.f32 %v10257, 0.70710677
        %v10344 = vmul.f32 %v10262, 0.70710677
        %v10345 = vmul.f32 %v10267, 0.70710677
        %v10346 = vmul.f32 %v10272, 0.70710677
        %v10347 = vmul.f32 %v10277, 0.70710677
        %v10348 = vmul.f32 %v10282, 0.70710677
        %v10349 = vmul.f32 %v10287, 0.70710677
        %v10350 = vmul.f32 %v10292, 0.70710677
        %v10351 = vmul.f32 %v10297, 0.70710677
        %v10352 = vmul.f32 %v10302, 0.70710677
        %v10353 = vmul.f32 %v10307, 0.70710677
        %v10354 = vmul.f32 %v10312, 0.70710677
        %v10355 = vmul.f32 %v10317, 0.70710677
        %v10356 = vmul.f32 %v10322, 0.70710677
        %v10357 = verf.f32.pop %v10341
        %v10358 = verf.f32.pop %v10342
        %v10359 = verf.f32.pop %v10343
        %v10360 = verf.f32.pop %v10344
        %v10361 = verf.f32.pop %v10345
        %v10362 = verf.f32.pop %v10346
        %v10363 = verf.f32.pop %v10347
        %v10364 = verf.f32.pop %v10348
        %v10365 = verf.f32.pop %v10349
        %v10366 = verf.f32.pop %v10350
        %v10367 = verf.f32.pop %v10351
        %v10368 = verf.f32.pop %v10352
        %v10369 = verf.f32.pop %v10353
        %v10370 = verf.f32.pop %v10354
        %v10371 = verf.f32.pop %v10355
        %v10372 = verf.f32.pop %v10356
        %v10373 = vadd.f32 %v10357, 1.0
        %v10374 = vadd.f32 %v10358, 1.0
        %v10375 = vadd.f32 %v10359, 1.0
        %v10376 = vadd.f32 %v10360, 1.0
        %v10377 = vadd.f32 %v10361, 1.0
        %v10378 = vadd.f32 %v10362, 1.0
        %v10379 = vadd.f32 %v10363, 1.0
        %v10380 = vadd.f32 %v10364, 1.0
        %v10381 = vadd.f32 %v10365, 1.0
        %v10382 = vadd.f32 %v10366, 1.0
        %v10383 = vadd.f32 %v10367, 1.0
        %v10384 = vadd.f32 %v10368, 1.0
        %v10385 = vadd.f32 %v10369, 1.0
        %v10386 = vadd.f32 %v10370, 1.0
        %v10387 = vadd.f32 %v10371, 1.0
        %v10388 = vadd.f32 %v10372, 1.0
        %v10389 = vmul.f32 %v10325, %v10373
        %v10390 = vmul.f32 %v10326, %v10374
        %v10391 = vmul.f32 %v10327, %v10375
        %v10392 = vmul.f32 %v10328, %v10376
        %v10393 = vmul.f32 %v10329, %v10377
        %v10394 = vmul.f32 %v10330, %v10378
        %v10395 = vmul.f32 %v10331, %v10379
        %v10396 = vmul.f32 %v10332, %v10380
        %v10397 = vmul.f32 %v10333, %v10381
        %v10398 = vmul.f32 %v10334, %v10382
        %v10399 = vmul.f32 %v10335, %v10383
        %v10400 = vmul.f32 %v10336, %v10384
        %v10401 = vmul.f32 %v10337, %v10385
        %v10402 = vmul.f32 %v10338, %v10386
        %v10403 = vmul.f32 %v10339, %v10387
        %v10404 = vmul.f32 %v10340, %v10388
        %v10405 = vld [vmem:[%s12] sm:$0x1]
        %v10406 = vld [vmem:[#allocation2] sm:$0x1]
        %10408 = vset.pattern.permute.xlu0 0
        %10409 = vperm.xlu0 %10408, %v10406
        %v10410 = vpop.permute.xlu0 %10409
        %v10412 = vlaneseq
        %v10413 = vshrl.u32 %v10412, 7
        %v10414 = vsub.s32 0, %v10413
        %v10415 = vrot.slane %v10410, %v10414
        %10416 = vmatprep.subr.mxu0 0.0
        %10417 = vmatpush1.msra.mxu0 %v10389
        %10418 = vmatprep.subr.mxu0 0.0
        %10419 = vmatpush1.msra.mxu0 %v10390
        %10420 = vmatprep.subr.mxu0 0.0
        %10421 = vmatpush1.msra.mxu0 %v10391
        %10422 = vmatprep.subr.mxu0 0.0
        %10423 = vmatpush1.msra.mxu0 %v10392
        %10424 = vmatprep.subr.mxu0 0.0
        %10425 = vmatpush1.msra.mxu0 %v10393
        %10426 = vmatprep.subr.mxu0 0.0
        %10427 = vmatpush1.msra.mxu0 %v10394
        %10428 = vmatprep.subr.mxu0 0.0
        %10429 = vmatpush1.msra.mxu0 %v10395
        %10430 = vmatprep.subr.mxu0 0.0
        %10431 = vmatpush1.msra.mxu0 %v10396
        %10432 = vmatprep.subr.mxu0 0.0
        %10433 = vmatpush1.msra.mxu0 %v10397
        %10434 = vmatprep.subr.mxu0 0.0
        %10435 = vmatpush1.msra.mxu0 %v10398
        %10436 = vmatprep.subr.mxu0 0.0
        %10437 = vmatpush1.msra.mxu0 %v10399
        %10438 = vmatprep.subr.mxu0 0.0
        %10439 = vmatpush1.msra.mxu0 %v10400
        %10440 = vmatprep.subr.mxu0 0.0
        %10441 = vmatpush1.msra.mxu0 %v10401
        %10442 = vmatprep.subr.mxu0 0.0
        %10443 = vmatpush1.msra.mxu0 %v10402
        %10444 = vmatprep.subr.mxu0 0.0
        %10445 = vmatpush1.msra.mxu0 %v10403
        %10446 = vmatprep.subr.mxu0 0.0
        %10447 = vmatpush1.msra.mxu0 %v10404
        %10448 = vmatprep.subr.mxu0 0.0
        %10449 = vmatpush1.msra.mxu0 0.0
        %10450 = vmatprep.subr.mxu0 0.0
        %10451 = vmatpush1.msra.mxu0 0.0
        %10452 = vmatprep.subr.mxu0 0.0
        %10453 = vmatpush1.msra.mxu0 0.0
        %10454 = vmatprep.subr.mxu0 0.0
        %10455 = vmatpush1.msra.mxu0 0.0
        %10456 = vmatprep.subr.mxu0 0.0
        %10457 = vmatpush1.msra.mxu0 0.0
        %10458 = vmatprep.subr.mxu0 0.0
        %10459 = vmatpush1.msra.mxu0 0.0
        %10460 = vmatprep.subr.mxu0 0.0
        %10461 = vmatpush1.msra.mxu0 0.0
        %10462 = vmatprep.subr.mxu0 0.0
        %10463 = vmatpush1.msra.mxu0 0.0
        %10464 = vmatprep.subr.mxu0 0.0
        %10465 = vmatpush1.msra.mxu0 0.0
        %10466 = vmatprep.subr.mxu0 0.0
        %10467 = vmatpush1.msra.mxu0 0.0
        %10468 = vmatprep.subr.mxu0 0.0
        %10469 = vmatpush1.msra.mxu0 0.0
        %10470 = vmatprep.subr.mxu0 0.0
        %10471 = vmatpush1.msra.mxu0 0.0
        %10472 = vmatprep.subr.mxu0 0.0
        %10473 = vmatpush1.msra.mxu0 0.0
        %10474 = vmatprep.subr.mxu0 0.0
        %10475 = vmatpush1.msra.mxu0 0.0
        %10476 = vmatprep.subr.mxu0 0.0
        %10477 = vmatpush1.msra.mxu0 0.0
        %10478 = vmatprep.subr.mxu0 0.0
        %10479 = vmatpush1.msra.mxu0 0.0
        %10480 = vmatprep.mubr.f32.mxu0 0.0
        %10481 = vmatmul.mubr.f32.gmra.mrb[0].mxu0 %v10405
        %v10482 = vpop.f32.mrb[0].mxu0
        %v10483 = vadd.f32 %v10415, %v10482
        %v10484 = vpop.f32.mrb[0].mxu0
        %10485 = vdwg.mxu0
        %vm10486 = vcmask 122880
        %10487 = vst.msk [vmem:[%s474] sm:$0x1] %vm10486, %v10483
        %s10488 = sand.u32 %s338, 1
        %s10489 = scalar_lea.sflag [#allocation5], %s10488
        %s10490 = sand.u32 %s338, 1
        %s10491 = scalar_lea.vmem [#allocation6], %s10490
        // Predicated region
        $region81: #{vno1d_forward.1} parent=75 // pred_check
          %p10492 = pneg %p348
        $region82: #{vno1d_forward.1} parent=75 // pred_check_branch
          %10494 = sbr.rel (%p10492) target = $region84
        $region83: #{vno1d_forward.1} parent=75 // pred_region
          %s10496 = ssub.s32 16, 16
          %10497 = vsyncadd %s10489, %s10496
          %s10498 = smul.addr %s31, 16
          %s10499 = scalar_lea.hbm %s14, %s10498
          %s10501 = sshll.u32 %s10491, 4
          %s10502 = int_to_ptr.vmem [resolvable:$true] %s10501
          %10504 = dma.vmem_to_hbm [thread:$0]  %s10502, 16, %s10499, %s10489
        $region84: #{vno1d_forward.1} parent=75 // pred_fallthru
          _
      $region76: #{vno1d_forward.1} parent=5 // pred_fallthru
        _
      %p10505 = scmp.le.s32.totalorder 2, %s26
      // Predicated region
      $region85: #{vno1d_forward.1} parent=5 // pred_check
        %p10506 = pneg %p10505
      $region86: #{vno1d_forward.1} parent=5 // pred_check_branch
        %10508 = sbr.rel (%p10506) target = $region88
      $region87: #{vno1d_forward.1} parent=5 // pred_region
        %s10509 = ssub.s32 %s26, 2
        // Predicated region
        $region89: #{vno1d_forward.1} parent=87 // pred_check
          %p10510 = pneg %p354
        $region90: #{vno1d_forward.1} parent=87 // pred_check_branch
          %10512 = sbr.rel (%p10510) target = $region92
        $region91: #{vno1d_forward.1} parent=87 // pred_region
          %s10513 = sand.u32 %s339, 1
          %s10514 = scalar_lea.sflag [#allocation5], %s10513
          %s10515 = sand.u32 %s339, 1
          %s10516 = scalar_lea.vmem [#allocation6], %s10515
          %10517 = dma.done %s10514, 16
        $region92: #{vno1d_forward.1} parent=87 // pred_fallthru
          _
      $region88: #{vno1d_forward.1} parent=5 // pred_fallthru
        _
    $region6: #{vno1d_forward.1} parent=1 // loop_footer
      %s30 = sadd.s32 1, %s26
    $region7: #{vno1d_forward.1} parent=1 // loop_footer_branch
      %25 = sbr.rel target = $region3
    $region8: #{vno1d_forward.1} parent=1 // loop_exit
      _
    %10518 = vsyncpa [#allocation4], 1
    %s10519 = scalar_lea.sflag [#allocation4], 1
    %10520 = vsyncpa %s10519, 1
    %10521 = vsyncpa [#allocation5], 1
    %s10522 = scalar_lea.sflag [#allocation5], 1
    %10523 = vsyncpa %s10522, 1

</llo_original>
